<compile_context>
chip_gen: v7x
topology: tpu7x:2x2x1
jax: 0.10.0
libtpu: 0.0.40
codegen_flags: <defaults>
</compile_context>

<pallas_src>
import functools
from types import SimpleNamespace

import jax
import jax.numpy as jnp
from jax import lax
from jax.experimental import pallas as pl
from jax.experimental.pallas import tpu as pltpu


# ------------------------------ fused kernel ------------------------------- #

def _fused_kernel(p1_ref,
                  w1_ref, b1_ref, w2_ref, b2_ref, w3_ref, b3_ref,
                  w4_ref, b4_ref, w5_ref, b5_ref, w6_ref, b6_ref,
                  w7_ref, b7_ref, wfc_ref, bfc_ref,
                  out_ref, stage_ref, *, block_batch):
    """conv1..conv7 + pools + fc1 for one batch block, VMEM-resident end to end."""
    f32 = jnp.float32
    bf16 = jnp.bfloat16
    batch = block_batch

    def pool_pairs(h):
        # MaxPool1d(2): rows are batch-major (b, l) and every per-batch length
        # here is even, so adjacent row pairs never cross a batch boundary.
        m, c = h.shape
        stage_ref[0:m, 0:c] = h
        even = stage_ref[pl.ds(0, m // 2, 2), pl.ds(0, c)]
        odd = stage_ref[pl.ds(1, m // 2, 2), pl.ds(0, c)]
        return jnp.maximum(even, odd)

    def conv_k3(h, w_ref, b_ref):
        # Conv1d(k=3, stride=1, pad=1) as shifted accumulation:
        #   y[l] = x[l-1] @ W0 + x[l] @ W1 + x[l+1] @ W2
        # The +-1 shifted views are offset reads of the VMEM staging scratch;
        # an iota mask supplies the per-batch zero padding (no batch mixing).
        m, c_in = h.shape
        length = m // batch
        stage_ref[1:m + 1, 0:c_in] = h
        l_idx = lax.broadcasted_iota(jnp.int32, (m, c_in), 0) % length
        prev = jnp.where(l_idx == 0, 0.0, stage_ref[0:m, 0:c_in])
        nxt = jnp.where(l_idx == length - 1, 0.0, stage_ref[2:m + 2, 0:c_in])
        y = jnp.dot(prev.astype(bf16), w_ref[0:c_in, :],
                    preferred_element_type=f32)
        y = y + jnp.dot(h.astype(bf16), w_ref[c_in:2 * c_in, :],
                        preferred_element_type=f32)
        y = y + jnp.dot(nxt.astype(bf16), w_ref[2 * c_in:3 * c_in, :],
                        preferred_element_type=f32)
        return jnp.maximum(y + b_ref[...], 0.0)

    # conv1 (im2col'ed JAX-side: stride-16, k=64 on the raw input) + pool1.
    h = jnp.dot(p1_ref[...], w1_ref[...], preferred_element_type=f32)
    h = jnp.maximum(h + b1_ref[...], 0.0)
    h = pool_pairs(h)

    # conv2..conv7; pools only after conv2/3/4 (pool1 already applied above).
    for w_ref, b_ref, do_pool in (
            (w2_ref, b2_ref, True), (w3_ref, b3_ref, True),
            (w4_ref, b4_ref, True), (w5_ref, b5_ref, False),
            (w6_ref, b6_ref, False), (w7_ref, b7_ref, False)):
        h = conv_k3(h, w_ref, b_ref)
        if do_pool:
            h = pool_pairs(h)

    # fc1.  PyTorch flattens (B, C, L) channel-major; the fc weight was
    # regrouped position-major at pack time, so the FC becomes a sum over the
    # final positions l of (B, C) @ (C, N) matmuls on strided row slices.
    m, c = h.shape
    length = m // batch
    n_out = out_ref.shape[1]
    stage_ref[0:m, 0:c] = h
    acc = jnp.zeros((batch, n_out), f32)
    for l in range(length):
        a_l = stage_ref[pl.ds(l, batch, length), pl.ds(0, c)]   # (batch, c)
        acc = acc + jnp.dot(a_l.astype(bf16), wfc_ref[l * c:(l + 1) * c, :],
                            preferred_element_type=f32)
    out_ref[...] = acc + bfc_ref[...]


# ------------------------------ JAX-side glue ------------------------------- #

def pack_params(params):
    """One-time weight re-layout into kernel-ready matrices (hoisted out of
    the forward path).  Conv weights (C_out, C_in, K) -> (K*C_in, C_out) bf16
    (tap-major rows); fc weight (N, C*L) -> (L*C, N) bf16 regrouped by length
    position so the kernel consumes the length-major activation directly."""
    packed = {}
    for name in ("conv1", "conv2", "conv3", "conv4", "conv5", "conv6", "conv7"):
        w, b = params[name]
        c_out, c_in, k = w.shape
        wm = jnp.transpose(w, (2, 1, 0)).reshape(k * c_in, c_out)
        packed[name] = (wm.astype(jnp.bfloat16),
                        b.reshape(1, c_out).astype(jnp.float32))
    w_fc, b_fc = params["fc1"]
    n_out, in_features = w_fc.shape
    c_last = params["conv7"][0].shape[0]
    l_last = in_features // c_last
    wt = w_fc.T.reshape(c_last, l_last, n_out)           # rows were c*L + l
    wfc = jnp.transpose(wt, (1, 0, 2)).reshape(l_last * c_last, n_out)
    packed["fc1"] = (wfc.astype(jnp.bfloat16),
                     b_fc.reshape(1, n_out).astype(jnp.float32))
    return packed


def _im2col_conv1(x, k, stride, pad):
    """(B, C_in, L) -> (B*L_out, k*C_in) patches for the stride-16 conv1."""
    batch, c_in, length = x.shape
    xw = jnp.transpose(x, (0, 2, 1))
    xp = jnp.pad(xw, ((0, 0), (pad, pad), (0, 0)))
    l_out = (length + 2 * pad - k) // stride + 1
    idx = jnp.arange(l_out)[:, None] * stride + jnp.arange(k)[None, :]
    patches = xp[:, idx, :]                               # (B, L_out, k, C_in)
    return patches.reshape(batch * l_out, k * c_in), l_out


def _pick_block_batch(batch, l_last):
    """Largest batch block that (a) divides the batch, (b) keeps every
    BlockSpec (8, 128)-friendly (bb % 8 == 0 unless bb == batch), (c) keeps
    >= 8 sublane rows at the deepest layer, and (d) leaves >= 2 grid steps so
    blocks can be split across megacore TensorCores and the patch DMA of the
    next block pipelines behind the current block's compute.  Falls back to a
    single full-batch block when no such split exists."""
    for bb in range(batch // 2, 0, -1):
        if batch % bb == 0 and bb % 8 == 0 and bb * l_last >= 8:
            return bb
    return batch


@jax.jit
def feature_extractor_4(x, packed):
    """x: (B, C_in, L) float32 (PyTorch NCW) -> (B, backbone_out_dim)."""
    batch = x.shape[0]
    patches, l1 = _im2col_conv1(x, k=64, stride=16, pad=24)
    # All four MaxPool1d(2) stages need even lengths (and the fc sizing needs
    # data_size % 256 == 0); assert statically.
    assert l1 % 16 == 0, "data_size must be a multiple of 256"
    patches = patches.astype(jnp.bfloat16)

    n_out = packed["fc1"][0].shape[1]
    max_c = packed["conv7"][0].shape[1]                   # widest channel count
    l_last = l1 // 16
    assert packed["fc1"][0].shape[0] == l_last * max_c

    bb = _pick_block_batch(batch, l_last)
    assert batch % bb == 0
    grid = (batch // bb,)

    inputs = [patches]
    for name in ("conv1", "conv2", "conv3", "conv4", "conv5", "conv6", "conv7",
                 "fc1"):
        w, b = packed[name]
        inputs.extend((w, b))

    # Batch-blocked patches / output; weights & biases as whole-array blocks
    # (constant block index -> fetched once, not re-DMA'd per grid step).
    in_specs = [pl.BlockSpec((bb * l1, patches.shape[1]), lambda i: (i, 0))]
    in_specs += [pl.BlockSpec(a.shape, lambda i: (0, 0)) for a in inputs[1:]]

    return pl.pallas_call(
        functools.partial(_fused_kernel, block_batch=bb),
        out_shape=jax.ShapeDtypeStruct((batch, n_out), jnp.float32),
        grid=grid,
        in_specs=in_specs,
        out_specs=pl.BlockSpec((bb, n_out), lambda i: (i, 0)),
        scratch_shapes=[pltpu.VMEM((bb * l1, max_c), jnp.float32)],
        compiler_params=pltpu.CompilerParams(
            dimension_semantics=("parallel",)),
    )(*inputs)


# --------------------------- deterministic params --------------------------- #

def init_params(key, args):
    def conv_init(k, c_out, c_in, ksz):
        k1, k2 = jax.random.split(k)
        bound = 1.0 / (c_in * ksz) ** 0.5
        w = jax.random.uniform(k1, (c_out, c_in, ksz), jnp.float32, -bound, bound)
        b = jax.random.uniform(k2, (c_out,), jnp.float32, -bound, bound)
        return w, b

    def linear_init(k, c_out, c_in):
        k1, k2 = jax.random.split(k)
        bound = 1.0 / c_in ** 0.5
        w = jax.random.uniform(k1, (c_out, c_in), jnp.float32, -bound, bound)
        b = jax.random.uniform(k2, (c_out,), jnp.float32, -bound, bound)
        return w, b

    keys = jax.random.split(key, 8)
    params = {
        "conv1": conv_init(keys[0], 16, args.in_channels, 64),
        "conv2": conv_init(keys[1], 32, 16, 3),
        "conv3": conv_init(keys[2], 64, 32, 3),
        "conv4": conv_init(keys[3], 64, 64, 3),
        "conv5": conv_init(keys[4], 64, 64, 3),
        "conv6": conv_init(keys[5], 64, 64, 3),
        "conv7": conv_init(keys[6], 64, 64, 3),
        "fc1": linear_init(keys[7], args.backbone_out_dim,
                           64 * (args.data_size // 256)),
    }
    return params


# --------------------------- pure-JAX reference ----------------------------- #

def reference_forward(x, params):
    def conv1d(h, w, b, stride, pad):
        y = lax.conv_general_dilated(h, w, (stride,), [(pad, pad)],
                                     dimension_numbers=("NCH", "OIH", "NCH"))
        return y + b[None, :, None]

    def pool(h):
        B, C, L = h.shape
        return h.reshape(B, C, L // 2, 2).max(axis=-1)

    h = pool(jax.nn.relu(conv1d(x, *params["conv1"], 16, 24)))
    h = pool(jax.nn.relu(conv1d(h, *params["conv2"], 1, 1)))
    h = pool(jax.nn.relu(conv1d(h, *params["conv3"], 1, 1)))
    h = pool(jax.nn.relu(conv1d(h, *params["conv4"], 1, 1)))
    h = jax.nn.relu(conv1d(h, *params["conv5"], 1, 1))
    h = jax.nn.relu(conv1d(h, *params["conv6"], 1, 1))
    h = jax.nn.relu(conv1d(h, *params["conv7"], 1, 1))
    h = h.reshape(h.shape[0], -1)
    w, b = params["fc1"]
    return h @ w.T + b


# ---------------------------------- main ------------------------------------ #

if __name__ == "__main__":
    args = SimpleNamespace(in_channels=1, data_size=1024, backbone_out_dim=32)
    batch = 16          # -> block_batch=8, grid=(2,): exercises the parallel batch grid

    key = jax.random.PRNGKey(0)
    kx, kp = jax.random.split(key)
    x = jax.random.normal(kx, (batch, args.in_channels, args.data_size),
                          jnp.float32)
    params = init_params(kp, args)
    packed = pack_params(params)          # one-time weight re-layout (hoisted)

    out = feature_extractor_4(x, packed)
    out = jax.block_until_ready(out)
    assert out.shape == (batch, args.backbone_out_dim), out.shape

    ref = reference_forward(x, params)
    err = float(jnp.max(jnp.abs(out - ref)))
    # bf16 MXU operands (f32 accumulation) vs. the pure-f32 reference.
    assert jnp.allclose(out, ref, rtol=2e-2, atol=3e-2), err

    print("KERNEL_OK")
</pallas_src>

<mosaic_0001>
module attributes {stable_mosaic.version = 11 : i64} {
  func.func @_fused_kernel(%arg0: i32, %arg1: memref<512x64xbf16, #tpu.memory_space<vmem>>, %arg2: memref<64x16xbf16, #tpu.memory_space<vmem>>, %arg3: memref<1x16xf32, #tpu.memory_space<vmem>>, %arg4: memref<48x32xbf16, #tpu.memory_space<vmem>>, %arg5: memref<1x32xf32, #tpu.memory_space<vmem>>, %arg6: memref<96x64xbf16, #tpu.memory_space<vmem>>, %arg7: memref<1x64xf32, #tpu.memory_space<vmem>>, %arg8: memref<192x64xbf16, #tpu.memory_space<vmem>>, %arg9: memref<1x64xf32, #tpu.memory_space<vmem>>, %arg10: memref<192x64xbf16, #tpu.memory_space<vmem>>, %arg11: memref<1x64xf32, #tpu.memory_space<vmem>>, %arg12: memref<192x64xbf16, #tpu.memory_space<vmem>>, %arg13: memref<1x64xf32, #tpu.memory_space<vmem>>, %arg14: memref<192x64xbf16, #tpu.memory_space<vmem>>, %arg15: memref<1x64xf32, #tpu.memory_space<vmem>>, %arg16: memref<256x32xbf16, #tpu.memory_space<vmem>>, %arg17: memref<1x32xf32, #tpu.memory_space<vmem>>, %arg18: memref<8x32xf32, #tpu.memory_space<vmem>>, %arg19: memref<512x64xf32, #tpu.memory_space<vmem>>) attributes {dimension_semantics = [#tpu.dimension_semantics<parallel>], iteration_bounds = array<i64: 2>, scalar_prefetch = 0 : i64, scratch_operands = 1 : i64, tpu.core_type = #tpu.core_type<tc>, window_params = [{transform_indices = @transform_0, window_bounds = array<i64: 512, 64>}, {pipeline_mode = #tpu.pipeline_mode<synchronous>, transform_indices = @transform_1, window_bounds = array<i64: 64, 16>}, {pipeline_mode = #tpu.pipeline_mode<synchronous>, transform_indices = @transform_2, window_bounds = array<i64: 1, 16>}, {pipeline_mode = #tpu.pipeline_mode<synchronous>, transform_indices = @transform_3, window_bounds = array<i64: 48, 32>}, {pipeline_mode = #tpu.pipeline_mode<synchronous>, transform_indices = @transform_4, window_bounds = array<i64: 1, 32>}, {pipeline_mode = #tpu.pipeline_mode<synchronous>, transform_indices = @transform_5, window_bounds = array<i64: 96, 64>}, {pipeline_mode = #tpu.pipeline_mode<synchronous>, transform_indices = @transform_6, window_bounds = array<i64: 1, 64>}, {pipeline_mode = #tpu.pipeline_mode<synchronous>, transform_indices = @transform_7, window_bounds = array<i64: 192, 64>}, {pipeline_mode = #tpu.pipeline_mode<synchronous>, transform_indices = @transform_8, window_bounds = array<i64: 1, 64>}, {pipeline_mode = #tpu.pipeline_mode<synchronous>, transform_indices = @transform_9, window_bounds = array<i64: 192, 64>}, {pipeline_mode = #tpu.pipeline_mode<synchronous>, transform_indices = @transform_10, window_bounds = array<i64: 1, 64>}, {pipeline_mode = #tpu.pipeline_mode<synchronous>, transform_indices = @transform_11, window_bounds = array<i64: 192, 64>}, {pipeline_mode = #tpu.pipeline_mode<synchronous>, transform_indices = @transform_12, window_bounds = array<i64: 1, 64>}, {pipeline_mode = #tpu.pipeline_mode<synchronous>, transform_indices = @transform_13, window_bounds = array<i64: 192, 64>}, {pipeline_mode = #tpu.pipeline_mode<synchronous>, transform_indices = @transform_14, window_bounds = array<i64: 1, 64>}, {pipeline_mode = #tpu.pipeline_mode<synchronous>, transform_indices = @transform_15, window_bounds = array<i64: 256, 32>}, {pipeline_mode = #tpu.pipeline_mode<synchronous>, transform_indices = @transform_16, window_bounds = array<i64: 1, 32>}, {transform_indices = @transform_17, window_bounds = array<i64: 8, 32>}]} {
    %c0 = arith.constant 0 : index
    %c0_0 = arith.constant 0 : index
    %0 = vector.load %arg1[%c0, %c0_0] : memref<512x64xbf16, #tpu.memory_space<vmem>>, vector<512x64xbf16>
    %c0_1 = arith.constant 0 : index
    %c0_2 = arith.constant 0 : index
    %1 = vector.load %arg2[%c0_1, %c0_2] : memref<64x16xbf16, #tpu.memory_space<vmem>>, vector<64x16xbf16>
    %cst = arith.constant dense<0.000000e+00> : vector<512x16xf32>
    %2 = tpu.matmul %0, %1, %cst {dimension_numbers = #tpu.dot_dimension_numbers<[1], [0], [0], [1], [0, 0, 1, 1], [], []>} : vector<512x64xbf16>, vector<64x16xbf16>, vector<512x16xf32> -> vector<512x16xf32>
    %c0_3 = arith.constant 0 : index
    %c0_4 = arith.constant 0 : index
    %3 = vector.load %arg3[%c0_3, %c0_4] : memref<1x16xf32, #tpu.memory_space<vmem>>, vector<1x16xf32>
    %4 = vector.broadcast %3 : vector<1x16xf32> to vector<512x16xf32>
    %5 = arith.addf %2, %4 : vector<512x16xf32>
    %cst_5 = arith.constant 0.000000e+00 : f32
    %6 = vector.broadcast %cst_5 : f32 to vector<512x16xf32>
    %7 = arith.maximumf %5, %6 : vector<512x16xf32>
    %c0_6 = arith.constant 0 : index
    %c0_7 = arith.constant 0 : index
    %8 = vector.load %arg19[%c0_6, %c0_7] : memref<512x64xf32, #tpu.memory_space<vmem>>, vector<512x16xf32>
    tpu.vector_store %arg19[%c0_6, %c0_7], %7 {strides = array<i32>} : memref<512x64xf32, #tpu.memory_space<vmem>>, vector<512x16xf32>,
    %c0_8 = arith.constant 0 : index
    %c0_9 = arith.constant 0 : index
    %9 = tpu.strided_load %arg19[%c0_8, %c0_9] {strides = array<i32: 2, 1>} : memref<512x64xf32, #tpu.memory_space<vmem>>, vector<256x16xf32>
    %c1 = arith.constant 1 : index
    %c0_10 = arith.constant 0 : index
    %10 = tpu.strided_load %arg19[%c1, %c0_10] {strides = array<i32: 2, 1>} : memref<512x64xf32, #tpu.memory_space<vmem>>, vector<256x16xf32>
    %11 = arith.maximumf %9, %10 : vector<256x16xf32>
    %c1_11 = arith.constant 1 : index
    %c0_12 = arith.constant 0 : index
    %12 = vector.load %arg19[%c1_11, %c0_12] : memref<512x64xf32, #tpu.memory_space<vmem>>, vector<256x16xf32>
    tpu.vector_store %arg19[%c1_11, %c0_12], %11 {strides = array<i32>} : memref<512x64xf32, #tpu.memory_space<vmem>>, vector<256x16xf32>,
    %13 = tpu.iota {dimensions = array<i32: 0>} : vector<256x16xi32>
    %c32_i32 = arith.constant 32 : i32
    %c0_i32 = arith.constant 0 : i32
    %14 = arith.cmpi eq, %c32_i32, %c0_i32 : i32
    %c1_i32 = arith.constant 1 : i32
    %15 = arith.select %14, %c1_i32, %c32_i32 : i32
    %16 = vector.broadcast %15 : i32 to vector<256x16xi32>
    %17 = arith.remsi %13, %16 : vector<256x16xi32>
    %c0_i32_13 = arith.constant 0 : i32
    %18 = vector.broadcast %c0_i32_13 : i32 to vector<256x16xi32>
    %19 = arith.cmpi ne, %17, %18 : vector<256x16xi32>
    %c0_i32_14 = arith.constant 0 : i32
    %20 = vector.broadcast %c0_i32_14 : i32 to vector<256x16xi32>
    %21 = arith.cmpi slt, %17, %20 : vector<256x16xi32>
    %c0_i32_15 = arith.constant 0 : i32
    %22 = arith.cmpi slt, %15, %c0_i32_15 : i32
    %23 = vector.broadcast %22 : i1 to vector<256x16xi1>
    %24 = vector.broadcast %23 : vector<256x16xi1> to vector<256x16xi1>
    %25 = arith.xori %21, %24 : vector<256x16xi1>
    %26 = arith.andi %25, %19 : vector<256x16xi1>
    %27 = vector.broadcast %15 : i32 to vector<256x16xi32>
    %28 = arith.addi %17, %27 : vector<256x16xi32>
    %29 = arith.select %26, %28, %17 : vector<256x16xi1>, vector<256x16xi32>
    %c0_i32_16 = arith.constant 0 : i32
    %30 = vector.broadcast %c0_i32_16 : i32 to vector<256x16xi32>
    %31 = arith.cmpi eq, %29, %30 : vector<256x16xi32>
    %c0_17 = arith.constant 0 : index
    %c0_18 = arith.constant 0 : index
    %32 = vector.load %arg19[%c0_17, %c0_18] : memref<512x64xf32, #tpu.memory_space<vmem>>, vector<256x16xf32>
    %cst_19 = arith.constant 0.000000e+00 : f32
    %33 = vector.broadcast %cst_19 : f32 to vector<256x16xf32>
    %34 = arith.select %31, %33, %32 : vector<256x16xi1>, vector<256x16xf32>
    %c31_i32 = arith.constant 31 : i32
    %35 = vector.broadcast %c31_i32 : i32 to vector<256x16xi32>
    %36 = arith.cmpi eq, %29, %35 : vector<256x16xi32>
    %c2 = arith.constant 2 : index
    %c0_20 = arith.constant 0 : index
    %37 = vector.load %arg19[%c2, %c0_20] : memref<512x64xf32, #tpu.memory_space<vmem>>, vector<256x16xf32>
    %cst_21 = arith.constant 0.000000e+00 : f32
    %38 = vector.broadcast %cst_21 : f32 to vector<256x16xf32>
    %39 = arith.select %36, %38, %37 : vector<256x16xi1>, vector<256x16xf32>
    %40 = arith.truncf %34 : vector<256x16xf32> to vector<256x16xbf16>
    %c0_22 = arith.constant 0 : index
    %c0_23 = arith.constant 0 : index
    %41 = vector.load %arg4[%c0_22, %c0_23] : memref<48x32xbf16, #tpu.memory_space<vmem>>, vector<16x32xbf16>
    %cst_24 = arith.constant dense<0.000000e+00> : vector<256x32xf32>
    %42 = tpu.matmul %40, %41, %cst_24 {dimension_numbers = #tpu.dot_dimension_numbers<[1], [0], [0], [1], [0, 0, 1, 1], [], []>} : vector<256x16xbf16>, vector<16x32xbf16>, vector<256x32xf32> -> vector<256x32xf32>
    %43 = arith.truncf %11 : vector<256x16xf32> to vector<256x16xbf16>
    %c16 = arith.constant 16 : index
    %c0_25 = arith.constant 0 : index
    %44 = vector.load %arg4[%c16, %c0_25] : memref<48x32xbf16, #tpu.memory_space<vmem>>, vector<16x32xbf16>
    %cst_26 = arith.constant dense<0.000000e+00> : vector<256x32xf32>
    %45 = tpu.matmul %43, %44, %cst_26 {dimension_numbers = #tpu.dot_dimension_numbers<[1], [0], [0], [1], [0, 0, 1, 1], [], []>} : vector<256x16xbf16>, vector<16x32xbf16>, vector<256x32xf32> -> vector<256x32xf32>
    %46 = arith.addf %42, %45 : vector<256x32xf32>
    %47 = arith.truncf %39 : vector<256x16xf32> to vector<256x16xbf16>
    %c32 = arith.constant 32 : index
    %c0_27 = arith.constant 0 : index
    %48 = vector.load %arg4[%c32, %c0_27] : memref<48x32xbf16, #tpu.memory_space<vmem>>, vector<16x32xbf16>
    %cst_28 = arith.constant dense<0.000000e+00> : vector<256x32xf32>
    %49 = tpu.matmul %47, %48, %cst_28 {dimension_numbers = #tpu.dot_dimension_numbers<[1], [0], [0], [1], [0, 0, 1, 1], [], []>} : vector<256x16xbf16>, vector<16x32xbf16>, vector<256x32xf32> -> vector<256x32xf32>
    %50 = arith.addf %46, %49 : vector<256x32xf32>
    %c0_29 = arith.constant 0 : index
    %c0_30 = arith.constant 0 : index
    %51 = vector.load %arg5[%c0_29, %c0_30] : memref<1x32xf32, #tpu.memory_space<vmem>>, vector<1x32xf32>
    %52 = vector.broadcast %51 : vector<1x32xf32> to vector<256x32xf32>
    %53 = arith.addf %50, %52 : vector<256x32xf32>
    %cst_31 = arith.constant 0.000000e+00 : f32
    %54 = vector.broadcast %cst_31 : f32 to vector<256x32xf32>
    %55 = arith.maximumf %53, %54 : vector<256x32xf32>
    %c0_32 = arith.constant 0 : index
    %c0_33 = arith.constant 0 : index
    %56 = vector.load %arg19[%c0_32, %c0_33] : memref<512x64xf32, #tpu.memory_space<vmem>>, vector<256x32xf32>
    tpu.vector_store %arg19[%c0_32, %c0_33], %55 {strides = array<i32>} : memref<512x64xf32, #tpu.memory_space<vmem>>, vector<256x32xf32>,
    %c0_34 = arith.constant 0 : index
    %c0_35 = arith.constant 0 : index
    %57 = tpu.strided_load %arg19[%c0_34, %c0_35] {strides = array<i32: 2, 1>} : memref<512x64xf32, #tpu.memory_space<vmem>>, vector<128x32xf32>
    %c1_36 = arith.constant 1 : index
    %c0_37 = arith.constant 0 : index
    %58 = tpu.strided_load %arg19[%c1_36, %c0_37] {strides = array<i32: 2, 1>} : memref<512x64xf32, #tpu.memory_space<vmem>>, vector<128x32xf32>
    %59 = arith.maximumf %57, %58 : vector<128x32xf32>
    %c1_38 = arith.constant 1 : index
    %c0_39 = arith.constant 0 : index
    %60 = vector.load %arg19[%c1_38, %c0_39] : memref<512x64xf32, #tpu.memory_space<vmem>>, vector<128x32xf32>
    tpu.vector_store %arg19[%c1_38, %c0_39], %59 {strides = array<i32>} : memref<512x64xf32, #tpu.memory_space<vmem>>, vector<128x32xf32>,
    %61 = tpu.iota {dimensions = array<i32: 0>} : vector<128x32xi32>
    %c16_i32 = arith.constant 16 : i32
    %c0_i32_40 = arith.constant 0 : i32
    %62 = arith.cmpi eq, %c16_i32, %c0_i32_40 : i32
    %c1_i32_41 = arith.constant 1 : i32
    %63 = arith.select %62, %c1_i32_41, %c16_i32 : i32
    %64 = vector.broadcast %63 : i32 to vector<128x32xi32>
    %65 = arith.remsi %61, %64 : vector<128x32xi32>
    %c0_i32_42 = arith.constant 0 : i32
    %66 = vector.broadcast %c0_i32_42 : i32 to vector<128x32xi32>
    %67 = arith.cmpi ne, %65, %66 : vector<128x32xi32>
    %c0_i32_43 = arith.constant 0 : i32
    %68 = vector.broadcast %c0_i32_43 : i32 to vector<128x32xi32>
    %69 = arith.cmpi slt, %65, %68 : vector<128x32xi32>
    %c0_i32_44 = arith.constant 0 : i32
    %70 = arith.cmpi slt, %63, %c0_i32_44 : i32
    %71 = vector.broadcast %70 : i1 to vector<128x32xi1>
    %72 = vector.broadcast %71 : vector<128x32xi1> to vector<128x32xi1>
    %73 = arith.xori %69, %72 : vector<128x32xi1>
    %74 = arith.andi %73, %67 : vector<128x32xi1>
    %75 = vector.broadcast %63 : i32 to vector<128x32xi32>
    %76 = arith.addi %65, %75 : vector<128x32xi32>
    %77 = arith.select %74, %76, %65 : vector<128x32xi1>, vector<128x32xi32>
    %c0_i32_45 = arith.constant 0 : i32
    %78 = vector.broadcast %c0_i32_45 : i32 to vector<128x32xi32>
    %79 = arith.cmpi eq, %77, %78 : vector<128x32xi32>
    %c0_46 = arith.constant 0 : index
    %c0_47 = arith.constant 0 : index
    %80 = vector.load %arg19[%c0_46, %c0_47] : memref<512x64xf32, #tpu.memory_space<vmem>>, vector<128x32xf32>
    %cst_48 = arith.constant 0.000000e+00 : f32
    %81 = vector.broadcast %cst_48 : f32 to vector<128x32xf32>
    %82 = arith.select %79, %81, %80 : vector<128x32xi1>, vector<128x32xf32>
    %c15_i32 = arith.constant 15 : i32
    %83 = vector.broadcast %c15_i32 : i32 to vector<128x32xi32>
    %84 = arith.cmpi eq, %77, %83 : vector<128x32xi32>
    %c2_49 = arith.constant 2 : index
    %c0_50 = arith.constant 0 : index
    %85 = vector.load %arg19[%c2_49, %c0_50] : memref<512x64xf32, #tpu.memory_space<vmem>>, vector<128x32xf32>
    %cst_51 = arith.constant 0.000000e+00 : f32
    %86 = vector.broadcast %cst_51 : f32 to vector<128x32xf32>
    %87 = arith.select %84, %86, %85 : vector<128x32xi1>, vector<128x32xf32>
    %88 = arith.truncf %82 : vector<128x32xf32> to vector<128x32xbf16>
    %c0_52 = arith.constant 0 : index
    %c0_53 = arith.constant 0 : index
    %89 = vector.load %arg6[%c0_52, %c0_53] : memref<96x64xbf16, #tpu.memory_space<vmem>>, vector<32x64xbf16>
    %cst_54 = arith.constant dense<0.000000e+00> : vector<128x64xf32>
    %90 = tpu.matmul %88, %89, %cst_54 {dimension_numbers = #tpu.dot_dimension_numbers<[1], [0], [0], [1], [0, 0, 1, 1], [], []>} : vector<128x32xbf16>, vector<32x64xbf16>, vector<128x64xf32> -> vector<128x64xf32>
    %91 = arith.truncf %59 : vector<128x32xf32> to vector<128x32xbf16>
    %c32_55 = arith.constant 32 : index
    %c0_56 = arith.constant 0 : index
    %92 = vector.load %arg6[%c32_55, %c0_56] : memref<96x64xbf16, #tpu.memory_space<vmem>>, vector<32x64xbf16>
    %cst_57 = arith.constant dense<0.000000e+00> : vector<128x64xf32>
    %93 = tpu.matmul %91, %92, %cst_57 {dimension_numbers = #tpu.dot_dimension_numbers<[1], [0], [0], [1], [0, 0, 1, 1], [], []>} : vector<128x32xbf16>, vector<32x64xbf16>, vector<128x64xf32> -> vector<128x64xf32>
    %94 = arith.addf %90, %93 : vector<128x64xf32>
    %95 = arith.truncf %87 : vector<128x32xf32> to vector<128x32xbf16>
    %c64 = arith.constant 64 : index
    %c0_58 = arith.constant 0 : index
    %96 = vector.load %arg6[%c64, %c0_58] : memref<96x64xbf16, #tpu.memory_space<vmem>>, vector<32x64xbf16>
    %cst_59 = arith.constant dense<0.000000e+00> : vector<128x64xf32>
    %97 = tpu.matmul %95, %96, %cst_59 {dimension_numbers = #tpu.dot_dimension_numbers<[1], [0], [0], [1], [0, 0, 1, 1], [], []>} : vector<128x32xbf16>, vector<32x64xbf16>, vector<128x64xf32> -> vector<128x64xf32>
    %98 = arith.addf %94, %97 : vector<128x64xf32>
    %c0_60 = arith.constant 0 : index
    %c0_61 = arith.constant 0 : index
    %99 = vector.load %arg7[%c0_60, %c0_61] : memref<1x64xf32, #tpu.memory_space<vmem>>, vector<1x64xf32>
    %100 = vector.broadcast %99 : vector<1x64xf32> to vector<128x64xf32>
    %101 = arith.addf %98, %100 : vector<128x64xf32>
    %cst_62 = arith.constant 0.000000e+00 : f32
    %102 = vector.broadcast %cst_62 : f32 to vector<128x64xf32>
    %103 = arith.maximumf %101, %102 : vector<128x64xf32>
    %c0_63 = arith.constant 0 : index
    %c0_64 = arith.constant 0 : index
    %104 = vector.load %arg19[%c0_63, %c0_64] : memref<512x64xf32, #tpu.memory_space<vmem>>, vector<128x64xf32>
    tpu.vector_store %arg19[%c0_63, %c0_64], %103 {strides = array<i32>} : memref<512x64xf32, #tpu.memory_space<vmem>>, vector<128x64xf32>,
    %c0_65 = arith.constant 0 : index
    %c0_66 = arith.constant 0 : index
    %105 = tpu.strided_load %arg19[%c0_65, %c0_66] {strides = array<i32: 2, 1>} : memref<512x64xf32, #tpu.memory_space<vmem>>, vector<64x64xf32>
    %c1_67 = arith.constant 1 : index
    %c0_68 = arith.constant 0 : index
    %106 = tpu.strided_load %arg19[%c1_67, %c0_68] {strides = array<i32: 2, 1>} : memref<512x64xf32, #tpu.memory_space<vmem>>, vector<64x64xf32>
    %107 = arith.maximumf %105, %106 : vector<64x64xf32>
    %c1_69 = arith.constant 1 : index
    %c0_70 = arith.constant 0 : index
    %108 = vector.load %arg19[%c1_69, %c0_70] : memref<512x64xf32, #tpu.memory_space<vmem>>, vector<64x64xf32>
    tpu.vector_store %arg19[%c1_69, %c0_70], %107 {strides = array<i32>} : memref<512x64xf32, #tpu.memory_space<vmem>>, vector<64x64xf32>,
    %109 = tpu.iota {dimensions = array<i32: 0>} : vector<64x64xi32>
    %c8_i32 = arith.constant 8 : i32
    %c0_i32_71 = arith.constant 0 : i32
    %110 = arith.cmpi eq, %c8_i32, %c0_i32_71 : i32
    %c1_i32_72 = arith.constant 1 : i32
    %111 = arith.select %110, %c1_i32_72, %c8_i32 : i32
    %112 = vector.broadcast %111 : i32 to vector<64x64xi32>
    %113 = arith.remsi %109, %112 : vector<64x64xi32>
    %c0_i32_73 = arith.constant 0 : i32
    %114 = vector.broadcast %c0_i32_73 : i32 to vector<64x64xi32>
    %115 = arith.cmpi ne, %113, %114 : vector<64x64xi32>
    %c0_i32_74 = arith.constant 0 : i32
    %116 = vector.broadcast %c0_i32_74 : i32 to vector<64x64xi32>
    %117 = arith.cmpi slt, %113, %116 : vector<64x64xi32>
    %c0_i32_75 = arith.constant 0 : i32
    %118 = arith.cmpi slt, %111, %c0_i32_75 : i32
    %119 = vector.broadcast %118 : i1 to vector<64x64xi1>
    %120 = vector.broadcast %119 : vector<64x64xi1> to vector<64x64xi1>
    %121 = arith.xori %117, %120 : vector<64x64xi1>
    %122 = arith.andi %121, %115 : vector<64x64xi1>
    %123 = vector.broadcast %111 : i32 to vector<64x64xi32>
    %124 = arith.addi %113, %123 : vector<64x64xi32>
    %125 = arith.select %122, %124, %113 : vector<64x64xi1>, vector<64x64xi32>
    %c0_i32_76 = arith.constant 0 : i32
    %126 = vector.broadcast %c0_i32_76 : i32 to vector<64x64xi32>
    %127 = arith.cmpi eq, %125, %126 : vector<64x64xi32>
    %c0_77 = arith.constant 0 : index
    %c0_78 = arith.constant 0 : index
    %128 = vector.load %arg19[%c0_77, %c0_78] : memref<512x64xf32, #tpu.memory_space<vmem>>, vector<64x64xf32>
    %cst_79 = arith.constant 0.000000e+00 : f32
    %129 = vector.broadcast %cst_79 : f32 to vector<64x64xf32>
    %130 = arith.select %127, %129, %128 : vector<64x64xi1>, vector<64x64xf32>
    %c7_i32 = arith.constant 7 : i32
    %131 = vector.broadcast %c7_i32 : i32 to vector<64x64xi32>
    %132 = arith.cmpi eq, %125, %131 : vector<64x64xi32>
    %c2_80 = arith.constant 2 : index
    %c0_81 = arith.constant 0 : index
    %133 = vector.load %arg19[%c2_80, %c0_81] : memref<512x64xf32, #tpu.memory_space<vmem>>, vector<64x64xf32>
    %cst_82 = arith.constant 0.000000e+00 : f32
    %134 = vector.broadcast %cst_82 : f32 to vector<64x64xf32>
    %135 = arith.select %132, %134, %133 : vector<64x64xi1>, vector<64x64xf32>
    %136 = arith.truncf %130 : vector<64x64xf32> to vector<64x64xbf16>
    %c0_83 = arith.constant 0 : index
    %c0_84 = arith.constant 0 : index
    %137 = vector.load %arg8[%c0_83, %c0_84] : memref<192x64xbf16, #tpu.memory_space<vmem>>, vector<64x64xbf16>
    %cst_85 = arith.constant dense<0.000000e+00> : vector<64x64xf32>
    %138 = tpu.matmul %136, %137, %cst_85 {dimension_numbers = #tpu.dot_dimension_numbers<[1], [0], [0], [1], [0, 0, 1, 1], [], []>} : vector<64x64xbf16>, vector<64x64xbf16>, vector<64x64xf32> -> vector<64x64xf32>
    %139 = arith.truncf %107 : vector<64x64xf32> to vector<64x64xbf16>
    %c64_86 = arith.constant 64 : index
    %c0_87 = arith.constant 0 : index
    %140 = vector.load %arg8[%c64_86, %c0_87] : memref<192x64xbf16, #tpu.memory_space<vmem>>, vector<64x64xbf16>
    %cst_88 = arith.constant dense<0.000000e+00> : vector<64x64xf32>
    %141 = tpu.matmul %139, %140, %cst_88 {dimension_numbers = #tpu.dot_dimension_numbers<[1], [0], [0], [1], [0, 0, 1, 1], [], []>} : vector<64x64xbf16>, vector<64x64xbf16>, vector<64x64xf32> -> vector<64x64xf32>
    %142 = arith.addf %138, %141 : vector<64x64xf32>
    %143 = arith.truncf %135 : vector<64x64xf32> to vector<64x64xbf16>
    %c128 = arith.constant 128 : index
    %c0_89 = arith.constant 0 : index
    %144 = vector.load %arg8[%c128, %c0_89] : memref<192x64xbf16, #tpu.memory_space<vmem>>, vector<64x64xbf16>
    %cst_90 = arith.constant dense<0.000000e+00> : vector<64x64xf32>
    %145 = tpu.matmul %143, %144, %cst_90 {dimension_numbers = #tpu.dot_dimension_numbers<[1], [0], [0], [1], [0, 0, 1, 1], [], []>} : vector<64x64xbf16>, vector<64x64xbf16>, vector<64x64xf32> -> vector<64x64xf32>
    %146 = arith.addf %142, %145 : vector<64x64xf32>
    %c0_91 = arith.constant 0 : index
    %c0_92 = arith.constant 0 : index
    %147 = vector.load %arg9[%c0_91, %c0_92] : memref<1x64xf32, #tpu.memory_space<vmem>>, vector<1x64xf32>
    %148 = vector.broadcast %147 : vector<1x64xf32> to vector<64x64xf32>
    %149 = arith.addf %146, %148 : vector<64x64xf32>
    %cst_93 = arith.constant 0.000000e+00 : f32
    %150 = vector.broadcast %cst_93 : f32 to vector<64x64xf32>
    %151 = arith.maximumf %149, %150 : vector<64x64xf32>
    %c0_94 = arith.constant 0 : index
    %c0_95 = arith.constant 0 : index
    %152 = vector.load %arg19[%c0_94, %c0_95] : memref<512x64xf32, #tpu.memory_space<vmem>>, vector<64x64xf32>
    tpu.vector_store %arg19[%c0_94, %c0_95], %151 {strides = array<i32>} : memref<512x64xf32, #tpu.memory_space<vmem>>, vector<64x64xf32>,
    %c0_96 = arith.constant 0 : index
    %c0_97 = arith.constant 0 : index
    %153 = tpu.strided_load %arg19[%c0_96, %c0_97] {strides = array<i32: 2, 1>} : memref<512x64xf32, #tpu.memory_space<vmem>>, vector<32x64xf32>
    %c1_98 = arith.constant 1 : index
    %c0_99 = arith.constant 0 : index
    %154 = tpu.strided_load %arg19[%c1_98, %c0_99] {strides = array<i32: 2, 1>} : memref<512x64xf32, #tpu.memory_space<vmem>>, vector<32x64xf32>
    %155 = arith.maximumf %153, %154 : vector<32x64xf32>
    %c1_100 = arith.constant 1 : index
    %c0_101 = arith.constant 0 : index
    %156 = vector.load %arg19[%c1_100, %c0_101] : memref<512x64xf32, #tpu.memory_space<vmem>>, vector<32x64xf32>
    tpu.vector_store %arg19[%c1_100, %c0_101], %155 {strides = array<i32>} : memref<512x64xf32, #tpu.memory_space<vmem>>, vector<32x64xf32>,
    %157 = tpu.iota {dimensions = array<i32: 0>} : vector<32x64xi32>
    %c4_i32 = arith.constant 4 : i32
    %c0_i32_102 = arith.constant 0 : i32
    %158 = arith.cmpi eq, %c4_i32, %c0_i32_102 : i32
    %c1_i32_103 = arith.constant 1 : i32
    %159 = arith.select %158, %c1_i32_103, %c4_i32 : i32
    %160 = vector.broadcast %159 : i32 to vector<32x64xi32>
    %161 = arith.remsi %157, %160 : vector<32x64xi32>
    %c0_i32_104 = arith.constant 0 : i32
    %162 = vector.broadcast %c0_i32_104 : i32 to vector<32x64xi32>
    %163 = arith.cmpi ne, %161, %162 : vector<32x64xi32>
    %c0_i32_105 = arith.constant 0 : i32
    %164 = vector.broadcast %c0_i32_105 : i32 to vector<32x64xi32>
    %165 = arith.cmpi slt, %161, %164 : vector<32x64xi32>
    %c0_i32_106 = arith.constant 0 : i32
    %166 = arith.cmpi slt, %159, %c0_i32_106 : i32
    %167 = vector.broadcast %166 : i1 to vector<32x64xi1>
    %168 = vector.broadcast %167 : vector<32x64xi1> to vector<32x64xi1>
    %169 = arith.xori %165, %168 : vector<32x64xi1>
    %170 = arith.andi %169, %163 : vector<32x64xi1>
    %171 = vector.broadcast %159 : i32 to vector<32x64xi32>
    %172 = arith.addi %161, %171 : vector<32x64xi32>
    %173 = arith.select %170, %172, %161 : vector<32x64xi1>, vector<32x64xi32>
    %c0_i32_107 = arith.constant 0 : i32
    %174 = vector.broadcast %c0_i32_107 : i32 to vector<32x64xi32>
    %175 = arith.cmpi eq, %173, %174 : vector<32x64xi32>
    %c0_108 = arith.constant 0 : index
    %c0_109 = arith.constant 0 : index
    %176 = vector.load %arg19[%c0_108, %c0_109] : memref<512x64xf32, #tpu.memory_space<vmem>>, vector<32x64xf32>
    %cst_110 = arith.constant 0.000000e+00 : f32
    %177 = vector.broadcast %cst_110 : f32 to vector<32x64xf32>
    %178 = arith.select %175, %177, %176 : vector<32x64xi1>, vector<32x64xf32>
    %c3_i32 = arith.constant 3 : i32
    %179 = vector.broadcast %c3_i32 : i32 to vector<32x64xi32>
    %180 = arith.cmpi eq, %173, %179 : vector<32x64xi32>
    %c2_111 = arith.constant 2 : index
    %c0_112 = arith.constant 0 : index
    %181 = vector.load %arg19[%c2_111, %c0_112] : memref<512x64xf32, #tpu.memory_space<vmem>>, vector<32x64xf32>
    %cst_113 = arith.constant 0.000000e+00 : f32
    %182 = vector.broadcast %cst_113 : f32 to vector<32x64xf32>
    %183 = arith.select %180, %182, %181 : vector<32x64xi1>, vector<32x64xf32>
    %184 = arith.truncf %178 : vector<32x64xf32> to vector<32x64xbf16>
    %c0_114 = arith.constant 0 : index
    %c0_115 = arith.constant 0 : index
    %185 = vector.load %arg10[%c0_114, %c0_115] : memref<192x64xbf16, #tpu.memory_space<vmem>>, vector<64x64xbf16>
    %cst_116 = arith.constant dense<0.000000e+00> : vector<32x64xf32>
    %186 = tpu.matmul %184, %185, %cst_116 {dimension_numbers = #tpu.dot_dimension_numbers<[1], [0], [0], [1], [0, 0, 1, 1], [], []>} : vector<32x64xbf16>, vector<64x64xbf16>, vector<32x64xf32> -> vector<32x64xf32>
    %187 = arith.truncf %155 : vector<32x64xf32> to vector<32x64xbf16>
    %c64_117 = arith.constant 64 : index
    %c0_118 = arith.constant 0 : index
    %188 = vector.load %arg10[%c64_117, %c0_118] : memref<192x64xbf16, #tpu.memory_space<vmem>>, vector<64x64xbf16>
    %cst_119 = arith.constant dense<0.000000e+00> : vector<32x64xf32>
    %189 = tpu.matmul %187, %188, %cst_119 {dimension_numbers = #tpu.dot_dimension_numbers<[1], [0], [0], [1], [0, 0, 1, 1], [], []>} : vector<32x64xbf16>, vector<64x64xbf16>, vector<32x64xf32> -> vector<32x64xf32>
    %190 = arith.addf %186, %189 : vector<32x64xf32>
    %191 = arith.truncf %183 : vector<32x64xf32> to vector<32x64xbf16>
    %c128_120 = arith.constant 128 : index
    %c0_121 = arith.constant 0 : index
    %192 = vector.load %arg10[%c128_120, %c0_121] : memref<192x64xbf16, #tpu.memory_space<vmem>>, vector<64x64xbf16>
    %cst_122 = arith.constant dense<0.000000e+00> : vector<32x64xf32>
    %193 = tpu.matmul %191, %192, %cst_122 {dimension_numbers = #tpu.dot_dimension_numbers<[1], [0], [0], [1], [0, 0, 1, 1], [], []>} : vector<32x64xbf16>, vector<64x64xbf16>, vector<32x64xf32> -> vector<32x64xf32>
    %194 = arith.addf %190, %193 : vector<32x64xf32>
    %c0_123 = arith.constant 0 : index
    %c0_124 = arith.constant 0 : index
    %195 = vector.load %arg11[%c0_123, %c0_124] : memref<1x64xf32, #tpu.memory_space<vmem>>, vector<1x64xf32>
    %196 = vector.broadcast %195 : vector<1x64xf32> to vector<32x64xf32>
    %197 = arith.addf %194, %196 : vector<32x64xf32>
    %cst_125 = arith.constant 0.000000e+00 : f32
    %198 = vector.broadcast %cst_125 : f32 to vector<32x64xf32>
    %199 = arith.maximumf %197, %198 : vector<32x64xf32>
    %c1_126 = arith.constant 1 : index
    %c0_127 = arith.constant 0 : index
    %200 = vector.load %arg19[%c1_126, %c0_127] : memref<512x64xf32, #tpu.memory_space<vmem>>, vector<32x64xf32>
    tpu.vector_store %arg19[%c1_126, %c0_127], %199 {strides = array<i32>} : memref<512x64xf32, #tpu.memory_space<vmem>>, vector<32x64xf32>,
    %201 = tpu.iota {dimensions = array<i32: 0>} : vector<32x64xi32>
    %c4_i32_128 = arith.constant 4 : i32
    %c0_i32_129 = arith.constant 0 : i32
    %202 = arith.cmpi eq, %c4_i32_128, %c0_i32_129 : i32
    %c1_i32_130 = arith.constant 1 : i32
    %203 = arith.select %202, %c1_i32_130, %c4_i32_128 : i32
    %204 = vector.broadcast %203 : i32 to vector<32x64xi32>
    %205 = arith.remsi %201, %204 : vector<32x64xi32>
    %c0_i32_131 = arith.constant 0 : i32
    %206 = vector.broadcast %c0_i32_131 : i32 to vector<32x64xi32>
    %207 = arith.cmpi ne, %205, %206 : vector<32x64xi32>
    %c0_i32_132 = arith.constant 0 : i32
    %208 = vector.broadcast %c0_i32_132 : i32 to vector<32x64xi32>
    %209 = arith.cmpi slt, %205, %208 : vector<32x64xi32>
    %c0_i32_133 = arith.constant 0 : i32
    %210 = arith.cmpi slt, %203, %c0_i32_133 : i32
    %211 = vector.broadcast %210 : i1 to vector<32x64xi1>
    %212 = vector.broadcast %211 : vector<32x64xi1> to vector<32x64xi1>
    %213 = arith.xori %209, %212 : vector<32x64xi1>
    %214 = arith.andi %213, %207 : vector<32x64xi1>
    %215 = vector.broadcast %203 : i32 to vector<32x64xi32>
    %216 = arith.addi %205, %215 : vector<32x64xi32>
    %217 = arith.select %214, %216, %205 : vector<32x64xi1>, vector<32x64xi32>
    %c0_i32_134 = arith.constant 0 : i32
    %218 = vector.broadcast %c0_i32_134 : i32 to vector<32x64xi32>
    %219 = arith.cmpi eq, %217, %218 : vector<32x64xi32>
    %c0_135 = arith.constant 0 : index
    %c0_136 = arith.constant 0 : index
    %220 = vector.load %arg19[%c0_135, %c0_136] : memref<512x64xf32, #tpu.memory_space<vmem>>, vector<32x64xf32>
    %cst_137 = arith.constant 0.000000e+00 : f32
    %221 = vector.broadcast %cst_137 : f32 to vector<32x64xf32>
    %222 = arith.select %219, %221, %220 : vector<32x64xi1>, vector<32x64xf32>
    %c3_i32_138 = arith.constant 3 : i32
    %223 = vector.broadcast %c3_i32_138 : i32 to vector<32x64xi32>
    %224 = arith.cmpi eq, %217, %223 : vector<32x64xi32>
    %c2_139 = arith.constant 2 : index
    %c0_140 = arith.constant 0 : index
    %225 = vector.load %arg19[%c2_139, %c0_140] : memref<512x64xf32, #tpu.memory_space<vmem>>, vector<32x64xf32>
    %cst_141 = arith.constant 0.000000e+00 : f32
    %226 = vector.broadcast %cst_141 : f32 to vector<32x64xf32>
    %227 = arith.select %224, %226, %225 : vector<32x64xi1>, vector<32x64xf32>
    %228 = arith.truncf %222 : vector<32x64xf32> to vector<32x64xbf16>
    %c0_142 = arith.constant 0 : index
    %c0_143 = arith.constant 0 : index
    %229 = vector.load %arg12[%c0_142, %c0_143] : memref<192x64xbf16, #tpu.memory_space<vmem>>, vector<64x64xbf16>
    %cst_144 = arith.constant dense<0.000000e+00> : vector<32x64xf32>
    %230 = tpu.matmul %228, %229, %cst_144 {dimension_numbers = #tpu.dot_dimension_numbers<[1], [0], [0], [1], [0, 0, 1, 1], [], []>} : vector<32x64xbf16>, vector<64x64xbf16>, vector<32x64xf32> -> vector<32x64xf32>
    %231 = arith.truncf %199 : vector<32x64xf32> to vector<32x64xbf16>
    %c64_145 = arith.constant 64 : index
    %c0_146 = arith.constant 0 : index
    %232 = vector.load %arg12[%c64_145, %c0_146] : memref<192x64xbf16, #tpu.memory_space<vmem>>, vector<64x64xbf16>
    %cst_147 = arith.constant dense<0.000000e+00> : vector<32x64xf32>
    %233 = tpu.matmul %231, %232, %cst_147 {dimension_numbers = #tpu.dot_dimension_numbers<[1], [0], [0], [1], [0, 0, 1, 1], [], []>} : vector<32x64xbf16>, vector<64x64xbf16>, vector<32x64xf32> -> vector<32x64xf32>
    %234 = arith.addf %230, %233 : vector<32x64xf32>
    %235 = arith.truncf %227 : vector<32x64xf32> to vector<32x64xbf16>
    %c128_148 = arith.constant 128 : index
    %c0_149 = arith.constant 0 : index
    %236 = vector.load %arg12[%c128_148, %c0_149] : memref<192x64xbf16, #tpu.memory_space<vmem>>, vector<64x64xbf16>
    %cst_150 = arith.constant dense<0.000000e+00> : vector<32x64xf32>
    %237 = tpu.matmul %235, %236, %cst_150 {dimension_numbers = #tpu.dot_dimension_numbers<[1], [0], [0], [1], [0, 0, 1, 1], [], []>} : vector<32x64xbf16>, vector<64x64xbf16>, vector<32x64xf32> -> vector<32x64xf32>
    %238 = arith.addf %234, %237 : vector<32x64xf32>
    %c0_151 = arith.constant 0 : index
    %c0_152 = arith.constant 0 : index
    %239 = vector.load %arg13[%c0_151, %c0_152] : memref<1x64xf32, #tpu.memory_space<vmem>>, vector<1x64xf32>
    %240 = vector.broadcast %239 : vector<1x64xf32> to vector<32x64xf32>
    %241 = arith.addf %238, %240 : vector<32x64xf32>
    %cst_153 = arith.constant 0.000000e+00 : f32
    %242 = vector.broadcast %cst_153 : f32 to vector<32x64xf32>
    %243 = arith.maximumf %241, %242 : vector<32x64xf32>
    %c1_154 = arith.constant 1 : index
    %c0_155 = arith.constant 0 : index
    %244 = vector.load %arg19[%c1_154, %c0_155] : memref<512x64xf32, #tpu.memory_space<vmem>>, vector<32x64xf32>
    tpu.vector_store %arg19[%c1_154, %c0_155], %243 {strides = array<i32>} : memref<512x64xf32, #tpu.memory_space<vmem>>, vector<32x64xf32>,
    %245 = tpu.iota {dimensions = array<i32: 0>} : vector<32x64xi32>
    %c4_i32_156 = arith.constant 4 : i32
    %c0_i32_157 = arith.constant 0 : i32
    %246 = arith.cmpi eq, %c4_i32_156, %c0_i32_157 : i32
    %c1_i32_158 = arith.constant 1 : i32
    %247 = arith.select %246, %c1_i32_158, %c4_i32_156 : i32
    %248 = vector.broadcast %247 : i32 to vector<32x64xi32>
    %249 = arith.remsi %245, %248 : vector<32x64xi32>
    %c0_i32_159 = arith.constant 0 : i32
    %250 = vector.broadcast %c0_i32_159 : i32 to vector<32x64xi32>
    %251 = arith.cmpi ne, %249, %250 : vector<32x64xi32>
    %c0_i32_160 = arith.constant 0 : i32
    %252 = vector.broadcast %c0_i32_160 : i32 to vector<32x64xi32>
    %253 = arith.cmpi slt, %249, %252 : vector<32x64xi32>
    %c0_i32_161 = arith.constant 0 : i32
    %254 = arith.cmpi slt, %247, %c0_i32_161 : i32
    %255 = vector.broadcast %254 : i1 to vector<32x64xi1>
    %256 = vector.broadcast %255 : vector<32x64xi1> to vector<32x64xi1>
    %257 = arith.xori %253, %256 : vector<32x64xi1>
    %258 = arith.andi %257, %251 : vector<32x64xi1>
    %259 = vector.broadcast %247 : i32 to vector<32x64xi32>
    %260 = arith.addi %249, %259 : vector<32x64xi32>
    %261 = arith.select %258, %260, %249 : vector<32x64xi1>, vector<32x64xi32>
    %c0_i32_162 = arith.constant 0 : i32
    %262 = vector.broadcast %c0_i32_162 : i32 to vector<32x64xi32>
    %263 = arith.cmpi eq, %261, %262 : vector<32x64xi32>
    %c0_163 = arith.constant 0 : index
    %c0_164 = arith.constant 0 : index
    %264 = vector.load %arg19[%c0_163, %c0_164] : memref<512x64xf32, #tpu.memory_space<vmem>>, vector<32x64xf32>
    %cst_165 = arith.constant 0.000000e+00 : f32
    %265 = vector.broadcast %cst_165 : f32 to vector<32x64xf32>
    %266 = arith.select %263, %265, %264 : vector<32x64xi1>, vector<32x64xf32>
    %c3_i32_166 = arith.constant 3 : i32
    %267 = vector.broadcast %c3_i32_166 : i32 to vector<32x64xi32>
    %268 = arith.cmpi eq, %261, %267 : vector<32x64xi32>
    %c2_167 = arith.constant 2 : index
    %c0_168 = arith.constant 0 : index
    %269 = vector.load %arg19[%c2_167, %c0_168] : memref<512x64xf32, #tpu.memory_space<vmem>>, vector<32x64xf32>
    %cst_169 = arith.constant 0.000000e+00 : f32
    %270 = vector.broadcast %cst_169 : f32 to vector<32x64xf32>
    %271 = arith.select %268, %270, %269 : vector<32x64xi1>, vector<32x64xf32>
    %272 = arith.truncf %266 : vector<32x64xf32> to vector<32x64xbf16>
    %c0_170 = arith.constant 0 : index
    %c0_171 = arith.constant 0 : index
    %273 = vector.load %arg14[%c0_170, %c0_171] : memref<192x64xbf16, #tpu.memory_space<vmem>>, vector<64x64xbf16>
    %cst_172 = arith.constant dense<0.000000e+00> : vector<32x64xf32>
    %274 = tpu.matmul %272, %273, %cst_172 {dimension_numbers = #tpu.dot_dimension_numbers<[1], [0], [0], [1], [0, 0, 1, 1], [], []>} : vector<32x64xbf16>, vector<64x64xbf16>, vector<32x64xf32> -> vector<32x64xf32>
    %275 = arith.truncf %243 : vector<32x64xf32> to vector<32x64xbf16>
    %c64_173 = arith.constant 64 : index
    %c0_174 = arith.constant 0 : index
    %276 = vector.load %arg14[%c64_173, %c0_174] : memref<192x64xbf16, #tpu.memory_space<vmem>>, vector<64x64xbf16>
    %cst_175 = arith.constant dense<0.000000e+00> : vector<32x64xf32>
    %277 = tpu.matmul %275, %276, %cst_175 {dimension_numbers = #tpu.dot_dimension_numbers<[1], [0], [0], [1], [0, 0, 1, 1], [], []>} : vector<32x64xbf16>, vector<64x64xbf16>, vector<32x64xf32> -> vector<32x64xf32>
    %278 = arith.addf %274, %277 : vector<32x64xf32>
    %279 = arith.truncf %271 : vector<32x64xf32> to vector<32x64xbf16>
    %c128_176 = arith.constant 128 : index
    %c0_177 = arith.constant 0 : index
    %280 = vector.load %arg14[%c128_176, %c0_177] : memref<192x64xbf16, #tpu.memory_space<vmem>>, vector<64x64xbf16>
    %cst_178 = arith.constant dense<0.000000e+00> : vector<32x64xf32>
    %281 = tpu.matmul %279, %280, %cst_178 {dimension_numbers = #tpu.dot_dimension_numbers<[1], [0], [0], [1], [0, 0, 1, 1], [], []>} : vector<32x64xbf16>, vector<64x64xbf16>, vector<32x64xf32> -> vector<32x64xf32>
    %282 = arith.addf %278, %281 : vector<32x64xf32>
    %c0_179 = arith.constant 0 : index
    %c0_180 = arith.constant 0 : index
    %283 = vector.load %arg15[%c0_179, %c0_180] : memref<1x64xf32, #tpu.memory_space<vmem>>, vector<1x64xf32>
    %284 = vector.broadcast %283 : vector<1x64xf32> to vector<32x64xf32>
    %285 = arith.addf %282, %284 : vector<32x64xf32>
    %cst_181 = arith.constant 0.000000e+00 : f32
    %286 = vector.broadcast %cst_181 : f32 to vector<32x64xf32>
    %287 = arith.maximumf %285, %286 : vector<32x64xf32>
    %c0_182 = arith.constant 0 : index
    %c0_183 = arith.constant 0 : index
    %288 = vector.load %arg19[%c0_182, %c0_183] : memref<512x64xf32, #tpu.memory_space<vmem>>, vector<32x64xf32>
    tpu.vector_store %arg19[%c0_182, %c0_183], %287 {strides = array<i32>} : memref<512x64xf32, #tpu.memory_space<vmem>>, vector<32x64xf32>,
    %cst_184 = arith.constant 0.000000e+00 : f32
    %289 = vector.broadcast %cst_184 : f32 to vector<8x32xf32>
    %c0_185 = arith.constant 0 : index
    %c0_186 = arith.constant 0 : index
    %290 = tpu.strided_load %arg19[%c0_185, %c0_186] {strides = array<i32: 4, 1>} : memref<512x64xf32, #tpu.memory_space<vmem>>, vector<8x64xf32>
    %291 = arith.truncf %290 : vector<8x64xf32> to vector<8x64xbf16>
    %c0_187 = arith.constant 0 : index
    %c0_188 = arith.constant 0 : index
    %292 = vector.load %arg16[%c0_187, %c0_188] : memref<256x32xbf16, #tpu.memory_space<vmem>>, vector<64x32xbf16>
    %cst_189 = arith.constant dense<0.000000e+00> : vector<8x32xf32>
    %293 = tpu.matmul %291, %292, %cst_189 {dimension_numbers = #tpu.dot_dimension_numbers<[1], [0], [0], [1], [0, 0, 1, 1], [], []>} : vector<8x64xbf16>, vector<64x32xbf16>, vector<8x32xf32> -> vector<8x32xf32>
    %294 = arith.addf %289, %293 : vector<8x32xf32>
    %c1_190 = arith.constant 1 : index
    %c0_191 = arith.constant 0 : index
    %295 = tpu.strided_load %arg19[%c1_190, %c0_191] {strides = array<i32: 4, 1>} : memref<512x64xf32, #tpu.memory_space<vmem>>, vector<8x64xf32>
    %296 = arith.truncf %295 : vector<8x64xf32> to vector<8x64xbf16>
    %c64_192 = arith.constant 64 : index
    %c0_193 = arith.constant 0 : index
    %297 = vector.load %arg16[%c64_192, %c0_193] : memref<256x32xbf16, #tpu.memory_space<vmem>>, vector<64x32xbf16>
    %cst_194 = arith.constant dense<0.000000e+00> : vector<8x32xf32>
    %298 = tpu.matmul %296, %297, %cst_194 {dimension_numbers = #tpu.dot_dimension_numbers<[1], [0], [0], [1], [0, 0, 1, 1], [], []>} : vector<8x64xbf16>, vector<64x32xbf16>, vector<8x32xf32> -> vector<8x32xf32>
    %299 = arith.addf %294, %298 : vector<8x32xf32>
    %c2_195 = arith.constant 2 : index
    %c0_196 = arith.constant 0 : index
    %300 = tpu.strided_load %arg19[%c2_195, %c0_196] {strides = array<i32: 4, 1>} : memref<512x64xf32, #tpu.memory_space<vmem>>, vector<8x64xf32>
    %301 = arith.truncf %300 : vector<8x64xf32> to vector<8x64xbf16>
    %c128_197 = arith.constant 128 : index
    %c0_198 = arith.constant 0 : index
    %302 = vector.load %arg16[%c128_197, %c0_198] : memref<256x32xbf16, #tpu.memory_space<vmem>>, vector<64x32xbf16>
    %cst_199 = arith.constant dense<0.000000e+00> : vector<8x32xf32>
    %303 = tpu.matmul %301, %302, %cst_199 {dimension_numbers = #tpu.dot_dimension_numbers<[1], [0], [0], [1], [0, 0, 1, 1], [], []>} : vector<8x64xbf16>, vector<64x32xbf16>, vector<8x32xf32> -> vector<8x32xf32>
    %304 = arith.addf %299, %303 : vector<8x32xf32>
    %c3 = arith.constant 3 : index
    %c0_200 = arith.constant 0 : index
    %305 = tpu.strided_load %arg19[%c3, %c0_200] {strides = array<i32: 4, 1>} : memref<512x64xf32, #tpu.memory_space<vmem>>, vector<8x64xf32>
    %306 = arith.truncf %305 : vector<8x64xf32> to vector<8x64xbf16>
    %c192 = arith.constant 192 : index
    %c0_201 = arith.constant 0 : index
    %307 = vector.load %arg16[%c192, %c0_201] : memref<256x32xbf16, #tpu.memory_space<vmem>>, vector<64x32xbf16>
    %cst_202 = arith.constant dense<0.000000e+00> : vector<8x32xf32>
    %308 = tpu.matmul %306, %307, %cst_202 {dimension_numbers = #tpu.dot_dimension_numbers<[1], [0], [0], [1], [0, 0, 1, 1], [], []>} : vector<8x64xbf16>, vector<64x32xbf16>, vector<8x32xf32> -> vector<8x32xf32>
    %309 = arith.addf %304, %308 : vector<8x32xf32>
    %c0_203 = arith.constant 0 : index
    %c0_204 = arith.constant 0 : index
    %310 = vector.load %arg17[%c0_203, %c0_204] : memref<1x32xf32, #tpu.memory_space<vmem>>, vector<1x32xf32>
    %311 = vector.broadcast %310 : vector<1x32xf32> to vector<8x32xf32>
    %312 = arith.addf %309, %311 : vector<8x32xf32>
    %c0_205 = arith.constant 0 : index
    %c0_206 = arith.constant 0 : index
    %313 = vector.load %arg18[%c0_205, %c0_206] : memref<8x32xf32, #tpu.memory_space<vmem>>, vector<8x32xf32>
    tpu.vector_store %arg18[%c0_205, %c0_206], %312 {strides = array<i32>} : memref<8x32xf32, #tpu.memory_space<vmem>>, vector<8x32xf32>,
    return
  }
  func.func @transform_0(%arg0: i32) -> (i32, i32) {
    %c0_i32 = arith.constant 0 : i32
    %c0_i32_0 = arith.constant 0 : i32
    return %arg0, %c0_i32 : i32, i32
  }
  func.func @transform_1(%arg0: i32) -> (i32, i32) {
    %c0_i32 = arith.constant 0 : i32
    %c0_i32_0 = arith.constant 0 : i32
    %c0_i32_1 = arith.constant 0 : i32
    return %c0_i32, %c0_i32_0 : i32, i32
  }
  func.func @transform_2(%arg0: i32) -> (i32, i32) {
    %c0_i32 = arith.constant 0 : i32
    %c0_i32_0 = arith.constant 0 : i32
    %c0_i32_1 = arith.constant 0 : i32
    return %c0_i32, %c0_i32_0 : i32, i32
  }
  func.func @transform_3(%arg0: i32) -> (i32, i32) {
    %c0_i32 = arith.constant 0 : i32
    %c0_i32_0 = arith.constant 0 : i32
    %c0_i32_1 = arith.constant 0 : i32
    return %c0_i32, %c0_i32_0 : i32, i32
  }
  func.func @transform_4(%arg0: i32) -> (i32, i32) {
    %c0_i32 = arith.constant 0 : i32
    %c0_i32_0 = arith.constant 0 : i32
    %c0_i32_1 = arith.constant 0 : i32
    return %c0_i32, %c0_i32_0 : i32, i32
  }
  func.func @transform_5(%arg0: i32) -> (i32, i32) {
    %c0_i32 = arith.constant 0 : i32
    %c0_i32_0 = arith.constant 0 : i32
    %c0_i32_1 = arith.constant 0 : i32
    return %c0_i32, %c0_i32_0 : i32, i32
  }
  func.func @transform_6(%arg0: i32) -> (i32, i32) {
    %c0_i32 = arith.constant 0 : i32
    %c0_i32_0 = arith.constant 0 : i32
    %c0_i32_1 = arith.constant 0 : i32
    return %c0_i32, %c0_i32_0 : i32, i32
  }
  func.func @transform_7(%arg0: i32) -> (i32, i32) {
    %c0_i32 = arith.constant 0 : i32
    %c0_i32_0 = arith.constant 0 : i32
    %c0_i32_1 = arith.constant 0 : i32
    return %c0_i32, %c0_i32_0 : i32, i32
  }
  func.func @transform_8(%arg0: i32) -> (i32, i32) {
    %c0_i32 = arith.constant 0 : i32
    %c0_i32_0 = arith.constant 0 : i32
    %c0_i32_1 = arith.constant 0 : i32
    return %c0_i32, %c0_i32_0 : i32, i32
  }
  func.func @transform_9(%arg0: i32) -> (i32, i32) {
    %c0_i32 = arith.constant 0 : i32
    %c0_i32_0 = arith.constant 0 : i32
    %c0_i32_1 = arith.constant 0 : i32
    return %c0_i32, %c0_i32_0 : i32, i32
  }
  func.func @transform_10(%arg0: i32) -> (i32, i32) {
    %c0_i32 = arith.constant 0 : i32
    %c0_i32_0 = arith.constant 0 : i32
    %c0_i32_1 = arith.constant 0 : i32
    return %c0_i32, %c0_i32_0 : i32, i32
  }
  func.func @transform_11(%arg0: i32) -> (i32, i32) {
    %c0_i32 = arith.constant 0 : i32
    %c0_i32_0 = arith.constant 0 : i32
    %c0_i32_1 = arith.constant 0 : i32
    return %c0_i32, %c0_i32_0 : i32, i32
  }
  func.func @transform_12(%arg0: i32) -> (i32, i32) {
    %c0_i32 = arith.constant 0 : i32
    %c0_i32_0 = arith.constant 0 : i32
    %c0_i32_1 = arith.constant 0 : i32
    return %c0_i32, %c0_i32_0 : i32, i32
  }
  func.func @transform_13(%arg0: i32) -> (i32, i32) {
    %c0_i32 = arith.constant 0 : i32
    %c0_i32_0 = arith.constant 0 : i32
    %c0_i32_1 = arith.constant 0 : i32
    return %c0_i32, %c0_i32_0 : i32, i32
  }
  func.func @transform_14(%arg0: i32) -> (i32, i32) {
    %c0_i32 = arith.constant 0 : i32
    %c0_i32_0 = arith.constant 0 : i32
    %c0_i32_1 = arith.constant 0 : i32
    return %c0_i32, %c0_i32_0 : i32, i32
  }
  func.func @transform_15(%arg0: i32) -> (i32, i32) {
    %c0_i32 = arith.constant 0 : i32
    %c0_i32_0 = arith.constant 0 : i32
    %c0_i32_1 = arith.constant 0 : i32
    return %c0_i32, %c0_i32_0 : i32, i32
  }
  func.func @transform_16(%arg0: i32) -> (i32, i32) {
    %c0_i32 = arith.constant 0 : i32
    %c0_i32_0 = arith.constant 0 : i32
    %c0_i32_1 = arith.constant 0 : i32
    return %c0_i32, %c0_i32_0 : i32, i32
  }
  func.func @transform_17(%arg0: i32) -> (i32, i32) {
    %c0_i32 = arith.constant 0 : i32
    %c0_i32_0 = arith.constant 0 : i32
    return %arg0, %c0_i32 : i32, i32
  }
}

</mosaic_0001>

<llo_original>
// kernel: feature_extractor_4.1
$region0: #{feature_extractor_4.1}
  #allocation0 [shape = 'u32[]', space=smem, size = 0x4, offset = 0x4, fixed_abs, tag = 'smem constant byte address 0x4 - core index']
  #allocation1 [shape = 'u32[144,128]{1,0:T(1,128)}', space=vmem, size = 0x12000, scoped, tag = 'internal scratch']
  #allocation2 [shape = 'f32[512,64]{1,0:T(8,128)}', space=vmem, size = 0x40000, scoped, tag = 'scratch operand']
  %s0 = inlined_call_operand.vmem [shape: bf16[1024,64], index: 0, kind: input, shape index: {}]
  %s1 = inlined_call_operand.vmem [shape: bf16[64,16], index: 1, kind: input, shape index: {}]
  %s2 = inlined_call_operand.vmem [shape: f32[1,16], index: 2, kind: input, shape index: {}]
  %s3 = inlined_call_operand.vmem [shape: bf16[48,32], index: 3, kind: input, shape index: {}]
  %s4 = inlined_call_operand.vmem [shape: f32[1,32], index: 4, kind: input, shape index: {}]
  %s5 = inlined_call_operand.vmem [shape: bf16[96,64], index: 5, kind: input, shape index: {}]
  %s6 = inlined_call_operand.vmem [shape: f32[1,64], index: 6, kind: input, shape index: {}]
  %s7 = inlined_call_operand.vmem [shape: bf16[192,64], index: 7, kind: input, shape index: {}]
  %s8 = inlined_call_operand.vmem [shape: f32[1,64], index: 8, kind: input, shape index: {}]
  %s9 = inlined_call_operand.vmem [shape: bf16[192,64], index: 9, kind: input, shape index: {}]
  %s10 = inlined_call_operand.vmem [shape: f32[1,64], index: 10, kind: input, shape index: {}]
  %s11 = inlined_call_operand.vmem [shape: bf16[192,64], index: 11, kind: input, shape index: {}]
  %s12 = inlined_call_operand.vmem [shape: f32[1,64], index: 12, kind: input, shape index: {}]
  %s13 = inlined_call_operand.vmem [shape: bf16[192,64], index: 13, kind: input, shape index: {}]
  %s14 = inlined_call_operand.vmem [shape: f32[1,64], index: 14, kind: input, shape index: {}]
  %s15 = inlined_call_operand.vmem [shape: bf16[256,32], index: 15, kind: input, shape index: {}]
  %s16 = inlined_call_operand.vmem [shape: f32[1,32], index: 16, kind: input, shape index: {}]
  %s17 = inlined_call_operand.hbm [shape: f32[16,32], index: 17, kind: output, shape index: {}]
  %s18 = sld [smem:[#allocation0]]
  $region101: #{feature_extractor_4.1} parent=0
    _
  %s20 = ssub.s32 1, %s18
  %s21 = scalar_select 0, %s20, %s18
  $region1: #{feature_extractor_4.1} parent=0
    #allocation3 [shape = 'u8[8192]{0}', space=vmem, size = 0x2000, scoped, tag = 'output window, operand 0']
    #allocation4 [shape = 's32[2]{0}', space=sflag, size = 0x8, scoped, tag = 'scoped memory for feature_extractor_4.1']
    %22 = vsyncpa [#allocation4], 0
    %s23 = scalar_lea.sflag [#allocation4], 1
    %24 = vsyncpa %s23, 0
    loop: start=0, step=1, limit=4
    $region2: #{feature_extractor_4.1} parent=1 // loop_pre_header
      _
    $region3: #{feature_extractor_4.1} parent=1 // loop_header
      %s26 = sphi 0, %s30
      %p27 = scmp.ge.s32.totalorder %s26, 4
      %s36 = sphi 0, %s38
      %s39 = sphi 0, %s36
      %s40 = sphi 0, %s39
      %s56 = sphi 0, %s40
      %s60 = sphi 0, %s60
      %s62 = sphi 0, %s60
      %s63 = sphi 0, %s62
      %s77 = sphi 0, %s63
      %s81 = sphi 0, %s81
      %s83 = sphi 0, %s81
      %s84 = sphi 0, %s83
      %s98 = sphi 0, %s84
      %s102 = sphi 0, %s102
      %s104 = sphi 0, %s102
      %s105 = sphi 0, %s104
      %s119 = sphi 0, %s105
      %s123 = sphi 0, %s123
      %s125 = sphi 0, %s123
      %s126 = sphi 0, %s125
      %s140 = sphi 0, %s126
      %s144 = sphi 0, %s144
      %s146 = sphi 0, %s144
      %s147 = sphi 0, %s146
      %s161 = sphi 0, %s147
      %s165 = sphi 0, %s165
      %s167 = sphi 0, %s165
      %s168 = sphi 0, %s167
      %s182 = sphi 0, %s168
      %s186 = sphi 0, %s186
      %s188 = sphi 0, %s186
      %s189 = sphi 0, %s188
      %s203 = sphi 0, %s189
      %s207 = sphi 0, %s207
      %s209 = sphi 0, %s207
      %s210 = sphi 0, %s209
      %s224 = sphi 0, %s210
      %s228 = sphi 0, %s228
      %s230 = sphi 0, %s228
      %s231 = sphi 0, %s230
      %s245 = sphi 0, %s231
      %s249 = sphi 0, %s249
      %s251 = sphi 0, %s249
      %s252 = sphi 0, %s251
      %s266 = sphi 0, %s252
      %s270 = sphi 0, %s270
      %s272 = sphi 0, %s270
      %s273 = sphi 0, %s272
      %s287 = sphi 0, %s273
      %s291 = sphi 0, %s291
      %s293 = sphi 0, %s291
      %s294 = sphi 0, %s293
      %s308 = sphi 0, %s294
      %s312 = sphi 0, %s312
      %s314 = sphi 0, %s312
      %s315 = sphi 0, %s314
      %s329 = sphi 0, %s315
      %s333 = sphi 0, %s333
      %s335 = sphi 0, %s333
      %s336 = sphi 0, %s335
      %s350 = sphi 0, %s336
      %s354 = sphi 0, %s354
      %s356 = sphi 0, %s354
      %s357 = sphi 0, %s356
      %s371 = sphi 0, %s357
      %s375 = sphi 0, %s375
      %s377 = sphi 0, %s375
      %s378 = sphi 0, %s377
      %s392 = sphi 0, %s378
      %s398 = sphi 0, %s400
      %s401 = sphi 0, %s398
      %s402 = sphi 0, %s401
      %s418 = sphi 0, %s402
    $region4: #{feature_extractor_4.1} parent=1 // loop_header_branch
      %29 = sbr.rel (%p27) target = $region8
    $region5: #{feature_extractor_4.1} parent=1 // loop_body
      %s31 = ssub.s32 %s26, 1
      %s32 = ssub.s32 %s26, 2
      %s33 = sadd.s32 %s26, 1
      %s34 = ssub.s32 %s26, %s33
      %p35 = scmp.eq.s32.totalorder %s34, 0
      %s37 = sadd.s32 %s36, 1
      %s38 = scalar_select %p35, %s36, %s37
      %p41 = pneg %p35
      %p42 = scmp.eq.s32.totalorder %s26, 1
      %p43 = por %p41, %p42
      %p44 = scmp.ne.s32.totalorder %s36, %s39
      %p45 = scmp.eq.s32.totalorder %s26, 0
      %p46 = por %p44, %p45
      %p47 = scmp.ne.s32.totalorder %s36, %s39
      %p48 = scmp.eq.s32.totalorder %s31, 1
      %p49 = por %p47, %p48
      %p50 = scmp.ne.s32.totalorder %s39, %s40
      %p51 = scmp.eq.s32.totalorder %s31, 0
      %p52 = por %p50, %p51
      %p53 = scmp.ne.s32.totalorder %s39, %s40
      %p54 = scmp.eq.s32.totalorder %s32, 1
      %p55 = por %p53, %p54
      %p57 = scmp.ne.s32.totalorder %s40, %s56
      %p58 = scmp.eq.s32.totalorder %s32, 0
      %p59 = por %p57, %p58
      %s61 = sadd.s32 %s60, 1
      %p64 = scmp.eq.s32.totalorder %s26, 1
      %p65 = scmp.ne.s32.totalorder %s60, %s62
      %p66 = scmp.eq.s32.totalorder %s26, 0
      %p67 = por %p65, %p66
      %p68 = scmp.ne.s32.totalorder %s60, %s62
      %p69 = scmp.eq.s32.totalorder %s31, 1
      %p70 = por %p68, %p69
      %p71 = scmp.ne.s32.totalorder %s62, %s63
      %p72 = scmp.eq.s32.totalorder %s31, 0
      %p73 = por %p71, %p72
      %p74 = scmp.ne.s32.totalorder %s62, %s63
      %p75 = scmp.eq.s32.totalorder %s32, 1
      %p76 = por %p74, %p75
      %p78 = scmp.ne.s32.totalorder %s63, %s77
      %p79 = scmp.eq.s32.totalorder %s32, 0
      %p80 = por %p78, %p79
      %s82 = sadd.s32 %s81, 1
      %p85 = scmp.eq.s32.totalorder %s26, 1
      %p86 = scmp.ne.s32.totalorder %s81, %s83
      %p87 = scmp.eq.s32.totalorder %s26, 0
      %p88 = por %p86, %p87
      %p89 = scmp.ne.s32.totalorder %s81, %s83
      %p90 = scmp.eq.s32.totalorder %s31, 1
      %p91 = por %p89, %p90
      %p92 = scmp.ne.s32.totalorder %s83, %s84
      %p93 = scmp.eq.s32.totalorder %s31, 0
      %p94 = por %p92, %p93
      %p95 = scmp.ne.s32.totalorder %s83, %s84
      %p96 = scmp.eq.s32.totalorder %s32, 1
      %p97 = por %p95, %p96
      %p99 = scmp.ne.s32.totalorder %s84, %s98
      %p100 = scmp.eq.s32.totalorder %s32, 0
      %p101 = por %p99, %p100
      %s103 = sadd.s32 %s102, 1
      %p106 = scmp.eq.s32.totalorder %s26, 1
      %p107 = scmp.ne.s32.totalorder %s102, %s104
      %p108 = scmp.eq.s32.totalorder %s26, 0
      %p109 = por %p107, %p108
      %p110 = scmp.ne.s32.totalorder %s102, %s104
      %p111 = scmp.eq.s32.totalorder %s31, 1
      %p112 = por %p110, %p111
      %p113 = scmp.ne.s32.totalorder %s104, %s105
      %p114 = scmp.eq.s32.totalorder %s31, 0
      %p115 = por %p113, %p114
      %p116 = scmp.ne.s32.totalorder %s104, %s105
      %p117 = scmp.eq.s32.totalorder %s32, 1
      %p118 = por %p116, %p117
      %p120 = scmp.ne.s32.totalorder %s105, %s119
      %p121 = scmp.eq.s32.totalorder %s32, 0
      %p122 = por %p120, %p121
      %s124 = sadd.s32 %s123, 1
      %p127 = scmp.eq.s32.totalorder %s26, 1
      %p128 = scmp.ne.s32.totalorder %s123, %s125
      %p129 = scmp.eq.s32.totalorder %s26, 0
      %p130 = por %p128, %p129
      %p131 = scmp.ne.s32.totalorder %s123, %s125
      %p132 = scmp.eq.s32.totalorder %s31, 1
      %p133 = por %p131, %p132
      %p134 = scmp.ne.s32.totalorder %s125, %s126
      %p135 = scmp.eq.s32.totalorder %s31, 0
      %p136 = por %p134, %p135
      %p137 = scmp.ne.s32.totalorder %s125, %s126
      %p138 = scmp.eq.s32.totalorder %s32, 1
      %p139 = por %p137, %p138
      %p141 = scmp.ne.s32.totalorder %s126, %s140
      %p142 = scmp.eq.s32.totalorder %s32, 0
      %p143 = por %p141, %p142
      %s145 = sadd.s32 %s144, 1
      %p148 = scmp.eq.s32.totalorder %s26, 1
      %p149 = scmp.ne.s32.totalorder %s144, %s146
      %p150 = scmp.eq.s32.totalorder %s26, 0
      %p151 = por %p149, %p150
      %p152 = scmp.ne.s32.totalorder %s144, %s146
      %p153 = scmp.eq.s32.totalorder %s31, 1
      %p154 = por %p152, %p153
      %p155 = scmp.ne.s32.totalorder %s146, %s147
      %p156 = scmp.eq.s32.totalorder %s31, 0
      %p157 = por %p155, %p156
      %p158 = scmp.ne.s32.totalorder %s146, %s147
      %p159 = scmp.eq.s32.totalorder %s32, 1
      %p160 = por %p158, %p159
      %p162 = scmp.ne.s32.totalorder %s147, %s161
      %p163 = scmp.eq.s32.totalorder %s32, 0
      %p164 = por %p162, %p163
      %s166 = sadd.s32 %s165, 1
      %p169 = scmp.eq.s32.totalorder %s26, 1
      %p170 = scmp.ne.s32.totalorder %s165, %s167
      %p171 = scmp.eq.s32.totalorder %s26, 0
      %p172 = por %p170, %p171
      %p173 = scmp.ne.s32.totalorder %s165, %s167
      %p174 = scmp.eq.s32.totalorder %s31, 1
      %p175 = por %p173, %p174
      %p176 = scmp.ne.s32.totalorder %s167, %s168
      %p177 = scmp.eq.s32.totalorder %s31, 0
      %p178 = por %p176, %p177
      %p179 = scmp.ne.s32.totalorder %s167, %s168
      %p180 = scmp.eq.s32.totalorder %s32, 1
      %p181 = por %p179, %p180
      %p183 = scmp.ne.s32.totalorder %s168, %s182
      %p184 = scmp.eq.s32.totalorder %s32, 0
      %p185 = por %p183, %p184
      %s187 = sadd.s32 %s186, 1
      %p190 = scmp.eq.s32.totalorder %s26, 1
      %p191 = scmp.ne.s32.totalorder %s186, %s188
      %p192 = scmp.eq.s32.totalorder %s26, 0
      %p193 = por %p191, %p192
      %p194 = scmp.ne.s32.totalorder %s186, %s188
      %p195 = scmp.eq.s32.totalorder %s31, 1
      %p196 = por %p194, %p195
      %p197 = scmp.ne.s32.totalorder %s188, %s189
      %p198 = scmp.eq.s32.totalorder %s31, 0
      %p199 = por %p197, %p198
      %p200 = scmp.ne.s32.totalorder %s188, %s189
      %p201 = scmp.eq.s32.totalorder %s32, 1
      %p202 = por %p200, %p201
      %p204 = scmp.ne.s32.totalorder %s189, %s203
      %p205 = scmp.eq.s32.totalorder %s32, 0
      %p206 = por %p204, %p205
      %s208 = sadd.s32 %s207, 1
      %p211 = scmp.eq.s32.totalorder %s26, 1
      %p212 = scmp.ne.s32.totalorder %s207, %s209
      %p213 = scmp.eq.s32.totalorder %s26, 0
      %p214 = por %p212, %p213
      %p215 = scmp.ne.s32.totalorder %s207, %s209
      %p216 = scmp.eq.s32.totalorder %s31, 1
      %p217 = por %p215, %p216
      %p218 = scmp.ne.s32.totalorder %s209, %s210
      %p219 = scmp.eq.s32.totalorder %s31, 0
      %p220 = por %p218, %p219
      %p221 = scmp.ne.s32.totalorder %s209, %s210
      %p222 = scmp.eq.s32.totalorder %s32, 1
      %p223 = por %p221, %p222
      %p225 = scmp.ne.s32.totalorder %s210, %s224
      %p226 = scmp.eq.s32.totalorder %s32, 0
      %p227 = por %p225, %p226
      %s229 = sadd.s32 %s228, 1
      %p232 = scmp.eq.s32.totalorder %s26, 1
      %p233 = scmp.ne.s32.totalorder %s228, %s230
      %p234 = scmp.eq.s32.totalorder %s26, 0
      %p235 = por %p233, %p234
      %p236 = scmp.ne.s32.totalorder %s228, %s230
      %p237 = scmp.eq.s32.totalorder %s31, 1
      %p238 = por %p236, %p237
      %p239 = scmp.ne.s32.totalorder %s230, %s231
      %p240 = scmp.eq.s32.totalorder %s31, 0
      %p241 = por %p239, %p240
      %p242 = scmp.ne.s32.totalorder %s230, %s231
      %p243 = scmp.eq.s32.totalorder %s32, 1
      %p244 = por %p242, %p243
      %p246 = scmp.ne.s32.totalorder %s231, %s245
      %p247 = scmp.eq.s32.totalorder %s32, 0
      %p248 = por %p246, %p247
      %s250 = sadd.s32 %s249, 1
      %p253 = scmp.eq.s32.totalorder %s26, 1
      %p254 = scmp.ne.s32.totalorder %s249, %s251
      %p255 = scmp.eq.s32.totalorder %s26, 0
      %p256 = por %p254, %p255
      %p257 = scmp.ne.s32.totalorder %s249, %s251
      %p258 = scmp.eq.s32.totalorder %s31, 1
      %p259 = por %p257, %p258
      %p260 = scmp.ne.s32.totalorder %s251, %s252
      %p261 = scmp.eq.s32.totalorder %s31, 0
      %p262 = por %p260, %p261
      %p263 = scmp.ne.s32.totalorder %s251, %s252
      %p264 = scmp.eq.s32.totalorder %s32, 1
      %p265 = por %p263, %p264
      %p267 = scmp.ne.s32.totalorder %s252, %s266
      %p268 = scmp.eq.s32.totalorder %s32, 0
      %p269 = por %p267, %p268
      %s271 = sadd.s32 %s270, 1
      %p274 = scmp.eq.s32.totalorder %s26, 1
      %p275 = scmp.ne.s32.totalorder %s270, %s272
      %p276 = scmp.eq.s32.totalorder %s26, 0
      %p277 = por %p275, %p276
      %p278 = scmp.ne.s32.totalorder %s270, %s272
      %p279 = scmp.eq.s32.totalorder %s31, 1
      %p280 = por %p278, %p279
      %p281 = scmp.ne.s32.totalorder %s272, %s273
      %p282 = scmp.eq.s32.totalorder %s31, 0
      %p283 = por %p281, %p282
      %p284 = scmp.ne.s32.totalorder %s272, %s273
      %p285 = scmp.eq.s32.totalorder %s32, 1
      %p286 = por %p284, %p285
      %p288 = scmp.ne.s32.totalorder %s273, %s287
      %p289 = scmp.eq.s32.totalorder %s32, 0
      %p290 = por %p288, %p289
      %s292 = sadd.s32 %s291, 1
      %p295 = scmp.eq.s32.totalorder %s26, 1
      %p296 = scmp.ne.s32.totalorder %s291, %s293
      %p297 = scmp.eq.s32.totalorder %s26, 0
      %p298 = por %p296, %p297
      %p299 = scmp.ne.s32.totalorder %s291, %s293
      %p300 = scmp.eq.s32.totalorder %s31, 1
      %p301 = por %p299, %p300
      %p302 = scmp.ne.s32.totalorder %s293, %s294
      %p303 = scmp.eq.s32.totalorder %s31, 0
      %p304 = por %p302, %p303
      %p305 = scmp.ne.s32.totalorder %s293, %s294
      %p306 = scmp.eq.s32.totalorder %s32, 1
      %p307 = por %p305, %p306
      %p309 = scmp.ne.s32.totalorder %s294, %s308
      %p310 = scmp.eq.s32.totalorder %s32, 0
      %p311 = por %p309, %p310
      %s313 = sadd.s32 %s312, 1
      %p316 = scmp.eq.s32.totalorder %s26, 1
      %p317 = scmp.ne.s32.totalorder %s312, %s314
      %p318 = scmp.eq.s32.totalorder %s26, 0
      %p319 = por %p317, %p318
      %p320 = scmp.ne.s32.totalorder %s312, %s314
      %p321 = scmp.eq.s32.totalorder %s31, 1
      %p322 = por %p320, %p321
      %p323 = scmp.ne.s32.totalorder %s314, %s315
      %p324 = scmp.eq.s32.totalorder %s31, 0
      %p325 = por %p323, %p324
      %p326 = scmp.ne.s32.totalorder %s314, %s315
      %p327 = scmp.eq.s32.totalorder %s32, 1
      %p328 = por %p326, %p327
      %p330 = scmp.ne.s32.totalorder %s315, %s329
      %p331 = scmp.eq.s32.totalorder %s32, 0
      %p332 = por %p330, %p331
      %s334 = sadd.s32 %s333, 1
      %p337 = scmp.eq.s32.totalorder %s26, 1
      %p338 = scmp.ne.s32.totalorder %s333, %s335
      %p339 = scmp.eq.s32.totalorder %s26, 0
      %p340 = por %p338, %p339
      %p341 = scmp.ne.s32.totalorder %s333, %s335
      %p342 = scmp.eq.s32.totalorder %s31, 1
      %p343 = por %p341, %p342
      %p344 = scmp.ne.s32.totalorder %s335, %s336
      %p345 = scmp.eq.s32.totalorder %s31, 0
      %p346 = por %p344, %p345
      %p347 = scmp.ne.s32.totalorder %s335, %s336
      %p348 = scmp.eq.s32.totalorder %s32, 1
      %p349 = por %p347, %p348
      %p351 = scmp.ne.s32.totalorder %s336, %s350
      %p352 = scmp.eq.s32.totalorder %s32, 0
      %p353 = por %p351, %p352
      %s355 = sadd.s32 %s354, 1
      %p358 = scmp.eq.s32.totalorder %s26, 1
      %p359 = scmp.ne.s32.totalorder %s354, %s356
      %p360 = scmp.eq.s32.totalorder %s26, 0
      %p361 = por %p359, %p360
      %p362 = scmp.ne.s32.totalorder %s354, %s356
      %p363 = scmp.eq.s32.totalorder %s31, 1
      %p364 = por %p362, %p363
      %p365 = scmp.ne.s32.totalorder %s356, %s357
      %p366 = scmp.eq.s32.totalorder %s31, 0
      %p367 = por %p365, %p366
      %p368 = scmp.ne.s32.totalorder %s356, %s357
      %p369 = scmp.eq.s32.totalorder %s32, 1
      %p370 = por %p368, %p369
      %p372 = scmp.ne.s32.totalorder %s357, %s371
      %p373 = scmp.eq.s32.totalorder %s32, 0
      %p374 = por %p372, %p373
      %s376 = sadd.s32 %s375, 1
      %p379 = scmp.eq.s32.totalorder %s26, 1
      %p380 = scmp.ne.s32.totalorder %s375, %s377
      %p381 = scmp.eq.s32.totalorder %s26, 0
      %p382 = por %p380, %p381
      %p383 = scmp.ne.s32.totalorder %s375, %s377
      %p384 = scmp.eq.s32.totalorder %s31, 1
      %p385 = por %p383, %p384
      %p386 = scmp.ne.s32.totalorder %s377, %s378
      %p387 = scmp.eq.s32.totalorder %s31, 0
      %p388 = por %p386, %p387
      %p389 = scmp.ne.s32.totalorder %s377, %s378
      %p390 = scmp.eq.s32.totalorder %s32, 1
      %p391 = por %p389, %p390
      %p393 = scmp.ne.s32.totalorder %s378, %s392
      %p394 = scmp.eq.s32.totalorder %s32, 0
      %p395 = por %p393, %p394
      %s396 = ssub.s32 %s26, %s33
      %p397 = scmp.eq.s32.totalorder %s396, 0
      %s399 = sadd.s32 %s398, 1
      %s400 = scalar_select %p397, %s398, %s399
      %p403 = pneg %p397
      %p404 = scmp.eq.s32.totalorder %s26, 1
      %p405 = por %p403, %p404
      %p406 = scmp.ne.s32.totalorder %s398, %s401
      %p407 = scmp.eq.s32.totalorder %s26, 0
      %p408 = por %p406, %p407
      %p409 = scmp.ne.s32.totalorder %s398, %s401
      %p410 = scmp.eq.s32.totalorder %s31, 1
      %p411 = por %p409, %p410
      %p412 = scmp.ne.s32.totalorder %s401, %s402
      %p413 = scmp.eq.s32.totalorder %s31, 0
      %p414 = por %p412, %p413
      %p415 = scmp.ne.s32.totalorder %s401, %s402
      %p416 = scmp.eq.s32.totalorder %s32, 1
      %p417 = por %p415, %p416
      %p419 = scmp.ne.s32.totalorder %s402, %s418
      %p420 = scmp.eq.s32.totalorder %s32, 0
      %p421 = por %p419, %p420
      %p422 = scmp.le.s32.totalorder 1, %s26
      %p423 = scmp.lt.s32.totalorder %s26, 3
      %p424 = pnand %p422, %p423
      %p425 = pneg %p424
      // Predicated region
      $region9: #{feature_extractor_4.1} parent=5 // pred_check
        _
      $region10: #{feature_extractor_4.1} parent=5 // pred_check_branch
        %427 = sbr.rel (%p424) target = $region12
      $region11: #{feature_extractor_4.1} parent=5 // pred_region
        %s428 = ssub.s32 %s26, 1
        // Predicated region
        $region13: #{feature_extractor_4.1} parent=11 // pred_check
          %p429 = pneg %p73
        $region14: #{feature_extractor_4.1} parent=11 // pred_check_branch
          %431 = sbr.rel (%p429) target = $region16
        $region15: #{feature_extractor_4.1} parent=11 // pred_region
          _
        $region16: #{feature_extractor_4.1} parent=11 // pred_fallthru
          _
        // Predicated region
        $region17: #{feature_extractor_4.1} parent=11 // pred_check
          %p432 = pneg %p94
        $region18: #{feature_extractor_4.1} parent=11 // pred_check_branch
          %434 = sbr.rel (%p432) target = $region20
        $region19: #{feature_extractor_4.1} parent=11 // pred_region
          _
        $region20: #{feature_extractor_4.1} parent=11 // pred_fallthru
          _
        // Predicated region
        $region21: #{feature_extractor_4.1} parent=11 // pred_check
          %p435 = pneg %p115
        $region22: #{feature_extractor_4.1} parent=11 // pred_check_branch
          %437 = sbr.rel (%p435) target = $region24
        $region23: #{feature_extractor_4.1} parent=11 // pred_region
          _
        $region24: #{feature_extractor_4.1} parent=11 // pred_fallthru
          _
        // Predicated region
        $region25: #{feature_extractor_4.1} parent=11 // pred_check
          %p438 = pneg %p136
        $region26: #{feature_extractor_4.1} parent=11 // pred_check_branch
          %440 = sbr.rel (%p438) target = $region28
        $region27: #{feature_extractor_4.1} parent=11 // pred_region
          _
        $region28: #{feature_extractor_4.1} parent=11 // pred_fallthru
          _
        // Predicated region
        $region29: #{feature_extractor_4.1} parent=11 // pred_check
          %p441 = pneg %p157
        $region30: #{feature_extractor_4.1} parent=11 // pred_check_branch
          %443 = sbr.rel (%p441) target = $region32
        $region31: #{feature_extractor_4.1} parent=11 // pred_region
          _
        $region32: #{feature_extractor_4.1} parent=11 // pred_fallthru
          _
        // Predicated region
        $region33: #{feature_extractor_4.1} parent=11 // pred_check
          %p444 = pneg %p178
        $region34: #{feature_extractor_4.1} parent=11 // pred_check_branch
          %446 = sbr.rel (%p444) target = $region36
        $region35: #{feature_extractor_4.1} parent=11 // pred_region
          _
        $region36: #{feature_extractor_4.1} parent=11 // pred_fallthru
          _
        // Predicated region
        $region37: #{feature_extractor_4.1} parent=11 // pred_check
          %p447 = pneg %p199
        $region38: #{feature_extractor_4.1} parent=11 // pred_check_branch
          %449 = sbr.rel (%p447) target = $region40
        $region39: #{feature_extractor_4.1} parent=11 // pred_region
          _
        $region40: #{feature_extractor_4.1} parent=11 // pred_fallthru
          _
        // Predicated region
        $region41: #{feature_extractor_4.1} parent=11 // pred_check
          %p450 = pneg %p220
        $region42: #{feature_extractor_4.1} parent=11 // pred_check_branch
          %452 = sbr.rel (%p450) target = $region44
        $region43: #{feature_extractor_4.1} parent=11 // pred_region
          _
        $region44: #{feature_extractor_4.1} parent=11 // pred_fallthru
          _
        // Predicated region
        $region45: #{feature_extractor_4.1} parent=11 // pred_check
          %p453 = pneg %p241
        $region46: #{feature_extractor_4.1} parent=11 // pred_check_branch
          %455 = sbr.rel (%p453) target = $region48
        $region47: #{feature_extractor_4.1} parent=11 // pred_region
          _
        $region48: #{feature_extractor_4.1} parent=11 // pred_fallthru
          _
        // Predicated region
        $region49: #{feature_extractor_4.1} parent=11 // pred_check
          %p456 = pneg %p262
        $region50: #{feature_extractor_4.1} parent=11 // pred_check_branch
          %458 = sbr.rel (%p456) target = $region52
        $region51: #{feature_extractor_4.1} parent=11 // pred_region
          _
        $region52: #{feature_extractor_4.1} parent=11 // pred_fallthru
          _
        // Predicated region
        $region53: #{feature_extractor_4.1} parent=11 // pred_check
          %p459 = pneg %p283
        $region54: #{feature_extractor_4.1} parent=11 // pred_check_branch
          %461 = sbr.rel (%p459) target = $region56
        $region55: #{feature_extractor_4.1} parent=11 // pred_region
          _
        $region56: #{feature_extractor_4.1} parent=11 // pred_fallthru
          _
        // Predicated region
        $region57: #{feature_extractor_4.1} parent=11 // pred_check
          %p462 = pneg %p304
        $region58: #{feature_extractor_4.1} parent=11 // pred_check_branch
          %464 = sbr.rel (%p462) target = $region60
        $region59: #{feature_extractor_4.1} parent=11 // pred_region
          _
        $region60: #{feature_extractor_4.1} parent=11 // pred_fallthru
          _
        // Predicated region
        $region61: #{feature_extractor_4.1} parent=11 // pred_check
          %p465 = pneg %p325
        $region62: #{feature_extractor_4.1} parent=11 // pred_check_branch
          %467 = sbr.rel (%p465) target = $region64
        $region63: #{feature_extractor_4.1} parent=11 // pred_region
          _
        $region64: #{feature_extractor_4.1} parent=11 // pred_fallthru
          _
        // Predicated region
        $region65: #{feature_extractor_4.1} parent=11 // pred_check
          %p468 = pneg %p346
        $region66: #{feature_extractor_4.1} parent=11 // pred_check_branch
          %470 = sbr.rel (%p468) target = $region68
        $region67: #{feature_extractor_4.1} parent=11 // pred_region
          _
        $region68: #{feature_extractor_4.1} parent=11 // pred_fallthru
          _
        // Predicated region
        $region69: #{feature_extractor_4.1} parent=11 // pred_check
          %p471 = pneg %p367
        $region70: #{feature_extractor_4.1} parent=11 // pred_check_branch
          %473 = sbr.rel (%p471) target = $region72
        $region71: #{feature_extractor_4.1} parent=11 // pred_region
          _
        $region72: #{feature_extractor_4.1} parent=11 // pred_fallthru
          _
        // Predicated region
        $region73: #{feature_extractor_4.1} parent=11 // pred_check
          %p474 = pneg %p388
        $region74: #{feature_extractor_4.1} parent=11 // pred_check_branch
          %476 = sbr.rel (%p474) target = $region76
        $region75: #{feature_extractor_4.1} parent=11 // pred_region
          _
        $region76: #{feature_extractor_4.1} parent=11 // pred_fallthru
          _
      $region12: #{feature_extractor_4.1} parent=5 // pred_fallthru
        _
      %p477 = scmp.lt.s32.totalorder %s26, 2
      // Predicated region
      $region77: #{feature_extractor_4.1} parent=5 // pred_check
        %p478 = pneg %p477
      $region78: #{feature_extractor_4.1} parent=5 // pred_check_branch
        %480 = sbr.rel (%p478) target = $region80
      $region79: #{feature_extractor_4.1} parent=5 // pred_region
        // Predicated region
        $region81: #{feature_extractor_4.1} parent=79 // pred_check
          %p481 = pneg %p46
        $region82: #{feature_extractor_4.1} parent=79 // pred_check_branch
          %483 = sbr.rel (%p481) target = $region84
        $region83: #{feature_extractor_4.1} parent=79 // pred_region
          %s484 = smul.u32 64, %s26
          %p485 = scmp.lt.s32.totalorder %s484, 127
          %s486 = scalar_select %p485, %s484, 127
          %s487 = smul.addr %s486, 4
          %s488 = scalar_lea.vmem %s0, %s487
          %s489 = smul.u32 64, %s26
        $region84: #{feature_extractor_4.1} parent=79 // pred_fallthru
          _
      $region80: #{feature_extractor_4.1} parent=5 // pred_fallthru
        _
      %p490 = scmp.le.s32.totalorder 1, %s26
      %p491 = scmp.lt.s32.totalorder %s26, 3
      %p492 = pnand %p490, %p491
      %p493 = pneg %p492
      // Predicated region
      $region85: #{feature_extractor_4.1} parent=5 // pred_check
        _
      $region86: #{feature_extractor_4.1} parent=5 // pred_check_branch
        %495 = sbr.rel (%p492) target = $region88
      $region87: #{feature_extractor_4.1} parent=5 // pred_region
        %s496 = ssub.s32 %s26, 1
        %s497 = smul.u32 64, %s31
        %p498 = scmp.lt.s32.totalorder %s497, 127
        %s499 = scalar_select %p498, %s497, 127
        %s500 = smul.addr %s499, 4
        %s501 = scalar_lea.vmem %s0, %s500
        %p502 = pneg %p52
        %p503 = pneg %p49
        %p504 = pneg %p73
        %p505 = pneg %p70
        %p506 = pneg %p94
        %p507 = pneg %p91
        %p508 = pneg %p115
        %p509 = pneg %p112
        %p510 = pneg %p136
        %p511 = pneg %p133
        %p512 = pneg %p157
        %p513 = pneg %p154
        %p514 = pneg %p178
        %p515 = pneg %p175
        %p516 = pneg %p199
        %p517 = pneg %p196
        %p518 = pneg %p220
        %p519 = pneg %p217
        %p520 = pneg %p241
        %p521 = pneg %p238
        %p522 = pneg %p262
        %p523 = pneg %p259
        %p524 = pneg %p283
        %p525 = pneg %p280
        %p526 = pneg %p304
        %p527 = pneg %p301
        %p528 = pneg %p325
        %p529 = pneg %p322
        %p530 = pneg %p346
        %p531 = pneg %p343
        %p532 = pneg %p367
        %p533 = pneg %p364
        %p534 = pneg %p388
        %p535 = pneg %p385
        %p536 = pneg %p414
        %p537 = pneg %p411
        %s538 = sand.u32 %s401, 1
        %s539 = scalar_lea.sflag [#allocation4], %s538
        %s540 = sand.u32 %s401, 1
        %s541 = smul.addr %s540, 8
        %s542 = scalar_lea.vmem [#allocation3], %s541
        %s543 = smul.u32 64, %s31
        %p544 = scmp.lt.s32.totalorder %s543, 127
        %s545 = scalar_select %p544, %s543, 127
        %s546 = smul.addr %s545, 4
        %s547 = scalar_lea.vmem %s0, %s546
        %s548 = smul.u32 64, %s31
        %v550 = vld [vmem:[%s547] sm:$0xf]
        %v551 = vld [vmem:[%s547 + $0x4] sm:$0xf]
        %v552 = vld [vmem:[%s547 + $0x8] sm:$0xf]
        %v553 = vld [vmem:[%s547 + $0xc] sm:$0xf]
        %v554 = vld [vmem:[%s547 + $0x10] sm:$0xf]
        %v555 = vld [vmem:[%s547 + $0x14] sm:$0xf]
        %v556 = vld [vmem:[%s547 + $0x18] sm:$0xf]
        %v557 = vld [vmem:[%s547 + $0x1c] sm:$0xf]
        %v558 = vld [vmem:[%s547 + $0x20] sm:$0xf]
        %v559 = vld [vmem:[%s547 + $0x24] sm:$0xf]
        %v560 = vld [vmem:[%s547 + $0x28] sm:$0xf]
        %v561 = vld [vmem:[%s547 + $0x2c] sm:$0xf]
        %v562 = vld [vmem:[%s547 + $0x30] sm:$0xf]
        %v563 = vld [vmem:[%s547 + $0x34] sm:$0xf]
        %v564 = vld [vmem:[%s547 + $0x38] sm:$0xf]
        %v565 = vld [vmem:[%s547 + $0x3c] sm:$0xf]
        %v566 = vld [vmem:[%s547 + $0x40] sm:$0xf]
        %v567 = vld [vmem:[%s547 + $0x44] sm:$0xf]
        %v568 = vld [vmem:[%s547 + $0x48] sm:$0xf]
        %v569 = vld [vmem:[%s547 + $0x4c] sm:$0xf]
        %v570 = vld [vmem:[%s547 + $0x50] sm:$0xf]
        %v571 = vld [vmem:[%s547 + $0x54] sm:$0xf]
        %v572 = vld [vmem:[%s547 + $0x58] sm:$0xf]
        %v573 = vld [vmem:[%s547 + $0x5c] sm:$0xf]
        %v574 = vld [vmem:[%s547 + $0x60] sm:$0xf]
        %v575 = vld [vmem:[%s547 + $0x64] sm:$0xf]
        %v576 = vld [vmem:[%s547 + $0x68] sm:$0xf]
        %v577 = vld [vmem:[%s547 + $0x6c] sm:$0xf]
        %v578 = vld [vmem:[%s547 + $0x70] sm:$0xf]
        %v579 = vld [vmem:[%s547 + $0x74] sm:$0xf]
        %v580 = vld [vmem:[%s547 + $0x78] sm:$0xf]
        %v581 = vld [vmem:[%s547 + $0x7c] sm:$0xf]
        %v582 = vld [vmem:[%s547 + $0x80] sm:$0xf]
        %v583 = vld [vmem:[%s547 + $0x84] sm:$0xf]
        %v584 = vld [vmem:[%s547 + $0x88] sm:$0xf]
        %v585 = vld [vmem:[%s547 + $0x8c] sm:$0xf]
        %v586 = vld [vmem:[%s547 + $0x90] sm:$0xf]
        %v587 = vld [vmem:[%s547 + $0x94] sm:$0xf]
        %v588 = vld [vmem:[%s547 + $0x98] sm:$0xf]
        %v589 = vld [vmem:[%s547 + $0x9c] sm:$0xf]
        %v590 = vld [vmem:[%s547 + $0xa0] sm:$0xf]
        %v591 = vld [vmem:[%s547 + $0xa4] sm:$0xf]
        %v592 = vld [vmem:[%s547 + $0xa8] sm:$0xf]
        %v593 = vld [vmem:[%s547 + $0xac] sm:$0xf]
        %v594 = vld [vmem:[%s547 + $0xb0] sm:$0xf]
        %v595 = vld [vmem:[%s547 + $0xb4] sm:$0xf]
        %v596 = vld [vmem:[%s547 + $0xb8] sm:$0xf]
        %v597 = vld [vmem:[%s547 + $0xbc] sm:$0xf]
        %v598 = vld [vmem:[%s547 + $0xc0] sm:$0xf]
        %v599 = vld [vmem:[%s547 + $0xc4] sm:$0xf]
        %v600 = vld [vmem:[%s547 + $0xc8] sm:$0xf]
        %v601 = vld [vmem:[%s547 + $0xcc] sm:$0xf]
        %v602 = vld [vmem:[%s547 + $0xd0] sm:$0xf]
        %v603 = vld [vmem:[%s547 + $0xd4] sm:$0xf]
        %v604 = vld [vmem:[%s547 + $0xd8] sm:$0xf]
        %v605 = vld [vmem:[%s547 + $0xdc] sm:$0xf]
        %v606 = vld [vmem:[%s547 + $0xe0] sm:$0xf]
        %v607 = vld [vmem:[%s547 + $0xe4] sm:$0xf]
        %v608 = vld [vmem:[%s547 + $0xe8] sm:$0xf]
        %v609 = vld [vmem:[%s547 + $0xec] sm:$0xf]
        %v610 = vld [vmem:[%s547 + $0xf0] sm:$0xf]
        %v611 = vld [vmem:[%s547 + $0xf4] sm:$0xf]
        %v612 = vld [vmem:[%s547 + $0xf8] sm:$0xf]
        %v613 = vld [vmem:[%s547 + $0xfc] sm:$0xf]
        %v614 = vld [vmem:[%s1] sm:$0xf]
        %v615 = vld [vmem:[%s1 + $0x4] sm:$0xf]
        %v616 = vld [vmem:[%s1 + $0x8] sm:$0xf]
        %v617 = vld [vmem:[%s1 + $0xc] sm:$0xf]
        %v618 = vld [vmem:[%s1 + $0x10] sm:$0xf]
        %v619 = vld [vmem:[%s1 + $0x14] sm:$0xf]
        %v620 = vld [vmem:[%s1 + $0x18] sm:$0xf]
        %v621 = vld [vmem:[%s1 + $0x1c] sm:$0xf]
        %v622 = vld [vmem:[%s2] sm:$0x1]
        %v624 = vlaneseq
        %v625 = vshrl.u32 %v624, 7
        %v626 = vsub.s32 0, %v625
        %v627 = vrot.slane %v622, %v626
        %v693 = vunpack.c.l.b16 %v550
        %v694 = vunpack.c.l.b16 %v551
        %v695 = vunpack.c.l.b16 %v552
        %v696 = vunpack.c.l.b16 %v553
        %v697 = vunpack.c.l.b16 %v554
        %v698 = vunpack.c.l.b16 %v555
        %v699 = vunpack.c.l.b16 %v556
        %v700 = vunpack.c.l.b16 %v557
        %v701 = vunpack.c.l.b16 %v558
        %v702 = vunpack.c.l.b16 %v559
        %v703 = vunpack.c.l.b16 %v560
        %v704 = vunpack.c.l.b16 %v561
        %v705 = vunpack.c.l.b16 %v562
        %v706 = vunpack.c.l.b16 %v563
        %v707 = vunpack.c.l.b16 %v564
        %v708 = vunpack.c.l.b16 %v565
        %v709 = vunpack.c.l.b16 %v566
        %v710 = vunpack.c.l.b16 %v567
        %v711 = vunpack.c.l.b16 %v568
        %v712 = vunpack.c.l.b16 %v569
        %v713 = vunpack.c.l.b16 %v570
        %v714 = vunpack.c.l.b16 %v571
        %v715 = vunpack.c.l.b16 %v572
        %v716 = vunpack.c.l.b16 %v573
        %v717 = vunpack.c.l.b16 %v574
        %v718 = vunpack.c.l.b16 %v575
        %v719 = vunpack.c.l.b16 %v576
        %v720 = vunpack.c.l.b16 %v577
        %v721 = vunpack.c.l.b16 %v578
        %v722 = vunpack.c.l.b16 %v579
        %v723 = vunpack.c.l.b16 %v580
        %v724 = vunpack.c.l.b16 %v581
        %v725 = vunpack.c.l.b16 %v582
        %v726 = vunpack.c.l.b16 %v583
        %v727 = vunpack.c.l.b16 %v584
        %v728 = vunpack.c.l.b16 %v585
        %v729 = vunpack.c.l.b16 %v586
        %v730 = vunpack.c.l.b16 %v587
        %v731 = vunpack.c.l.b16 %v588
        %v732 = vunpack.c.l.b16 %v589
        %v733 = vunpack.c.l.b16 %v590
        %v734 = vunpack.c.l.b16 %v591
        %v735 = vunpack.c.l.b16 %v592
        %v736 = vunpack.c.l.b16 %v593
        %v737 = vunpack.c.l.b16 %v594
        %v738 = vunpack.c.l.b16 %v595
        %v739 = vunpack.c.l.b16 %v596
        %v740 = vunpack.c.l.b16 %v597
        %v741 = vunpack.c.l.b16 %v598
        %v742 = vunpack.c.l.b16 %v599
        %v743 = vunpack.c.l.b16 %v600
        %v744 = vunpack.c.l.b16 %v601
        %v745 = vunpack.c.l.b16 %v602
        %v746 = vunpack.c.l.b16 %v603
        %v747 = vunpack.c.l.b16 %v604
        %v748 = vunpack.c.l.b16 %v605
        %v749 = vunpack.c.l.b16 %v606
        %v750 = vunpack.c.l.b16 %v607
        %v751 = vunpack.c.l.b16 %v608
        %v752 = vunpack.c.l.b16 %v609
        %v753 = vunpack.c.l.b16 %v610
        %v754 = vunpack.c.l.b16 %v611
        %v755 = vunpack.c.l.b16 %v612
        %v756 = vunpack.c.l.b16 %v613
        %v757 = vpack.c.b16 %v694, %v693
        %v758 = vpack.c.b16 %v696, %v695
        %v759 = vpack.c.b16 %v698, %v697
        %v760 = vpack.c.b16 %v700, %v699
        %v761 = vpack.c.b16 %v702, %v701
        %v762 = vpack.c.b16 %v704, %v703
        %v763 = vpack.c.b16 %v706, %v705
        %v764 = vpack.c.b16 %v708, %v707
        %v765 = vpack.c.b16 %v710, %v709
        %v766 = vpack.c.b16 %v712, %v711
        %v767 = vpack.c.b16 %v714, %v713
        %v768 = vpack.c.b16 %v716, %v715
        %v769 = vpack.c.b16 %v718, %v717
        %v770 = vpack.c.b16 %v720, %v719
        %v771 = vpack.c.b16 %v722, %v721
        %v772 = vpack.c.b16 %v724, %v723
        %v773 = vpack.c.b16 %v726, %v725
        %v774 = vpack.c.b16 %v728, %v727
        %v775 = vpack.c.b16 %v730, %v729
        %v776 = vpack.c.b16 %v732, %v731
        %v777 = vpack.c.b16 %v734, %v733
        %v778 = vpack.c.b16 %v736, %v735
        %v779 = vpack.c.b16 %v738, %v737
        %v780 = vpack.c.b16 %v740, %v739
        %v781 = vpack.c.b16 %v742, %v741
        %v782 = vpack.c.b16 %v744, %v743
        %v783 = vpack.c.b16 %v746, %v745
        %v784 = vpack.c.b16 %v748, %v747
        %v785 = vpack.c.b16 %v750, %v749
        %v786 = vpack.c.b16 %v752, %v751
        %v787 = vpack.c.b16 %v754, %v753
        %v788 = vpack.c.b16 %v756, %v755
        %v797 = vunpack.c.l.b16 %v614
        %v798 = vunpack.c.l.b16 %v615
        %v799 = vunpack.c.l.b16 %v616
        %v800 = vunpack.c.l.b16 %v617
        %v801 = vunpack.c.l.b16 %v618
        %v802 = vunpack.c.l.b16 %v619
        %v803 = vunpack.c.l.b16 %v620
        %v804 = vunpack.c.l.b16 %v621
        %v805 = vpack.c.b16 %v798, %v797
        %v806 = vpack.c.b16 %v800, %v799
        %v807 = vpack.c.b16 %v802, %v801
        %v808 = vpack.c.b16 %v804, %v803
        %vm813 = vcmask 523264
        %v815 = vsel %vm813, %v757, 0
        %v818 = vsel %vm813, %v758, 0
        %v821 = vsel %vm813, %v759, 0
        %v824 = vsel %vm813, %v760, 0
        %v827 = vsel %vm813, %v761, 0
        %v830 = vsel %vm813, %v762, 0
        %v833 = vsel %vm813, %v763, 0
        %v836 = vsel %vm813, %v764, 0
        %v839 = vsel %vm813, %v765, 0
        %v842 = vsel %vm813, %v766, 0
        %v845 = vsel %vm813, %v767, 0
        %v848 = vsel %vm813, %v768, 0
        %v851 = vsel %vm813, %v769, 0
        %v854 = vsel %vm813, %v770, 0
        %v857 = vsel %vm813, %v771, 0
        %v860 = vsel %vm813, %v772, 0
        %v863 = vsel %vm813, %v773, 0
        %v866 = vsel %vm813, %v774, 0
        %v869 = vsel %vm813, %v775, 0
        %v872 = vsel %vm813, %v776, 0
        %v875 = vsel %vm813, %v777, 0
        %v878 = vsel %vm813, %v778, 0
        %v881 = vsel %vm813, %v779, 0
        %v884 = vsel %vm813, %v780, 0
        %v887 = vsel %vm813, %v781, 0
        %v890 = vsel %vm813, %v782, 0
        %v893 = vsel %vm813, %v783, 0
        %v896 = vsel %vm813, %v784, 0
        %v899 = vsel %vm813, %v785, 0
        %v902 = vsel %vm813, %v786, 0
        %v905 = vsel %vm813, %v787, 0
        %v908 = vsel %vm813, %v788, 0
        %910 = vmatprep.subr.bf16.mxu0 0
        %911 = vmatpush1.bf16.msra.mxu0 %v805
        %912 = vmatprep.subr.bf16.mxu0 0
        %913 = vmatpush1.bf16.msra.mxu0 %v806
        %914 = vmatprep.subr.bf16.mxu0 0
        %915 = vmatpush1.bf16.msra.mxu0 %v807
        %916 = vmatprep.subr.bf16.mxu0 0
        %917 = vmatpush1.bf16.msra.mxu0 %v808
        %918 = vmatprep.subr.bf16.mxu0 0
        %919 = vmatpush1.bf16.msra.mxu0 0
        %920 = vmatprep.subr.bf16.mxu0 0
        %921 = vmatpush1.bf16.msra.mxu0 0
        %922 = vmatprep.subr.bf16.mxu0 0
        %923 = vmatpush1.bf16.msra.mxu0 0
        %924 = vmatprep.subr.bf16.mxu0 0
        %925 = vmatpush1.bf16.msra.mxu0 0
        %926 = vmatprep.subr.bf16.mxu0 0
        %927 = vmatpush1.bf16.msra.mxu0 0
        %928 = vmatprep.subr.bf16.mxu0 0
        %929 = vmatpush1.bf16.msra.mxu0 0
        %930 = vmatprep.subr.bf16.mxu0 0
        %931 = vmatpush1.bf16.msra.mxu0 0
        %932 = vmatprep.subr.bf16.mxu0 0
        %933 = vmatpush1.bf16.msra.mxu0 0
        %934 = vmatprep.subr.bf16.mxu0 0
        %935 = vmatpush1.bf16.msra.mxu0 0
        %936 = vmatprep.subr.bf16.mxu0 0
        %937 = vmatpush1.bf16.msra.mxu0 0
        %938 = vmatprep.subr.bf16.mxu0 0
        %939 = vmatpush1.bf16.msra.mxu0 0
        %940 = vmatprep.subr.bf16.mxu0 0
        %941 = vmatpush1.bf16.msra.mxu0 0
        %942 = vmatprep.mubr.bf16.mxu0 0
        %943 = vmatmul.mubr.bf16.gmra.mrb[0].mxu0 %v815
        %v944 = vpop.f32.mrb[0].mxu0
        %v945 = vadd.f32 %v627, %v944
        %v946 = vpop.f32.mrb[0].mxu0
        %v947 = vpop.f32.mrb[0].mxu0
        %v948 = vadd.f32 %v627, %v947
        %v949 = vpop.f32.mrb[0].mxu0
        %950 = vmatprep.mubr.bf16.mxu0 0
        %951 = vmatmul.mubr.bf16.gmra.mrb[0].mxu0 %v818
        %v952 = vpop.f32.mrb[0].mxu0
        %v953 = vadd.f32 %v627, %v952
        %v954 = vpop.f32.mrb[0].mxu0
        %v955 = vpop.f32.mrb[0].mxu0
        %v956 = vadd.f32 %v627, %v955
        %v957 = vpop.f32.mrb[0].mxu0
        %958 = vmatprep.mubr.bf16.mxu0 0
        %959 = vmatmul.mubr.bf16.gmra.mrb[0].mxu0 %v821
        %v960 = vpop.f32.mrb[0].mxu0
        %v961 = vadd.f32 %v627, %v960
        %v962 = vpop.f32.mrb[0].mxu0
        %v963 = vpop.f32.mrb[0].mxu0
        %v964 = vadd.f32 %v627, %v963
        %v965 = vpop.f32.mrb[0].mxu0
        %966 = vmatprep.mubr.bf16.mxu0 0
        %967 = vmatmul.mubr.bf16.gmra.mrb[0].mxu0 %v824
        %v968 = vpop.f32.mrb[0].mxu0
        %v969 = vadd.f32 %v627, %v968
        %v970 = vpop.f32.mrb[0].mxu0
        %v971 = vpop.f32.mrb[0].mxu0
        %v972 = vadd.f32 %v627, %v971
        %v973 = vpop.f32.mrb[0].mxu0
        %974 = vmatprep.mubr.bf16.mxu0 0
        %975 = vmatmul.mubr.bf16.gmra.mrb[0].mxu0 %v827
        %v976 = vpop.f32.mrb[0].mxu0
        %v977 = vadd.f32 %v627, %v976
        %v978 = vpop.f32.mrb[0].mxu0
        %v979 = vpop.f32.mrb[0].mxu0
        %v980 = vadd.f32 %v627, %v979
        %v981 = vpop.f32.mrb[0].mxu0
        %982 = vmatprep.mubr.bf16.mxu0 0
        %983 = vmatmul.mubr.bf16.gmra.mrb[0].mxu0 %v830
        %v984 = vpop.f32.mrb[0].mxu0
        %v985 = vadd.f32 %v627, %v984
        %v986 = vpop.f32.mrb[0].mxu0
        %v987 = vpop.f32.mrb[0].mxu0
        %v988 = vadd.f32 %v627, %v987
        %v989 = vpop.f32.mrb[0].mxu0
        %990 = vmatprep.mubr.bf16.mxu0 0
        %991 = vmatmul.mubr.bf16.gmra.mrb[0].mxu0 %v833
        %v992 = vpop.f32.mrb[0].mxu0
        %v993 = vadd.f32 %v627, %v992
        %v994 = vpop.f32.mrb[0].mxu0
        %v995 = vpop.f32.mrb[0].mxu0
        %v996 = vadd.f32 %v627, %v995
        %v997 = vpop.f32.mrb[0].mxu0
        %998 = vmatprep.mubr.bf16.mxu0 0
        %999 = vmatmul.mubr.bf16.gmra.mrb[0].mxu0 %v836
        %v1000 = vpop.f32.mrb[0].mxu0
        %v1001 = vadd.f32 %v627, %v1000
        %v1002 = vpop.f32.mrb[0].mxu0
        %v1003 = vpop.f32.mrb[0].mxu0
        %v1004 = vadd.f32 %v627, %v1003
        %v1005 = vpop.f32.mrb[0].mxu0
        %1006 = vmatprep.mubr.bf16.mxu0 0
        %1007 = vmatmul.mubr.bf16.gmra.mrb[0].mxu0 %v839
        %v1008 = vpop.f32.mrb[0].mxu0
        %v1009 = vadd.f32 %v627, %v1008
        %v1010 = vpop.f32.mrb[0].mxu0
        %v1011 = vpop.f32.mrb[0].mxu0
        %v1012 = vadd.f32 %v627, %v1011
        %v1013 = vpop.f32.mrb[0].mxu0
        %1014 = vmatprep.mubr.bf16.mxu0 0
        %1015 = vmatmul.mubr.bf16.gmra.mrb[0].mxu0 %v842
        %v1016 = vpop.f32.mrb[0].mxu0
        %v1017 = vadd.f32 %v627, %v1016
        %v1018 = vpop.f32.mrb[0].mxu0
        %v1019 = vpop.f32.mrb[0].mxu0
        %v1020 = vadd.f32 %v627, %v1019
        %v1021 = vpop.f32.mrb[0].mxu0
        %1022 = vmatprep.mubr.bf16.mxu0 0
        %1023 = vmatmul.mubr.bf16.gmra.mrb[0].mxu0 %v845
        %v1024 = vpop.f32.mrb[0].mxu0
        %v1025 = vadd.f32 %v627, %v1024
        %v1026 = vpop.f32.mrb[0].mxu0
        %v1027 = vpop.f32.mrb[0].mxu0
        %v1028 = vadd.f32 %v627, %v1027
        %v1029 = vpop.f32.mrb[0].mxu0
        %1030 = vmatprep.mubr.bf16.mxu0 0
        %1031 = vmatmul.mubr.bf16.gmra.mrb[0].mxu0 %v848
        %v1032 = vpop.f32.mrb[0].mxu0
        %v1033 = vadd.f32 %v627, %v1032
        %v1034 = vpop.f32.mrb[0].mxu0
        %v1035 = vpop.f32.mrb[0].mxu0
        %v1036 = vadd.f32 %v627, %v1035
        %v1037 = vpop.f32.mrb[0].mxu0
        %1038 = vmatprep.mubr.bf16.mxu0 0
        %1039 = vmatmul.mubr.bf16.gmra.mrb[0].mxu0 %v851
        %v1040 = vpop.f32.mrb[0].mxu0
        %v1041 = vadd.f32 %v627, %v1040
        %v1042 = vpop.f32.mrb[0].mxu0
        %v1043 = vpop.f32.mrb[0].mxu0
        %v1044 = vadd.f32 %v627, %v1043
        %v1045 = vpop.f32.mrb[0].mxu0
        %1046 = vmatprep.mubr.bf16.mxu0 0
        %1047 = vmatmul.mubr.bf16.gmra.mrb[0].mxu0 %v854
        %v1048 = vpop.f32.mrb[0].mxu0
        %v1049 = vadd.f32 %v627, %v1048
        %v1050 = vpop.f32.mrb[0].mxu0
        %v1051 = vpop.f32.mrb[0].mxu0
        %v1052 = vadd.f32 %v627, %v1051
        %v1053 = vpop.f32.mrb[0].mxu0
        %1054 = vmatprep.mubr.bf16.mxu0 0
        %1055 = vmatmul.mubr.bf16.gmra.mrb[0].mxu0 %v857
        %v1056 = vpop.f32.mrb[0].mxu0
        %v1057 = vadd.f32 %v627, %v1056
        %v1058 = vpop.f32.mrb[0].mxu0
        %v1059 = vpop.f32.mrb[0].mxu0
        %v1060 = vadd.f32 %v627, %v1059
        %v1061 = vpop.f32.mrb[0].mxu0
        %1062 = vmatprep.mubr.bf16.mxu0 0
        %1063 = vmatmul.mubr.bf16.gmra.mrb[0].mxu0 %v860
        %v1064 = vpop.f32.mrb[0].mxu0
        %v1065 = vadd.f32 %v627, %v1064
        %v1066 = vpop.f32.mrb[0].mxu0
        %v1067 = vpop.f32.mrb[0].mxu0
        %v1068 = vadd.f32 %v627, %v1067
        %v1069 = vpop.f32.mrb[0].mxu0
        %1070 = vmatprep.mubr.bf16.mxu0 0
        %1071 = vmatmul.mubr.bf16.gmra.mrb[0].mxu0 %v863
        %v1072 = vpop.f32.mrb[0].mxu0
        %v1073 = vadd.f32 %v627, %v1072
        %v1074 = vpop.f32.mrb[0].mxu0
        %v1075 = vpop.f32.mrb[0].mxu0
        %v1076 = vadd.f32 %v627, %v1075
        %v1077 = vpop.f32.mrb[0].mxu0
        %1078 = vmatprep.mubr.bf16.mxu0 0
        %1079 = vmatmul.mubr.bf16.gmra.mrb[0].mxu0 %v866
        %v1080 = vpop.f32.mrb[0].mxu0
        %v1081 = vadd.f32 %v627, %v1080
        %v1082 = vpop.f32.mrb[0].mxu0
        %v1083 = vpop.f32.mrb[0].mxu0
        %v1084 = vadd.f32 %v627, %v1083
        %v1085 = vpop.f32.mrb[0].mxu0
        %1086 = vmatprep.mubr.bf16.mxu0 0
        %1087 = vmatmul.mubr.bf16.gmra.mrb[0].mxu0 %v869
        %v1088 = vpop.f32.mrb[0].mxu0
        %v1089 = vadd.f32 %v627, %v1088
        %v1090 = vpop.f32.mrb[0].mxu0
        %v1091 = vpop.f32.mrb[0].mxu0
        %v1092 = vadd.f32 %v627, %v1091
        %v1093 = vpop.f32.mrb[0].mxu0
        %1094 = vmatprep.mubr.bf16.mxu0 0
        %1095 = vmatmul.mubr.bf16.gmra.mrb[0].mxu0 %v872
        %v1096 = vpop.f32.mrb[0].mxu0
        %v1097 = vadd.f32 %v627, %v1096
        %v1098 = vpop.f32.mrb[0].mxu0
        %v1099 = vpop.f32.mrb[0].mxu0
        %v1100 = vadd.f32 %v627, %v1099
        %v1101 = vpop.f32.mrb[0].mxu0
        %1102 = vmatprep.mubr.bf16.mxu0 0
        %1103 = vmatmul.mubr.bf16.gmra.mrb[0].mxu0 %v875
        %v1104 = vpop.f32.mrb[0].mxu0
        %v1105 = vadd.f32 %v627, %v1104
        %v1106 = vpop.f32.mrb[0].mxu0
        %v1107 = vpop.f32.mrb[0].mxu0
        %v1108 = vadd.f32 %v627, %v1107
        %v1109 = vpop.f32.mrb[0].mxu0
        %1110 = vmatprep.mubr.bf16.mxu0 0
        %1111 = vmatmul.mubr.bf16.gmra.mrb[0].mxu0 %v878
        %v1112 = vpop.f32.mrb[0].mxu0
        %v1113 = vadd.f32 %v627, %v1112
        %v1114 = vpop.f32.mrb[0].mxu0
        %v1115 = vpop.f32.mrb[0].mxu0
        %v1116 = vadd.f32 %v627, %v1115
        %v1117 = vpop.f32.mrb[0].mxu0
        %1118 = vmatprep.mubr.bf16.mxu0 0
        %1119 = vmatmul.mubr.bf16.gmra.mrb[0].mxu0 %v881
        %v1120 = vpop.f32.mrb[0].mxu0
        %v1121 = vadd.f32 %v627, %v1120
        %v1122 = vpop.f32.mrb[0].mxu0
        %v1123 = vpop.f32.mrb[0].mxu0
        %v1124 = vadd.f32 %v627, %v1123
        %v1125 = vpop.f32.mrb[0].mxu0
        %1126 = vmatprep.mubr.bf16.mxu0 0
        %1127 = vmatmul.mubr.bf16.gmra.mrb[0].mxu0 %v884
        %v1128 = vpop.f32.mrb[0].mxu0
        %v1129 = vadd.f32 %v627, %v1128
        %v1130 = vpop.f32.mrb[0].mxu0
        %v1131 = vpop.f32.mrb[0].mxu0
        %v1132 = vadd.f32 %v627, %v1131
        %v1133 = vpop.f32.mrb[0].mxu0
        %1134 = vmatprep.mubr.bf16.mxu0 0
        %1135 = vmatmul.mubr.bf16.gmra.mrb[0].mxu0 %v887
        %v1136 = vpop.f32.mrb[0].mxu0
        %v1137 = vadd.f32 %v627, %v1136
        %v1138 = vpop.f32.mrb[0].mxu0
        %v1139 = vpop.f32.mrb[0].mxu0
        %v1140 = vadd.f32 %v627, %v1139
        %v1141 = vpop.f32.mrb[0].mxu0
        %1142 = vmatprep.mubr.bf16.mxu0 0
        %1143 = vmatmul.mubr.bf16.gmra.mrb[0].mxu0 %v890
        %v1144 = vpop.f32.mrb[0].mxu0
        %v1145 = vadd.f32 %v627, %v1144
        %v1146 = vpop.f32.mrb[0].mxu0
        %v1147 = vpop.f32.mrb[0].mxu0
        %v1148 = vadd.f32 %v627, %v1147
        %v1149 = vpop.f32.mrb[0].mxu0
        %1150 = vmatprep.mubr.bf16.mxu0 0
        %1151 = vmatmul.mubr.bf16.gmra.mrb[0].mxu0 %v893
        %v1152 = vpop.f32.mrb[0].mxu0
        %v1153 = vadd.f32 %v627, %v1152
        %v1154 = vpop.f32.mrb[0].mxu0
        %v1155 = vpop.f32.mrb[0].mxu0
        %v1156 = vadd.f32 %v627, %v1155
        %v1157 = vpop.f32.mrb[0].mxu0
        %1158 = vmatprep.mubr.bf16.mxu0 0
        %1159 = vmatmul.mubr.bf16.gmra.mrb[0].mxu0 %v896
        %v1160 = vpop.f32.mrb[0].mxu0
        %v1161 = vadd.f32 %v627, %v1160
        %v1162 = vpop.f32.mrb[0].mxu0
        %v1163 = vpop.f32.mrb[0].mxu0
        %v1164 = vadd.f32 %v627, %v1163
        %v1165 = vpop.f32.mrb[0].mxu0
        %1166 = vmatprep.mubr.bf16.mxu0 0
        %1167 = vmatmul.mubr.bf16.gmra.mrb[0].mxu0 %v899
        %v1168 = vpop.f32.mrb[0].mxu0
        %v1169 = vadd.f32 %v627, %v1168
        %v1170 = vpop.f32.mrb[0].mxu0
        %v1171 = vpop.f32.mrb[0].mxu0
        %v1172 = vadd.f32 %v627, %v1171
        %v1173 = vpop.f32.mrb[0].mxu0
        %1174 = vmatprep.mubr.bf16.mxu0 0
        %1175 = vmatmul.mubr.bf16.gmra.mrb[0].mxu0 %v902
        %v1176 = vpop.f32.mrb[0].mxu0
        %v1177 = vadd.f32 %v627, %v1176
        %v1178 = vpop.f32.mrb[0].mxu0
        %v1179 = vpop.f32.mrb[0].mxu0
        %v1180 = vadd.f32 %v627, %v1179
        %v1181 = vpop.f32.mrb[0].mxu0
        %1182 = vmatprep.mubr.bf16.mxu0 0
        %1183 = vmatmul.mubr.bf16.gmra.mrb[0].mxu0 %v905
        %v1184 = vpop.f32.mrb[0].mxu0
        %v1185 = vadd.f32 %v627, %v1184
        %v1186 = vpop.f32.mrb[0].mxu0
        %v1187 = vpop.f32.mrb[0].mxu0
        %v1188 = vadd.f32 %v627, %v1187
        %v1189 = vpop.f32.mrb[0].mxu0
        %1190 = vmatprep.mubr.bf16.mxu0 0
        %1191 = vmatmul.mubr.bf16.gmra.mrb[0].mxu0 %v908
        %v1192 = vpop.f32.mrb[0].mxu0
        %v1193 = vadd.f32 %v627, %v1192
        %v1194 = vpop.f32.mrb[0].mxu0
        %v1195 = vpop.f32.mrb[0].mxu0
        %v1196 = vadd.f32 %v627, %v1195
        %v1197 = vpop.f32.mrb[0].mxu0
        %1198 = vdwg.mxu0
        %v1199 = vmax.f32 %v945, 0.0
        %v1200 = vmax.f32 %v948, 0.0
        %v1201 = vmax.f32 %v953, 0.0
        %v1202 = vmax.f32 %v956, 0.0
        %v1203 = vmax.f32 %v961, 0.0
        %v1204 = vmax.f32 %v964, 0.0
        %v1205 = vmax.f32 %v969, 0.0
        %v1206 = vmax.f32 %v972, 0.0
        %v1207 = vmax.f32 %v977, 0.0
        %v1208 = vmax.f32 %v980, 0.0
        %v1209 = vmax.f32 %v985, 0.0
        %v1210 = vmax.f32 %v988, 0.0
        %v1211 = vmax.f32 %v993, 0.0
        %v1212 = vmax.f32 %v996, 0.0
        %v1213 = vmax.f32 %v1001, 0.0
        %v1214 = vmax.f32 %v1004, 0.0
        %v1215 = vmax.f32 %v1009, 0.0
        %v1216 = vmax.f32 %v1012, 0.0
        %v1217 = vmax.f32 %v1017, 0.0
        %v1218 = vmax.f32 %v1020, 0.0
        %v1219 = vmax.f32 %v1025, 0.0
        %v1220 = vmax.f32 %v1028, 0.0
        %v1221 = vmax.f32 %v1033, 0.0
        %v1222 = vmax.f32 %v1036, 0.0
        %v1223 = vmax.f32 %v1041, 0.0
        %v1224 = vmax.f32 %v1044, 0.0
        %v1225 = vmax.f32 %v1049, 0.0
        %v1226 = vmax.f32 %v1052, 0.0
        %v1227 = vmax.f32 %v1057, 0.0
        %v1228 = vmax.f32 %v1060, 0.0
        %v1229 = vmax.f32 %v1065, 0.0
        %v1230 = vmax.f32 %v1068, 0.0
        %v1231 = vmax.f32 %v1073, 0.0
        %v1232 = vmax.f32 %v1076, 0.0
        %v1233 = vmax.f32 %v1081, 0.0
        %v1234 = vmax.f32 %v1084, 0.0
        %v1235 = vmax.f32 %v1089, 0.0
        %v1236 = vmax.f32 %v1092, 0.0
        %v1237 = vmax.f32 %v1097, 0.0
        %v1238 = vmax.f32 %v1100, 0.0
        %v1239 = vmax.f32 %v1105, 0.0
        %v1240 = vmax.f32 %v1108, 0.0
        %v1241 = vmax.f32 %v1113, 0.0
        %v1242 = vmax.f32 %v1116, 0.0
        %v1243 = vmax.f32 %v1121, 0.0
        %v1244 = vmax.f32 %v1124, 0.0
        %v1245 = vmax.f32 %v1129, 0.0
        %v1246 = vmax.f32 %v1132, 0.0
        %v1247 = vmax.f32 %v1137, 0.0
        %v1248 = vmax.f32 %v1140, 0.0
        %v1249 = vmax.f32 %v1145, 0.0
        %v1250 = vmax.f32 %v1148, 0.0
        %v1251 = vmax.f32 %v1153, 0.0
        %v1252 = vmax.f32 %v1156, 0.0
        %v1253 = vmax.f32 %v1161, 0.0
        %v1254 = vmax.f32 %v1164, 0.0
        %v1255 = vmax.f32 %v1169, 0.0
        %v1256 = vmax.f32 %v1172, 0.0
        %v1257 = vmax.f32 %v1177, 0.0
        %v1258 = vmax.f32 %v1180, 0.0
        %v1259 = vmax.f32 %v1185, 0.0
        %v1260 = vmax.f32 %v1188, 0.0
        %v1261 = vmax.f32 %v1193, 0.0
        %v1262 = vmax.f32 %v1196, 0.0
        %vm1263 = vcmask 130048
        %1264 = vst.msk [vmem:[#allocation2] sm:$0xff] %vm1263, %v1199
        %1265 = vst.msk [vmem:[#allocation2 + $0x8] sm:$0xff] %vm1263, %v1200
        %1266 = vst.msk [vmem:[#allocation2 + $0x10] sm:$0xff] %vm1263, %v1201
        %1267 = vst.msk [vmem:[#allocation2 + $0x18] sm:$0xff] %vm1263, %v1202
        %1268 = vst.msk [vmem:[#allocation2 + $0x20] sm:$0xff] %vm1263, %v1203
        %1269 = vst.msk [vmem:[#allocation2 + $0x28] sm:$0xff] %vm1263, %v1204
        %1270 = vst.msk [vmem:[#allocation2 + $0x30] sm:$0xff] %vm1263, %v1205
        %1271 = vst.msk [vmem:[#allocation2 + $0x38] sm:$0xff] %vm1263, %v1206
        %1272 = vst.msk [vmem:[#allocation2 + $0x40] sm:$0xff] %vm1263, %v1207
        %1273 = vst.msk [vmem:[#allocation2 + $0x48] sm:$0xff] %vm1263, %v1208
        %1274 = vst.msk [vmem:[#allocation2 + $0x50] sm:$0xff] %vm1263, %v1209
        %1275 = vst.msk [vmem:[#allocation2 + $0x58] sm:$0xff] %vm1263, %v1210
        %1276 = vst.msk [vmem:[#allocation2 + $0x60] sm:$0xff] %vm1263, %v1211
        %1277 = vst.msk [vmem:[#allocation2 + $0x68] sm:$0xff] %vm1263, %v1212
        %1278 = vst.msk [vmem:[#allocation2 + $0x70] sm:$0xff] %vm1263, %v1213
        %1279 = vst.msk [vmem:[#allocation2 + $0x78] sm:$0xff] %vm1263, %v1214
        %1280 = vst.msk [vmem:[#allocation2 + $0x80] sm:$0xff] %vm1263, %v1215
        %1281 = vst.msk [vmem:[#allocation2 + $0x88] sm:$0xff] %vm1263, %v1216
        %1282 = vst.msk [vmem:[#allocation2 + $0x90] sm:$0xff] %vm1263, %v1217
        %1283 = vst.msk [vmem:[#allocation2 + $0x98] sm:$0xff] %vm1263, %v1218
        %1284 = vst.msk [vmem:[#allocation2 + $0xa0] sm:$0xff] %vm1263, %v1219
        %1285 = vst.msk [vmem:[#allocation2 + $0xa8] sm:$0xff] %vm1263, %v1220
        %1286 = vst.msk [vmem:[#allocation2 + $0xb0] sm:$0xff] %vm1263, %v1221
        %1287 = vst.msk [vmem:[#allocation2 + $0xb8] sm:$0xff] %vm1263, %v1222
        %1288 = vst.msk [vmem:[#allocation2 + $0xc0] sm:$0xff] %vm1263, %v1223
        %1289 = vst.msk [vmem:[#allocation2 + $0xc8] sm:$0xff] %vm1263, %v1224
        %1290 = vst.msk [vmem:[#allocation2 + $0xd0] sm:$0xff] %vm1263, %v1225
        %1291 = vst.msk [vmem:[#allocation2 + $0xd8] sm:$0xff] %vm1263, %v1226
        %1292 = vst.msk [vmem:[#allocation2 + $0xe0] sm:$0xff] %vm1263, %v1227
        %1293 = vst.msk [vmem:[#allocation2 + $0xe8] sm:$0xff] %vm1263, %v1228
        %1294 = vst.msk [vmem:[#allocation2 + $0xf0] sm:$0xff] %vm1263, %v1229
        %1295 = vst.msk [vmem:[#allocation2 + $0xf8] sm:$0xff] %vm1263, %v1230
        %1296 = vst.msk [vmem:[#allocation2 + $0x100] sm:$0xff] %vm1263, %v1231
        %1297 = vst.msk [vmem:[#allocation2 + $0x108] sm:$0xff] %vm1263, %v1232
        %1298 = vst.msk [vmem:[#allocation2 + $0x110] sm:$0xff] %vm1263, %v1233
        %1299 = vst.msk [vmem:[#allocation2 + $0x118] sm:$0xff] %vm1263, %v1234
        %1300 = vst.msk [vmem:[#allocation2 + $0x120] sm:$0xff] %vm1263, %v1235
        %1301 = vst.msk [vmem:[#allocation2 + $0x128] sm:$0xff] %vm1263, %v1236
        %1302 = vst.msk [vmem:[#allocation2 + $0x130] sm:$0xff] %vm1263, %v1237
        %1303 = vst.msk [vmem:[#allocation2 + $0x138] sm:$0xff] %vm1263, %v1238
        %1304 = vst.msk [vmem:[#allocation2 + $0x140] sm:$0xff] %vm1263, %v1239
        %1305 = vst.msk [vmem:[#allocation2 + $0x148] sm:$0xff] %vm1263, %v1240
        %1306 = vst.msk [vmem:[#allocation2 + $0x150] sm:$0xff] %vm1263, %v1241
        %1307 = vst.msk [vmem:[#allocation2 + $0x158] sm:$0xff] %vm1263, %v1242
        %1308 = vst.msk [vmem:[#allocation2 + $0x160] sm:$0xff] %vm1263, %v1243
        %1309 = vst.msk [vmem:[#allocation2 + $0x168] sm:$0xff] %vm1263, %v1244
        %1310 = vst.msk [vmem:[#allocation2 + $0x170] sm:$0xff] %vm1263, %v1245
        %1311 = vst.msk [vmem:[#allocation2 + $0x178] sm:$0xff] %vm1263, %v1246
        %1312 = vst.msk [vmem:[#allocation2 + $0x180] sm:$0xff] %vm1263, %v1247
        %1313 = vst.msk [vmem:[#allocation2 + $0x188] sm:$0xff] %vm1263, %v1248
        %1314 = vst.msk [vmem:[#allocation2 + $0x190] sm:$0xff] %vm1263, %v1249
        %1315 = vst.msk [vmem:[#allocation2 + $0x198] sm:$0xff] %vm1263, %v1250
        %1316 = vst.msk [vmem:[#allocation2 + $0x1a0] sm:$0xff] %vm1263, %v1251
        %1317 = vst.msk [vmem:[#allocation2 + $0x1a8] sm:$0xff] %vm1263, %v1252
        %1318 = vst.msk [vmem:[#allocation2 + $0x1b0] sm:$0xff] %vm1263, %v1253
        %1319 = vst.msk [vmem:[#allocation2 + $0x1b8] sm:$0xff] %vm1263, %v1254
        %1320 = vst.msk [vmem:[#allocation2 + $0x1c0] sm:$0xff] %vm1263, %v1255
        %1321 = vst.msk [vmem:[#allocation2 + $0x1c8] sm:$0xff] %vm1263, %v1256
        %1322 = vst.msk [vmem:[#allocation2 + $0x1d0] sm:$0xff] %vm1263, %v1257
        %1323 = vst.msk [vmem:[#allocation2 + $0x1d8] sm:$0xff] %vm1263, %v1258
        %1324 = vst.msk [vmem:[#allocation2 + $0x1e0] sm:$0xff] %vm1263, %v1259
        %1325 = vst.msk [vmem:[#allocation2 + $0x1e8] sm:$0xff] %vm1263, %v1260
        %1326 = vst.msk [vmem:[#allocation2 + $0x1f0] sm:$0xff] %vm1263, %v1261
        %1327 = vst.msk [vmem:[#allocation2 + $0x1f8] sm:$0xff] %vm1263, %v1262
        %v1328 = vld [vmem:[#allocation2] ss:$2 sm:$0xff]
        %s1329 = scalar_lea.vmem [#allocation2], 16
        %v1330 = vld [vmem:[%s1329] ss:$2 sm:$0xff]
        %s1331 = scalar_lea.vmem [#allocation2], 32
        %v1332 = vld [vmem:[%s1331] ss:$2 sm:$0xff]
        %s1333 = scalar_lea.vmem [#allocation2], 48
        %v1334 = vld [vmem:[%s1333] ss:$2 sm:$0xff]
        %s1335 = scalar_lea.vmem [#allocation2], 64
        %v1336 = vld [vmem:[%s1335] ss:$2 sm:$0xff]
        %s1337 = scalar_lea.vmem [#allocation2], 80
        %v1338 = vld [vmem:[%s1337] ss:$2 sm:$0xff]
        %s1339 = scalar_lea.vmem [#allocation2], 96
        %v1340 = vld [vmem:[%s1339] ss:$2 sm:$0xff]
        %s1341 = scalar_lea.vmem [#allocation2], 112
        %v1342 = vld [vmem:[%s1341] ss:$2 sm:$0xff]
        %s1343 = scalar_lea.vmem [#allocation2], 128
        %v1344 = vld [vmem:[%s1343] ss:$2 sm:$0xff]
        %s1345 = scalar_lea.vmem [#allocation2], 144
        %v1346 = vld [vmem:[%s1345] ss:$2 sm:$0xff]
        %s1347 = scalar_lea.vmem [#allocation2], 160
        %v1348 = vld [vmem:[%s1347] ss:$2 sm:$0xff]
        %s1349 = scalar_lea.vmem [#allocation2], 176
        %v1350 = vld [vmem:[%s1349] ss:$2 sm:$0xff]
        %s1351 = scalar_lea.vmem [#allocation2], 192
        %v1352 = vld [vmem:[%s1351] ss:$2 sm:$0xff]
        %s1353 = scalar_lea.vmem [#allocation2], 208
        %v1354 = vld [vmem:[%s1353] ss:$2 sm:$0xff]
        %s1355 = scalar_lea.vmem [#allocation2], 224
        %v1356 = vld [vmem:[%s1355] ss:$2 sm:$0xff]
        %s1357 = scalar_lea.vmem [#allocation2], 240
        %v1358 = vld [vmem:[%s1357] ss:$2 sm:$0xff]
        %s1359 = scalar_lea.vmem [#allocation2], 256
        %v1360 = vld [vmem:[%s1359] ss:$2 sm:$0xff]
        %s1361 = scalar_lea.vmem [#allocation2], 272
        %v1362 = vld [vmem:[%s1361] ss:$2 sm:$0xff]
        %s1363 = scalar_lea.vmem [#allocation2], 288
        %v1364 = vld [vmem:[%s1363] ss:$2 sm:$0xff]
        %s1365 = scalar_lea.vmem [#allocation2], 304
        %v1366 = vld [vmem:[%s1365] ss:$2 sm:$0xff]
        %s1367 = scalar_lea.vmem [#allocation2], 320
        %v1368 = vld [vmem:[%s1367] ss:$2 sm:$0xff]
        %s1369 = scalar_lea.vmem [#allocation2], 336
        %v1370 = vld [vmem:[%s1369] ss:$2 sm:$0xff]
        %s1371 = scalar_lea.vmem [#allocation2], 352
        %v1372 = vld [vmem:[%s1371] ss:$2 sm:$0xff]
        %s1373 = scalar_lea.vmem [#allocation2], 368
        %v1374 = vld [vmem:[%s1373] ss:$2 sm:$0xff]
        %s1375 = scalar_lea.vmem [#allocation2], 384
        %v1376 = vld [vmem:[%s1375] ss:$2 sm:$0xff]
        %s1377 = scalar_lea.vmem [#allocation2], 400
        %v1378 = vld [vmem:[%s1377] ss:$2 sm:$0xff]
        %s1379 = scalar_lea.vmem [#allocation2], 416
        %v1380 = vld [vmem:[%s1379] ss:$2 sm:$0xff]
        %s1381 = scalar_lea.vmem [#allocation2], 432
        %v1382 = vld [vmem:[%s1381] ss:$2 sm:$0xff]
        %s1383 = scalar_lea.vmem [#allocation2], 448
        %v1384 = vld [vmem:[%s1383] ss:$2 sm:$0xff]
        %s1385 = scalar_lea.vmem [#allocation2], 464
        %v1386 = vld [vmem:[%s1385] ss:$2 sm:$0xff]
        %s1387 = scalar_lea.vmem [#allocation2], 480
        %v1388 = vld [vmem:[%s1387] ss:$2 sm:$0xff]
        %s1389 = scalar_lea.vmem [#allocation2], 496
        %v1390 = vld [vmem:[%s1389] ss:$2 sm:$0xff]
        %s1391 = scalar_lea.vmem [#allocation2], 1
        %v1392 = vld [vmem:[%s1391] ss:$2 sm:$0xff]
        %s1393 = scalar_lea.vmem [#allocation2], 17
        %v1394 = vld [vmem:[%s1393] ss:$2 sm:$0xff]
        %s1395 = scalar_lea.vmem [#allocation2], 33
        %v1396 = vld [vmem:[%s1395] ss:$2 sm:$0xff]
        %s1397 = scalar_lea.vmem [#allocation2], 49
        %v1398 = vld [vmem:[%s1397] ss:$2 sm:$0xff]
        %s1399 = scalar_lea.vmem [#allocation2], 65
        %v1400 = vld [vmem:[%s1399] ss:$2 sm:$0xff]
        %s1401 = scalar_lea.vmem [#allocation2], 81
        %v1402 = vld [vmem:[%s1401] ss:$2 sm:$0xff]
        %s1403 = scalar_lea.vmem [#allocation2], 97
        %v1404 = vld [vmem:[%s1403] ss:$2 sm:$0xff]
        %s1405 = scalar_lea.vmem [#allocation2], 113
        %v1406 = vld [vmem:[%s1405] ss:$2 sm:$0xff]
        %s1407 = scalar_lea.vmem [#allocation2], 129
        %v1408 = vld [vmem:[%s1407] ss:$2 sm:$0xff]
        %s1409 = scalar_lea.vmem [#allocation2], 145
        %v1410 = vld [vmem:[%s1409] ss:$2 sm:$0xff]
        %s1411 = scalar_lea.vmem [#allocation2], 161
        %v1412 = vld [vmem:[%s1411] ss:$2 sm:$0xff]
        %s1413 = scalar_lea.vmem [#allocation2], 177
        %v1414 = vld [vmem:[%s1413] ss:$2 sm:$0xff]
        %s1415 = scalar_lea.vmem [#allocation2], 193
        %v1416 = vld [vmem:[%s1415] ss:$2 sm:$0xff]
        %s1417 = scalar_lea.vmem [#allocation2], 209
        %v1418 = vld [vmem:[%s1417] ss:$2 sm:$0xff]
        %s1419 = scalar_lea.vmem [#allocation2], 225
        %v1420 = vld [vmem:[%s1419] ss:$2 sm:$0xff]
        %s1421 = scalar_lea.vmem [#allocation2], 241
        %v1422 = vld [vmem:[%s1421] ss:$2 sm:$0xff]
        %s1423 = scalar_lea.vmem [#allocation2], 257
        %v1424 = vld [vmem:[%s1423] ss:$2 sm:$0xff]
        %s1425 = scalar_lea.vmem [#allocation2], 273
        %v1426 = vld [vmem:[%s1425] ss:$2 sm:$0xff]
        %s1427 = scalar_lea.vmem [#allocation2], 289
        %v1428 = vld [vmem:[%s1427] ss:$2 sm:$0xff]
        %s1429 = scalar_lea.vmem [#allocation2], 305
        %v1430 = vld [vmem:[%s1429] ss:$2 sm:$0xff]
        %s1431 = scalar_lea.vmem [#allocation2], 321
        %v1432 = vld [vmem:[%s1431] ss:$2 sm:$0xff]
        %s1433 = scalar_lea.vmem [#allocation2], 337
        %v1434 = vld [vmem:[%s1433] ss:$2 sm:$0xff]
        %s1435 = scalar_lea.vmem [#allocation2], 353
        %v1436 = vld [vmem:[%s1435] ss:$2 sm:$0xff]
        %s1437 = scalar_lea.vmem [#allocation2], 369
        %v1438 = vld [vmem:[%s1437] ss:$2 sm:$0xff]
        %s1439 = scalar_lea.vmem [#allocation2], 385
        %v1440 = vld [vmem:[%s1439] ss:$2 sm:$0xff]
        %s1441 = scalar_lea.vmem [#allocation2], 401
        %v1442 = vld [vmem:[%s1441] ss:$2 sm:$0xff]
        %s1443 = scalar_lea.vmem [#allocation2], 417
        %v1444 = vld [vmem:[%s1443] ss:$2 sm:$0xff]
        %s1445 = scalar_lea.vmem [#allocation2], 433
        %v1446 = vld [vmem:[%s1445] ss:$2 sm:$0xff]
        %s1447 = scalar_lea.vmem [#allocation2], 449
        %v1448 = vld [vmem:[%s1447] ss:$2 sm:$0xff]
        %s1449 = scalar_lea.vmem [#allocation2], 465
        %v1450 = vld [vmem:[%s1449] ss:$2 sm:$0xff]
        %s1451 = scalar_lea.vmem [#allocation2], 481
        %v1452 = vld [vmem:[%s1451] ss:$2 sm:$0xff]
        %s1453 = scalar_lea.vmem [#allocation2], 497
        %v1454 = vld [vmem:[%s1453] ss:$2 sm:$0xff]
        %v1455 = vmax.f32 %v1328, %v1392
        %v1456 = vmax.f32 %v1330, %v1394
        %v1457 = vmax.f32 %v1332, %v1396
        %v1458 = vmax.f32 %v1334, %v1398
        %v1459 = vmax.f32 %v1336, %v1400
        %v1460 = vmax.f32 %v1338, %v1402
        %v1461 = vmax.f32 %v1340, %v1404
        %v1462 = vmax.f32 %v1342, %v1406
        %v1463 = vmax.f32 %v1344, %v1408
        %v1464 = vmax.f32 %v1346, %v1410
        %v1465 = vmax.f32 %v1348, %v1412
        %v1466 = vmax.f32 %v1350, %v1414
        %v1467 = vmax.f32 %v1352, %v1416
        %v1468 = vmax.f32 %v1354, %v1418
        %v1469 = vmax.f32 %v1356, %v1420
        %v1470 = vmax.f32 %v1358, %v1422
        %v1471 = vmax.f32 %v1360, %v1424
        %v1472 = vmax.f32 %v1362, %v1426
        %v1473 = vmax.f32 %v1364, %v1428
        %v1474 = vmax.f32 %v1366, %v1430
        %v1475 = vmax.f32 %v1368, %v1432
        %v1476 = vmax.f32 %v1370, %v1434
        %v1477 = vmax.f32 %v1372, %v1436
        %v1478 = vmax.f32 %v1374, %v1438
        %v1479 = vmax.f32 %v1376, %v1440
        %v1480 = vmax.f32 %v1378, %v1442
        %v1481 = vmax.f32 %v1380, %v1444
        %v1482 = vmax.f32 %v1382, %v1446
        %v1483 = vmax.f32 %v1384, %v1448
        %v1484 = vmax.f32 %v1386, %v1450
        %v1485 = vmax.f32 %v1388, %v1452
        %v1486 = vmax.f32 %v1390, %v1454
        %1487 = vst.msk [vmem:[#allocation2 + $0x1] sm:$0xff] %vm1263, %v1455
        %1488 = vst.msk [vmem:[#allocation2 + $0x9] sm:$0xff] %vm1263, %v1456
        %1489 = vst.msk [vmem:[#allocation2 + $0x11] sm:$0xff] %vm1263, %v1457
        %1490 = vst.msk [vmem:[#allocation2 + $0x19] sm:$0xff] %vm1263, %v1458
        %1491 = vst.msk [vmem:[#allocation2 + $0x21] sm:$0xff] %vm1263, %v1459
        %1492 = vst.msk [vmem:[#allocation2 + $0x29] sm:$0xff] %vm1263, %v1460
        %1493 = vst.msk [vmem:[#allocation2 + $0x31] sm:$0xff] %vm1263, %v1461
        %1494 = vst.msk [vmem:[#allocation2 + $0x39] sm:$0xff] %vm1263, %v1462
        %1495 = vst.msk [vmem:[#allocation2 + $0x41] sm:$0xff] %vm1263, %v1463
        %1496 = vst.msk [vmem:[#allocation2 + $0x49] sm:$0xff] %vm1263, %v1464
        %1497 = vst.msk [vmem:[#allocation2 + $0x51] sm:$0xff] %vm1263, %v1465
        %1498 = vst.msk [vmem:[#allocation2 + $0x59] sm:$0xff] %vm1263, %v1466
        %1499 = vst.msk [vmem:[#allocation2 + $0x61] sm:$0xff] %vm1263, %v1467
        %1500 = vst.msk [vmem:[#allocation2 + $0x69] sm:$0xff] %vm1263, %v1468
        %1501 = vst.msk [vmem:[#allocation2 + $0x71] sm:$0xff] %vm1263, %v1469
        %1502 = vst.msk [vmem:[#allocation2 + $0x79] sm:$0xff] %vm1263, %v1470
        %1503 = vst.msk [vmem:[#allocation2 + $0x81] sm:$0xff] %vm1263, %v1471
        %1504 = vst.msk [vmem:[#allocation2 + $0x89] sm:$0xff] %vm1263, %v1472
        %1505 = vst.msk [vmem:[#allocation2 + $0x91] sm:$0xff] %vm1263, %v1473
        %1506 = vst.msk [vmem:[#allocation2 + $0x99] sm:$0xff] %vm1263, %v1474
        %1507 = vst.msk [vmem:[#allocation2 + $0xa1] sm:$0xff] %vm1263, %v1475
        %1508 = vst.msk [vmem:[#allocation2 + $0xa9] sm:$0xff] %vm1263, %v1476
        %1509 = vst.msk [vmem:[#allocation2 + $0xb1] sm:$0xff] %vm1263, %v1477
        %1510 = vst.msk [vmem:[#allocation2 + $0xb9] sm:$0xff] %vm1263, %v1478
        %1511 = vst.msk [vmem:[#allocation2 + $0xc1] sm:$0xff] %vm1263, %v1479
        %1512 = vst.msk [vmem:[#allocation2 + $0xc9] sm:$0xff] %vm1263, %v1480
        %1513 = vst.msk [vmem:[#allocation2 + $0xd1] sm:$0xff] %vm1263, %v1481
        %1514 = vst.msk [vmem:[#allocation2 + $0xd9] sm:$0xff] %vm1263, %v1482
        %1515 = vst.msk [vmem:[#allocation2 + $0xe1] sm:$0xff] %vm1263, %v1483
        %1516 = vst.msk [vmem:[#allocation2 + $0xe9] sm:$0xff] %vm1263, %v1484
        %1517 = vst.msk [vmem:[#allocation2 + $0xf1] sm:$0xff] %vm1263, %v1485
        %1518 = vst.msk [vmem:[#allocation2 + $0xf9] sm:$0xff] %vm1263, %v1486
        %v1519 = vlaneseq
        %v1520 = vshrl.u32 %v1519, 7
        %v1521 = vadd.s32 %v1520, 8
        %v1522 = vadd.s32 %v1520, 16
        %v1523 = vadd.s32 %v1520, 24
        %v1524 = vadd.s32 %v1520, 32
        %v1525 = vadd.s32 %v1520, 40
        %v1526 = vadd.s32 %v1520, 48
        %v1527 = vadd.s32 %v1520, 56
        %v1528 = vadd.s32 %v1520, 64
        %v1529 = vadd.s32 %v1520, 72
        %v1530 = vadd.s32 %v1520, 80
        %v1531 = vadd.s32 %v1520, 88
        %v1532 = vadd.s32 %v1520, 96
        %v1533 = vadd.s32 %v1520, 104
        %v1534 = vadd.s32 %v1520, 112
        %v1535 = vadd.s32 %v1520, 120
        %v1536 = vadd.s32 %v1520, 128
        %v1537 = vadd.s32 %v1520, 136
        %v1538 = vadd.s32 %v1520, 144
        %v1539 = vadd.s32 %v1520, 152
        %v1540 = vadd.s32 %v1520, 160
        %v1541 = vadd.s32 %v1520, 168
        %v1542 = vadd.s32 %v1520, 176
        %v1543 = vadd.s32 %v1520, 184
        %v1544 = vadd.s32 %v1520, 192
        %v1545 = vadd.s32 %v1520, 200
        %v1546 = vadd.s32 %v1520, 208
        %v1547 = vadd.s32 %v1520, 216
        %v1548 = vadd.s32 %v1520, 224
        %v1549 = vadd.s32 %v1520, 232
        %v1550 = vadd.s32 %v1520, 240
        %v1551 = vadd.s32 %v1520, 248
        %vm1552 = vcmp.lt.s32.totalorder %v1520, 0
        %v1553 = vsub.s32 0, %v1520
        %v1554 = vsel %vm1552, %v1553, %v1520
        %v1555 = vshrl.u32 %v1554, 5
        %v1556 = vand.u32 %v1554, 31
        %v1557 = vsub.s32 0, %v1556
        %v1558 = vsel %vm1552, %v1557, %v1556
        %vm1559 = vcmp.lt.s32.totalorder %v1521, 0
        %v1560 = vsub.s32 0, %v1521
        %v1561 = vsel %vm1559, %v1560, %v1521
        %v1562 = vshrl.u32 %v1561, 5
        %v1563 = vand.u32 %v1561, 31
        %v1564 = vsub.s32 0, %v1563
        %v1565 = vsel %vm1559, %v1564, %v1563
        %vm1566 = vcmp.lt.s32.totalorder %v1522, 0
        %v1567 = vsub.s32 0, %v1522
        %v1568 = vsel %vm1566, %v1567, %v1522
        %v1569 = vshrl.u32 %v1568, 5
        %v1570 = vand.u32 %v1568, 31
        %v1571 = vsub.s32 0, %v1570
        %v1572 = vsel %vm1566, %v1571, %v1570
        %vm1573 = vcmp.lt.s32.totalorder %v1523, 0
        %v1574 = vsub.s32 0, %v1523
        %v1575 = vsel %vm1573, %v1574, %v1523
        %v1576 = vshrl.u32 %v1575, 5
        %v1577 = vand.u32 %v1575, 31
        %v1578 = vsub.s32 0, %v1577
        %v1579 = vsel %vm1573, %v1578, %v1577
        %vm1580 = vcmp.lt.s32.totalorder %v1524, 0
        %v1581 = vsub.s32 0, %v1524
        %v1582 = vsel %vm1580, %v1581, %v1524
        %v1583 = vshrl.u32 %v1582, 5
        %v1584 = vand.u32 %v1582, 31
        %v1585 = vsub.s32 0, %v1584
        %v1586 = vsel %vm1580, %v1585, %v1584
        %vm1587 = vcmp.lt.s32.totalorder %v1525, 0
        %v1588 = vsub.s32 0, %v1525
        %v1589 = vsel %vm1587, %v1588, %v1525
        %v1590 = vshrl.u32 %v1589, 5
        %v1591 = vand.u32 %v1589, 31
        %v1592 = vsub.s32 0, %v1591
        %v1593 = vsel %vm1587, %v1592, %v1591
        %vm1594 = vcmp.lt.s32.totalorder %v1526, 0
        %v1595 = vsub.s32 0, %v1526
        %v1596 = vsel %vm1594, %v1595, %v1526
        %v1597 = vshrl.u32 %v1596, 5
        %v1598 = vand.u32 %v1596, 31
        %v1599 = vsub.s32 0, %v1598
        %v1600 = vsel %vm1594, %v1599, %v1598
        %vm1601 = vcmp.lt.s32.totalorder %v1527, 0
        %v1602 = vsub.s32 0, %v1527
        %v1603 = vsel %vm1601, %v1602, %v1527
        %v1604 = vshrl.u32 %v1603, 5
        %v1605 = vand.u32 %v1603, 31
        %v1606 = vsub.s32 0, %v1605
        %v1607 = vsel %vm1601, %v1606, %v1605
        %vm1608 = vcmp.lt.s32.totalorder %v1528, 0
        %v1609 = vsub.s32 0, %v1528
        %v1610 = vsel %vm1608, %v1609, %v1528
        %v1611 = vshrl.u32 %v1610, 5
        %v1612 = vand.u32 %v1610, 31
        %v1613 = vsub.s32 0, %v1612
        %v1614 = vsel %vm1608, %v1613, %v1612
        %vm1615 = vcmp.lt.s32.totalorder %v1529, 0
        %v1616 = vsub.s32 0, %v1529
        %v1617 = vsel %vm1615, %v1616, %v1529
        %v1618 = vshrl.u32 %v1617, 5
        %v1619 = vand.u32 %v1617, 31
        %v1620 = vsub.s32 0, %v1619
        %v1621 = vsel %vm1615, %v1620, %v1619
        %vm1622 = vcmp.lt.s32.totalorder %v1530, 0
        %v1623 = vsub.s32 0, %v1530
        %v1624 = vsel %vm1622, %v1623, %v1530
        %v1625 = vshrl.u32 %v1624, 5
        %v1626 = vand.u32 %v1624, 31
        %v1627 = vsub.s32 0, %v1626
        %v1628 = vsel %vm1622, %v1627, %v1626
        %vm1629 = vcmp.lt.s32.totalorder %v1531, 0
        %v1630 = vsub.s32 0, %v1531
        %v1631 = vsel %vm1629, %v1630, %v1531
        %v1632 = vshrl.u32 %v1631, 5
        %v1633 = vand.u32 %v1631, 31
        %v1634 = vsub.s32 0, %v1633
        %v1635 = vsel %vm1629, %v1634, %v1633
        %vm1636 = vcmp.lt.s32.totalorder %v1532, 0
        %v1637 = vsub.s32 0, %v1532
        %v1638 = vsel %vm1636, %v1637, %v1532
        %v1639 = vshrl.u32 %v1638, 5
        %v1640 = vand.u32 %v1638, 31
        %v1641 = vsub.s32 0, %v1640
        %v1642 = vsel %vm1636, %v1641, %v1640
        %vm1643 = vcmp.lt.s32.totalorder %v1533, 0
        %v1644 = vsub.s32 0, %v1533
        %v1645 = vsel %vm1643, %v1644, %v1533
        %v1646 = vshrl.u32 %v1645, 5
        %v1647 = vand.u32 %v1645, 31
        %v1648 = vsub.s32 0, %v1647
        %v1649 = vsel %vm1643, %v1648, %v1647
        %vm1650 = vcmp.lt.s32.totalorder %v1534, 0
        %v1651 = vsub.s32 0, %v1534
        %v1652 = vsel %vm1650, %v1651, %v1534
        %v1653 = vshrl.u32 %v1652, 5
        %v1654 = vand.u32 %v1652, 31
        %v1655 = vsub.s32 0, %v1654
        %v1656 = vsel %vm1650, %v1655, %v1654
        %vm1657 = vcmp.lt.s32.totalorder %v1535, 0
        %v1658 = vsub.s32 0, %v1535
        %v1659 = vsel %vm1657, %v1658, %v1535
        %v1660 = vshrl.u32 %v1659, 5
        %v1661 = vand.u32 %v1659, 31
        %v1662 = vsub.s32 0, %v1661
        %v1663 = vsel %vm1657, %v1662, %v1661
        %vm1664 = vcmp.lt.s32.totalorder %v1536, 0
        %v1665 = vsub.s32 0, %v1536
        %v1666 = vsel %vm1664, %v1665, %v1536
        %v1667 = vshrl.u32 %v1666, 5
        %v1668 = vand.u32 %v1666, 31
        %v1669 = vsub.s32 0, %v1668
        %v1670 = vsel %vm1664, %v1669, %v1668
        %vm1671 = vcmp.lt.s32.totalorder %v1537, 0
        %v1672 = vsub.s32 0, %v1537
        %v1673 = vsel %vm1671, %v1672, %v1537
        %v1674 = vshrl.u32 %v1673, 5
        %v1675 = vand.u32 %v1673, 31
        %v1676 = vsub.s32 0, %v1675
        %v1677 = vsel %vm1671, %v1676, %v1675
        %vm1678 = vcmp.lt.s32.totalorder %v1538, 0
        %v1679 = vsub.s32 0, %v1538
        %v1680 = vsel %vm1678, %v1679, %v1538
        %v1681 = vshrl.u32 %v1680, 5
        %v1682 = vand.u32 %v1680, 31
        %v1683 = vsub.s32 0, %v1682
        %v1684 = vsel %vm1678, %v1683, %v1682
        %vm1685 = vcmp.lt.s32.totalorder %v1539, 0
        %v1686 = vsub.s32 0, %v1539
        %v1687 = vsel %vm1685, %v1686, %v1539
        %v1688 = vshrl.u32 %v1687, 5
        %v1689 = vand.u32 %v1687, 31
        %v1690 = vsub.s32 0, %v1689
        %v1691 = vsel %vm1685, %v1690, %v1689
        %vm1692 = vcmp.lt.s32.totalorder %v1540, 0
        %v1693 = vsub.s32 0, %v1540
        %v1694 = vsel %vm1692, %v1693, %v1540
        %v1695 = vshrl.u32 %v1694, 5
        %v1696 = vand.u32 %v1694, 31
        %v1697 = vsub.s32 0, %v1696
        %v1698 = vsel %vm1692, %v1697, %v1696
        %vm1699 = vcmp.lt.s32.totalorder %v1541, 0
        %v1700 = vsub.s32 0, %v1541
        %v1701 = vsel %vm1699, %v1700, %v1541
        %v1702 = vshrl.u32 %v1701, 5
        %v1703 = vand.u32 %v1701, 31
        %v1704 = vsub.s32 0, %v1703
        %v1705 = vsel %vm1699, %v1704, %v1703
        %vm1706 = vcmp.lt.s32.totalorder %v1542, 0
        %v1707 = vsub.s32 0, %v1542
        %v1708 = vsel %vm1706, %v1707, %v1542
        %v1709 = vshrl.u32 %v1708, 5
        %v1710 = vand.u32 %v1708, 31
        %v1711 = vsub.s32 0, %v1710
        %v1712 = vsel %vm1706, %v1711, %v1710
        %vm1713 = vcmp.lt.s32.totalorder %v1543, 0
        %v1714 = vsub.s32 0, %v1543
        %v1715 = vsel %vm1713, %v1714, %v1543
        %v1716 = vshrl.u32 %v1715, 5
        %v1717 = vand.u32 %v1715, 31
        %v1718 = vsub.s32 0, %v1717
        %v1719 = vsel %vm1713, %v1718, %v1717
        %vm1720 = vcmp.lt.s32.totalorder %v1544, 0
        %v1721 = vsub.s32 0, %v1544
        %v1722 = vsel %vm1720, %v1721, %v1544
        %v1723 = vshrl.u32 %v1722, 5
        %v1724 = vand.u32 %v1722, 31
        %v1725 = vsub.s32 0, %v1724
        %v1726 = vsel %vm1720, %v1725, %v1724
        %vm1727 = vcmp.lt.s32.totalorder %v1545, 0
        %v1728 = vsub.s32 0, %v1545
        %v1729 = vsel %vm1727, %v1728, %v1545
        %v1730 = vshrl.u32 %v1729, 5
        %v1731 = vand.u32 %v1729, 31
        %v1732 = vsub.s32 0, %v1731
        %v1733 = vsel %vm1727, %v1732, %v1731
        %vm1734 = vcmp.lt.s32.totalorder %v1546, 0
        %v1735 = vsub.s32 0, %v1546
        %v1736 = vsel %vm1734, %v1735, %v1546
        %v1737 = vshrl.u32 %v1736, 5
        %v1738 = vand.u32 %v1736, 31
        %v1739 = vsub.s32 0, %v1738
        %v1740 = vsel %vm1734, %v1739, %v1738
        %vm1741 = vcmp.lt.s32.totalorder %v1547, 0
        %v1742 = vsub.s32 0, %v1547
        %v1743 = vsel %vm1741, %v1742, %v1547
        %v1744 = vshrl.u32 %v1743, 5
        %v1745 = vand.u32 %v1743, 31
        %v1746 = vsub.s32 0, %v1745
        %v1747 = vsel %vm1741, %v1746, %v1745
        %vm1748 = vcmp.lt.s32.totalorder %v1548, 0
        %v1749 = vsub.s32 0, %v1548
        %v1750 = vsel %vm1748, %v1749, %v1548
        %v1751 = vshrl.u32 %v1750, 5
        %v1752 = vand.u32 %v1750, 31
        %v1753 = vsub.s32 0, %v1752
        %v1754 = vsel %vm1748, %v1753, %v1752
        %vm1755 = vcmp.lt.s32.totalorder %v1549, 0
        %v1756 = vsub.s32 0, %v1549
        %v1757 = vsel %vm1755, %v1756, %v1549
        %v1758 = vshrl.u32 %v1757, 5
        %v1759 = vand.u32 %v1757, 31
        %v1760 = vsub.s32 0, %v1759
        %v1761 = vsel %vm1755, %v1760, %v1759
        %vm1762 = vcmp.lt.s32.totalorder %v1550, 0
        %v1763 = vsub.s32 0, %v1550
        %v1764 = vsel %vm1762, %v1763, %v1550
        %v1765 = vshrl.u32 %v1764, 5
        %v1766 = vand.u32 %v1764, 31
        %v1767 = vsub.s32 0, %v1766
        %v1768 = vsel %vm1762, %v1767, %v1766
        %vm1769 = vcmp.lt.s32.totalorder %v1551, 0
        %v1770 = vsub.s32 0, %v1551
        %v1771 = vsel %vm1769, %v1770, %v1551
        %v1772 = vshrl.u32 %v1771, 5
        %v1773 = vand.u32 %v1771, 31
        %v1774 = vsub.s32 0, %v1773
        %v1775 = vsel %vm1769, %v1774, %v1773
        %vm1776 = vcmp.ne.s32.totalorder %v1558, 0
        %vm1777 = vcmp.ne.s32.totalorder %v1565, 0
        %vm1778 = vcmp.ne.s32.totalorder %v1572, 0
        %vm1779 = vcmp.ne.s32.totalorder %v1579, 0
        %vm1780 = vcmp.ne.s32.totalorder %v1586, 0
        %vm1781 = vcmp.ne.s32.totalorder %v1593, 0
        %vm1782 = vcmp.ne.s32.totalorder %v1600, 0
        %vm1783 = vcmp.ne.s32.totalorder %v1607, 0
        %vm1784 = vcmp.ne.s32.totalorder %v1614, 0
        %vm1785 = vcmp.ne.s32.totalorder %v1621, 0
        %vm1786 = vcmp.ne.s32.totalorder %v1628, 0
        %vm1787 = vcmp.ne.s32.totalorder %v1635, 0
        %vm1788 = vcmp.ne.s32.totalorder %v1642, 0
        %vm1789 = vcmp.ne.s32.totalorder %v1649, 0
        %vm1790 = vcmp.ne.s32.totalorder %v1656, 0
        %vm1791 = vcmp.ne.s32.totalorder %v1663, 0
        %vm1792 = vcmp.ne.s32.totalorder %v1670, 0
        %vm1793 = vcmp.ne.s32.totalorder %v1677, 0
        %vm1794 = vcmp.ne.s32.totalorder %v1684, 0
        %vm1795 = vcmp.ne.s32.totalorder %v1691, 0
        %vm1796 = vcmp.ne.s32.totalorder %v1698, 0
        %vm1797 = vcmp.ne.s32.totalorder %v1705, 0
        %vm1798 = vcmp.ne.s32.totalorder %v1712, 0
        %vm1799 = vcmp.ne.s32.totalorder %v1719, 0
        %vm1800 = vcmp.ne.s32.totalorder %v1726, 0
        %vm1801 = vcmp.ne.s32.totalorder %v1733, 0
        %vm1802 = vcmp.ne.s32.totalorder %v1740, 0
        %vm1803 = vcmp.ne.s32.totalorder %v1747, 0
        %vm1804 = vcmp.ne.s32.totalorder %v1754, 0
        %vm1805 = vcmp.ne.s32.totalorder %v1761, 0
        %vm1806 = vcmp.ne.s32.totalorder %v1768, 0
        %vm1807 = vcmp.ne.s32.totalorder %v1775, 0
        %vm1808 = vcmp.lt.s32.totalorder %v1558, 0
        %vm1809 = vcmp.lt.s32.totalorder %v1565, 0
        %vm1810 = vcmp.lt.s32.totalorder %v1572, 0
        %vm1811 = vcmp.lt.s32.totalorder %v1579, 0
        %vm1812 = vcmp.lt.s32.totalorder %v1586, 0
        %vm1813 = vcmp.lt.s32.totalorder %v1593, 0
        %vm1814 = vcmp.lt.s32.totalorder %v1600, 0
        %vm1815 = vcmp.lt.s32.totalorder %v1607, 0
        %vm1816 = vcmp.lt.s32.totalorder %v1614, 0
        %vm1817 = vcmp.lt.s32.totalorder %v1621, 0
        %vm1818 = vcmp.lt.s32.totalorder %v1628, 0
        %vm1819 = vcmp.lt.s32.totalorder %v1635, 0
        %vm1820 = vcmp.lt.s32.totalorder %v1642, 0
        %vm1821 = vcmp.lt.s32.totalorder %v1649, 0
        %vm1822 = vcmp.lt.s32.totalorder %v1656, 0
        %vm1823 = vcmp.lt.s32.totalorder %v1663, 0
        %vm1824 = vcmp.lt.s32.totalorder %v1670, 0
        %vm1825 = vcmp.lt.s32.totalorder %v1677, 0
        %vm1826 = vcmp.lt.s32.totalorder %v1684, 0
        %vm1827 = vcmp.lt.s32.totalorder %v1691, 0
        %vm1828 = vcmp.lt.s32.totalorder %v1698, 0
        %vm1829 = vcmp.lt.s32.totalorder %v1705, 0
        %vm1830 = vcmp.lt.s32.totalorder %v1712, 0
        %vm1831 = vcmp.lt.s32.totalorder %v1719, 0
        %vm1832 = vcmp.lt.s32.totalorder %v1726, 0
        %vm1833 = vcmp.lt.s32.totalorder %v1733, 0
        %vm1834 = vcmp.lt.s32.totalorder %v1740, 0
        %vm1835 = vcmp.lt.s32.totalorder %v1747, 0
        %vm1836 = vcmp.lt.s32.totalorder %v1754, 0
        %vm1837 = vcmp.lt.s32.totalorder %v1761, 0
        %vm1838 = vcmp.lt.s32.totalorder %v1768, 0
        %vm1839 = vcmp.lt.s32.totalorder %v1775, 0
        %vm1840 = vmand %vm1808, %vm1776
        %vm1841 = vmand %vm1809, %vm1777
        %vm1842 = vmand %vm1810, %vm1778
        %vm1843 = vmand %vm1811, %vm1779
        %vm1844 = vmand %vm1812, %vm1780
        %vm1845 = vmand %vm1813, %vm1781
        %vm1846 = vmand %vm1814, %vm1782
        %vm1847 = vmand %vm1815, %vm1783
        %vm1848 = vmand %vm1816, %vm1784
        %vm1849 = vmand %vm1817, %vm1785
        %vm1850 = vmand %vm1818, %vm1786
        %vm1851 = vmand %vm1819, %vm1787
        %vm1852 = vmand %vm1820, %vm1788
        %vm1853 = vmand %vm1821, %vm1789
        %vm1854 = vmand %vm1822, %vm1790
        %vm1855 = vmand %vm1823, %vm1791
        %vm1856 = vmand %vm1824, %vm1792
        %vm1857 = vmand %vm1825, %vm1793
        %vm1858 = vmand %vm1826, %vm1794
        %vm1859 = vmand %vm1827, %vm1795
        %vm1860 = vmand %vm1828, %vm1796
        %vm1861 = vmand %vm1829, %vm1797
        %vm1862 = vmand %vm1830, %vm1798
        %vm1863 = vmand %vm1831, %vm1799
        %vm1864 = vmand %vm1832, %vm1800
        %vm1865 = vmand %vm1833, %vm1801
        %vm1866 = vmand %vm1834, %vm1802
        %vm1867 = vmand %vm1835, %vm1803
        %vm1868 = vmand %vm1836, %vm1804
        %vm1869 = vmand %vm1837, %vm1805
        %vm1870 = vmand %vm1838, %vm1806
        %vm1871 = vmand %vm1839, %vm1807
        %v1872 = vadd.s32 %v1558, 32
        %v1873 = vadd.s32 %v1565, 32
        %v1874 = vadd.s32 %v1572, 32
        %v1875 = vadd.s32 %v1579, 32
        %v1876 = vadd.s32 %v1586, 32
        %v1877 = vadd.s32 %v1593, 32
        %v1878 = vadd.s32 %v1600, 32
        %v1879 = vadd.s32 %v1607, 32
        %v1880 = vadd.s32 %v1614, 32
        %v1881 = vadd.s32 %v1621, 32
        %v1882 = vadd.s32 %v1628, 32
        %v1883 = vadd.s32 %v1635, 32
        %v1884 = vadd.s32 %v1642, 32
        %v1885 = vadd.s32 %v1649, 32
        %v1886 = vadd.s32 %v1656, 32
        %v1887 = vadd.s32 %v1663, 32
        %v1888 = vadd.s32 %v1670, 32
        %v1889 = vadd.s32 %v1677, 32
        %v1890 = vadd.s32 %v1684, 32
        %v1891 = vadd.s32 %v1691, 32
        %v1892 = vadd.s32 %v1698, 32
        %v1893 = vadd.s32 %v1705, 32
        %v1894 = vadd.s32 %v1712, 32
        %v1895 = vadd.s32 %v1719, 32
        %v1896 = vadd.s32 %v1726, 32
        %v1897 = vadd.s32 %v1733, 32
        %v1898 = vadd.s32 %v1740, 32
        %v1899 = vadd.s32 %v1747, 32
        %v1900 = vadd.s32 %v1754, 32
        %v1901 = vadd.s32 %v1761, 32
        %v1902 = vadd.s32 %v1768, 32
        %v1903 = vadd.s32 %v1775, 32
        %v1904 = vsel %vm1840, %v1872, %v1558
        %v1905 = vsel %vm1841, %v1873, %v1565
        %v1906 = vsel %vm1842, %v1874, %v1572
        %v1907 = vsel %vm1843, %v1875, %v1579
        %v1908 = vsel %vm1844, %v1876, %v1586
        %v1909 = vsel %vm1845, %v1877, %v1593
        %v1910 = vsel %vm1846, %v1878, %v1600
        %v1911 = vsel %vm1847, %v1879, %v1607
        %v1912 = vsel %vm1848, %v1880, %v1614
        %v1913 = vsel %vm1849, %v1881, %v1621
        %v1914 = vsel %vm1850, %v1882, %v1628
        %v1915 = vsel %vm1851, %v1883, %v1635
        %v1916 = vsel %vm1852, %v1884, %v1642
        %v1917 = vsel %vm1853, %v1885, %v1649
        %v1918 = vsel %vm1854, %v1886, %v1656
        %v1919 = vsel %vm1855, %v1887, %v1663
        %v1920 = vsel %vm1856, %v1888, %v1670
        %v1921 = vsel %vm1857, %v1889, %v1677
        %v1922 = vsel %vm1858, %v1890, %v1684
        %v1923 = vsel %vm1859, %v1891, %v1691
        %v1924 = vsel %vm1860, %v1892, %v1698
        %v1925 = vsel %vm1861, %v1893, %v1705
        %v1926 = vsel %vm1862, %v1894, %v1712
        %v1927 = vsel %vm1863, %v1895, %v1719
        %v1928 = vsel %vm1864, %v1896, %v1726
        %v1929 = vsel %vm1865, %v1897, %v1733
        %v1930 = vsel %vm1866, %v1898, %v1740
        %v1931 = vsel %vm1867, %v1899, %v1747
        %v1932 = vsel %vm1868, %v1900, %v1754
        %v1933 = vsel %vm1869, %v1901, %v1761
        %v1934 = vsel %vm1870, %v1902, %v1768
        %v1935 = vsel %vm1871, %v1903, %v1775
        %vm1936 = vcmp.eq.s32.totalorder %v1904, 0
        %vm1937 = vcmp.eq.s32.totalorder %v1905, 0
        %vm1938 = vcmp.eq.s32.totalorder %v1906, 0
        %vm1939 = vcmp.eq.s32.totalorder %v1907, 0
        %vm1940 = vcmp.eq.s32.totalorder %v1908, 0
        %vm1941 = vcmp.eq.s32.totalorder %v1909, 0
        %vm1942 = vcmp.eq.s32.totalorder %v1910, 0
        %vm1943 = vcmp.eq.s32.totalorder %v1911, 0
        %vm1944 = vcmp.eq.s32.totalorder %v1912, 0
        %vm1945 = vcmp.eq.s32.totalorder %v1913, 0
        %vm1946 = vcmp.eq.s32.totalorder %v1914, 0
        %vm1947 = vcmp.eq.s32.totalorder %v1915, 0
        %vm1948 = vcmp.eq.s32.totalorder %v1916, 0
        %vm1949 = vcmp.eq.s32.totalorder %v1917, 0
        %vm1950 = vcmp.eq.s32.totalorder %v1918, 0
        %vm1951 = vcmp.eq.s32.totalorder %v1919, 0
        %vm1952 = vcmp.eq.s32.totalorder %v1920, 0
        %vm1953 = vcmp.eq.s32.totalorder %v1921, 0
        %vm1954 = vcmp.eq.s32.totalorder %v1922, 0
        %vm1955 = vcmp.eq.s32.totalorder %v1923, 0
        %vm1956 = vcmp.eq.s32.totalorder %v1924, 0
        %vm1957 = vcmp.eq.s32.totalorder %v1925, 0
        %vm1958 = vcmp.eq.s32.totalorder %v1926, 0
        %vm1959 = vcmp.eq.s32.totalorder %v1927, 0
        %vm1960 = vcmp.eq.s32.totalorder %v1928, 0
        %vm1961 = vcmp.eq.s32.totalorder %v1929, 0
        %vm1962 = vcmp.eq.s32.totalorder %v1930, 0
        %vm1963 = vcmp.eq.s32.totalorder %v1931, 0
        %vm1964 = vcmp.eq.s32.totalorder %v1932, 0
        %vm1965 = vcmp.eq.s32.totalorder %v1933, 0
        %vm1966 = vcmp.eq.s32.totalorder %v1934, 0
        %vm1967 = vcmp.eq.s32.totalorder %v1935, 0
        %v1968 = vld [vmem:[#allocation2] sm:$0xff]
        %v1969 = vld [vmem:[#allocation2 + $0x8] sm:$0xff]
        %v1970 = vld [vmem:[#allocation2 + $0x10] sm:$0xff]
        %v1971 = vld [vmem:[#allocation2 + $0x18] sm:$0xff]
        %v1972 = vld [vmem:[#allocation2 + $0x20] sm:$0xff]
        %v1973 = vld [vmem:[#allocation2 + $0x28] sm:$0xff]
        %v1974 = vld [vmem:[#allocation2 + $0x30] sm:$0xff]
        %v1975 = vld [vmem:[#allocation2 + $0x38] sm:$0xff]
        %v1976 = vld [vmem:[#allocation2 + $0x40] sm:$0xff]
        %v1977 = vld [vmem:[#allocation2 + $0x48] sm:$0xff]
        %v1978 = vld [vmem:[#allocation2 + $0x50] sm:$0xff]
        %v1979 = vld [vmem:[#allocation2 + $0x58] sm:$0xff]
        %v1980 = vld [vmem:[#allocation2 + $0x60] sm:$0xff]
        %v1981 = vld [vmem:[#allocation2 + $0x68] sm:$0xff]
        %v1982 = vld [vmem:[#allocation2 + $0x70] sm:$0xff]
        %v1983 = vld [vmem:[#allocation2 + $0x78] sm:$0xff]
        %v1984 = vld [vmem:[#allocation2 + $0x80] sm:$0xff]
        %v1985 = vld [vmem:[#allocation2 + $0x88] sm:$0xff]
        %v1986 = vld [vmem:[#allocation2 + $0x90] sm:$0xff]
        %v1987 = vld [vmem:[#allocation2 + $0x98] sm:$0xff]
        %v1988 = vld [vmem:[#allocation2 + $0xa0] sm:$0xff]
        %v1989 = vld [vmem:[#allocation2 + $0xa8] sm:$0xff]
        %v1990 = vld [vmem:[#allocation2 + $0xb0] sm:$0xff]
        %v1991 = vld [vmem:[#allocation2 + $0xb8] sm:$0xff]
        %v1992 = vld [vmem:[#allocation2 + $0xc0] sm:$0xff]
        %v1993 = vld [vmem:[#allocation2 + $0xc8] sm:$0xff]
        %v1994 = vld [vmem:[#allocation2 + $0xd0] sm:$0xff]
        %v1995 = vld [vmem:[#allocation2 + $0xd8] sm:$0xff]
        %v1996 = vld [vmem:[#allocation2 + $0xe0] sm:$0xff]
        %v1997 = vld [vmem:[#allocation2 + $0xe8] sm:$0xff]
        %v1998 = vld [vmem:[#allocation2 + $0xf0] sm:$0xff]
        %v1999 = vld [vmem:[#allocation2 + $0xf8] sm:$0xff]
        %v2000 = vsel %vm1936, 0.0, %v1968
        %v2001 = vsel %vm1937, 0.0, %v1969
        %v2002 = vsel %vm1938, 0.0, %v1970
        %v2003 = vsel %vm1939, 0.0, %v1971
        %v2004 = vsel %vm1940, 0.0, %v1972
        %v2005 = vsel %vm1941, 0.0, %v1973
        %v2006 = vsel %vm1942, 0.0, %v1974
        %v2007 = vsel %vm1943, 0.0, %v1975
        %v2008 = vsel %vm1944, 0.0, %v1976
        %v2009 = vsel %vm1945, 0.0, %v1977
        %v2010 = vsel %vm1946, 0.0, %v1978
        %v2011 = vsel %vm1947, 0.0, %v1979
        %v2012 = vsel %vm1948, 0.0, %v1980
        %v2013 = vsel %vm1949, 0.0, %v1981
        %v2014 = vsel %vm1950, 0.0, %v1982
        %v2015 = vsel %vm1951, 0.0, %v1983
        %v2016 = vsel %vm1952, 0.0, %v1984
        %v2017 = vsel %vm1953, 0.0, %v1985
        %v2018 = vsel %vm1954, 0.0, %v1986
        %v2019 = vsel %vm1955, 0.0, %v1987
        %v2020 = vsel %vm1956, 0.0, %v1988
        %v2021 = vsel %vm1957, 0.0, %v1989
        %v2022 = vsel %vm1958, 0.0, %v1990
        %v2023 = vsel %vm1959, 0.0, %v1991
        %v2024 = vsel %vm1960, 0.0, %v1992
        %v2025 = vsel %vm1961, 0.0, %v1993
        %v2026 = vsel %vm1962, 0.0, %v1994
        %v2027 = vsel %vm1963, 0.0, %v1995
        %v2028 = vsel %vm1964, 0.0, %v1996
        %v2029 = vsel %vm1965, 0.0, %v1997
        %v2030 = vsel %vm1966, 0.0, %v1998
        %v2031 = vsel %vm1967, 0.0, %v1999
        %vm2032 = vcmp.eq.s32.totalorder %v1904, 31
        %vm2033 = vcmp.eq.s32.totalorder %v1905, 31
        %vm2034 = vcmp.eq.s32.totalorder %v1906, 31
        %vm2035 = vcmp.eq.s32.totalorder %v1907, 31
        %vm2036 = vcmp.eq.s32.totalorder %v1908, 31
        %vm2037 = vcmp.eq.s32.totalorder %v1909, 31
        %vm2038 = vcmp.eq.s32.totalorder %v1910, 31
        %vm2039 = vcmp.eq.s32.totalorder %v1911, 31
        %vm2040 = vcmp.eq.s32.totalorder %v1912, 31
        %vm2041 = vcmp.eq.s32.totalorder %v1913, 31
        %vm2042 = vcmp.eq.s32.totalorder %v1914, 31
        %vm2043 = vcmp.eq.s32.totalorder %v1915, 31
        %vm2044 = vcmp.eq.s32.totalorder %v1916, 31
        %vm2045 = vcmp.eq.s32.totalorder %v1917, 31
        %vm2046 = vcmp.eq.s32.totalorder %v1918, 31
        %vm2047 = vcmp.eq.s32.totalorder %v1919, 31
        %vm2048 = vcmp.eq.s32.totalorder %v1920, 31
        %vm2049 = vcmp.eq.s32.totalorder %v1921, 31
        %vm2050 = vcmp.eq.s32.totalorder %v1922, 31
        %vm2051 = vcmp.eq.s32.totalorder %v1923, 31
        %vm2052 = vcmp.eq.s32.totalorder %v1924, 31
        %vm2053 = vcmp.eq.s32.totalorder %v1925, 31
        %vm2054 = vcmp.eq.s32.totalorder %v1926, 31
        %vm2055 = vcmp.eq.s32.totalorder %v1927, 31
        %vm2056 = vcmp.eq.s32.totalorder %v1928, 31
        %vm2057 = vcmp.eq.s32.totalorder %v1929, 31
        %vm2058 = vcmp.eq.s32.totalorder %v1930, 31
        %vm2059 = vcmp.eq.s32.totalorder %v1931, 31
        %vm2060 = vcmp.eq.s32.totalorder %v1932, 31
        %vm2061 = vcmp.eq.s32.totalorder %v1933, 31
        %vm2062 = vcmp.eq.s32.totalorder %v1934, 31
        %vm2063 = vcmp.eq.s32.totalorder %v1935, 31
        %v2064 = vld [vmem:[#allocation2 + $0x2] sm:$0xff]
        %v2065 = vld [vmem:[#allocation2 + $0xa] sm:$0xff]
        %v2066 = vld [vmem:[#allocation2 + $0x12] sm:$0xff]
        %v2067 = vld [vmem:[#allocation2 + $0x1a] sm:$0xff]
        %v2068 = vld [vmem:[#allocation2 + $0x22] sm:$0xff]
        %v2069 = vld [vmem:[#allocation2 + $0x2a] sm:$0xff]
        %v2070 = vld [vmem:[#allocation2 + $0x32] sm:$0xff]
        %v2071 = vld [vmem:[#allocation2 + $0x3a] sm:$0xff]
        %v2072 = vld [vmem:[#allocation2 + $0x42] sm:$0xff]
        %v2073 = vld [vmem:[#allocation2 + $0x4a] sm:$0xff]
        %v2074 = vld [vmem:[#allocation2 + $0x52] sm:$0xff]
        %v2075 = vld [vmem:[#allocation2 + $0x5a] sm:$0xff]
        %v2076 = vld [vmem:[#allocation2 + $0x62] sm:$0xff]
        %v2077 = vld [vmem:[#allocation2 + $0x6a] sm:$0xff]
        %v2078 = vld [vmem:[#allocation2 + $0x72] sm:$0xff]
        %v2079 = vld [vmem:[#allocation2 + $0x7a] sm:$0xff]
        %v2080 = vld [vmem:[#allocation2 + $0x82] sm:$0xff]
        %v2081 = vld [vmem:[#allocation2 + $0x8a] sm:$0xff]
        %v2082 = vld [vmem:[#allocation2 + $0x92] sm:$0xff]
        %v2083 = vld [vmem:[#allocation2 + $0x9a] sm:$0xff]
        %v2084 = vld [vmem:[#allocation2 + $0xa2] sm:$0xff]
        %v2085 = vld [vmem:[#allocation2 + $0xaa] sm:$0xff]
        %v2086 = vld [vmem:[#allocation2 + $0xb2] sm:$0xff]
        %v2087 = vld [vmem:[#allocation2 + $0xba] sm:$0xff]
        %v2088 = vld [vmem:[#allocation2 + $0xc2] sm:$0xff]
        %v2089 = vld [vmem:[#allocation2 + $0xca] sm:$0xff]
        %v2090 = vld [vmem:[#allocation2 + $0xd2] sm:$0xff]
        %v2091 = vld [vmem:[#allocation2 + $0xda] sm:$0xff]
        %v2092 = vld [vmem:[#allocation2 + $0xe2] sm:$0xff]
        %v2093 = vld [vmem:[#allocation2 + $0xea] sm:$0xff]
        %v2094 = vld [vmem:[#allocation2 + $0xf2] sm:$0xff]
        %v2095 = vld [vmem:[#allocation2 + $0xfa] sm:$0xff]
        %v2096 = vsel %vm2032, 0.0, %v2064
        %v2097 = vsel %vm2033, 0.0, %v2065
        %v2098 = vsel %vm2034, 0.0, %v2066
        %v2099 = vsel %vm2035, 0.0, %v2067
        %v2100 = vsel %vm2036, 0.0, %v2068
        %v2101 = vsel %vm2037, 0.0, %v2069
        %v2102 = vsel %vm2038, 0.0, %v2070
        %v2103 = vsel %vm2039, 0.0, %v2071
        %v2104 = vsel %vm2040, 0.0, %v2072
        %v2105 = vsel %vm2041, 0.0, %v2073
        %v2106 = vsel %vm2042, 0.0, %v2074
        %v2107 = vsel %vm2043, 0.0, %v2075
        %v2108 = vsel %vm2044, 0.0, %v2076
        %v2109 = vsel %vm2045, 0.0, %v2077
        %v2110 = vsel %vm2046, 0.0, %v2078
        %v2111 = vsel %vm2047, 0.0, %v2079
        %v2112 = vsel %vm2048, 0.0, %v2080
        %v2113 = vsel %vm2049, 0.0, %v2081
        %v2114 = vsel %vm2050, 0.0, %v2082
        %v2115 = vsel %vm2051, 0.0, %v2083
        %v2116 = vsel %vm2052, 0.0, %v2084
        %v2117 = vsel %vm2053, 0.0, %v2085
        %v2118 = vsel %vm2054, 0.0, %v2086
        %v2119 = vsel %vm2055, 0.0, %v2087
        %v2120 = vsel %vm2056, 0.0, %v2088
        %v2121 = vsel %vm2057, 0.0, %v2089
        %v2122 = vsel %vm2058, 0.0, %v2090
        %v2123 = vsel %vm2059, 0.0, %v2091
        %v2124 = vsel %vm2060, 0.0, %v2092
        %v2125 = vsel %vm2061, 0.0, %v2093
        %v2126 = vsel %vm2062, 0.0, %v2094
        %v2127 = vsel %vm2063, 0.0, %v2095
        %v2128 = vpack.c.bf16 %v2001, %v2000
        %v2129 = vpack.c.bf16 %v2003, %v2002
        %v2130 = vpack.c.bf16 %v2005, %v2004
        %v2131 = vpack.c.bf16 %v2007, %v2006
        %v2132 = vpack.c.bf16 %v2009, %v2008
        %v2133 = vpack.c.bf16 %v2011, %v2010
        %v2134 = vpack.c.bf16 %v2013, %v2012
        %v2135 = vpack.c.bf16 %v2015, %v2014
        %v2136 = vpack.c.bf16 %v2017, %v2016
        %v2137 = vpack.c.bf16 %v2019, %v2018
        %v2138 = vpack.c.bf16 %v2021, %v2020
        %v2139 = vpack.c.bf16 %v2023, %v2022
        %v2140 = vpack.c.bf16 %v2025, %v2024
        %v2141 = vpack.c.bf16 %v2027, %v2026
        %v2142 = vpack.c.bf16 %v2029, %v2028
        %v2143 = vpack.c.bf16 %v2031, %v2030
        %v2144 = vld [vmem:[%s3] sm:$0xf]
        %v2145 = vld [vmem:[%s3 + $0x4] sm:$0xf]
        %v2146 = vpack.c.bf16 %v1456, %v1455
        %v2147 = vpack.c.bf16 %v1458, %v1457
        %v2148 = vpack.c.bf16 %v1460, %v1459
        %v2149 = vpack.c.bf16 %v1462, %v1461
        %v2150 = vpack.c.bf16 %v1464, %v1463
        %v2151 = vpack.c.bf16 %v1466, %v1465
        %v2152 = vpack.c.bf16 %v1468, %v1467
        %v2153 = vpack.c.bf16 %v1470, %v1469
        %v2154 = vpack.c.bf16 %v1472, %v1471
        %v2155 = vpack.c.bf16 %v1474, %v1473
        %v2156 = vpack.c.bf16 %v1476, %v1475
        %v2157 = vpack.c.bf16 %v1478, %v1477
        %v2158 = vpack.c.bf16 %v1480, %v1479
        %v2159 = vpack.c.bf16 %v1482, %v1481
        %v2160 = vpack.c.bf16 %v1484, %v1483
        %v2161 = vpack.c.bf16 %v1486, %v1485
        %v2162 = vld [vmem:[%s3 + $0x8] sm:$0xf]
        %v2163 = vld [vmem:[%s3 + $0xc] sm:$0xf]
        %v2166 = vunpack.c.l.b16 %v2162
        %v2167 = vunpack.c.l.b16 %v2163
        %v2168 = vpack.c.b16 %v2167, %v2166
        %v2171 = vsel %vm1263, %v2146, 0
        %v2174 = vsel %vm1263, %v2147, 0
        %v2177 = vsel %vm1263, %v2148, 0
        %v2180 = vsel %vm1263, %v2149, 0
        %v2183 = vsel %vm1263, %v2150, 0
        %v2186 = vsel %vm1263, %v2151, 0
        %v2189 = vsel %vm1263, %v2152, 0
        %v2192 = vsel %vm1263, %v2153, 0
        %v2195 = vsel %vm1263, %v2154, 0
        %v2198 = vsel %vm1263, %v2155, 0
        %v2201 = vsel %vm1263, %v2156, 0
        %v2204 = vsel %vm1263, %v2157, 0
        %v2207 = vsel %vm1263, %v2158, 0
        %v2210 = vsel %vm1263, %v2159, 0
        %v2213 = vsel %vm1263, %v2160, 0
        %v2216 = vsel %vm1263, %v2161, 0
        %2218 = vmatprep.subr.bf16.mxu0 0
        %2219 = vmatpush1.bf16.msra.mxu0 %v2168
        %2220 = vmatprep.subr.bf16.mxu0 0
        %2221 = vmatpush1.bf16.msra.mxu0 0
        %2222 = vmatprep.subr.bf16.mxu0 0
        %2223 = vmatpush1.bf16.msra.mxu0 0
        %2224 = vmatprep.subr.bf16.mxu0 0
        %2225 = vmatpush1.bf16.msra.mxu0 0
        %2226 = vmatprep.subr.bf16.mxu0 0
        %2227 = vmatpush1.bf16.msra.mxu0 0
        %2228 = vmatprep.subr.bf16.mxu0 0
        %2229 = vmatpush1.bf16.msra.mxu0 0
        %2230 = vmatprep.subr.bf16.mxu0 0
        %2231 = vmatpush1.bf16.msra.mxu0 0
        %2232 = vmatprep.subr.bf16.mxu0 0
        %2233 = vmatpush1.bf16.msra.mxu0 0
        %2234 = vmatprep.subr.bf16.mxu0 0
        %2235 = vmatpush1.bf16.msra.mxu0 0
        %2236 = vmatprep.subr.bf16.mxu0 0
        %2237 = vmatpush1.bf16.msra.mxu0 0
        %2238 = vmatprep.subr.bf16.mxu0 0
        %2239 = vmatpush1.bf16.msra.mxu0 0
        %2240 = vmatprep.subr.bf16.mxu0 0
        %2241 = vmatpush1.bf16.msra.mxu0 0
        %2242 = vmatprep.subr.bf16.mxu0 0
        %2243 = vmatpush1.bf16.msra.mxu0 0
        %2244 = vmatprep.subr.bf16.mxu0 0
        %2245 = vmatpush1.bf16.msra.mxu0 0
        %2246 = vmatprep.subr.bf16.mxu0 0
        %2247 = vmatpush1.bf16.msra.mxu0 0
        %2248 = vmatprep.subr.bf16.mxu0 0
        %2249 = vmatpush1.bf16.msra.mxu0 0
        %2250 = vmatprep.mubr.bf16.mxu0 0
        %2251 = vmatmul.mubr.bf16.gmra.mrb[0].mxu0 %v2171
        %v2252 = vpop.f32.mrb[0].mxu0
        %v2253 = vadd.f32 0.0, %v2252
        %v2254 = vpop.f32.mrb[0].mxu0
        %v2255 = vpop.f32.mrb[0].mxu0
        %v2256 = vadd.f32 0.0, %v2255
        %v2257 = vpop.f32.mrb[0].mxu0
        %2258 = vmatprep.mubr.bf16.mxu0 0
        %2259 = vmatmul.mubr.bf16.gmra.mrb[0].mxu0 %v2174
        %v2260 = vpop.f32.mrb[0].mxu0
        %v2261 = vadd.f32 0.0, %v2260
        %v2262 = vpop.f32.mrb[0].mxu0
        %v2263 = vpop.f32.mrb[0].mxu0
        %v2264 = vadd.f32 0.0, %v2263
        %v2265 = vpop.f32.mrb[0].mxu0
        %2266 = vmatprep.mubr.bf16.mxu0 0
        %2267 = vmatmul.mubr.bf16.gmra.mrb[0].mxu0 %v2177
        %v2268 = vpop.f32.mrb[0].mxu0
        %v2269 = vadd.f32 0.0, %v2268
        %v2270 = vpop.f32.mrb[0].mxu0
        %v2271 = vpop.f32.mrb[0].mxu0
        %v2272 = vadd.f32 0.0, %v2271
        %v2273 = vpop.f32.mrb[0].mxu0
        %2274 = vmatprep.mubr.bf16.mxu0 0
        %2275 = vmatmul.mubr.bf16.gmra.mrb[0].mxu0 %v2180
        %v2276 = vpop.f32.mrb[0].mxu0
        %v2277 = vadd.f32 0.0, %v2276
        %v2278 = vpop.f32.mrb[0].mxu0
        %v2279 = vpop.f32.mrb[0].mxu0
        %v2280 = vadd.f32 0.0, %v2279
        %v2281 = vpop.f32.mrb[0].mxu0
        %2282 = vmatprep.mubr.bf16.mxu0 0
        %2283 = vmatmul.mubr.bf16.gmra.mrb[0].mxu0 %v2183
        %v2284 = vpop.f32.mrb[0].mxu0
        %v2285 = vadd.f32 0.0, %v2284
        %v2286 = vpop.f32.mrb[0].mxu0
        %v2287 = vpop.f32.mrb[0].mxu0
        %v2288 = vadd.f32 0.0, %v2287
        %v2289 = vpop.f32.mrb[0].mxu0
        %2290 = vmatprep.mubr.bf16.mxu0 0
        %2291 = vmatmul.mubr.bf16.gmra.mrb[0].mxu0 %v2186
        %v2292 = vpop.f32.mrb[0].mxu0
        %v2293 = vadd.f32 0.0, %v2292
        %v2294 = vpop.f32.mrb[0].mxu0
        %v2295 = vpop.f32.mrb[0].mxu0
        %v2296 = vadd.f32 0.0, %v2295
        %v2297 = vpop.f32.mrb[0].mxu0
        %2298 = vmatprep.mubr.bf16.mxu0 0
        %2299 = vmatmul.mubr.bf16.gmra.mrb[0].mxu0 %v2189
        %v2300 = vpop.f32.mrb[0].mxu0
        %v2301 = vadd.f32 0.0, %v2300
        %v2302 = vpop.f32.mrb[0].mxu0
        %v2303 = vpop.f32.mrb[0].mxu0
        %v2304 = vadd.f32 0.0, %v2303
        %v2305 = vpop.f32.mrb[0].mxu0
        %2306 = vmatprep.mubr.bf16.mxu0 0
        %2307 = vmatmul.mubr.bf16.gmra.mrb[0].mxu0 %v2192
        %v2308 = vpop.f32.mrb[0].mxu0
        %v2309 = vadd.f32 0.0, %v2308
        %v2310 = vpop.f32.mrb[0].mxu0
        %v2311 = vpop.f32.mrb[0].mxu0
        %v2312 = vadd.f32 0.0, %v2311
        %v2313 = vpop.f32.mrb[0].mxu0
        %2314 = vmatprep.mubr.bf16.mxu0 0
        %2315 = vmatmul.mubr.bf16.gmra.mrb[0].mxu0 %v2195
        %v2316 = vpop.f32.mrb[0].mxu0
        %v2317 = vadd.f32 0.0, %v2316
        %v2318 = vpop.f32.mrb[0].mxu0
        %v2319 = vpop.f32.mrb[0].mxu0
        %v2320 = vadd.f32 0.0, %v2319
        %v2321 = vpop.f32.mrb[0].mxu0
        %2322 = vmatprep.mubr.bf16.mxu0 0
        %2323 = vmatmul.mubr.bf16.gmra.mrb[0].mxu0 %v2198
        %v2324 = vpop.f32.mrb[0].mxu0
        %v2325 = vadd.f32 0.0, %v2324
        %v2326 = vpop.f32.mrb[0].mxu0
        %v2327 = vpop.f32.mrb[0].mxu0
        %v2328 = vadd.f32 0.0, %v2327
        %v2329 = vpop.f32.mrb[0].mxu0
        %2330 = vmatprep.mubr.bf16.mxu0 0
        %2331 = vmatmul.mubr.bf16.gmra.mrb[0].mxu0 %v2201
        %v2332 = vpop.f32.mrb[0].mxu0
        %v2333 = vadd.f32 0.0, %v2332
        %v2334 = vpop.f32.mrb[0].mxu0
        %v2335 = vpop.f32.mrb[0].mxu0
        %v2336 = vadd.f32 0.0, %v2335
        %v2337 = vpop.f32.mrb[0].mxu0
        %2338 = vmatprep.mubr.bf16.mxu0 0
        %2339 = vmatmul.mubr.bf16.gmra.mrb[0].mxu0 %v2204
        %v2340 = vpop.f32.mrb[0].mxu0
        %v2341 = vadd.f32 0.0, %v2340
        %v2342 = vpop.f32.mrb[0].mxu0
        %v2343 = vpop.f32.mrb[0].mxu0
        %v2344 = vadd.f32 0.0, %v2343
        %v2345 = vpop.f32.mrb[0].mxu0
        %2346 = vmatprep.mubr.bf16.mxu0 0
        %2347 = vmatmul.mubr.bf16.gmra.mrb[0].mxu0 %v2207
        %v2348 = vpop.f32.mrb[0].mxu0
        %v2349 = vadd.f32 0.0, %v2348
        %v2350 = vpop.f32.mrb[0].mxu0
        %v2351 = vpop.f32.mrb[0].mxu0
        %v2352 = vadd.f32 0.0, %v2351
        %v2353 = vpop.f32.mrb[0].mxu0
        %2354 = vmatprep.mubr.bf16.mxu0 0
        %2355 = vmatmul.mubr.bf16.gmra.mrb[0].mxu0 %v2210
        %v2356 = vpop.f32.mrb[0].mxu0
        %v2357 = vadd.f32 0.0, %v2356
        %v2358 = vpop.f32.mrb[0].mxu0
        %v2359 = vpop.f32.mrb[0].mxu0
        %v2360 = vadd.f32 0.0, %v2359
        %v2361 = vpop.f32.mrb[0].mxu0
        %2362 = vmatprep.mubr.bf16.mxu0 0
        %2363 = vmatmul.mubr.bf16.gmra.mrb[0].mxu0 %v2213
        %v2364 = vpop.f32.mrb[0].mxu0
        %v2365 = vadd.f32 0.0, %v2364
        %v2366 = vpop.f32.mrb[0].mxu0
        %v2367 = vpop.f32.mrb[0].mxu0
        %v2368 = vadd.f32 0.0, %v2367
        %v2369 = vpop.f32.mrb[0].mxu0
        %2370 = vmatprep.mubr.bf16.mxu0 0
        %2371 = vmatmul.mubr.bf16.gmra.mrb[0].mxu0 %v2216
        %v2372 = vpop.f32.mrb[0].mxu0
        %v2373 = vadd.f32 0.0, %v2372
        %v2374 = vpop.f32.mrb[0].mxu0
        %v2375 = vpop.f32.mrb[0].mxu0
        %v2376 = vadd.f32 0.0, %v2375
        %v2377 = vpop.f32.mrb[0].mxu0
        %2378 = vdwg.mxu0
        %v2381 = vunpack.c.l.b16 %v2144
        %v2382 = vunpack.c.l.b16 %v2145
        %v2383 = vpack.c.b16 %v2382, %v2381
        %v2386 = vsel %vm1263, %v2128, 0
        %v2389 = vsel %vm1263, %v2129, 0
        %v2392 = vsel %vm1263, %v2130, 0
        %v2395 = vsel %vm1263, %v2131, 0
        %v2398 = vsel %vm1263, %v2132, 0
        %v2401 = vsel %vm1263, %v2133, 0
        %v2404 = vsel %vm1263, %v2134, 0
        %v2407 = vsel %vm1263, %v2135, 0
        %v2410 = vsel %vm1263, %v2136, 0
        %v2413 = vsel %vm1263, %v2137, 0
        %v2416 = vsel %vm1263, %v2138, 0
        %v2419 = vsel %vm1263, %v2139, 0
        %v2422 = vsel %vm1263, %v2140, 0
        %v2425 = vsel %vm1263, %v2141, 0
        %v2428 = vsel %vm1263, %v2142, 0
        %v2431 = vsel %vm1263, %v2143, 0
        %2433 = vmatprep.subr.bf16.mxu0 0
        %2434 = vmatpush1.bf16.msra.mxu0 %v2383
        %2435 = vmatprep.subr.bf16.mxu0 0
        %2436 = vmatpush1.bf16.msra.mxu0 0
        %2437 = vmatprep.subr.bf16.mxu0 0
        %2438 = vmatpush1.bf16.msra.mxu0 0
        %2439 = vmatprep.subr.bf16.mxu0 0
        %2440 = vmatpush1.bf16.msra.mxu0 0
        %2441 = vmatprep.subr.bf16.mxu0 0
        %2442 = vmatpush1.bf16.msra.mxu0 0
        %2443 = vmatprep.subr.bf16.mxu0 0
        %2444 = vmatpush1.bf16.msra.mxu0 0
        %2445 = vmatprep.subr.bf16.mxu0 0
        %2446 = vmatpush1.bf16.msra.mxu0 0
        %2447 = vmatprep.subr.bf16.mxu0 0
        %2448 = vmatpush1.bf16.msra.mxu0 0
        %2449 = vmatprep.subr.bf16.mxu0 0
        %2450 = vmatpush1.bf16.msra.mxu0 0
        %2451 = vmatprep.subr.bf16.mxu0 0
        %2452 = vmatpush1.bf16.msra.mxu0 0
        %2453 = vmatprep.subr.bf16.mxu0 0
        %2454 = vmatpush1.bf16.msra.mxu0 0
        %2455 = vmatprep.subr.bf16.mxu0 0
        %2456 = vmatpush1.bf16.msra.mxu0 0
        %2457 = vmatprep.subr.bf16.mxu0 0
        %2458 = vmatpush1.bf16.msra.mxu0 0
        %2459 = vmatprep.subr.bf16.mxu0 0
        %2460 = vmatpush1.bf16.msra.mxu0 0
        %2461 = vmatprep.subr.bf16.mxu0 0
        %2462 = vmatpush1.bf16.msra.mxu0 0
        %2463 = vmatprep.subr.bf16.mxu0 0
        %2464 = vmatpush1.bf16.msra.mxu0 0
        %2465 = vmatprep.mubr.bf16.mxu0 0
        %2466 = vmatmul.mubr.bf16.gmra.mrb[0].mxu0 %v2386
        %v2467 = vpop.f32.mrb[0].mxu0
        %v2468 = vadd.f32 %v2253, %v2467
        %v2469 = vpop.f32.mrb[0].mxu0
        %v2470 = vpop.f32.mrb[0].mxu0
        %v2471 = vadd.f32 %v2256, %v2470
        %v2472 = vpop.f32.mrb[0].mxu0
        %2473 = vmatprep.mubr.bf16.mxu0 0
        %2474 = vmatmul.mubr.bf16.gmra.mrb[0].mxu0 %v2389
        %v2475 = vpop.f32.mrb[0].mxu0
        %v2476 = vadd.f32 %v2261, %v2475
        %v2477 = vpop.f32.mrb[0].mxu0
        %v2478 = vpop.f32.mrb[0].mxu0
        %v2479 = vadd.f32 %v2264, %v2478
        %v2480 = vpop.f32.mrb[0].mxu0
        %2481 = vmatprep.mubr.bf16.mxu0 0
        %2482 = vmatmul.mubr.bf16.gmra.mrb[0].mxu0 %v2392
        %v2483 = vpop.f32.mrb[0].mxu0
        %v2484 = vadd.f32 %v2269, %v2483
        %v2485 = vpop.f32.mrb[0].mxu0
        %v2486 = vpop.f32.mrb[0].mxu0
        %v2487 = vadd.f32 %v2272, %v2486
        %v2488 = vpop.f32.mrb[0].mxu0
        %2489 = vmatprep.mubr.bf16.mxu0 0
        %2490 = vmatmul.mubr.bf16.gmra.mrb[0].mxu0 %v2395
        %v2491 = vpop.f32.mrb[0].mxu0
        %v2492 = vadd.f32 %v2277, %v2491
        %v2493 = vpop.f32.mrb[0].mxu0
        %v2494 = vpop.f32.mrb[0].mxu0
        %v2495 = vadd.f32 %v2280, %v2494
        %v2496 = vpop.f32.mrb[0].mxu0
        %2497 = vmatprep.mubr.bf16.mxu0 0
        %2498 = vmatmul.mubr.bf16.gmra.mrb[0].mxu0 %v2398
        %v2499 = vpop.f32.mrb[0].mxu0
        %v2500 = vadd.f32 %v2285, %v2499
        %v2501 = vpop.f32.mrb[0].mxu0
        %v2502 = vpop.f32.mrb[0].mxu0
        %v2503 = vadd.f32 %v2288, %v2502
        %v2504 = vpop.f32.mrb[0].mxu0
        %2505 = vmatprep.mubr.bf16.mxu0 0
        %2506 = vmatmul.mubr.bf16.gmra.mrb[0].mxu0 %v2401
        %v2507 = vpop.f32.mrb[0].mxu0
        %v2508 = vadd.f32 %v2293, %v2507
        %v2509 = vpop.f32.mrb[0].mxu0
        %v2510 = vpop.f32.mrb[0].mxu0
        %v2511 = vadd.f32 %v2296, %v2510
        %v2512 = vpop.f32.mrb[0].mxu0
        %2513 = vmatprep.mubr.bf16.mxu0 0
        %2514 = vmatmul.mubr.bf16.gmra.mrb[0].mxu0 %v2404
        %v2515 = vpop.f32.mrb[0].mxu0
        %v2516 = vadd.f32 %v2301, %v2515
        %v2517 = vpop.f32.mrb[0].mxu0
        %v2518 = vpop.f32.mrb[0].mxu0
        %v2519 = vadd.f32 %v2304, %v2518
        %v2520 = vpop.f32.mrb[0].mxu0
        %2521 = vmatprep.mubr.bf16.mxu0 0
        %2522 = vmatmul.mubr.bf16.gmra.mrb[0].mxu0 %v2407
        %v2523 = vpop.f32.mrb[0].mxu0
        %v2524 = vadd.f32 %v2309, %v2523
        %v2525 = vpop.f32.mrb[0].mxu0
        %v2526 = vpop.f32.mrb[0].mxu0
        %v2527 = vadd.f32 %v2312, %v2526
        %v2528 = vpop.f32.mrb[0].mxu0
        %2529 = vmatprep.mubr.bf16.mxu0 0
        %2530 = vmatmul.mubr.bf16.gmra.mrb[0].mxu0 %v2410
        %v2531 = vpop.f32.mrb[0].mxu0
        %v2532 = vadd.f32 %v2317, %v2531
        %v2533 = vpop.f32.mrb[0].mxu0
        %v2534 = vpop.f32.mrb[0].mxu0
        %v2535 = vadd.f32 %v2320, %v2534
        %v2536 = vpop.f32.mrb[0].mxu0
        %2537 = vmatprep.mubr.bf16.mxu0 0
        %2538 = vmatmul.mubr.bf16.gmra.mrb[0].mxu0 %v2413
        %v2539 = vpop.f32.mrb[0].mxu0
        %v2540 = vadd.f32 %v2325, %v2539
        %v2541 = vpop.f32.mrb[0].mxu0
        %v2542 = vpop.f32.mrb[0].mxu0
        %v2543 = vadd.f32 %v2328, %v2542
        %v2544 = vpop.f32.mrb[0].mxu0
        %2545 = vmatprep.mubr.bf16.mxu0 0
        %2546 = vmatmul.mubr.bf16.gmra.mrb[0].mxu0 %v2416
        %v2547 = vpop.f32.mrb[0].mxu0
        %v2548 = vadd.f32 %v2333, %v2547
        %v2549 = vpop.f32.mrb[0].mxu0
        %v2550 = vpop.f32.mrb[0].mxu0
        %v2551 = vadd.f32 %v2336, %v2550
        %v2552 = vpop.f32.mrb[0].mxu0
        %2553 = vmatprep.mubr.bf16.mxu0 0
        %2554 = vmatmul.mubr.bf16.gmra.mrb[0].mxu0 %v2419
        %v2555 = vpop.f32.mrb[0].mxu0
        %v2556 = vadd.f32 %v2341, %v2555
        %v2557 = vpop.f32.mrb[0].mxu0
        %v2558 = vpop.f32.mrb[0].mxu0
        %v2559 = vadd.f32 %v2344, %v2558
        %v2560 = vpop.f32.mrb[0].mxu0
        %2561 = vmatprep.mubr.bf16.mxu0 0
        %2562 = vmatmul.mubr.bf16.gmra.mrb[0].mxu0 %v2422
        %v2563 = vpop.f32.mrb[0].mxu0
        %v2564 = vadd.f32 %v2349, %v2563
        %v2565 = vpop.f32.mrb[0].mxu0
        %v2566 = vpop.f32.mrb[0].mxu0
        %v2567 = vadd.f32 %v2352, %v2566
        %v2568 = vpop.f32.mrb[0].mxu0
        %2569 = vmatprep.mubr.bf16.mxu0 0
        %2570 = vmatmul.mubr.bf16.gmra.mrb[0].mxu0 %v2425
        %v2571 = vpop.f32.mrb[0].mxu0
        %v2572 = vadd.f32 %v2357, %v2571
        %v2573 = vpop.f32.mrb[0].mxu0
        %v2574 = vpop.f32.mrb[0].mxu0
        %v2575 = vadd.f32 %v2360, %v2574
        %v2576 = vpop.f32.mrb[0].mxu0
        %2577 = vmatprep.mubr.bf16.mxu0 0
        %2578 = vmatmul.mubr.bf16.gmra.mrb[0].mxu0 %v2428
        %v2579 = vpop.f32.mrb[0].mxu0
        %v2580 = vadd.f32 %v2365, %v2579
        %v2581 = vpop.f32.mrb[0].mxu0
        %v2582 = vpop.f32.mrb[0].mxu0
        %v2583 = vadd.f32 %v2368, %v2582
        %v2584 = vpop.f32.mrb[0].mxu0
        %2585 = vmatprep.mubr.bf16.mxu0 0
        %2586 = vmatmul.mubr.bf16.gmra.mrb[0].mxu0 %v2431
        %v2587 = vpop.f32.mrb[0].mxu0
        %v2588 = vadd.f32 %v2373, %v2587
        %v2589 = vpop.f32.mrb[0].mxu0
        %v2590 = vpop.f32.mrb[0].mxu0
        %v2591 = vadd.f32 %v2376, %v2590
        %v2592 = vpop.f32.mrb[0].mxu0
        %2593 = vdwg.mxu0
        %v2594 = vpack.c.bf16 %v2097, %v2096
        %v2595 = vpack.c.bf16 %v2099, %v2098
        %v2596 = vpack.c.bf16 %v2101, %v2100
        %v2597 = vpack.c.bf16 %v2103, %v2102
        %v2598 = vpack.c.bf16 %v2105, %v2104
        %v2599 = vpack.c.bf16 %v2107, %v2106
        %v2600 = vpack.c.bf16 %v2109, %v2108
        %v2601 = vpack.c.bf16 %v2111, %v2110
        %v2602 = vpack.c.bf16 %v2113, %v2112
        %v2603 = vpack.c.bf16 %v2115, %v2114
        %v2604 = vpack.c.bf16 %v2117, %v2116
        %v2605 = vpack.c.bf16 %v2119, %v2118
        %v2606 = vpack.c.bf16 %v2121, %v2120
        %v2607 = vpack.c.bf16 %v2123, %v2122
        %v2608 = vpack.c.bf16 %v2125, %v2124
        %v2609 = vpack.c.bf16 %v2127, %v2126
        %v2610 = vld [vmem:[%s3 + $0x10] sm:$0xf]
        %v2611 = vld [vmem:[%s3 + $0x14] sm:$0xf]
        %v2614 = vunpack.c.l.b16 %v2610
        %v2615 = vunpack.c.l.b16 %v2611
        %v2616 = vpack.c.b16 %v2615, %v2614
        %v2619 = vsel %vm1263, %v2594, 0
        %v2622 = vsel %vm1263, %v2595, 0
        %v2625 = vsel %vm1263, %v2596, 0
        %v2628 = vsel %vm1263, %v2597, 0
        %v2631 = vsel %vm1263, %v2598, 0
        %v2634 = vsel %vm1263, %v2599, 0
        %v2637 = vsel %vm1263, %v2600, 0
        %v2640 = vsel %vm1263, %v2601, 0
        %v2643 = vsel %vm1263, %v2602, 0
        %v2646 = vsel %vm1263, %v2603, 0
        %v2649 = vsel %vm1263, %v2604, 0
        %v2652 = vsel %vm1263, %v2605, 0
        %v2655 = vsel %vm1263, %v2606, 0
        %v2658 = vsel %vm1263, %v2607, 0
        %v2661 = vsel %vm1263, %v2608, 0
        %v2664 = vsel %vm1263, %v2609, 0
        %2666 = vmatprep.subr.bf16.mxu0 0
        %2667 = vmatpush1.bf16.msra.mxu0 %v2616
        %2668 = vmatprep.subr.bf16.mxu0 0
        %2669 = vmatpush1.bf16.msra.mxu0 0
        %2670 = vmatprep.subr.bf16.mxu0 0
        %2671 = vmatpush1.bf16.msra.mxu0 0
        %2672 = vmatprep.subr.bf16.mxu0 0
        %2673 = vmatpush1.bf16.msra.mxu0 0
        %2674 = vmatprep.subr.bf16.mxu0 0
        %2675 = vmatpush1.bf16.msra.mxu0 0
        %2676 = vmatprep.subr.bf16.mxu0 0
        %2677 = vmatpush1.bf16.msra.mxu0 0
        %2678 = vmatprep.subr.bf16.mxu0 0
        %2679 = vmatpush1.bf16.msra.mxu0 0
        %2680 = vmatprep.subr.bf16.mxu0 0
        %2681 = vmatpush1.bf16.msra.mxu0 0
        %2682 = vmatprep.subr.bf16.mxu0 0
        %2683 = vmatpush1.bf16.msra.mxu0 0
        %2684 = vmatprep.subr.bf16.mxu0 0
        %2685 = vmatpush1.bf16.msra.mxu0 0
        %2686 = vmatprep.subr.bf16.mxu0 0
        %2687 = vmatpush1.bf16.msra.mxu0 0
        %2688 = vmatprep.subr.bf16.mxu0 0
        %2689 = vmatpush1.bf16.msra.mxu0 0
        %2690 = vmatprep.subr.bf16.mxu0 0
        %2691 = vmatpush1.bf16.msra.mxu0 0
        %2692 = vmatprep.subr.bf16.mxu0 0
        %2693 = vmatpush1.bf16.msra.mxu0 0
        %2694 = vmatprep.subr.bf16.mxu0 0
        %2695 = vmatpush1.bf16.msra.mxu0 0
        %2696 = vmatprep.subr.bf16.mxu0 0
        %2697 = vmatpush1.bf16.msra.mxu0 0
        %2698 = vmatprep.mubr.bf16.mxu0 0
        %2699 = vmatmul.mubr.bf16.gmra.mrb[0].mxu0 %v2619
        %v2700 = vpop.f32.mrb[0].mxu0
        %v2701 = vadd.f32 0.0, %v2700
        %v2702 = vpop.f32.mrb[0].mxu0
        %v2703 = vpop.f32.mrb[0].mxu0
        %v2704 = vadd.f32 0.0, %v2703
        %v2705 = vpop.f32.mrb[0].mxu0
        %2706 = vmatprep.mubr.bf16.mxu0 0
        %2707 = vmatmul.mubr.bf16.gmra.mrb[0].mxu0 %v2622
        %v2708 = vpop.f32.mrb[0].mxu0
        %v2709 = vadd.f32 0.0, %v2708
        %v2710 = vpop.f32.mrb[0].mxu0
        %v2711 = vpop.f32.mrb[0].mxu0
        %v2712 = vadd.f32 0.0, %v2711
        %v2713 = vpop.f32.mrb[0].mxu0
        %2714 = vmatprep.mubr.bf16.mxu0 0
        %2715 = vmatmul.mubr.bf16.gmra.mrb[0].mxu0 %v2625
        %v2716 = vpop.f32.mrb[0].mxu0
        %v2717 = vadd.f32 0.0, %v2716
        %v2718 = vpop.f32.mrb[0].mxu0
        %v2719 = vpop.f32.mrb[0].mxu0
        %v2720 = vadd.f32 0.0, %v2719
        %v2721 = vpop.f32.mrb[0].mxu0
        %2722 = vmatprep.mubr.bf16.mxu0 0
        %2723 = vmatmul.mubr.bf16.gmra.mrb[0].mxu0 %v2628
        %v2724 = vpop.f32.mrb[0].mxu0
        %v2725 = vadd.f32 0.0, %v2724
        %v2726 = vpop.f32.mrb[0].mxu0
        %v2727 = vpop.f32.mrb[0].mxu0
        %v2728 = vadd.f32 0.0, %v2727
        %v2729 = vpop.f32.mrb[0].mxu0
        %2730 = vmatprep.mubr.bf16.mxu0 0
        %2731 = vmatmul.mubr.bf16.gmra.mrb[0].mxu0 %v2631
        %v2732 = vpop.f32.mrb[0].mxu0
        %v2733 = vadd.f32 0.0, %v2732
        %v2734 = vpop.f32.mrb[0].mxu0
        %v2735 = vpop.f32.mrb[0].mxu0
        %v2736 = vadd.f32 0.0, %v2735
        %v2737 = vpop.f32.mrb[0].mxu0
        %2738 = vmatprep.mubr.bf16.mxu0 0
        %2739 = vmatmul.mubr.bf16.gmra.mrb[0].mxu0 %v2634
        %v2740 = vpop.f32.mrb[0].mxu0
        %v2741 = vadd.f32 0.0, %v2740
        %v2742 = vpop.f32.mrb[0].mxu0
        %v2743 = vpop.f32.mrb[0].mxu0
        %v2744 = vadd.f32 0.0, %v2743
        %v2745 = vpop.f32.mrb[0].mxu0
        %2746 = vmatprep.mubr.bf16.mxu0 0
        %2747 = vmatmul.mubr.bf16.gmra.mrb[0].mxu0 %v2637
        %v2748 = vpop.f32.mrb[0].mxu0
        %v2749 = vadd.f32 0.0, %v2748
        %v2750 = vpop.f32.mrb[0].mxu0
        %v2751 = vpop.f32.mrb[0].mxu0
        %v2752 = vadd.f32 0.0, %v2751
        %v2753 = vpop.f32.mrb[0].mxu0
        %2754 = vmatprep.mubr.bf16.mxu0 0
        %2755 = vmatmul.mubr.bf16.gmra.mrb[0].mxu0 %v2640
        %v2756 = vpop.f32.mrb[0].mxu0
        %v2757 = vadd.f32 0.0, %v2756
        %v2758 = vpop.f32.mrb[0].mxu0
        %v2759 = vpop.f32.mrb[0].mxu0
        %v2760 = vadd.f32 0.0, %v2759
        %v2761 = vpop.f32.mrb[0].mxu0
        %2762 = vmatprep.mubr.bf16.mxu0 0
        %2763 = vmatmul.mubr.bf16.gmra.mrb[0].mxu0 %v2643
        %v2764 = vpop.f32.mrb[0].mxu0
        %v2765 = vadd.f32 0.0, %v2764
        %v2766 = vpop.f32.mrb[0].mxu0
        %v2767 = vpop.f32.mrb[0].mxu0
        %v2768 = vadd.f32 0.0, %v2767
        %v2769 = vpop.f32.mrb[0].mxu0
        %2770 = vmatprep.mubr.bf16.mxu0 0
        %2771 = vmatmul.mubr.bf16.gmra.mrb[0].mxu0 %v2646
        %v2772 = vpop.f32.mrb[0].mxu0
        %v2773 = vadd.f32 0.0, %v2772
        %v2774 = vpop.f32.mrb[0].mxu0
        %v2775 = vpop.f32.mrb[0].mxu0
        %v2776 = vadd.f32 0.0, %v2775
        %v2777 = vpop.f32.mrb[0].mxu0
        %2778 = vmatprep.mubr.bf16.mxu0 0
        %2779 = vmatmul.mubr.bf16.gmra.mrb[0].mxu0 %v2649
        %v2780 = vpop.f32.mrb[0].mxu0
        %v2781 = vadd.f32 0.0, %v2780
        %v2782 = vpop.f32.mrb[0].mxu0
        %v2783 = vpop.f32.mrb[0].mxu0
        %v2784 = vadd.f32 0.0, %v2783
        %v2785 = vpop.f32.mrb[0].mxu0
        %2786 = vmatprep.mubr.bf16.mxu0 0
        %2787 = vmatmul.mubr.bf16.gmra.mrb[0].mxu0 %v2652
        %v2788 = vpop.f32.mrb[0].mxu0
        %v2789 = vadd.f32 0.0, %v2788
        %v2790 = vpop.f32.mrb[0].mxu0
        %v2791 = vpop.f32.mrb[0].mxu0
        %v2792 = vadd.f32 0.0, %v2791
        %v2793 = vpop.f32.mrb[0].mxu0
        %2794 = vmatprep.mubr.bf16.mxu0 0
        %2795 = vmatmul.mubr.bf16.gmra.mrb[0].mxu0 %v2655
        %v2796 = vpop.f32.mrb[0].mxu0
        %v2797 = vadd.f32 0.0, %v2796
        %v2798 = vpop.f32.mrb[0].mxu0
        %v2799 = vpop.f32.mrb[0].mxu0
        %v2800 = vadd.f32 0.0, %v2799
        %v2801 = vpop.f32.mrb[0].mxu0
        %2802 = vmatprep.mubr.bf16.mxu0 0
        %2803 = vmatmul.mubr.bf16.gmra.mrb[0].mxu0 %v2658
        %v2804 = vpop.f32.mrb[0].mxu0
        %v2805 = vadd.f32 0.0, %v2804
        %v2806 = vpop.f32.mrb[0].mxu0
        %v2807 = vpop.f32.mrb[0].mxu0
        %v2808 = vadd.f32 0.0, %v2807
        %v2809 = vpop.f32.mrb[0].mxu0
        %2810 = vmatprep.mubr.bf16.mxu0 0
        %2811 = vmatmul.mubr.bf16.gmra.mrb[0].mxu0 %v2661
        %v2812 = vpop.f32.mrb[0].mxu0
        %v2813 = vadd.f32 0.0, %v2812
        %v2814 = vpop.f32.mrb[0].mxu0
        %v2815 = vpop.f32.mrb[0].mxu0
        %v2816 = vadd.f32 0.0, %v2815
        %v2817 = vpop.f32.mrb[0].mxu0
        %2818 = vmatprep.mubr.bf16.mxu0 0
        %2819 = vmatmul.mubr.bf16.gmra.mrb[0].mxu0 %v2664
        %v2820 = vpop.f32.mrb[0].mxu0
        %v2821 = vadd.f32 0.0, %v2820
        %v2822 = vpop.f32.mrb[0].mxu0
        %v2823 = vpop.f32.mrb[0].mxu0
        %v2824 = vadd.f32 0.0, %v2823
        %v2825 = vpop.f32.mrb[0].mxu0
        %2826 = vdwg.mxu0
        %v2827 = vadd.f32 %v2468, %v2701
        %v2828 = vadd.f32 %v2471, %v2704
        %v2829 = vadd.f32 %v2476, %v2709
        %v2830 = vadd.f32 %v2479, %v2712
        %v2831 = vadd.f32 %v2484, %v2717
        %v2832 = vadd.f32 %v2487, %v2720
        %v2833 = vadd.f32 %v2492, %v2725
        %v2834 = vadd.f32 %v2495, %v2728
        %v2835 = vadd.f32 %v2500, %v2733
        %v2836 = vadd.f32 %v2503, %v2736
        %v2837 = vadd.f32 %v2508, %v2741
        %v2838 = vadd.f32 %v2511, %v2744
        %v2839 = vadd.f32 %v2516, %v2749
        %v2840 = vadd.f32 %v2519, %v2752
        %v2841 = vadd.f32 %v2524, %v2757
        %v2842 = vadd.f32 %v2527, %v2760
        %v2843 = vadd.f32 %v2532, %v2765
        %v2844 = vadd.f32 %v2535, %v2768
        %v2845 = vadd.f32 %v2540, %v2773
        %v2846 = vadd.f32 %v2543, %v2776
        %v2847 = vadd.f32 %v2548, %v2781
        %v2848 = vadd.f32 %v2551, %v2784
        %v2849 = vadd.f32 %v2556, %v2789
        %v2850 = vadd.f32 %v2559, %v2792
        %v2851 = vadd.f32 %v2564, %v2797
        %v2852 = vadd.f32 %v2567, %v2800
        %v2853 = vadd.f32 %v2572, %v2805
        %v2854 = vadd.f32 %v2575, %v2808
        %v2855 = vadd.f32 %v2580, %v2813
        %v2856 = vadd.f32 %v2583, %v2816
        %v2857 = vadd.f32 %v2588, %v2821
        %v2858 = vadd.f32 %v2591, %v2824
        %v2859 = vld [vmem:[%s4] sm:$0x1]
        %v2861 = vlaneseq
        %v2862 = vshrl.u32 %v2861, 7
        %v2863 = vsub.s32 0, %v2862
        %v2864 = vrot.slane %v2859, %v2863
        %v2866 = vadd.f32 %v2827, %v2864
        %v2867 = vadd.f32 %v2828, %v2864
        %v2868 = vadd.f32 %v2829, %v2864
        %v2869 = vadd.f32 %v2830, %v2864
        %v2870 = vadd.f32 %v2831, %v2864
        %v2871 = vadd.f32 %v2832, %v2864
        %v2872 = vadd.f32 %v2833, %v2864
        %v2873 = vadd.f32 %v2834, %v2864
        %v2874 = vadd.f32 %v2835, %v2864
        %v2875 = vadd.f32 %v2836, %v2864
        %v2876 = vadd.f32 %v2837, %v2864
        %v2877 = vadd.f32 %v2838, %v2864
        %v2878 = vadd.f32 %v2839, %v2864
        %v2879 = vadd.f32 %v2840, %v2864
        %v2880 = vadd.f32 %v2841, %v2864
        %v2881 = vadd.f32 %v2842, %v2864
        %v2882 = vadd.f32 %v2843, %v2864
        %v2883 = vadd.f32 %v2844, %v2864
        %v2884 = vadd.f32 %v2845, %v2864
        %v2885 = vadd.f32 %v2846, %v2864
        %v2886 = vadd.f32 %v2847, %v2864
        %v2887 = vadd.f32 %v2848, %v2864
        %v2888 = vadd.f32 %v2849, %v2864
        %v2889 = vadd.f32 %v2850, %v2864
        %v2890 = vadd.f32 %v2851, %v2864
        %v2891 = vadd.f32 %v2852, %v2864
        %v2892 = vadd.f32 %v2853, %v2864
        %v2893 = vadd.f32 %v2854, %v2864
        %v2894 = vadd.f32 %v2855, %v2864
        %v2895 = vadd.f32 %v2856, %v2864
        %v2896 = vadd.f32 %v2857, %v2864
        %v2897 = vadd.f32 %v2858, %v2864
        %v2898 = vmax.f32 %v2866, 0.0
        %v2899 = vmax.f32 %v2867, 0.0
        %v2900 = vmax.f32 %v2868, 0.0
        %v2901 = vmax.f32 %v2869, 0.0
        %v2902 = vmax.f32 %v2870, 0.0
        %v2903 = vmax.f32 %v2871, 0.0
        %v2904 = vmax.f32 %v2872, 0.0
        %v2905 = vmax.f32 %v2873, 0.0
        %v2906 = vmax.f32 %v2874, 0.0
        %v2907 = vmax.f32 %v2875, 0.0
        %v2908 = vmax.f32 %v2876, 0.0
        %v2909 = vmax.f32 %v2877, 0.0
        %v2910 = vmax.f32 %v2878, 0.0
        %v2911 = vmax.f32 %v2879, 0.0
        %v2912 = vmax.f32 %v2880, 0.0
        %v2913 = vmax.f32 %v2881, 0.0
        %v2914 = vmax.f32 %v2882, 0.0
        %v2915 = vmax.f32 %v2883, 0.0
        %v2916 = vmax.f32 %v2884, 0.0
        %v2917 = vmax.f32 %v2885, 0.0
        %v2918 = vmax.f32 %v2886, 0.0
        %v2919 = vmax.f32 %v2887, 0.0
        %v2920 = vmax.f32 %v2888, 0.0
        %v2921 = vmax.f32 %v2889, 0.0
        %v2922 = vmax.f32 %v2890, 0.0
        %v2923 = vmax.f32 %v2891, 0.0
        %v2924 = vmax.f32 %v2892, 0.0
        %v2925 = vmax.f32 %v2893, 0.0
        %v2926 = vmax.f32 %v2894, 0.0
        %v2927 = vmax.f32 %v2895, 0.0
        %v2928 = vmax.f32 %v2896, 0.0
        %v2929 = vmax.f32 %v2897, 0.0
        %vm2930 = vcmask 261120
        %2931 = vst.msk [vmem:[#allocation2] sm:$0xff] %vm2930, %v2898
        %2932 = vst.msk [vmem:[#allocation2 + $0x8] sm:$0xff] %vm2930, %v2899
        %2933 = vst.msk [vmem:[#allocation2 + $0x10] sm:$0xff] %vm2930, %v2900
        %2934 = vst.msk [vmem:[#allocation2 + $0x18] sm:$0xff] %vm2930, %v2901
        %2935 = vst.msk [vmem:[#allocation2 + $0x20] sm:$0xff] %vm2930, %v2902
        %2936 = vst.msk [vmem:[#allocation2 + $0x28] sm:$0xff] %vm2930, %v2903
        %2937 = vst.msk [vmem:[#allocation2 + $0x30] sm:$0xff] %vm2930, %v2904
        %2938 = vst.msk [vmem:[#allocation2 + $0x38] sm:$0xff] %vm2930, %v2905
        %2939 = vst.msk [vmem:[#allocation2 + $0x40] sm:$0xff] %vm2930, %v2906
        %2940 = vst.msk [vmem:[#allocation2 + $0x48] sm:$0xff] %vm2930, %v2907
        %2941 = vst.msk [vmem:[#allocation2 + $0x50] sm:$0xff] %vm2930, %v2908
        %2942 = vst.msk [vmem:[#allocation2 + $0x58] sm:$0xff] %vm2930, %v2909
        %2943 = vst.msk [vmem:[#allocation2 + $0x60] sm:$0xff] %vm2930, %v2910
        %2944 = vst.msk [vmem:[#allocation2 + $0x68] sm:$0xff] %vm2930, %v2911
        %2945 = vst.msk [vmem:[#allocation2 + $0x70] sm:$0xff] %vm2930, %v2912
        %2946 = vst.msk [vmem:[#allocation2 + $0x78] sm:$0xff] %vm2930, %v2913
        %2947 = vst.msk [vmem:[#allocation2 + $0x80] sm:$0xff] %vm2930, %v2914
        %2948 = vst.msk [vmem:[#allocation2 + $0x88] sm:$0xff] %vm2930, %v2915
        %2949 = vst.msk [vmem:[#allocation2 + $0x90] sm:$0xff] %vm2930, %v2916
        %2950 = vst.msk [vmem:[#allocation2 + $0x98] sm:$0xff] %vm2930, %v2917
        %2951 = vst.msk [vmem:[#allocation2 + $0xa0] sm:$0xff] %vm2930, %v2918
        %2952 = vst.msk [vmem:[#allocation2 + $0xa8] sm:$0xff] %vm2930, %v2919
        %2953 = vst.msk [vmem:[#allocation2 + $0xb0] sm:$0xff] %vm2930, %v2920
        %2954 = vst.msk [vmem:[#allocation2 + $0xb8] sm:$0xff] %vm2930, %v2921
        %2955 = vst.msk [vmem:[#allocation2 + $0xc0] sm:$0xff] %vm2930, %v2922
        %2956 = vst.msk [vmem:[#allocation2 + $0xc8] sm:$0xff] %vm2930, %v2923
        %2957 = vst.msk [vmem:[#allocation2 + $0xd0] sm:$0xff] %vm2930, %v2924
        %2958 = vst.msk [vmem:[#allocation2 + $0xd8] sm:$0xff] %vm2930, %v2925
        %2959 = vst.msk [vmem:[#allocation2 + $0xe0] sm:$0xff] %vm2930, %v2926
        %2960 = vst.msk [vmem:[#allocation2 + $0xe8] sm:$0xff] %vm2930, %v2927
        %2961 = vst.msk [vmem:[#allocation2 + $0xf0] sm:$0xff] %vm2930, %v2928
        %2962 = vst.msk [vmem:[#allocation2 + $0xf8] sm:$0xff] %vm2930, %v2929
        %v2963 = vld [vmem:[#allocation2] ss:$2 sm:$0xff]
        %v2964 = vld [vmem:[%s1329] ss:$2 sm:$0xff]
        %v2965 = vld [vmem:[%s1331] ss:$2 sm:$0xff]
        %v2966 = vld [vmem:[%s1333] ss:$2 sm:$0xff]
        %v2967 = vld [vmem:[%s1335] ss:$2 sm:$0xff]
        %v2968 = vld [vmem:[%s1337] ss:$2 sm:$0xff]
        %v2969 = vld [vmem:[%s1339] ss:$2 sm:$0xff]
        %v2970 = vld [vmem:[%s1341] ss:$2 sm:$0xff]
        %v2971 = vld [vmem:[%s1343] ss:$2 sm:$0xff]
        %v2972 = vld [vmem:[%s1345] ss:$2 sm:$0xff]
        %v2973 = vld [vmem:[%s1347] ss:$2 sm:$0xff]
        %v2974 = vld [vmem:[%s1349] ss:$2 sm:$0xff]
        %v2975 = vld [vmem:[%s1351] ss:$2 sm:$0xff]
        %v2976 = vld [vmem:[%s1353] ss:$2 sm:$0xff]
        %v2977 = vld [vmem:[%s1355] ss:$2 sm:$0xff]
        %v2978 = vld [vmem:[%s1357] ss:$2 sm:$0xff]
        %v2979 = vld [vmem:[%s1391] ss:$2 sm:$0xff]
        %v2980 = vld [vmem:[%s1393] ss:$2 sm:$0xff]
        %v2981 = vld [vmem:[%s1395] ss:$2 sm:$0xff]
        %v2982 = vld [vmem:[%s1397] ss:$2 sm:$0xff]
        %v2983 = vld [vmem:[%s1399] ss:$2 sm:$0xff]
        %v2984 = vld [vmem:[%s1401] ss:$2 sm:$0xff]
        %v2985 = vld [vmem:[%s1403] ss:$2 sm:$0xff]
        %v2986 = vld [vmem:[%s1405] ss:$2 sm:$0xff]
        %v2987 = vld [vmem:[%s1407] ss:$2 sm:$0xff]
        %v2988 = vld [vmem:[%s1409] ss:$2 sm:$0xff]
        %v2989 = vld [vmem:[%s1411] ss:$2 sm:$0xff]
        %v2990 = vld [vmem:[%s1413] ss:$2 sm:$0xff]
        %v2991 = vld [vmem:[%s1415] ss:$2 sm:$0xff]
        %v2992 = vld [vmem:[%s1417] ss:$2 sm:$0xff]
        %v2993 = vld [vmem:[%s1419] ss:$2 sm:$0xff]
        %v2994 = vld [vmem:[%s1421] ss:$2 sm:$0xff]
        %v2995 = vmax.f32 %v2963, %v2979
        %v2996 = vmax.f32 %v2964, %v2980
        %v2997 = vmax.f32 %v2965, %v2981
        %v2998 = vmax.f32 %v2966, %v2982
        %v2999 = vmax.f32 %v2967, %v2983
        %v3000 = vmax.f32 %v2968, %v2984
        %v3001 = vmax.f32 %v2969, %v2985
        %v3002 = vmax.f32 %v2970, %v2986
        %v3003 = vmax.f32 %v2971, %v2987
        %v3004 = vmax.f32 %v2972, %v2988
        %v3005 = vmax.f32 %v2973, %v2989
        %v3006 = vmax.f32 %v2974, %v2990
        %v3007 = vmax.f32 %v2975, %v2991
        %v3008 = vmax.f32 %v2976, %v2992
        %v3009 = vmax.f32 %v2977, %v2993
        %v3010 = vmax.f32 %v2978, %v2994
        %3011 = vst.msk [vmem:[#allocation2 + $0x1] sm:$0xff] %vm2930, %v2995
        %3012 = vst.msk [vmem:[#allocation2 + $0x9] sm:$0xff] %vm2930, %v2996
        %3013 = vst.msk [vmem:[#allocation2 + $0x11] sm:$0xff] %vm2930, %v2997
        %3014 = vst.msk [vmem:[#allocation2 + $0x19] sm:$0xff] %vm2930, %v2998
        %3015 = vst.msk [vmem:[#allocation2 + $0x21] sm:$0xff] %vm2930, %v2999
        %3016 = vst.msk [vmem:[#allocation2 + $0x29] sm:$0xff] %vm2930, %v3000
        %3017 = vst.msk [vmem:[#allocation2 + $0x31] sm:$0xff] %vm2930, %v3001
        %3018 = vst.msk [vmem:[#allocation2 + $0x39] sm:$0xff] %vm2930, %v3002
        %3019 = vst.msk [vmem:[#allocation2 + $0x41] sm:$0xff] %vm2930, %v3003
        %3020 = vst.msk [vmem:[#allocation2 + $0x49] sm:$0xff] %vm2930, %v3004
        %3021 = vst.msk [vmem:[#allocation2 + $0x51] sm:$0xff] %vm2930, %v3005
        %3022 = vst.msk [vmem:[#allocation2 + $0x59] sm:$0xff] %vm2930, %v3006
        %3023 = vst.msk [vmem:[#allocation2 + $0x61] sm:$0xff] %vm2930, %v3007
        %3024 = vst.msk [vmem:[#allocation2 + $0x69] sm:$0xff] %vm2930, %v3008
        %3025 = vst.msk [vmem:[#allocation2 + $0x71] sm:$0xff] %vm2930, %v3009
        %3026 = vst.msk [vmem:[#allocation2 + $0x79] sm:$0xff] %vm2930, %v3010
        %vm3027 = vcmp.lt.s32.totalorder %v1520, 0
        %v3028 = vsub.s32 0, %v1520
        %v3029 = vsel %vm3027, %v3028, %v1520
        %v3030 = vshrl.u32 %v3029, 4
        %v3031 = vand.u32 %v3029, 15
        %v3032 = vsub.s32 0, %v3031
        %v3033 = vsel %vm3027, %v3032, %v3031
        %vm3034 = vcmp.lt.s32.totalorder %v1521, 0
        %v3035 = vsub.s32 0, %v1521
        %v3036 = vsel %vm3034, %v3035, %v1521
        %v3037 = vshrl.u32 %v3036, 4
        %v3038 = vand.u32 %v3036, 15
        %v3039 = vsub.s32 0, %v3038
        %v3040 = vsel %vm3034, %v3039, %v3038
        %vm3041 = vcmp.lt.s32.totalorder %v1522, 0
        %v3042 = vsub.s32 0, %v1522
        %v3043 = vsel %vm3041, %v3042, %v1522
        %v3044 = vshrl.u32 %v3043, 4
        %v3045 = vand.u32 %v3043, 15
        %v3046 = vsub.s32 0, %v3045
        %v3047 = vsel %vm3041, %v3046, %v3045
        %vm3048 = vcmp.lt.s32.totalorder %v1523, 0
        %v3049 = vsub.s32 0, %v1523
        %v3050 = vsel %vm3048, %v3049, %v1523
        %v3051 = vshrl.u32 %v3050, 4
        %v3052 = vand.u32 %v3050, 15
        %v3053 = vsub.s32 0, %v3052
        %v3054 = vsel %vm3048, %v3053, %v3052
        %vm3055 = vcmp.lt.s32.totalorder %v1524, 0
        %v3056 = vsub.s32 0, %v1524
        %v3057 = vsel %vm3055, %v3056, %v1524
        %v3058 = vshrl.u32 %v3057, 4
        %v3059 = vand.u32 %v3057, 15
        %v3060 = vsub.s32 0, %v3059
        %v3061 = vsel %vm3055, %v3060, %v3059
        %vm3062 = vcmp.lt.s32.totalorder %v1525, 0
        %v3063 = vsub.s32 0, %v1525
        %v3064 = vsel %vm3062, %v3063, %v1525
        %v3065 = vshrl.u32 %v3064, 4
        %v3066 = vand.u32 %v3064, 15
        %v3067 = vsub.s32 0, %v3066
        %v3068 = vsel %vm3062, %v3067, %v3066
        %vm3069 = vcmp.lt.s32.totalorder %v1526, 0
        %v3070 = vsub.s32 0, %v1526
        %v3071 = vsel %vm3069, %v3070, %v1526
        %v3072 = vshrl.u32 %v3071, 4
        %v3073 = vand.u32 %v3071, 15
        %v3074 = vsub.s32 0, %v3073
        %v3075 = vsel %vm3069, %v3074, %v3073
        %vm3076 = vcmp.lt.s32.totalorder %v1527, 0
        %v3077 = vsub.s32 0, %v1527
        %v3078 = vsel %vm3076, %v3077, %v1527
        %v3079 = vshrl.u32 %v3078, 4
        %v3080 = vand.u32 %v3078, 15
        %v3081 = vsub.s32 0, %v3080
        %v3082 = vsel %vm3076, %v3081, %v3080
        %vm3083 = vcmp.lt.s32.totalorder %v1528, 0
        %v3084 = vsub.s32 0, %v1528
        %v3085 = vsel %vm3083, %v3084, %v1528
        %v3086 = vshrl.u32 %v3085, 4
        %v3087 = vand.u32 %v3085, 15
        %v3088 = vsub.s32 0, %v3087
        %v3089 = vsel %vm3083, %v3088, %v3087
        %vm3090 = vcmp.lt.s32.totalorder %v1529, 0
        %v3091 = vsub.s32 0, %v1529
        %v3092 = vsel %vm3090, %v3091, %v1529
        %v3093 = vshrl.u32 %v3092, 4
        %v3094 = vand.u32 %v3092, 15
        %v3095 = vsub.s32 0, %v3094
        %v3096 = vsel %vm3090, %v3095, %v3094
        %vm3097 = vcmp.lt.s32.totalorder %v1530, 0
        %v3098 = vsub.s32 0, %v1530
        %v3099 = vsel %vm3097, %v3098, %v1530
        %v3100 = vshrl.u32 %v3099, 4
        %v3101 = vand.u32 %v3099, 15
        %v3102 = vsub.s32 0, %v3101
        %v3103 = vsel %vm3097, %v3102, %v3101
        %vm3104 = vcmp.lt.s32.totalorder %v1531, 0
        %v3105 = vsub.s32 0, %v1531
        %v3106 = vsel %vm3104, %v3105, %v1531
        %v3107 = vshrl.u32 %v3106, 4
        %v3108 = vand.u32 %v3106, 15
        %v3109 = vsub.s32 0, %v3108
        %v3110 = vsel %vm3104, %v3109, %v3108
        %vm3111 = vcmp.lt.s32.totalorder %v1532, 0
        %v3112 = vsub.s32 0, %v1532
        %v3113 = vsel %vm3111, %v3112, %v1532
        %v3114 = vshrl.u32 %v3113, 4
        %v3115 = vand.u32 %v3113, 15
        %v3116 = vsub.s32 0, %v3115
        %v3117 = vsel %vm3111, %v3116, %v3115
        %vm3118 = vcmp.lt.s32.totalorder %v1533, 0
        %v3119 = vsub.s32 0, %v1533
        %v3120 = vsel %vm3118, %v3119, %v1533
        %v3121 = vshrl.u32 %v3120, 4
        %v3122 = vand.u32 %v3120, 15
        %v3123 = vsub.s32 0, %v3122
        %v3124 = vsel %vm3118, %v3123, %v3122
        %vm3125 = vcmp.lt.s32.totalorder %v1534, 0
        %v3126 = vsub.s32 0, %v1534
        %v3127 = vsel %vm3125, %v3126, %v1534
        %v3128 = vshrl.u32 %v3127, 4
        %v3129 = vand.u32 %v3127, 15
        %v3130 = vsub.s32 0, %v3129
        %v3131 = vsel %vm3125, %v3130, %v3129
        %vm3132 = vcmp.lt.s32.totalorder %v1535, 0
        %v3133 = vsub.s32 0, %v1535
        %v3134 = vsel %vm3132, %v3133, %v1535
        %v3135 = vshrl.u32 %v3134, 4
        %v3136 = vand.u32 %v3134, 15
        %v3137 = vsub.s32 0, %v3136
        %v3138 = vsel %vm3132, %v3137, %v3136
        %vm3139 = vcmp.ne.s32.totalorder %v3033, 0
        %vm3140 = vcmp.ne.s32.totalorder %v3040, 0
        %vm3141 = vcmp.ne.s32.totalorder %v3047, 0
        %vm3142 = vcmp.ne.s32.totalorder %v3054, 0
        %vm3143 = vcmp.ne.s32.totalorder %v3061, 0
        %vm3144 = vcmp.ne.s32.totalorder %v3068, 0
        %vm3145 = vcmp.ne.s32.totalorder %v3075, 0
        %vm3146 = vcmp.ne.s32.totalorder %v3082, 0
        %vm3147 = vcmp.ne.s32.totalorder %v3089, 0
        %vm3148 = vcmp.ne.s32.totalorder %v3096, 0
        %vm3149 = vcmp.ne.s32.totalorder %v3103, 0
        %vm3150 = vcmp.ne.s32.totalorder %v3110, 0
        %vm3151 = vcmp.ne.s32.totalorder %v3117, 0
        %vm3152 = vcmp.ne.s32.totalorder %v3124, 0
        %vm3153 = vcmp.ne.s32.totalorder %v3131, 0
        %vm3154 = vcmp.ne.s32.totalorder %v3138, 0
        %vm3155 = vcmp.lt.s32.totalorder %v3033, 0
        %vm3156 = vcmp.lt.s32.totalorder %v3040, 0
        %vm3157 = vcmp.lt.s32.totalorder %v3047, 0
        %vm3158 = vcmp.lt.s32.totalorder %v3054, 0
        %vm3159 = vcmp.lt.s32.totalorder %v3061, 0
        %vm3160 = vcmp.lt.s32.totalorder %v3068, 0
        %vm3161 = vcmp.lt.s32.totalorder %v3075, 0
        %vm3162 = vcmp.lt.s32.totalorder %v3082, 0
        %vm3163 = vcmp.lt.s32.totalorder %v3089, 0
        %vm3164 = vcmp.lt.s32.totalorder %v3096, 0
        %vm3165 = vcmp.lt.s32.totalorder %v3103, 0
        %vm3166 = vcmp.lt.s32.totalorder %v3110, 0
        %vm3167 = vcmp.lt.s32.totalorder %v3117, 0
        %vm3168 = vcmp.lt.s32.totalorder %v3124, 0
        %vm3169 = vcmp.lt.s32.totalorder %v3131, 0
        %vm3170 = vcmp.lt.s32.totalorder %v3138, 0
        %vm3171 = vmand %vm3155, %vm3139
        %vm3172 = vmand %vm3156, %vm3140
        %vm3173 = vmand %vm3157, %vm3141
        %vm3174 = vmand %vm3158, %vm3142
        %vm3175 = vmand %vm3159, %vm3143
        %vm3176 = vmand %vm3160, %vm3144
        %vm3177 = vmand %vm3161, %vm3145
        %vm3178 = vmand %vm3162, %vm3146
        %vm3179 = vmand %vm3163, %vm3147
        %vm3180 = vmand %vm3164, %vm3148
        %vm3181 = vmand %vm3165, %vm3149
        %vm3182 = vmand %vm3166, %vm3150
        %vm3183 = vmand %vm3167, %vm3151
        %vm3184 = vmand %vm3168, %vm3152
        %vm3185 = vmand %vm3169, %vm3153
        %vm3186 = vmand %vm3170, %vm3154
        %v3187 = vadd.s32 %v3033, 16
        %v3188 = vadd.s32 %v3040, 16
        %v3189 = vadd.s32 %v3047, 16
        %v3190 = vadd.s32 %v3054, 16
        %v3191 = vadd.s32 %v3061, 16
        %v3192 = vadd.s32 %v3068, 16
        %v3193 = vadd.s32 %v3075, 16
        %v3194 = vadd.s32 %v3082, 16
        %v3195 = vadd.s32 %v3089, 16
        %v3196 = vadd.s32 %v3096, 16
        %v3197 = vadd.s32 %v3103, 16
        %v3198 = vadd.s32 %v3110, 16
        %v3199 = vadd.s32 %v3117, 16
        %v3200 = vadd.s32 %v3124, 16
        %v3201 = vadd.s32 %v3131, 16
        %v3202 = vadd.s32 %v3138, 16
        %v3203 = vsel %vm3171, %v3187, %v3033
        %v3204 = vsel %vm3172, %v3188, %v3040
        %v3205 = vsel %vm3173, %v3189, %v3047
        %v3206 = vsel %vm3174, %v3190, %v3054
        %v3207 = vsel %vm3175, %v3191, %v3061
        %v3208 = vsel %vm3176, %v3192, %v3068
        %v3209 = vsel %vm3177, %v3193, %v3075
        %v3210 = vsel %vm3178, %v3194, %v3082
        %v3211 = vsel %vm3179, %v3195, %v3089
        %v3212 = vsel %vm3180, %v3196, %v3096
        %v3213 = vsel %vm3181, %v3197, %v3103
        %v3214 = vsel %vm3182, %v3198, %v3110
        %v3215 = vsel %vm3183, %v3199, %v3117
        %v3216 = vsel %vm3184, %v3200, %v3124
        %v3217 = vsel %vm3185, %v3201, %v3131
        %v3218 = vsel %vm3186, %v3202, %v3138
        %vm3219 = vcmp.eq.s32.totalorder %v3203, 0
        %vm3220 = vcmp.eq.s32.totalorder %v3204, 0
        %vm3221 = vcmp.eq.s32.totalorder %v3205, 0
        %vm3222 = vcmp.eq.s32.totalorder %v3206, 0
        %vm3223 = vcmp.eq.s32.totalorder %v3207, 0
        %vm3224 = vcmp.eq.s32.totalorder %v3208, 0
        %vm3225 = vcmp.eq.s32.totalorder %v3209, 0
        %vm3226 = vcmp.eq.s32.totalorder %v3210, 0
        %vm3227 = vcmp.eq.s32.totalorder %v3211, 0
        %vm3228 = vcmp.eq.s32.totalorder %v3212, 0
        %vm3229 = vcmp.eq.s32.totalorder %v3213, 0
        %vm3230 = vcmp.eq.s32.totalorder %v3214, 0
        %vm3231 = vcmp.eq.s32.totalorder %v3215, 0
        %vm3232 = vcmp.eq.s32.totalorder %v3216, 0
        %vm3233 = vcmp.eq.s32.totalorder %v3217, 0
        %vm3234 = vcmp.eq.s32.totalorder %v3218, 0
        %v3235 = vld [vmem:[#allocation2] sm:$0xff]
        %v3236 = vld [vmem:[#allocation2 + $0x8] sm:$0xff]
        %v3237 = vld [vmem:[#allocation2 + $0x10] sm:$0xff]
        %v3238 = vld [vmem:[#allocation2 + $0x18] sm:$0xff]
        %v3239 = vld [vmem:[#allocation2 + $0x20] sm:$0xff]
        %v3240 = vld [vmem:[#allocation2 + $0x28] sm:$0xff]
        %v3241 = vld [vmem:[#allocation2 + $0x30] sm:$0xff]
        %v3242 = vld [vmem:[#allocation2 + $0x38] sm:$0xff]
        %v3243 = vld [vmem:[#allocation2 + $0x40] sm:$0xff]
        %v3244 = vld [vmem:[#allocation2 + $0x48] sm:$0xff]
        %v3245 = vld [vmem:[#allocation2 + $0x50] sm:$0xff]
        %v3246 = vld [vmem:[#allocation2 + $0x58] sm:$0xff]
        %v3247 = vld [vmem:[#allocation2 + $0x60] sm:$0xff]
        %v3248 = vld [vmem:[#allocation2 + $0x68] sm:$0xff]
        %v3249 = vld [vmem:[#allocation2 + $0x70] sm:$0xff]
        %v3250 = vld [vmem:[#allocation2 + $0x78] sm:$0xff]
        %v3251 = vsel %vm3219, 0.0, %v3235
        %v3252 = vsel %vm3220, 0.0, %v3236
        %v3253 = vsel %vm3221, 0.0, %v3237
        %v3254 = vsel %vm3222, 0.0, %v3238
        %v3255 = vsel %vm3223, 0.0, %v3239
        %v3256 = vsel %vm3224, 0.0, %v3240
        %v3257 = vsel %vm3225, 0.0, %v3241
        %v3258 = vsel %vm3226, 0.0, %v3242
        %v3259 = vsel %vm3227, 0.0, %v3243
        %v3260 = vsel %vm3228, 0.0, %v3244
        %v3261 = vsel %vm3229, 0.0, %v3245
        %v3262 = vsel %vm3230, 0.0, %v3246
        %v3263 = vsel %vm3231, 0.0, %v3247
        %v3264 = vsel %vm3232, 0.0, %v3248
        %v3265 = vsel %vm3233, 0.0, %v3249
        %v3266 = vsel %vm3234, 0.0, %v3250
        %vm3267 = vcmp.eq.s32.totalorder %v3203, 15
        %vm3268 = vcmp.eq.s32.totalorder %v3204, 15
        %vm3269 = vcmp.eq.s32.totalorder %v3205, 15
        %vm3270 = vcmp.eq.s32.totalorder %v3206, 15
        %vm3271 = vcmp.eq.s32.totalorder %v3207, 15
        %vm3272 = vcmp.eq.s32.totalorder %v3208, 15
        %vm3273 = vcmp.eq.s32.totalorder %v3209, 15
        %vm3274 = vcmp.eq.s32.totalorder %v3210, 15
        %vm3275 = vcmp.eq.s32.totalorder %v3211, 15
        %vm3276 = vcmp.eq.s32.totalorder %v3212, 15
        %vm3277 = vcmp.eq.s32.totalorder %v3213, 15
        %vm3278 = vcmp.eq.s32.totalorder %v3214, 15
        %vm3279 = vcmp.eq.s32.totalorder %v3215, 15
        %vm3280 = vcmp.eq.s32.totalorder %v3216, 15
        %vm3281 = vcmp.eq.s32.totalorder %v3217, 15
        %vm3282 = vcmp.eq.s32.totalorder %v3218, 15
        %v3283 = vld [vmem:[#allocation2 + $0x2] sm:$0xff]
        %v3284 = vld [vmem:[#allocation2 + $0xa] sm:$0xff]
        %v3285 = vld [vmem:[#allocation2 + $0x12] sm:$0xff]
        %v3286 = vld [vmem:[#allocation2 + $0x1a] sm:$0xff]
        %v3287 = vld [vmem:[#allocation2 + $0x22] sm:$0xff]
        %v3288 = vld [vmem:[#allocation2 + $0x2a] sm:$0xff]
        %v3289 = vld [vmem:[#allocation2 + $0x32] sm:$0xff]
        %v3290 = vld [vmem:[#allocation2 + $0x3a] sm:$0xff]
        %v3291 = vld [vmem:[#allocation2 + $0x42] sm:$0xff]
        %v3292 = vld [vmem:[#allocation2 + $0x4a] sm:$0xff]
        %v3293 = vld [vmem:[#allocation2 + $0x52] sm:$0xff]
        %v3294 = vld [vmem:[#allocation2 + $0x5a] sm:$0xff]
        %v3295 = vld [vmem:[#allocation2 + $0x62] sm:$0xff]
        %v3296 = vld [vmem:[#allocation2 + $0x6a] sm:$0xff]
        %v3297 = vld [vmem:[#allocation2 + $0x72] sm:$0xff]
        %v3298 = vld [vmem:[#allocation2 + $0x7a] sm:$0xff]
        %v3299 = vsel %vm3267, 0.0, %v3283
        %v3300 = vsel %vm3268, 0.0, %v3284
        %v3301 = vsel %vm3269, 0.0, %v3285
        %v3302 = vsel %vm3270, 0.0, %v3286
        %v3303 = vsel %vm3271, 0.0, %v3287
        %v3304 = vsel %vm3272, 0.0, %v3288
        %v3305 = vsel %vm3273, 0.0, %v3289
        %v3306 = vsel %vm3274, 0.0, %v3290
        %v3307 = vsel %vm3275, 0.0, %v3291
        %v3308 = vsel %vm3276, 0.0, %v3292
        %v3309 = vsel %vm3277, 0.0, %v3293
        %v3310 = vsel %vm3278, 0.0, %v3294
        %v3311 = vsel %vm3279, 0.0, %v3295
        %v3312 = vsel %vm3280, 0.0, %v3296
        %v3313 = vsel %vm3281, 0.0, %v3297
        %v3314 = vsel %vm3282, 0.0, %v3298
        %v3315 = vpack.c.bf16 %v3252, %v3251
        %v3316 = vpack.c.bf16 %v3254, %v3253
        %v3317 = vpack.c.bf16 %v3256, %v3255
        %v3318 = vpack.c.bf16 %v3258, %v3257
        %v3319 = vpack.c.bf16 %v3260, %v3259
        %v3320 = vpack.c.bf16 %v3262, %v3261
        %v3321 = vpack.c.bf16 %v3264, %v3263
        %v3322 = vpack.c.bf16 %v3266, %v3265
        %v3323 = vld [vmem:[%s5] sm:$0xf]
        %v3324 = vld [vmem:[%s5 + $0x4] sm:$0xf]
        %v3325 = vld [vmem:[%s5 + $0x8] sm:$0xf]
        %v3326 = vld [vmem:[%s5 + $0xc] sm:$0xf]
        %v3327 = vpack.c.bf16 %v2996, %v2995
        %v3328 = vpack.c.bf16 %v2998, %v2997
        %v3329 = vpack.c.bf16 %v3000, %v2999
        %v3330 = vpack.c.bf16 %v3002, %v3001
        %v3331 = vpack.c.bf16 %v3004, %v3003
        %v3332 = vpack.c.bf16 %v3006, %v3005
        %v3333 = vpack.c.bf16 %v3008, %v3007
        %v3334 = vpack.c.bf16 %v3010, %v3009
        %v3335 = vld [vmem:[%s5 + $0x10] sm:$0xf]
        %v3336 = vld [vmem:[%s5 + $0x14] sm:$0xf]
        %v3337 = vld [vmem:[%s5 + $0x18] sm:$0xf]
        %v3338 = vld [vmem:[%s5 + $0x1c] sm:$0xf]
        %v3343 = vunpack.c.l.b16 %v3335
        %v3344 = vunpack.c.l.b16 %v3336
        %v3345 = vunpack.c.l.b16 %v3337
        %v3346 = vunpack.c.l.b16 %v3338
        %v3347 = vpack.c.b16 %v3344, %v3343
        %v3348 = vpack.c.b16 %v3346, %v3345
        %v3352 = vsel %vm2930, %v3327, 0
        %v3355 = vsel %vm2930, %v3328, 0
        %v3358 = vsel %vm2930, %v3329, 0
        %v3361 = vsel %vm2930, %v3330, 0
        %v3364 = vsel %vm2930, %v3331, 0
        %v3367 = vsel %vm2930, %v3332, 0
        %v3370 = vsel %vm2930, %v3333, 0
        %v3373 = vsel %vm2930, %v3334, 0
        %3375 = vmatprep.subr.bf16.mxu0 0
        %3376 = vmatpush1.bf16.msra.mxu0 %v3347
        %3377 = vmatprep.subr.bf16.mxu0 0
        %3378 = vmatpush1.bf16.msra.mxu0 %v3348
        %3379 = vmatprep.subr.bf16.mxu0 0
        %3380 = vmatpush1.bf16.msra.mxu0 0
        %3381 = vmatprep.subr.bf16.mxu0 0
        %3382 = vmatpush1.bf16.msra.mxu0 0
        %3383 = vmatprep.subr.bf16.mxu0 0
        %3384 = vmatpush1.bf16.msra.mxu0 0
        %3385 = vmatprep.subr.bf16.mxu0 0
        %3386 = vmatpush1.bf16.msra.mxu0 0
        %3387 = vmatprep.subr.bf16.mxu0 0
        %3388 = vmatpush1.bf16.msra.mxu0 0
        %3389 = vmatprep.subr.bf16.mxu0 0
        %3390 = vmatpush1.bf16.msra.mxu0 0
        %3391 = vmatprep.subr.bf16.mxu0 0
        %3392 = vmatpush1.bf16.msra.mxu0 0
        %3393 = vmatprep.subr.bf16.mxu0 0
        %3394 = vmatpush1.bf16.msra.mxu0 0
        %3395 = vmatprep.subr.bf16.mxu0 0
        %3396 = vmatpush1.bf16.msra.mxu0 0
        %3397 = vmatprep.subr.bf16.mxu0 0
        %3398 = vmatpush1.bf16.msra.mxu0 0
        %3399 = vmatprep.subr.bf16.mxu0 0
        %3400 = vmatpush1.bf16.msra.mxu0 0
        %3401 = vmatprep.subr.bf16.mxu0 0
        %3402 = vmatpush1.bf16.msra.mxu0 0
        %3403 = vmatprep.subr.bf16.mxu0 0
        %3404 = vmatpush1.bf16.msra.mxu0 0
        %3405 = vmatprep.subr.bf16.mxu0 0
        %3406 = vmatpush1.bf16.msra.mxu0 0
        %3407 = vmatprep.mubr.bf16.mxu0 0
        %3408 = vmatmul.mubr.bf16.gmra.mrb[0].mxu0 %v3352
        %v3409 = vpop.f32.mrb[0].mxu0
        %v3410 = vadd.f32 0.0, %v3409
        %v3411 = vpop.f32.mrb[0].mxu0
        %v3412 = vpop.f32.mrb[0].mxu0
        %v3413 = vadd.f32 0.0, %v3412
        %v3414 = vpop.f32.mrb[0].mxu0
        %3415 = vmatprep.mubr.bf16.mxu0 0
        %3416 = vmatmul.mubr.bf16.gmra.mrb[0].mxu0 %v3355
        %v3417 = vpop.f32.mrb[0].mxu0
        %v3418 = vadd.f32 0.0, %v3417
        %v3419 = vpop.f32.mrb[0].mxu0
        %v3420 = vpop.f32.mrb[0].mxu0
        %v3421 = vadd.f32 0.0, %v3420
        %v3422 = vpop.f32.mrb[0].mxu0
        %3423 = vmatprep.mubr.bf16.mxu0 0
        %3424 = vmatmul.mubr.bf16.gmra.mrb[0].mxu0 %v3358
        %v3425 = vpop.f32.mrb[0].mxu0
        %v3426 = vadd.f32 0.0, %v3425
        %v3427 = vpop.f32.mrb[0].mxu0
        %v3428 = vpop.f32.mrb[0].mxu0
        %v3429 = vadd.f32 0.0, %v3428
        %v3430 = vpop.f32.mrb[0].mxu0
        %3431 = vmatprep.mubr.bf16.mxu0 0
        %3432 = vmatmul.mubr.bf16.gmra.mrb[0].mxu0 %v3361
        %v3433 = vpop.f32.mrb[0].mxu0
        %v3434 = vadd.f32 0.0, %v3433
        %v3435 = vpop.f32.mrb[0].mxu0
        %v3436 = vpop.f32.mrb[0].mxu0
        %v3437 = vadd.f32 0.0, %v3436
        %v3438 = vpop.f32.mrb[0].mxu0
        %3439 = vmatprep.mubr.bf16.mxu0 0
        %3440 = vmatmul.mubr.bf16.gmra.mrb[0].mxu0 %v3364
        %v3441 = vpop.f32.mrb[0].mxu0
        %v3442 = vadd.f32 0.0, %v3441
        %v3443 = vpop.f32.mrb[0].mxu0
        %v3444 = vpop.f32.mrb[0].mxu0
        %v3445 = vadd.f32 0.0, %v3444
        %v3446 = vpop.f32.mrb[0].mxu0
        %3447 = vmatprep.mubr.bf16.mxu0 0
        %3448 = vmatmul.mubr.bf16.gmra.mrb[0].mxu0 %v3367
        %v3449 = vpop.f32.mrb[0].mxu0
        %v3450 = vadd.f32 0.0, %v3449
        %v3451 = vpop.f32.mrb[0].mxu0
        %v3452 = vpop.f32.mrb[0].mxu0
        %v3453 = vadd.f32 0.0, %v3452
        %v3454 = vpop.f32.mrb[0].mxu0
        %3455 = vmatprep.mubr.bf16.mxu0 0
        %3456 = vmatmul.mubr.bf16.gmra.mrb[0].mxu0 %v3370
        %v3457 = vpop.f32.mrb[0].mxu0
        %v3458 = vadd.f32 0.0, %v3457
        %v3459 = vpop.f32.mrb[0].mxu0
        %v3460 = vpop.f32.mrb[0].mxu0
        %v3461 = vadd.f32 0.0, %v3460
        %v3462 = vpop.f32.mrb[0].mxu0
        %3463 = vmatprep.mubr.bf16.mxu0 0
        %3464 = vmatmul.mubr.bf16.gmra.mrb[0].mxu0 %v3373
        %v3465 = vpop.f32.mrb[0].mxu0
        %v3466 = vadd.f32 0.0, %v3465
        %v3467 = vpop.f32.mrb[0].mxu0
        %v3468 = vpop.f32.mrb[0].mxu0
        %v3469 = vadd.f32 0.0, %v3468
        %v3470 = vpop.f32.mrb[0].mxu0
        %3471 = vdwg.mxu0
        %v3476 = vunpack.c.l.b16 %v3323
        %v3477 = vunpack.c.l.b16 %v3324
        %v3478 = vunpack.c.l.b16 %v3325
        %v3479 = vunpack.c.l.b16 %v3326
        %v3480 = vpack.c.b16 %v3477, %v3476
        %v3481 = vpack.c.b16 %v3479, %v3478
        %v3485 = vsel %vm2930, %v3315, 0
        %v3488 = vsel %vm2930, %v3316, 0
        %v3491 = vsel %vm2930, %v3317, 0
        %v3494 = vsel %vm2930, %v3318, 0
        %v3497 = vsel %vm2930, %v3319, 0
        %v3500 = vsel %vm2930, %v3320, 0
        %v3503 = vsel %vm2930, %v3321, 0
        %v3506 = vsel %vm2930, %v3322, 0
        %3508 = vmatprep.subr.bf16.mxu0 0
        %3509 = vmatpush1.bf16.msra.mxu0 %v3480
        %3510 = vmatprep.subr.bf16.mxu0 0
        %3511 = vmatpush1.bf16.msra.mxu0 %v3481
        %3512 = vmatprep.subr.bf16.mxu0 0
        %3513 = vmatpush1.bf16.msra.mxu0 0
        %3514 = vmatprep.subr.bf16.mxu0 0
        %3515 = vmatpush1.bf16.msra.mxu0 0
        %3516 = vmatprep.subr.bf16.mxu0 0
        %3517 = vmatpush1.bf16.msra.mxu0 0
        %3518 = vmatprep.subr.bf16.mxu0 0
        %3519 = vmatpush1.bf16.msra.mxu0 0
        %3520 = vmatprep.subr.bf16.mxu0 0
        %3521 = vmatpush1.bf16.msra.mxu0 0
        %3522 = vmatprep.subr.bf16.mxu0 0
        %3523 = vmatpush1.bf16.msra.mxu0 0
        %3524 = vmatprep.subr.bf16.mxu0 0
        %3525 = vmatpush1.bf16.msra.mxu0 0
        %3526 = vmatprep.subr.bf16.mxu0 0
        %3527 = vmatpush1.bf16.msra.mxu0 0
        %3528 = vmatprep.subr.bf16.mxu0 0
        %3529 = vmatpush1.bf16.msra.mxu0 0
        %3530 = vmatprep.subr.bf16.mxu0 0
        %3531 = vmatpush1.bf16.msra.mxu0 0
        %3532 = vmatprep.subr.bf16.mxu0 0
        %3533 = vmatpush1.bf16.msra.mxu0 0
        %3534 = vmatprep.subr.bf16.mxu0 0
        %3535 = vmatpush1.bf16.msra.mxu0 0
        %3536 = vmatprep.subr.bf16.mxu0 0
        %3537 = vmatpush1.bf16.msra.mxu0 0
        %3538 = vmatprep.subr.bf16.mxu0 0
        %3539 = vmatpush1.bf16.msra.mxu0 0
        %3540 = vmatprep.mubr.bf16.mxu0 0
        %3541 = vmatmul.mubr.bf16.gmra.mrb[0].mxu0 %v3485
        %v3542 = vpop.f32.mrb[0].mxu0
        %v3543 = vadd.f32 %v3410, %v3542
        %v3544 = vpop.f32.mrb[0].mxu0
        %v3545 = vpop.f32.mrb[0].mxu0
        %v3546 = vadd.f32 %v3413, %v3545
        %v3547 = vpop.f32.mrb[0].mxu0
        %3548 = vmatprep.mubr.bf16.mxu0 0
        %3549 = vmatmul.mubr.bf16.gmra.mrb[0].mxu0 %v3488
        %v3550 = vpop.f32.mrb[0].mxu0
        %v3551 = vadd.f32 %v3418, %v3550
        %v3552 = vpop.f32.mrb[0].mxu0
        %v3553 = vpop.f32.mrb[0].mxu0
        %v3554 = vadd.f32 %v3421, %v3553
        %v3555 = vpop.f32.mrb[0].mxu0
        %3556 = vmatprep.mubr.bf16.mxu0 0
        %3557 = vmatmul.mubr.bf16.gmra.mrb[0].mxu0 %v3491
        %v3558 = vpop.f32.mrb[0].mxu0
        %v3559 = vadd.f32 %v3426, %v3558
        %v3560 = vpop.f32.mrb[0].mxu0
        %v3561 = vpop.f32.mrb[0].mxu0
        %v3562 = vadd.f32 %v3429, %v3561
        %v3563 = vpop.f32.mrb[0].mxu0
        %3564 = vmatprep.mubr.bf16.mxu0 0
        %3565 = vmatmul.mubr.bf16.gmra.mrb[0].mxu0 %v3494
        %v3566 = vpop.f32.mrb[0].mxu0
        %v3567 = vadd.f32 %v3434, %v3566
        %v3568 = vpop.f32.mrb[0].mxu0
        %v3569 = vpop.f32.mrb[0].mxu0
        %v3570 = vadd.f32 %v3437, %v3569
        %v3571 = vpop.f32.mrb[0].mxu0
        %3572 = vmatprep.mubr.bf16.mxu0 0
        %3573 = vmatmul.mubr.bf16.gmra.mrb[0].mxu0 %v3497
        %v3574 = vpop.f32.mrb[0].mxu0
        %v3575 = vadd.f32 %v3442, %v3574
        %v3576 = vpop.f32.mrb[0].mxu0
        %v3577 = vpop.f32.mrb[0].mxu0
        %v3578 = vadd.f32 %v3445, %v3577
        %v3579 = vpop.f32.mrb[0].mxu0
        %3580 = vmatprep.mubr.bf16.mxu0 0
        %3581 = vmatmul.mubr.bf16.gmra.mrb[0].mxu0 %v3500
        %v3582 = vpop.f32.mrb[0].mxu0
        %v3583 = vadd.f32 %v3450, %v3582
        %v3584 = vpop.f32.mrb[0].mxu0
        %v3585 = vpop.f32.mrb[0].mxu0
        %v3586 = vadd.f32 %v3453, %v3585
        %v3587 = vpop.f32.mrb[0].mxu0
        %3588 = vmatprep.mubr.bf16.mxu0 0
        %3589 = vmatmul.mubr.bf16.gmra.mrb[0].mxu0 %v3503
        %v3590 = vpop.f32.mrb[0].mxu0
        %v3591 = vadd.f32 %v3458, %v3590
        %v3592 = vpop.f32.mrb[0].mxu0
        %v3593 = vpop.f32.mrb[0].mxu0
        %v3594 = vadd.f32 %v3461, %v3593
        %v3595 = vpop.f32.mrb[0].mxu0
        %3596 = vmatprep.mubr.bf16.mxu0 0
        %3597 = vmatmul.mubr.bf16.gmra.mrb[0].mxu0 %v3506
        %v3598 = vpop.f32.mrb[0].mxu0
        %v3599 = vadd.f32 %v3466, %v3598
        %v3600 = vpop.f32.mrb[0].mxu0
        %v3601 = vpop.f32.mrb[0].mxu0
        %v3602 = vadd.f32 %v3469, %v3601
        %v3603 = vpop.f32.mrb[0].mxu0
        %3604 = vdwg.mxu0
        %v3605 = vpack.c.bf16 %v3300, %v3299
        %v3606 = vpack.c.bf16 %v3302, %v3301
        %v3607 = vpack.c.bf16 %v3304, %v3303
        %v3608 = vpack.c.bf16 %v3306, %v3305
        %v3609 = vpack.c.bf16 %v3308, %v3307
        %v3610 = vpack.c.bf16 %v3310, %v3309
        %v3611 = vpack.c.bf16 %v3312, %v3311
        %v3612 = vpack.c.bf16 %v3314, %v3313
        %v3613 = vld [vmem:[%s5 + $0x20] sm:$0xf]
        %v3614 = vld [vmem:[%s5 + $0x24] sm:$0xf]
        %v3615 = vld [vmem:[%s5 + $0x28] sm:$0xf]
        %v3616 = vld [vmem:[%s5 + $0x2c] sm:$0xf]
        %v3621 = vunpack.c.l.b16 %v3613
        %v3622 = vunpack.c.l.b16 %v3614
        %v3623 = vunpack.c.l.b16 %v3615
        %v3624 = vunpack.c.l.b16 %v3616
        %v3625 = vpack.c.b16 %v3622, %v3621
        %v3626 = vpack.c.b16 %v3624, %v3623
        %v3630 = vsel %vm2930, %v3605, 0
        %v3633 = vsel %vm2930, %v3606, 0
        %v3636 = vsel %vm2930, %v3607, 0
        %v3639 = vsel %vm2930, %v3608, 0
        %v3642 = vsel %vm2930, %v3609, 0
        %v3645 = vsel %vm2930, %v3610, 0
        %v3648 = vsel %vm2930, %v3611, 0
        %v3651 = vsel %vm2930, %v3612, 0
        %3653 = vmatprep.subr.bf16.mxu0 0
        %3654 = vmatpush1.bf16.msra.mxu0 %v3625
        %3655 = vmatprep.subr.bf16.mxu0 0
        %3656 = vmatpush1.bf16.msra.mxu0 %v3626
        %3657 = vmatprep.subr.bf16.mxu0 0
        %3658 = vmatpush1.bf16.msra.mxu0 0
        %3659 = vmatprep.subr.bf16.mxu0 0
        %3660 = vmatpush1.bf16.msra.mxu0 0
        %3661 = vmatprep.subr.bf16.mxu0 0
        %3662 = vmatpush1.bf16.msra.mxu0 0
        %3663 = vmatprep.subr.bf16.mxu0 0
        %3664 = vmatpush1.bf16.msra.mxu0 0
        %3665 = vmatprep.subr.bf16.mxu0 0
        %3666 = vmatpush1.bf16.msra.mxu0 0
        %3667 = vmatprep.subr.bf16.mxu0 0
        %3668 = vmatpush1.bf16.msra.mxu0 0
        %3669 = vmatprep.subr.bf16.mxu0 0
        %3670 = vmatpush1.bf16.msra.mxu0 0
        %3671 = vmatprep.subr.bf16.mxu0 0
        %3672 = vmatpush1.bf16.msra.mxu0 0
        %3673 = vmatprep.subr.bf16.mxu0 0
        %3674 = vmatpush1.bf16.msra.mxu0 0
        %3675 = vmatprep.subr.bf16.mxu0 0
        %3676 = vmatpush1.bf16.msra.mxu0 0
        %3677 = vmatprep.subr.bf16.mxu0 0
        %3678 = vmatpush1.bf16.msra.mxu0 0
        %3679 = vmatprep.subr.bf16.mxu0 0
        %3680 = vmatpush1.bf16.msra.mxu0 0
        %3681 = vmatprep.subr.bf16.mxu0 0
        %3682 = vmatpush1.bf16.msra.mxu0 0
        %3683 = vmatprep.subr.bf16.mxu0 0
        %3684 = vmatpush1.bf16.msra.mxu0 0
        %3685 = vmatprep.mubr.bf16.mxu0 0
        %3686 = vmatmul.mubr.bf16.gmra.mrb[0].mxu0 %v3630
        %v3687 = vpop.f32.mrb[0].mxu0
        %v3688 = vadd.f32 0.0, %v3687
        %v3689 = vpop.f32.mrb[0].mxu0
        %v3690 = vpop.f32.mrb[0].mxu0
        %v3691 = vadd.f32 0.0, %v3690
        %v3692 = vpop.f32.mrb[0].mxu0
        %3693 = vmatprep.mubr.bf16.mxu0 0
        %3694 = vmatmul.mubr.bf16.gmra.mrb[0].mxu0 %v3633
        %v3695 = vpop.f32.mrb[0].mxu0
        %v3696 = vadd.f32 0.0, %v3695
        %v3697 = vpop.f32.mrb[0].mxu0
        %v3698 = vpop.f32.mrb[0].mxu0
        %v3699 = vadd.f32 0.0, %v3698
        %v3700 = vpop.f32.mrb[0].mxu0
        %3701 = vmatprep.mubr.bf16.mxu0 0
        %3702 = vmatmul.mubr.bf16.gmra.mrb[0].mxu0 %v3636
        %v3703 = vpop.f32.mrb[0].mxu0
        %v3704 = vadd.f32 0.0, %v3703
        %v3705 = vpop.f32.mrb[0].mxu0
        %v3706 = vpop.f32.mrb[0].mxu0
        %v3707 = vadd.f32 0.0, %v3706
        %v3708 = vpop.f32.mrb[0].mxu0
        %3709 = vmatprep.mubr.bf16.mxu0 0
        %3710 = vmatmul.mubr.bf16.gmra.mrb[0].mxu0 %v3639
        %v3711 = vpop.f32.mrb[0].mxu0
        %v3712 = vadd.f32 0.0, %v3711
        %v3713 = vpop.f32.mrb[0].mxu0
        %v3714 = vpop.f32.mrb[0].mxu0
        %v3715 = vadd.f32 0.0, %v3714
        %v3716 = vpop.f32.mrb[0].mxu0
        %3717 = vmatprep.mubr.bf16.mxu0 0
        %3718 = vmatmul.mubr.bf16.gmra.mrb[0].mxu0 %v3642
        %v3719 = vpop.f32.mrb[0].mxu0
        %v3720 = vadd.f32 0.0, %v3719
        %v3721 = vpop.f32.mrb[0].mxu0
        %v3722 = vpop.f32.mrb[0].mxu0
        %v3723 = vadd.f32 0.0, %v3722
        %v3724 = vpop.f32.mrb[0].mxu0
        %3725 = vmatprep.mubr.bf16.mxu0 0
        %3726 = vmatmul.mubr.bf16.gmra.mrb[0].mxu0 %v3645
        %v3727 = vpop.f32.mrb[0].mxu0
        %v3728 = vadd.f32 0.0, %v3727
        %v3729 = vpop.f32.mrb[0].mxu0
        %v3730 = vpop.f32.mrb[0].mxu0
        %v3731 = vadd.f32 0.0, %v3730
        %v3732 = vpop.f32.mrb[0].mxu0
        %3733 = vmatprep.mubr.bf16.mxu0 0
        %3734 = vmatmul.mubr.bf16.gmra.mrb[0].mxu0 %v3648
        %v3735 = vpop.f32.mrb[0].mxu0
        %v3736 = vadd.f32 0.0, %v3735
        %v3737 = vpop.f32.mrb[0].mxu0
        %v3738 = vpop.f32.mrb[0].mxu0
        %v3739 = vadd.f32 0.0, %v3738
        %v3740 = vpop.f32.mrb[0].mxu0
        %3741 = vmatprep.mubr.bf16.mxu0 0
        %3742 = vmatmul.mubr.bf16.gmra.mrb[0].mxu0 %v3651
        %v3743 = vpop.f32.mrb[0].mxu0
        %v3744 = vadd.f32 0.0, %v3743
        %v3745 = vpop.f32.mrb[0].mxu0
        %v3746 = vpop.f32.mrb[0].mxu0
        %v3747 = vadd.f32 0.0, %v3746
        %v3748 = vpop.f32.mrb[0].mxu0
        %3749 = vdwg.mxu0
        %v3750 = vadd.f32 %v3543, %v3688
        %v3751 = vadd.f32 %v3546, %v3691
        %v3752 = vadd.f32 %v3551, %v3696
        %v3753 = vadd.f32 %v3554, %v3699
        %v3754 = vadd.f32 %v3559, %v3704
        %v3755 = vadd.f32 %v3562, %v3707
        %v3756 = vadd.f32 %v3567, %v3712
        %v3757 = vadd.f32 %v3570, %v3715
        %v3758 = vadd.f32 %v3575, %v3720
        %v3759 = vadd.f32 %v3578, %v3723
        %v3760 = vadd.f32 %v3583, %v3728
        %v3761 = vadd.f32 %v3586, %v3731
        %v3762 = vadd.f32 %v3591, %v3736
        %v3763 = vadd.f32 %v3594, %v3739
        %v3764 = vadd.f32 %v3599, %v3744
        %v3765 = vadd.f32 %v3602, %v3747
        %v3766 = vld [vmem:[%s6] sm:$0x1]
        %v3768 = vlaneseq
        %v3769 = vshrl.u32 %v3768, 7
        %v3770 = vsub.s32 0, %v3769
        %v3771 = vrot.slane %v3766, %v3770
        %v3773 = vadd.f32 %v3750, %v3771
        %v3774 = vadd.f32 %v3751, %v3771
        %v3775 = vadd.f32 %v3752, %v3771
        %v3776 = vadd.f32 %v3753, %v3771
        %v3777 = vadd.f32 %v3754, %v3771
        %v3778 = vadd.f32 %v3755, %v3771
        %v3779 = vadd.f32 %v3756, %v3771
        %v3780 = vadd.f32 %v3757, %v3771
        %v3781 = vadd.f32 %v3758, %v3771
        %v3782 = vadd.f32 %v3759, %v3771
        %v3783 = vadd.f32 %v3760, %v3771
        %v3784 = vadd.f32 %v3761, %v3771
        %v3785 = vadd.f32 %v3762, %v3771
        %v3786 = vadd.f32 %v3763, %v3771
        %v3787 = vadd.f32 %v3764, %v3771
        %v3788 = vadd.f32 %v3765, %v3771
        %v3789 = vmax.f32 %v3773, 0.0
        %v3790 = vmax.f32 %v3774, 0.0
        %v3791 = vmax.f32 %v3775, 0.0
        %v3792 = vmax.f32 %v3776, 0.0
        %v3793 = vmax.f32 %v3777, 0.0
        %v3794 = vmax.f32 %v3778, 0.0
        %v3795 = vmax.f32 %v3779, 0.0
        %v3796 = vmax.f32 %v3780, 0.0
        %v3797 = vmax.f32 %v3781, 0.0
        %v3798 = vmax.f32 %v3782, 0.0
        %v3799 = vmax.f32 %v3783, 0.0
        %v3800 = vmax.f32 %v3784, 0.0
        %v3801 = vmax.f32 %v3785, 0.0
        %v3802 = vmax.f32 %v3786, 0.0
        %v3803 = vmax.f32 %v3787, 0.0
        %v3804 = vmax.f32 %v3788, 0.0
        %3805 = vst.msk [vmem:[#allocation2] sm:$0xff] %vm813, %v3789
        %3806 = vst.msk [vmem:[#allocation2 + $0x8] sm:$0xff] %vm813, %v3790
        %3807 = vst.msk [vmem:[#allocation2 + $0x10] sm:$0xff] %vm813, %v3791
        %3808 = vst.msk [vmem:[#allocation2 + $0x18] sm:$0xff] %vm813, %v3792
        %3809 = vst.msk [vmem:[#allocation2 + $0x20] sm:$0xff] %vm813, %v3793
        %3810 = vst.msk [vmem:[#allocation2 + $0x28] sm:$0xff] %vm813, %v3794
        %3811 = vst.msk [vmem:[#allocation2 + $0x30] sm:$0xff] %vm813, %v3795
        %3812 = vst.msk [vmem:[#allocation2 + $0x38] sm:$0xff] %vm813, %v3796
        %3813 = vst.msk [vmem:[#allocation2 + $0x40] sm:$0xff] %vm813, %v3797
        %3814 = vst.msk [vmem:[#allocation2 + $0x48] sm:$0xff] %vm813, %v3798
        %3815 = vst.msk [vmem:[#allocation2 + $0x50] sm:$0xff] %vm813, %v3799
        %3816 = vst.msk [vmem:[#allocation2 + $0x58] sm:$0xff] %vm813, %v3800
        %3817 = vst.msk [vmem:[#allocation2 + $0x60] sm:$0xff] %vm813, %v3801
        %3818 = vst.msk [vmem:[#allocation2 + $0x68] sm:$0xff] %vm813, %v3802
        %3819 = vst.msk [vmem:[#allocation2 + $0x70] sm:$0xff] %vm813, %v3803
        %3820 = vst.msk [vmem:[#allocation2 + $0x78] sm:$0xff] %vm813, %v3804
        %v3821 = vld [vmem:[#allocation2] ss:$2 sm:$0xff]
        %v3822 = vld [vmem:[%s1329] ss:$2 sm:$0xff]
        %v3823 = vld [vmem:[%s1331] ss:$2 sm:$0xff]
        %v3824 = vld [vmem:[%s1333] ss:$2 sm:$0xff]
        %v3825 = vld [vmem:[%s1335] ss:$2 sm:$0xff]
        %v3826 = vld [vmem:[%s1337] ss:$2 sm:$0xff]
        %v3827 = vld [vmem:[%s1339] ss:$2 sm:$0xff]
        %v3828 = vld [vmem:[%s1341] ss:$2 sm:$0xff]
        %v3829 = vld [vmem:[%s1391] ss:$2 sm:$0xff]
        %v3830 = vld [vmem:[%s1393] ss:$2 sm:$0xff]
        %v3831 = vld [vmem:[%s1395] ss:$2 sm:$0xff]
        %v3832 = vld [vmem:[%s1397] ss:$2 sm:$0xff]
        %v3833 = vld [vmem:[%s1399] ss:$2 sm:$0xff]
        %v3834 = vld [vmem:[%s1401] ss:$2 sm:$0xff]
        %v3835 = vld [vmem:[%s1403] ss:$2 sm:$0xff]
        %v3836 = vld [vmem:[%s1405] ss:$2 sm:$0xff]
        %v3837 = vmax.f32 %v3821, %v3829
        %v3838 = vmax.f32 %v3822, %v3830
        %v3839 = vmax.f32 %v3823, %v3831
        %v3840 = vmax.f32 %v3824, %v3832
        %v3841 = vmax.f32 %v3825, %v3833
        %v3842 = vmax.f32 %v3826, %v3834
        %v3843 = vmax.f32 %v3827, %v3835
        %v3844 = vmax.f32 %v3828, %v3836
        %3845 = vst.msk [vmem:[#allocation2 + $0x1] sm:$0xff] %vm813, %v3837
        %3846 = vst.msk [vmem:[#allocation2 + $0x9] sm:$0xff] %vm813, %v3838
        %3847 = vst.msk [vmem:[#allocation2 + $0x11] sm:$0xff] %vm813, %v3839
        %3848 = vst.msk [vmem:[#allocation2 + $0x19] sm:$0xff] %vm813, %v3840
        %3849 = vst.msk [vmem:[#allocation2 + $0x21] sm:$0xff] %vm813, %v3841
        %3850 = vst.msk [vmem:[#allocation2 + $0x29] sm:$0xff] %vm813, %v3842
        %3851 = vst.msk [vmem:[#allocation2 + $0x31] sm:$0xff] %vm813, %v3843
        %3852 = vst.msk [vmem:[#allocation2 + $0x39] sm:$0xff] %vm813, %v3844
        %vm3853 = vcmp.lt.s32.totalorder %v1520, 0
        %v3854 = vsub.s32 0, %v1520
        %v3855 = vsel %vm3853, %v3854, %v1520
        %v3856 = vshrl.u32 %v3855, 3
        %v3857 = vand.u32 %v3855, 7
        %v3858 = vsub.s32 0, %v3857
        %v3859 = vsel %vm3853, %v3858, %v3857
        %vm3860 = vcmp.lt.s32.totalorder %v1521, 0
        %v3861 = vsub.s32 0, %v1521
        %v3862 = vsel %vm3860, %v3861, %v1521
        %v3863 = vshrl.u32 %v3862, 3
        %v3864 = vand.u32 %v3862, 7
        %v3865 = vsub.s32 0, %v3864
        %v3866 = vsel %vm3860, %v3865, %v3864
        %vm3867 = vcmp.lt.s32.totalorder %v1522, 0
        %v3868 = vsub.s32 0, %v1522
        %v3869 = vsel %vm3867, %v3868, %v1522
        %v3870 = vshrl.u32 %v3869, 3
        %v3871 = vand.u32 %v3869, 7
        %v3872 = vsub.s32 0, %v3871
        %v3873 = vsel %vm3867, %v3872, %v3871
        %vm3874 = vcmp.lt.s32.totalorder %v1523, 0
        %v3875 = vsub.s32 0, %v1523
        %v3876 = vsel %vm3874, %v3875, %v1523
        %v3877 = vshrl.u32 %v3876, 3
        %v3878 = vand.u32 %v3876, 7
        %v3879 = vsub.s32 0, %v3878
        %v3880 = vsel %vm3874, %v3879, %v3878
        %vm3881 = vcmp.lt.s32.totalorder %v1524, 0
        %v3882 = vsub.s32 0, %v1524
        %v3883 = vsel %vm3881, %v3882, %v1524
        %v3884 = vshrl.u32 %v3883, 3
        %v3885 = vand.u32 %v3883, 7
        %v3886 = vsub.s32 0, %v3885
        %v3887 = vsel %vm3881, %v3886, %v3885
        %vm3888 = vcmp.lt.s32.totalorder %v1525, 0
        %v3889 = vsub.s32 0, %v1525
        %v3890 = vsel %vm3888, %v3889, %v1525
        %v3891 = vshrl.u32 %v3890, 3
        %v3892 = vand.u32 %v3890, 7
        %v3893 = vsub.s32 0, %v3892
        %v3894 = vsel %vm3888, %v3893, %v3892
        %vm3895 = vcmp.lt.s32.totalorder %v1526, 0
        %v3896 = vsub.s32 0, %v1526
        %v3897 = vsel %vm3895, %v3896, %v1526
        %v3898 = vshrl.u32 %v3897, 3
        %v3899 = vand.u32 %v3897, 7
        %v3900 = vsub.s32 0, %v3899
        %v3901 = vsel %vm3895, %v3900, %v3899
        %vm3902 = vcmp.lt.s32.totalorder %v1527, 0
        %v3903 = vsub.s32 0, %v1527
        %v3904 = vsel %vm3902, %v3903, %v1527
        %v3905 = vshrl.u32 %v3904, 3
        %v3906 = vand.u32 %v3904, 7
        %v3907 = vsub.s32 0, %v3906
        %v3908 = vsel %vm3902, %v3907, %v3906
        %vm3909 = vcmp.ne.s32.totalorder %v3859, 0
        %vm3910 = vcmp.ne.s32.totalorder %v3866, 0
        %vm3911 = vcmp.ne.s32.totalorder %v3873, 0
        %vm3912 = vcmp.ne.s32.totalorder %v3880, 0
        %vm3913 = vcmp.ne.s32.totalorder %v3887, 0
        %vm3914 = vcmp.ne.s32.totalorder %v3894, 0
        %vm3915 = vcmp.ne.s32.totalorder %v3901, 0
        %vm3916 = vcmp.ne.s32.totalorder %v3908, 0
        %vm3917 = vcmp.lt.s32.totalorder %v3859, 0
        %vm3918 = vcmp.lt.s32.totalorder %v3866, 0
        %vm3919 = vcmp.lt.s32.totalorder %v3873, 0
        %vm3920 = vcmp.lt.s32.totalorder %v3880, 0
        %vm3921 = vcmp.lt.s32.totalorder %v3887, 0
        %vm3922 = vcmp.lt.s32.totalorder %v3894, 0
        %vm3923 = vcmp.lt.s32.totalorder %v3901, 0
        %vm3924 = vcmp.lt.s32.totalorder %v3908, 0
        %vm3925 = vmand %vm3917, %vm3909
        %vm3926 = vmand %vm3918, %vm3910
        %vm3927 = vmand %vm3919, %vm3911
        %vm3928 = vmand %vm3920, %vm3912
        %vm3929 = vmand %vm3921, %vm3913
        %vm3930 = vmand %vm3922, %vm3914
        %vm3931 = vmand %vm3923, %vm3915
        %vm3932 = vmand %vm3924, %vm3916
        %v3933 = vadd.s32 %v3859, 8
        %v3934 = vadd.s32 %v3866, 8
        %v3935 = vadd.s32 %v3873, 8
        %v3936 = vadd.s32 %v3880, 8
        %v3937 = vadd.s32 %v3887, 8
        %v3938 = vadd.s32 %v3894, 8
        %v3939 = vadd.s32 %v3901, 8
        %v3940 = vadd.s32 %v3908, 8
        %v3941 = vsel %vm3925, %v3933, %v3859
        %v3942 = vsel %vm3926, %v3934, %v3866
        %v3943 = vsel %vm3927, %v3935, %v3873
        %v3944 = vsel %vm3928, %v3936, %v3880
        %v3945 = vsel %vm3929, %v3937, %v3887
        %v3946 = vsel %vm3930, %v3938, %v3894
        %v3947 = vsel %vm3931, %v3939, %v3901
        %v3948 = vsel %vm3932, %v3940, %v3908
        %vm3949 = vcmp.eq.s32.totalorder %v3941, 0
        %vm3950 = vcmp.eq.s32.totalorder %v3942, 0
        %vm3951 = vcmp.eq.s32.totalorder %v3943, 0
        %vm3952 = vcmp.eq.s32.totalorder %v3944, 0
        %vm3953 = vcmp.eq.s32.totalorder %v3945, 0
        %vm3954 = vcmp.eq.s32.totalorder %v3946, 0
        %vm3955 = vcmp.eq.s32.totalorder %v3947, 0
        %vm3956 = vcmp.eq.s32.totalorder %v3948, 0
        %v3957 = vld [vmem:[#allocation2] sm:$0xff]
        %v3958 = vld [vmem:[#allocation2 + $0x8] sm:$0xff]
        %v3959 = vld [vmem:[#allocation2 + $0x10] sm:$0xff]
        %v3960 = vld [vmem:[#allocation2 + $0x18] sm:$0xff]
        %v3961 = vld [vmem:[#allocation2 + $0x20] sm:$0xff]
        %v3962 = vld [vmem:[#allocation2 + $0x28] sm:$0xff]
        %v3963 = vld [vmem:[#allocation2 + $0x30] sm:$0xff]
        %v3964 = vld [vmem:[#allocation2 + $0x38] sm:$0xff]
        %v3965 = vsel %vm3949, 0.0, %v3957
        %v3966 = vsel %vm3950, 0.0, %v3958
        %v3967 = vsel %vm3951, 0.0, %v3959
        %v3968 = vsel %vm3952, 0.0, %v3960
        %v3969 = vsel %vm3953, 0.0, %v3961
        %v3970 = vsel %vm3954, 0.0, %v3962
        %v3971 = vsel %vm3955, 0.0, %v3963
        %v3972 = vsel %vm3956, 0.0, %v3964
        %vm3973 = vcmp.eq.s32.totalorder %v3941, 7
        %vm3974 = vcmp.eq.s32.totalorder %v3942, 7
        %vm3975 = vcmp.eq.s32.totalorder %v3943, 7
        %vm3976 = vcmp.eq.s32.totalorder %v3944, 7
        %vm3977 = vcmp.eq.s32.totalorder %v3945, 7
        %vm3978 = vcmp.eq.s32.totalorder %v3946, 7
        %vm3979 = vcmp.eq.s32.totalorder %v3947, 7
        %vm3980 = vcmp.eq.s32.totalorder %v3948, 7
        %v3981 = vld [vmem:[#allocation2 + $0x2] sm:$0xff]
        %v3982 = vld [vmem:[#allocation2 + $0xa] sm:$0xff]
        %v3983 = vld [vmem:[#allocation2 + $0x12] sm:$0xff]
        %v3984 = vld [vmem:[#allocation2 + $0x1a] sm:$0xff]
        %v3985 = vld [vmem:[#allocation2 + $0x22] sm:$0xff]
        %v3986 = vld [vmem:[#allocation2 + $0x2a] sm:$0xff]
        %v3987 = vld [vmem:[#allocation2 + $0x32] sm:$0xff]
        %v3988 = vld [vmem:[#allocation2 + $0x3a] sm:$0xff]
        %v3989 = vsel %vm3973, 0.0, %v3981
        %v3990 = vsel %vm3974, 0.0, %v3982
        %v3991 = vsel %vm3975, 0.0, %v3983
        %v3992 = vsel %vm3976, 0.0, %v3984
        %v3993 = vsel %vm3977, 0.0, %v3985
        %v3994 = vsel %vm3978, 0.0, %v3986
        %v3995 = vsel %vm3979, 0.0, %v3987
        %v3996 = vsel %vm3980, 0.0, %v3988
        %v3997 = vpack.c.bf16 %v3966, %v3965
        %v3998 = vpack.c.bf16 %v3968, %v3967
        %v3999 = vpack.c.bf16 %v3970, %v3969
        %v4000 = vpack.c.bf16 %v3972, %v3971
        %v4001 = vld [vmem:[%s7] sm:$0xf]
        %v4002 = vld [vmem:[%s7 + $0x4] sm:$0xf]
        %v4003 = vld [vmem:[%s7 + $0x8] sm:$0xf]
        %v4004 = vld [vmem:[%s7 + $0xc] sm:$0xf]
        %v4005 = vld [vmem:[%s7 + $0x10] sm:$0xf]
        %v4006 = vld [vmem:[%s7 + $0x14] sm:$0xf]
        %v4007 = vld [vmem:[%s7 + $0x18] sm:$0xf]
        %v4008 = vld [vmem:[%s7 + $0x1c] sm:$0xf]
        %v4009 = vpack.c.bf16 %v3838, %v3837
        %v4010 = vpack.c.bf16 %v3840, %v3839
        %v4011 = vpack.c.bf16 %v3842, %v3841
        %v4012 = vpack.c.bf16 %v3844, %v3843
        %v4013 = vld [vmem:[%s7 + $0x20] sm:$0xf]
        %v4014 = vld [vmem:[%s7 + $0x24] sm:$0xf]
        %v4015 = vld [vmem:[%s7 + $0x28] sm:$0xf]
        %v4016 = vld [vmem:[%s7 + $0x2c] sm:$0xf]
        %v4017 = vld [vmem:[%s7 + $0x30] sm:$0xf]
        %v4018 = vld [vmem:[%s7 + $0x34] sm:$0xf]
        %v4019 = vld [vmem:[%s7 + $0x38] sm:$0xf]
        %v4020 = vld [vmem:[%s7 + $0x3c] sm:$0xf]
        %v4029 = vunpack.c.l.b16 %v4013
        %v4030 = vunpack.c.l.b16 %v4014
        %v4031 = vunpack.c.l.b16 %v4015
        %v4032 = vunpack.c.l.b16 %v4016
        %v4033 = vunpack.c.l.b16 %v4017
        %v4034 = vunpack.c.l.b16 %v4018
        %v4035 = vunpack.c.l.b16 %v4019
        %v4036 = vunpack.c.l.b16 %v4020
        %v4037 = vpack.c.b16 %v4030, %v4029
        %v4038 = vpack.c.b16 %v4032, %v4031
        %v4039 = vpack.c.b16 %v4034, %v4033
        %v4040 = vpack.c.b16 %v4036, %v4035
        %v4046 = vsel %vm813, %v4009, 0
        %v4049 = vsel %vm813, %v4010, 0
        %v4052 = vsel %vm813, %v4011, 0
        %v4055 = vsel %vm813, %v4012, 0
        %4057 = vmatprep.subr.bf16.mxu0 0
        %4058 = vmatpush1.bf16.msra.mxu0 %v4037
        %4059 = vmatprep.subr.bf16.mxu0 0
        %4060 = vmatpush1.bf16.msra.mxu0 %v4038
        %4061 = vmatprep.subr.bf16.mxu0 0
        %4062 = vmatpush1.bf16.msra.mxu0 %v4039
        %4063 = vmatprep.subr.bf16.mxu0 0
        %4064 = vmatpush1.bf16.msra.mxu0 %v4040
        %4065 = vmatprep.subr.bf16.mxu0 0
        %4066 = vmatpush1.bf16.msra.mxu0 0
        %4067 = vmatprep.subr.bf16.mxu0 0
        %4068 = vmatpush1.bf16.msra.mxu0 0
        %4069 = vmatprep.subr.bf16.mxu0 0
        %4070 = vmatpush1.bf16.msra.mxu0 0
        %4071 = vmatprep.subr.bf16.mxu0 0
        %4072 = vmatpush1.bf16.msra.mxu0 0
        %4073 = vmatprep.subr.bf16.mxu0 0
        %4074 = vmatpush1.bf16.msra.mxu0 0
        %4075 = vmatprep.subr.bf16.mxu0 0
        %4076 = vmatpush1.bf16.msra.mxu0 0
        %4077 = vmatprep.subr.bf16.mxu0 0
        %4078 = vmatpush1.bf16.msra.mxu0 0
        %4079 = vmatprep.subr.bf16.mxu0 0
        %4080 = vmatpush1.bf16.msra.mxu0 0
        %4081 = vmatprep.subr.bf16.mxu0 0
        %4082 = vmatpush1.bf16.msra.mxu0 0
        %4083 = vmatprep.subr.bf16.mxu0 0
        %4084 = vmatpush1.bf16.msra.mxu0 0
        %4085 = vmatprep.subr.bf16.mxu0 0
        %4086 = vmatpush1.bf16.msra.mxu0 0
        %4087 = vmatprep.subr.bf16.mxu0 0
        %4088 = vmatpush1.bf16.msra.mxu0 0
        %4089 = vmatprep.mubr.bf16.mxu0 0
        %4090 = vmatmul.mubr.bf16.gmra.mrb[0].mxu0 %v4046
        %v4091 = vpop.f32.mrb[0].mxu0
        %v4092 = vadd.f32 0.0, %v4091
        %v4093 = vpop.f32.mrb[0].mxu0
        %v4094 = vpop.f32.mrb[0].mxu0
        %v4095 = vadd.f32 0.0, %v4094
        %v4096 = vpop.f32.mrb[0].mxu0
        %4097 = vmatprep.mubr.bf16.mxu0 0
        %4098 = vmatmul.mubr.bf16.gmra.mrb[0].mxu0 %v4049
        %v4099 = vpop.f32.mrb[0].mxu0
        %v4100 = vadd.f32 0.0, %v4099
        %v4101 = vpop.f32.mrb[0].mxu0
        %v4102 = vpop.f32.mrb[0].mxu0
        %v4103 = vadd.f32 0.0, %v4102
        %v4104 = vpop.f32.mrb[0].mxu0
        %4105 = vmatprep.mubr.bf16.mxu0 0
        %4106 = vmatmul.mubr.bf16.gmra.mrb[0].mxu0 %v4052
        %v4107 = vpop.f32.mrb[0].mxu0
        %v4108 = vadd.f32 0.0, %v4107
        %v4109 = vpop.f32.mrb[0].mxu0
        %v4110 = vpop.f32.mrb[0].mxu0
        %v4111 = vadd.f32 0.0, %v4110
        %v4112 = vpop.f32.mrb[0].mxu0
        %4113 = vmatprep.mubr.bf16.mxu0 0
        %4114 = vmatmul.mubr.bf16.gmra.mrb[0].mxu0 %v4055
        %v4115 = vpop.f32.mrb[0].mxu0
        %v4116 = vadd.f32 0.0, %v4115
        %v4117 = vpop.f32.mrb[0].mxu0
        %v4118 = vpop.f32.mrb[0].mxu0
        %v4119 = vadd.f32 0.0, %v4118
        %v4120 = vpop.f32.mrb[0].mxu0
        %4121 = vdwg.mxu0
        %v4130 = vunpack.c.l.b16 %v4001
        %v4131 = vunpack.c.l.b16 %v4002
        %v4132 = vunpack.c.l.b16 %v4003
        %v4133 = vunpack.c.l.b16 %v4004
        %v4134 = vunpack.c.l.b16 %v4005
        %v4135 = vunpack.c.l.b16 %v4006
        %v4136 = vunpack.c.l.b16 %v4007
        %v4137 = vunpack.c.l.b16 %v4008
        %v4138 = vpack.c.b16 %v4131, %v4130
        %v4139 = vpack.c.b16 %v4133, %v4132
        %v4140 = vpack.c.b16 %v4135, %v4134
        %v4141 = vpack.c.b16 %v4137, %v4136
        %v4147 = vsel %vm813, %v3997, 0
        %v4150 = vsel %vm813, %v3998, 0
        %v4153 = vsel %vm813, %v3999, 0
        %v4156 = vsel %vm813, %v4000, 0
        %4158 = vmatprep.subr.bf16.mxu0 0
        %4159 = vmatpush1.bf16.msra.mxu0 %v4138
        %4160 = vmatprep.subr.bf16.mxu0 0
        %4161 = vmatpush1.bf16.msra.mxu0 %v4139
        %4162 = vmatprep.subr.bf16.mxu0 0
        %4163 = vmatpush1.bf16.msra.mxu0 %v4140
        %4164 = vmatprep.subr.bf16.mxu0 0
        %4165 = vmatpush1.bf16.msra.mxu0 %v4141
        %4166 = vmatprep.subr.bf16.mxu0 0
        %4167 = vmatpush1.bf16.msra.mxu0 0
        %4168 = vmatprep.subr.bf16.mxu0 0
        %4169 = vmatpush1.bf16.msra.mxu0 0
        %4170 = vmatprep.subr.bf16.mxu0 0
        %4171 = vmatpush1.bf16.msra.mxu0 0
        %4172 = vmatprep.subr.bf16.mxu0 0
        %4173 = vmatpush1.bf16.msra.mxu0 0
        %4174 = vmatprep.subr.bf16.mxu0 0
        %4175 = vmatpush1.bf16.msra.mxu0 0
        %4176 = vmatprep.subr.bf16.mxu0 0
        %4177 = vmatpush1.bf16.msra.mxu0 0
        %4178 = vmatprep.subr.bf16.mxu0 0
        %4179 = vmatpush1.bf16.msra.mxu0 0
        %4180 = vmatprep.subr.bf16.mxu0 0
        %4181 = vmatpush1.bf16.msra.mxu0 0
        %4182 = vmatprep.subr.bf16.mxu0 0
        %4183 = vmatpush1.bf16.msra.mxu0 0
        %4184 = vmatprep.subr.bf16.mxu0 0
        %4185 = vmatpush1.bf16.msra.mxu0 0
        %4186 = vmatprep.subr.bf16.mxu0 0
        %4187 = vmatpush1.bf16.msra.mxu0 0
        %4188 = vmatprep.subr.bf16.mxu0 0
        %4189 = vmatpush1.bf16.msra.mxu0 0
        %4190 = vmatprep.mubr.bf16.mxu0 0
        %4191 = vmatmul.mubr.bf16.gmra.mrb[0].mxu0 %v4147
        %v4192 = vpop.f32.mrb[0].mxu0
        %v4193 = vadd.f32 %v4092, %v4192
        %v4194 = vpop.f32.mrb[0].mxu0
        %v4195 = vpop.f32.mrb[0].mxu0
        %v4196 = vadd.f32 %v4095, %v4195
        %v4197 = vpop.f32.mrb[0].mxu0
        %4198 = vmatprep.mubr.bf16.mxu0 0
        %4199 = vmatmul.mubr.bf16.gmra.mrb[0].mxu0 %v4150
        %v4200 = vpop.f32.mrb[0].mxu0
        %v4201 = vadd.f32 %v4100, %v4200
        %v4202 = vpop.f32.mrb[0].mxu0
        %v4203 = vpop.f32.mrb[0].mxu0
        %v4204 = vadd.f32 %v4103, %v4203
        %v4205 = vpop.f32.mrb[0].mxu0
        %4206 = vmatprep.mubr.bf16.mxu0 0
        %4207 = vmatmul.mubr.bf16.gmra.mrb[0].mxu0 %v4153
        %v4208 = vpop.f32.mrb[0].mxu0
        %v4209 = vadd.f32 %v4108, %v4208
        %v4210 = vpop.f32.mrb[0].mxu0
        %v4211 = vpop.f32.mrb[0].mxu0
        %v4212 = vadd.f32 %v4111, %v4211
        %v4213 = vpop.f32.mrb[0].mxu0
        %4214 = vmatprep.mubr.bf16.mxu0 0
        %4215 = vmatmul.mubr.bf16.gmra.mrb[0].mxu0 %v4156
        %v4216 = vpop.f32.mrb[0].mxu0
        %v4217 = vadd.f32 %v4116, %v4216
        %v4218 = vpop.f32.mrb[0].mxu0
        %v4219 = vpop.f32.mrb[0].mxu0
        %v4220 = vadd.f32 %v4119, %v4219
        %v4221 = vpop.f32.mrb[0].mxu0
        %4222 = vdwg.mxu0
        %v4223 = vpack.c.bf16 %v3990, %v3989
        %v4224 = vpack.c.bf16 %v3992, %v3991
        %v4225 = vpack.c.bf16 %v3994, %v3993
        %v4226 = vpack.c.bf16 %v3996, %v3995
        %v4227 = vld [vmem:[%s7 + $0x40] sm:$0xf]
        %v4228 = vld [vmem:[%s7 + $0x44] sm:$0xf]
        %v4229 = vld [vmem:[%s7 + $0x48] sm:$0xf]
        %v4230 = vld [vmem:[%s7 + $0x4c] sm:$0xf]
        %v4231 = vld [vmem:[%s7 + $0x50] sm:$0xf]
        %v4232 = vld [vmem:[%s7 + $0x54] sm:$0xf]
        %v4233 = vld [vmem:[%s7 + $0x58] sm:$0xf]
        %v4234 = vld [vmem:[%s7 + $0x5c] sm:$0xf]
        %v4243 = vunpack.c.l.b16 %v4227
        %v4244 = vunpack.c.l.b16 %v4228
        %v4245 = vunpack.c.l.b16 %v4229
        %v4246 = vunpack.c.l.b16 %v4230
        %v4247 = vunpack.c.l.b16 %v4231
        %v4248 = vunpack.c.l.b16 %v4232
        %v4249 = vunpack.c.l.b16 %v4233
        %v4250 = vunpack.c.l.b16 %v4234
        %v4251 = vpack.c.b16 %v4244, %v4243
        %v4252 = vpack.c.b16 %v4246, %v4245
        %v4253 = vpack.c.b16 %v4248, %v4247
        %v4254 = vpack.c.b16 %v4250, %v4249
        %v4260 = vsel %vm813, %v4223, 0
        %v4263 = vsel %vm813, %v4224, 0
        %v4266 = vsel %vm813, %v4225, 0
        %v4269 = vsel %vm813, %v4226, 0
        %4271 = vmatprep.subr.bf16.mxu0 0
        %4272 = vmatpush1.bf16.msra.mxu0 %v4251
        %4273 = vmatprep.subr.bf16.mxu0 0
        %4274 = vmatpush1.bf16.msra.mxu0 %v4252
        %4275 = vmatprep.subr.bf16.mxu0 0
        %4276 = vmatpush1.bf16.msra.mxu0 %v4253
        %4277 = vmatprep.subr.bf16.mxu0 0
        %4278 = vmatpush1.bf16.msra.mxu0 %v4254
        %4279 = vmatprep.subr.bf16.mxu0 0
        %4280 = vmatpush1.bf16.msra.mxu0 0
        %4281 = vmatprep.subr.bf16.mxu0 0
        %4282 = vmatpush1.bf16.msra.mxu0 0
        %4283 = vmatprep.subr.bf16.mxu0 0
        %4284 = vmatpush1.bf16.msra.mxu0 0
        %4285 = vmatprep.subr.bf16.mxu0 0
        %4286 = vmatpush1.bf16.msra.mxu0 0
        %4287 = vmatprep.subr.bf16.mxu0 0
        %4288 = vmatpush1.bf16.msra.mxu0 0
        %4289 = vmatprep.subr.bf16.mxu0 0
        %4290 = vmatpush1.bf16.msra.mxu0 0
        %4291 = vmatprep.subr.bf16.mxu0 0
        %4292 = vmatpush1.bf16.msra.mxu0 0
        %4293 = vmatprep.subr.bf16.mxu0 0
        %4294 = vmatpush1.bf16.msra.mxu0 0
        %4295 = vmatprep.subr.bf16.mxu0 0
        %4296 = vmatpush1.bf16.msra.mxu0 0
        %4297 = vmatprep.subr.bf16.mxu0 0
        %4298 = vmatpush1.bf16.msra.mxu0 0
        %4299 = vmatprep.subr.bf16.mxu0 0
        %4300 = vmatpush1.bf16.msra.mxu0 0
        %4301 = vmatprep.subr.bf16.mxu0 0
        %4302 = vmatpush1.bf16.msra.mxu0 0
        %4303 = vmatprep.mubr.bf16.mxu0 0
        %4304 = vmatmul.mubr.bf16.gmra.mrb[0].mxu0 %v4260
        %v4305 = vpop.f32.mrb[0].mxu0
        %v4306 = vadd.f32 0.0, %v4305
        %v4307 = vpop.f32.mrb[0].mxu0
        %v4308 = vpop.f32.mrb[0].mxu0
        %v4309 = vadd.f32 0.0, %v4308
        %v4310 = vpop.f32.mrb[0].mxu0
        %4311 = vmatprep.mubr.bf16.mxu0 0
        %4312 = vmatmul.mubr.bf16.gmra.mrb[0].mxu0 %v4263
        %v4313 = vpop.f32.mrb[0].mxu0
        %v4314 = vadd.f32 0.0, %v4313
        %v4315 = vpop.f32.mrb[0].mxu0
        %v4316 = vpop.f32.mrb[0].mxu0
        %v4317 = vadd.f32 0.0, %v4316
        %v4318 = vpop.f32.mrb[0].mxu0
        %4319 = vmatprep.mubr.bf16.mxu0 0
        %4320 = vmatmul.mubr.bf16.gmra.mrb[0].mxu0 %v4266
        %v4321 = vpop.f32.mrb[0].mxu0
        %v4322 = vadd.f32 0.0, %v4321
        %v4323 = vpop.f32.mrb[0].mxu0
        %v4324 = vpop.f32.mrb[0].mxu0
        %v4325 = vadd.f32 0.0, %v4324
        %v4326 = vpop.f32.mrb[0].mxu0
        %4327 = vmatprep.mubr.bf16.mxu0 0
        %4328 = vmatmul.mubr.bf16.gmra.mrb[0].mxu0 %v4269
        %v4329 = vpop.f32.mrb[0].mxu0
        %v4330 = vadd.f32 0.0, %v4329
        %v4331 = vpop.f32.mrb[0].mxu0
        %v4332 = vpop.f32.mrb[0].mxu0
        %v4333 = vadd.f32 0.0, %v4332
        %v4334 = vpop.f32.mrb[0].mxu0
        %4335 = vdwg.mxu0
        %v4336 = vadd.f32 %v4193, %v4306
        %v4337 = vadd.f32 %v4196, %v4309
        %v4338 = vadd.f32 %v4201, %v4314
        %v4339 = vadd.f32 %v4204, %v4317
        %v4340 = vadd.f32 %v4209, %v4322
        %v4341 = vadd.f32 %v4212, %v4325
        %v4342 = vadd.f32 %v4217, %v4330
        %v4343 = vadd.f32 %v4220, %v4333
        %v4344 = vld [vmem:[%s8] sm:$0x1]
        %v4346 = vlaneseq
        %v4347 = vshrl.u32 %v4346, 7
        %v4348 = vsub.s32 0, %v4347
        %v4349 = vrot.slane %v4344, %v4348
        %v4351 = vadd.f32 %v4336, %v4349
        %v4352 = vadd.f32 %v4337, %v4349
        %v4353 = vadd.f32 %v4338, %v4349
        %v4354 = vadd.f32 %v4339, %v4349
        %v4355 = vadd.f32 %v4340, %v4349
        %v4356 = vadd.f32 %v4341, %v4349
        %v4357 = vadd.f32 %v4342, %v4349
        %v4358 = vadd.f32 %v4343, %v4349
        %v4359 = vmax.f32 %v4351, 0.0
        %v4360 = vmax.f32 %v4352, 0.0
        %v4361 = vmax.f32 %v4353, 0.0
        %v4362 = vmax.f32 %v4354, 0.0
        %v4363 = vmax.f32 %v4355, 0.0
        %v4364 = vmax.f32 %v4356, 0.0
        %v4365 = vmax.f32 %v4357, 0.0
        %v4366 = vmax.f32 %v4358, 0.0
        %4367 = vst.msk [vmem:[#allocation2] sm:$0xff] %vm813, %v4359
        %4368 = vst.msk [vmem:[#allocation2 + $0x8] sm:$0xff] %vm813, %v4360
        %4369 = vst.msk [vmem:[#allocation2 + $0x10] sm:$0xff] %vm813, %v4361
        %4370 = vst.msk [vmem:[#allocation2 + $0x18] sm:$0xff] %vm813, %v4362
        %4371 = vst.msk [vmem:[#allocation2 + $0x20] sm:$0xff] %vm813, %v4363
        %4372 = vst.msk [vmem:[#allocation2 + $0x28] sm:$0xff] %vm813, %v4364
        %4373 = vst.msk [vmem:[#allocation2 + $0x30] sm:$0xff] %vm813, %v4365
        %4374 = vst.msk [vmem:[#allocation2 + $0x38] sm:$0xff] %vm813, %v4366
        %v4375 = vld [vmem:[#allocation2] ss:$2 sm:$0xff]
        %v4376 = vld [vmem:[%s1329] ss:$2 sm:$0xff]
        %v4377 = vld [vmem:[%s1331] ss:$2 sm:$0xff]
        %v4378 = vld [vmem:[%s1333] ss:$2 sm:$0xff]
        %v4379 = vld [vmem:[%s1391] ss:$2 sm:$0xff]
        %v4380 = vld [vmem:[%s1393] ss:$2 sm:$0xff]
        %v4381 = vld [vmem:[%s1395] ss:$2 sm:$0xff]
        %v4382 = vld [vmem:[%s1397] ss:$2 sm:$0xff]
        %v4383 = vmax.f32 %v4375, %v4379
        %v4384 = vmax.f32 %v4376, %v4380
        %v4385 = vmax.f32 %v4377, %v4381
        %v4386 = vmax.f32 %v4378, %v4382
        %4387 = vst.msk [vmem:[#allocation2 + $0x1] sm:$0xff] %vm813, %v4383
        %4388 = vst.msk [vmem:[#allocation2 + $0x9] sm:$0xff] %vm813, %v4384
        %4389 = vst.msk [vmem:[#allocation2 + $0x11] sm:$0xff] %vm813, %v4385
        %4390 = vst.msk [vmem:[#allocation2 + $0x19] sm:$0xff] %vm813, %v4386
        %vm4391 = vcmp.lt.s32.totalorder %v1520, 0
        %v4392 = vsub.s32 0, %v1520
        %v4393 = vsel %vm4391, %v4392, %v1520
        %v4394 = vshrl.u32 %v4393, 2
        %v4395 = vand.u32 %v4393, 3
        %v4396 = vsub.s32 0, %v4395
        %v4397 = vsel %vm4391, %v4396, %v4395
        %vm4398 = vcmp.lt.s32.totalorder %v1521, 0
        %v4399 = vsub.s32 0, %v1521
        %v4400 = vsel %vm4398, %v4399, %v1521
        %v4401 = vshrl.u32 %v4400, 2
        %v4402 = vand.u32 %v4400, 3
        %v4403 = vsub.s32 0, %v4402
        %v4404 = vsel %vm4398, %v4403, %v4402
        %vm4405 = vcmp.lt.s32.totalorder %v1522, 0
        %v4406 = vsub.s32 0, %v1522
        %v4407 = vsel %vm4405, %v4406, %v1522
        %v4408 = vshrl.u32 %v4407, 2
        %v4409 = vand.u32 %v4407, 3
        %v4410 = vsub.s32 0, %v4409
        %v4411 = vsel %vm4405, %v4410, %v4409
        %vm4412 = vcmp.lt.s32.totalorder %v1523, 0
        %v4413 = vsub.s32 0, %v1523
        %v4414 = vsel %vm4412, %v4413, %v1523
        %v4415 = vshrl.u32 %v4414, 2
        %v4416 = vand.u32 %v4414, 3
        %v4417 = vsub.s32 0, %v4416
        %v4418 = vsel %vm4412, %v4417, %v4416
        %vm4419 = vcmp.ne.s32.totalorder %v4397, 0
        %vm4420 = vcmp.ne.s32.totalorder %v4404, 0
        %vm4421 = vcmp.ne.s32.totalorder %v4411, 0
        %vm4422 = vcmp.ne.s32.totalorder %v4418, 0
        %vm4423 = vcmp.lt.s32.totalorder %v4397, 0
        %vm4424 = vcmp.lt.s32.totalorder %v4404, 0
        %vm4425 = vcmp.lt.s32.totalorder %v4411, 0
        %vm4426 = vcmp.lt.s32.totalorder %v4418, 0
        %vm4427 = vmand %vm4423, %vm4419
        %vm4428 = vmand %vm4424, %vm4420
        %vm4429 = vmand %vm4425, %vm4421
        %vm4430 = vmand %vm4426, %vm4422
        %v4431 = vadd.s32 %v4397, 4
        %v4432 = vadd.s32 %v4404, 4
        %v4433 = vadd.s32 %v4411, 4
        %v4434 = vadd.s32 %v4418, 4
        %v4435 = vsel %vm4427, %v4431, %v4397
        %v4436 = vsel %vm4428, %v4432, %v4404
        %v4437 = vsel %vm4429, %v4433, %v4411
        %v4438 = vsel %vm4430, %v4434, %v4418
        %vm4439 = vcmp.eq.s32.totalorder %v4435, 0
        %vm4440 = vcmp.eq.s32.totalorder %v4436, 0
        %vm4441 = vcmp.eq.s32.totalorder %v4437, 0
        %vm4442 = vcmp.eq.s32.totalorder %v4438, 0
        %v4443 = vld [vmem:[#allocation2] sm:$0xff]
        %v4444 = vld [vmem:[#allocation2 + $0x8] sm:$0xff]
        %v4445 = vld [vmem:[#allocation2 + $0x10] sm:$0xff]
        %v4446 = vld [vmem:[#allocation2 + $0x18] sm:$0xff]
        %v4447 = vsel %vm4439, 0.0, %v4443
        %v4448 = vsel %vm4440, 0.0, %v4444
        %v4449 = vsel %vm4441, 0.0, %v4445
        %v4450 = vsel %vm4442, 0.0, %v4446
        %vm4451 = vcmp.eq.s32.totalorder %v4435, 3
        %vm4452 = vcmp.eq.s32.totalorder %v4436, 3
        %vm4453 = vcmp.eq.s32.totalorder %v4437, 3
        %vm4454 = vcmp.eq.s32.totalorder %v4438, 3
        %v4455 = vld [vmem:[#allocation2 + $0x2] sm:$0xff]
        %v4456 = vld [vmem:[#allocation2 + $0xa] sm:$0xff]
        %v4457 = vld [vmem:[#allocation2 + $0x12] sm:$0xff]
        %v4458 = vld [vmem:[#allocation2 + $0x1a] sm:$0xff]
        %v4459 = vsel %vm4451, 0.0, %v4455
        %v4460 = vsel %vm4452, 0.0, %v4456
        %v4461 = vsel %vm4453, 0.0, %v4457
        %v4462 = vsel %vm4454, 0.0, %v4458
        %v4463 = vpack.c.bf16 %v4448, %v4447
        %v4464 = vpack.c.bf16 %v4450, %v4449
        %v4465 = vld [vmem:[%s9] sm:$0xf]
        %v4466 = vld [vmem:[%s9 + $0x4] sm:$0xf]
        %v4467 = vld [vmem:[%s9 + $0x8] sm:$0xf]
        %v4468 = vld [vmem:[%s9 + $0xc] sm:$0xf]
        %v4469 = vld [vmem:[%s9 + $0x10] sm:$0xf]
        %v4470 = vld [vmem:[%s9 + $0x14] sm:$0xf]
        %v4471 = vld [vmem:[%s9 + $0x18] sm:$0xf]
        %v4472 = vld [vmem:[%s9 + $0x1c] sm:$0xf]
        %v4473 = vpack.c.bf16 %v4384, %v4383
        %v4474 = vpack.c.bf16 %v4386, %v4385
        %v4475 = vld [vmem:[%s9 + $0x20] sm:$0xf]
        %v4476 = vld [vmem:[%s9 + $0x24] sm:$0xf]
        %v4477 = vld [vmem:[%s9 + $0x28] sm:$0xf]
        %v4478 = vld [vmem:[%s9 + $0x2c] sm:$0xf]
        %v4479 = vld [vmem:[%s9 + $0x30] sm:$0xf]
        %v4480 = vld [vmem:[%s9 + $0x34] sm:$0xf]
        %v4481 = vld [vmem:[%s9 + $0x38] sm:$0xf]
        %v4482 = vld [vmem:[%s9 + $0x3c] sm:$0xf]
        %v4491 = vunpack.c.l.b16 %v4475
        %v4492 = vunpack.c.l.b16 %v4476
        %v4493 = vunpack.c.l.b16 %v4477
        %v4494 = vunpack.c.l.b16 %v4478
        %v4495 = vunpack.c.l.b16 %v4479
        %v4496 = vunpack.c.l.b16 %v4480
        %v4497 = vunpack.c.l.b16 %v4481
        %v4498 = vunpack.c.l.b16 %v4482
        %v4499 = vpack.c.b16 %v4492, %v4491
        %v4500 = vpack.c.b16 %v4494, %v4493
        %v4501 = vpack.c.b16 %v4496, %v4495
        %v4502 = vpack.c.b16 %v4498, %v4497
        %v4508 = vsel %vm813, %v4473, 0
        %v4511 = vsel %vm813, %v4474, 0
        %4513 = vmatprep.subr.bf16.mxu0 0
        %4514 = vmatpush1.bf16.msra.mxu0 %v4499
        %4515 = vmatprep.subr.bf16.mxu0 0
        %4516 = vmatpush1.bf16.msra.mxu0 %v4500
        %4517 = vmatprep.subr.bf16.mxu0 0
        %4518 = vmatpush1.bf16.msra.mxu0 %v4501
        %4519 = vmatprep.subr.bf16.mxu0 0
        %4520 = vmatpush1.bf16.msra.mxu0 %v4502
        %4521 = vmatprep.subr.bf16.mxu0 0
        %4522 = vmatpush1.bf16.msra.mxu0 0
        %4523 = vmatprep.subr.bf16.mxu0 0
        %4524 = vmatpush1.bf16.msra.mxu0 0
        %4525 = vmatprep.subr.bf16.mxu0 0
        %4526 = vmatpush1.bf16.msra.mxu0 0
        %4527 = vmatprep.subr.bf16.mxu0 0
        %4528 = vmatpush1.bf16.msra.mxu0 0
        %4529 = vmatprep.subr.bf16.mxu0 0
        %4530 = vmatpush1.bf16.msra.mxu0 0
        %4531 = vmatprep.subr.bf16.mxu0 0
        %4532 = vmatpush1.bf16.msra.mxu0 0
        %4533 = vmatprep.subr.bf16.mxu0 0
        %4534 = vmatpush1.bf16.msra.mxu0 0
        %4535 = vmatprep.subr.bf16.mxu0 0
        %4536 = vmatpush1.bf16.msra.mxu0 0
        %4537 = vmatprep.subr.bf16.mxu0 0
        %4538 = vmatpush1.bf16.msra.mxu0 0
        %4539 = vmatprep.subr.bf16.mxu0 0
        %4540 = vmatpush1.bf16.msra.mxu0 0
        %4541 = vmatprep.subr.bf16.mxu0 0
        %4542 = vmatpush1.bf16.msra.mxu0 0
        %4543 = vmatprep.subr.bf16.mxu0 0
        %4544 = vmatpush1.bf16.msra.mxu0 0
        %4545 = vmatprep.mubr.bf16.mxu0 0
        %4546 = vmatmul.mubr.bf16.gmra.mrb[0].mxu0 %v4508
        %v4547 = vpop.f32.mrb[0].mxu0
        %v4548 = vadd.f32 0.0, %v4547
        %v4549 = vpop.f32.mrb[0].mxu0
        %v4550 = vpop.f32.mrb[0].mxu0
        %v4551 = vadd.f32 0.0, %v4550
        %v4552 = vpop.f32.mrb[0].mxu0
        %4553 = vmatprep.mubr.bf16.mxu0 0
        %4554 = vmatmul.mubr.bf16.gmra.mrb[0].mxu0 %v4511
        %v4555 = vpop.f32.mrb[0].mxu0
        %v4556 = vadd.f32 0.0, %v4555
        %v4557 = vpop.f32.mrb[0].mxu0
        %v4558 = vpop.f32.mrb[0].mxu0
        %v4559 = vadd.f32 0.0, %v4558
        %v4560 = vpop.f32.mrb[0].mxu0
        %4561 = vdwg.mxu0
        %v4570 = vunpack.c.l.b16 %v4465
        %v4571 = vunpack.c.l.b16 %v4466
        %v4572 = vunpack.c.l.b16 %v4467
        %v4573 = vunpack.c.l.b16 %v4468
        %v4574 = vunpack.c.l.b16 %v4469
        %v4575 = vunpack.c.l.b16 %v4470
        %v4576 = vunpack.c.l.b16 %v4471
        %v4577 = vunpack.c.l.b16 %v4472
        %v4578 = vpack.c.b16 %v4571, %v4570
        %v4579 = vpack.c.b16 %v4573, %v4572
        %v4580 = vpack.c.b16 %v4575, %v4574
        %v4581 = vpack.c.b16 %v4577, %v4576
        %v4587 = vsel %vm813, %v4463, 0
        %v4590 = vsel %vm813, %v4464, 0
        %4592 = vmatprep.subr.bf16.mxu0 0
        %4593 = vmatpush1.bf16.msra.mxu0 %v4578
        %4594 = vmatprep.subr.bf16.mxu0 0
        %4595 = vmatpush1.bf16.msra.mxu0 %v4579
        %4596 = vmatprep.subr.bf16.mxu0 0
        %4597 = vmatpush1.bf16.msra.mxu0 %v4580
        %4598 = vmatprep.subr.bf16.mxu0 0
        %4599 = vmatpush1.bf16.msra.mxu0 %v4581
        %4600 = vmatprep.subr.bf16.mxu0 0
        %4601 = vmatpush1.bf16.msra.mxu0 0
        %4602 = vmatprep.subr.bf16.mxu0 0
        %4603 = vmatpush1.bf16.msra.mxu0 0
        %4604 = vmatprep.subr.bf16.mxu0 0
        %4605 = vmatpush1.bf16.msra.mxu0 0
        %4606 = vmatprep.subr.bf16.mxu0 0
        %4607 = vmatpush1.bf16.msra.mxu0 0
        %4608 = vmatprep.subr.bf16.mxu0 0
        %4609 = vmatpush1.bf16.msra.mxu0 0
        %4610 = vmatprep.subr.bf16.mxu0 0
        %4611 = vmatpush1.bf16.msra.mxu0 0
        %4612 = vmatprep.subr.bf16.mxu0 0
        %4613 = vmatpush1.bf16.msra.mxu0 0
        %4614 = vmatprep.subr.bf16.mxu0 0
        %4615 = vmatpush1.bf16.msra.mxu0 0
        %4616 = vmatprep.subr.bf16.mxu0 0
        %4617 = vmatpush1.bf16.msra.mxu0 0
        %4618 = vmatprep.subr.bf16.mxu0 0
        %4619 = vmatpush1.bf16.msra.mxu0 0
        %4620 = vmatprep.subr.bf16.mxu0 0
        %4621 = vmatpush1.bf16.msra.mxu0 0
        %4622 = vmatprep.subr.bf16.mxu0 0
        %4623 = vmatpush1.bf16.msra.mxu0 0
        %4624 = vmatprep.mubr.bf16.mxu0 0
        %4625 = vmatmul.mubr.bf16.gmra.mrb[0].mxu0 %v4587
        %v4626 = vpop.f32.mrb[0].mxu0
        %v4627 = vadd.f32 %v4548, %v4626
        %v4628 = vpop.f32.mrb[0].mxu0
        %v4629 = vpop.f32.mrb[0].mxu0
        %v4630 = vadd.f32 %v4551, %v4629
        %v4631 = vpop.f32.mrb[0].mxu0
        %4632 = vmatprep.mubr.bf16.mxu0 0
        %4633 = vmatmul.mubr.bf16.gmra.mrb[0].mxu0 %v4590
        %v4634 = vpop.f32.mrb[0].mxu0
        %v4635 = vadd.f32 %v4556, %v4634
        %v4636 = vpop.f32.mrb[0].mxu0
        %v4637 = vpop.f32.mrb[0].mxu0
        %v4638 = vadd.f32 %v4559, %v4637
        %v4639 = vpop.f32.mrb[0].mxu0
        %4640 = vdwg.mxu0
        %v4641 = vpack.c.bf16 %v4460, %v4459
        %v4642 = vpack.c.bf16 %v4462, %v4461
        %v4643 = vld [vmem:[%s9 + $0x40] sm:$0xf]
        %v4644 = vld [vmem:[%s9 + $0x44] sm:$0xf]
        %v4645 = vld [vmem:[%s9 + $0x48] sm:$0xf]
        %v4646 = vld [vmem:[%s9 + $0x4c] sm:$0xf]
        %v4647 = vld [vmem:[%s9 + $0x50] sm:$0xf]
        %v4648 = vld [vmem:[%s9 + $0x54] sm:$0xf]
        %v4649 = vld [vmem:[%s9 + $0x58] sm:$0xf]
        %v4650 = vld [vmem:[%s9 + $0x5c] sm:$0xf]
        %v4659 = vunpack.c.l.b16 %v4643
        %v4660 = vunpack.c.l.b16 %v4644
        %v4661 = vunpack.c.l.b16 %v4645
        %v4662 = vunpack.c.l.b16 %v4646
        %v4663 = vunpack.c.l.b16 %v4647
        %v4664 = vunpack.c.l.b16 %v4648
        %v4665 = vunpack.c.l.b16 %v4649
        %v4666 = vunpack.c.l.b16 %v4650
        %v4667 = vpack.c.b16 %v4660, %v4659
        %v4668 = vpack.c.b16 %v4662, %v4661
        %v4669 = vpack.c.b16 %v4664, %v4663
        %v4670 = vpack.c.b16 %v4666, %v4665
        %v4676 = vsel %vm813, %v4641, 0
        %v4679 = vsel %vm813, %v4642, 0
        %4681 = vmatprep.subr.bf16.mxu0 0
        %4682 = vmatpush1.bf16.msra.mxu0 %v4667
        %4683 = vmatprep.subr.bf16.mxu0 0
        %4684 = vmatpush1.bf16.msra.mxu0 %v4668
        %4685 = vmatprep.subr.bf16.mxu0 0
        %4686 = vmatpush1.bf16.msra.mxu0 %v4669
        %4687 = vmatprep.subr.bf16.mxu0 0
        %4688 = vmatpush1.bf16.msra.mxu0 %v4670
        %4689 = vmatprep.subr.bf16.mxu0 0
        %4690 = vmatpush1.bf16.msra.mxu0 0
        %4691 = vmatprep.subr.bf16.mxu0 0
        %4692 = vmatpush1.bf16.msra.mxu0 0
        %4693 = vmatprep.subr.bf16.mxu0 0
        %4694 = vmatpush1.bf16.msra.mxu0 0
        %4695 = vmatprep.subr.bf16.mxu0 0
        %4696 = vmatpush1.bf16.msra.mxu0 0
        %4697 = vmatprep.subr.bf16.mxu0 0
        %4698 = vmatpush1.bf16.msra.mxu0 0
        %4699 = vmatprep.subr.bf16.mxu0 0
        %4700 = vmatpush1.bf16.msra.mxu0 0
        %4701 = vmatprep.subr.bf16.mxu0 0
        %4702 = vmatpush1.bf16.msra.mxu0 0
        %4703 = vmatprep.subr.bf16.mxu0 0
        %4704 = vmatpush1.bf16.msra.mxu0 0
        %4705 = vmatprep.subr.bf16.mxu0 0
        %4706 = vmatpush1.bf16.msra.mxu0 0
        %4707 = vmatprep.subr.bf16.mxu0 0
        %4708 = vmatpush1.bf16.msra.mxu0 0
        %4709 = vmatprep.subr.bf16.mxu0 0
        %4710 = vmatpush1.bf16.msra.mxu0 0
        %4711 = vmatprep.subr.bf16.mxu0 0
        %4712 = vmatpush1.bf16.msra.mxu0 0
        %4713 = vmatprep.mubr.bf16.mxu0 0
        %4714 = vmatmul.mubr.bf16.gmra.mrb[0].mxu0 %v4676
        %v4715 = vpop.f32.mrb[0].mxu0
        %v4716 = vadd.f32 0.0, %v4715
        %v4717 = vpop.f32.mrb[0].mxu0
        %v4718 = vpop.f32.mrb[0].mxu0
        %v4719 = vadd.f32 0.0, %v4718
        %v4720 = vpop.f32.mrb[0].mxu0
        %4721 = vmatprep.mubr.bf16.mxu0 0
        %4722 = vmatmul.mubr.bf16.gmra.mrb[0].mxu0 %v4679
        %v4723 = vpop.f32.mrb[0].mxu0
        %v4724 = vadd.f32 0.0, %v4723
        %v4725 = vpop.f32.mrb[0].mxu0
        %v4726 = vpop.f32.mrb[0].mxu0
        %v4727 = vadd.f32 0.0, %v4726
        %v4728 = vpop.f32.mrb[0].mxu0
        %4729 = vdwg.mxu0
        %v4730 = vadd.f32 %v4627, %v4716
        %v4731 = vadd.f32 %v4630, %v4719
        %v4732 = vadd.f32 %v4635, %v4724
        %v4733 = vadd.f32 %v4638, %v4727
        %v4734 = vld [vmem:[%s10] sm:$0x1]
        %v4736 = vlaneseq
        %v4737 = vshrl.u32 %v4736, 7
        %v4738 = vsub.s32 0, %v4737
        %v4739 = vrot.slane %v4734, %v4738
        %v4741 = vadd.f32 %v4730, %v4739
        %v4742 = vadd.f32 %v4731, %v4739
        %v4743 = vadd.f32 %v4732, %v4739
        %v4744 = vadd.f32 %v4733, %v4739
        %v4745 = vmax.f32 %v4741, 0.0
        %v4746 = vmax.f32 %v4742, 0.0
        %v4747 = vmax.f32 %v4743, 0.0
        %v4748 = vmax.f32 %v4744, 0.0
        %4749 = vst.msk [vmem:[#allocation2 + $0x1] sm:$0xff] %vm813, %v4745
        %4750 = vst.msk [vmem:[#allocation2 + $0x9] sm:$0xff] %vm813, %v4746
        %4751 = vst.msk [vmem:[#allocation2 + $0x11] sm:$0xff] %vm813, %v4747
        %4752 = vst.msk [vmem:[#allocation2 + $0x19] sm:$0xff] %vm813, %v4748
        %v4753 = vld [vmem:[#allocation2] sm:$0xff]
        %v4754 = vld [vmem:[#allocation2 + $0x8] sm:$0xff]
        %v4755 = vld [vmem:[#allocation2 + $0x10] sm:$0xff]
        %v4756 = vld [vmem:[#allocation2 + $0x18] sm:$0xff]
        %v4757 = vsel %vm4439, 0.0, %v4753
        %v4758 = vsel %vm4440, 0.0, %v4754
        %v4759 = vsel %vm4441, 0.0, %v4755
        %v4760 = vsel %vm4442, 0.0, %v4756
        %v4761 = vld [vmem:[#allocation2 + $0x2] sm:$0xff]
        %v4762 = vld [vmem:[#allocation2 + $0xa] sm:$0xff]
        %v4763 = vld [vmem:[#allocation2 + $0x12] sm:$0xff]
        %v4764 = vld [vmem:[#allocation2 + $0x1a] sm:$0xff]
        %v4765 = vsel %vm4451, 0.0, %v4761
        %v4766 = vsel %vm4452, 0.0, %v4762
        %v4767 = vsel %vm4453, 0.0, %v4763
        %v4768 = vsel %vm4454, 0.0, %v4764
        %v4769 = vpack.c.bf16 %v4758, %v4757
        %v4770 = vpack.c.bf16 %v4760, %v4759
        %v4771 = vld [vmem:[%s11] sm:$0xf]
        %v4772 = vld [vmem:[%s11 + $0x4] sm:$0xf]
        %v4773 = vld [vmem:[%s11 + $0x8] sm:$0xf]
        %v4774 = vld [vmem:[%s11 + $0xc] sm:$0xf]
        %v4775 = vld [vmem:[%s11 + $0x10] sm:$0xf]
        %v4776 = vld [vmem:[%s11 + $0x14] sm:$0xf]
        %v4777 = vld [vmem:[%s11 + $0x18] sm:$0xf]
        %v4778 = vld [vmem:[%s11 + $0x1c] sm:$0xf]
        %v4779 = vpack.c.bf16 %v4746, %v4745
        %v4780 = vpack.c.bf16 %v4748, %v4747
        %v4781 = vld [vmem:[%s11 + $0x20] sm:$0xf]
        %v4782 = vld [vmem:[%s11 + $0x24] sm:$0xf]
        %v4783 = vld [vmem:[%s11 + $0x28] sm:$0xf]
        %v4784 = vld [vmem:[%s11 + $0x2c] sm:$0xf]
        %v4785 = vld [vmem:[%s11 + $0x30] sm:$0xf]
        %v4786 = vld [vmem:[%s11 + $0x34] sm:$0xf]
        %v4787 = vld [vmem:[%s11 + $0x38] sm:$0xf]
        %v4788 = vld [vmem:[%s11 + $0x3c] sm:$0xf]
        %v4797 = vunpack.c.l.b16 %v4781
        %v4798 = vunpack.c.l.b16 %v4782
        %v4799 = vunpack.c.l.b16 %v4783
        %v4800 = vunpack.c.l.b16 %v4784
        %v4801 = vunpack.c.l.b16 %v4785
        %v4802 = vunpack.c.l.b16 %v4786
        %v4803 = vunpack.c.l.b16 %v4787
        %v4804 = vunpack.c.l.b16 %v4788
        %v4805 = vpack.c.b16 %v4798, %v4797
        %v4806 = vpack.c.b16 %v4800, %v4799
        %v4807 = vpack.c.b16 %v4802, %v4801
        %v4808 = vpack.c.b16 %v4804, %v4803
        %v4814 = vsel %vm813, %v4779, 0
        %v4817 = vsel %vm813, %v4780, 0
        %4819 = vmatprep.subr.bf16.mxu0 0
        %4820 = vmatpush1.bf16.msra.mxu0 %v4805
        %4821 = vmatprep.subr.bf16.mxu0 0
        %4822 = vmatpush1.bf16.msra.mxu0 %v4806
        %4823 = vmatprep.subr.bf16.mxu0 0
        %4824 = vmatpush1.bf16.msra.mxu0 %v4807
        %4825 = vmatprep.subr.bf16.mxu0 0
        %4826 = vmatpush1.bf16.msra.mxu0 %v4808
        %4827 = vmatprep.subr.bf16.mxu0 0
        %4828 = vmatpush1.bf16.msra.mxu0 0
        %4829 = vmatprep.subr.bf16.mxu0 0
        %4830 = vmatpush1.bf16.msra.mxu0 0
        %4831 = vmatprep.subr.bf16.mxu0 0
        %4832 = vmatpush1.bf16.msra.mxu0 0
        %4833 = vmatprep.subr.bf16.mxu0 0
        %4834 = vmatpush1.bf16.msra.mxu0 0
        %4835 = vmatprep.subr.bf16.mxu0 0
        %4836 = vmatpush1.bf16.msra.mxu0 0
        %4837 = vmatprep.subr.bf16.mxu0 0
        %4838 = vmatpush1.bf16.msra.mxu0 0
        %4839 = vmatprep.subr.bf16.mxu0 0
        %4840 = vmatpush1.bf16.msra.mxu0 0
        %4841 = vmatprep.subr.bf16.mxu0 0
        %4842 = vmatpush1.bf16.msra.mxu0 0
        %4843 = vmatprep.subr.bf16.mxu0 0
        %4844 = vmatpush1.bf16.msra.mxu0 0
        %4845 = vmatprep.subr.bf16.mxu0 0
        %4846 = vmatpush1.bf16.msra.mxu0 0
        %4847 = vmatprep.subr.bf16.mxu0 0
        %4848 = vmatpush1.bf16.msra.mxu0 0
        %4849 = vmatprep.subr.bf16.mxu0 0
        %4850 = vmatpush1.bf16.msra.mxu0 0
        %4851 = vmatprep.mubr.bf16.mxu0 0
        %4852 = vmatmul.mubr.bf16.gmra.mrb[0].mxu0 %v4814
        %v4853 = vpop.f32.mrb[0].mxu0
        %v4854 = vadd.f32 0.0, %v4853
        %v4855 = vpop.f32.mrb[0].mxu0
        %v4856 = vpop.f32.mrb[0].mxu0
        %v4857 = vadd.f32 0.0, %v4856
        %v4858 = vpop.f32.mrb[0].mxu0
        %4859 = vmatprep.mubr.bf16.mxu0 0
        %4860 = vmatmul.mubr.bf16.gmra.mrb[0].mxu0 %v4817
        %v4861 = vpop.f32.mrb[0].mxu0
        %v4862 = vadd.f32 0.0, %v4861
        %v4863 = vpop.f32.mrb[0].mxu0
        %v4864 = vpop.f32.mrb[0].mxu0
        %v4865 = vadd.f32 0.0, %v4864
        %v4866 = vpop.f32.mrb[0].mxu0
        %4867 = vdwg.mxu0
        %v4876 = vunpack.c.l.b16 %v4771
        %v4877 = vunpack.c.l.b16 %v4772
        %v4878 = vunpack.c.l.b16 %v4773
        %v4879 = vunpack.c.l.b16 %v4774
        %v4880 = vunpack.c.l.b16 %v4775
        %v4881 = vunpack.c.l.b16 %v4776
        %v4882 = vunpack.c.l.b16 %v4777
        %v4883 = vunpack.c.l.b16 %v4778
        %v4884 = vpack.c.b16 %v4877, %v4876
        %v4885 = vpack.c.b16 %v4879, %v4878
        %v4886 = vpack.c.b16 %v4881, %v4880
        %v4887 = vpack.c.b16 %v4883, %v4882
        %v4893 = vsel %vm813, %v4769, 0
        %v4896 = vsel %vm813, %v4770, 0
        %4898 = vmatprep.subr.bf16.mxu0 0
        %4899 = vmatpush1.bf16.msra.mxu0 %v4884
        %4900 = vmatprep.subr.bf16.mxu0 0
        %4901 = vmatpush1.bf16.msra.mxu0 %v4885
        %4902 = vmatprep.subr.bf16.mxu0 0
        %4903 = vmatpush1.bf16.msra.mxu0 %v4886
        %4904 = vmatprep.subr.bf16.mxu0 0
        %4905 = vmatpush1.bf16.msra.mxu0 %v4887
        %4906 = vmatprep.subr.bf16.mxu0 0
        %4907 = vmatpush1.bf16.msra.mxu0 0
        %4908 = vmatprep.subr.bf16.mxu0 0
        %4909 = vmatpush1.bf16.msra.mxu0 0
        %4910 = vmatprep.subr.bf16.mxu0 0
        %4911 = vmatpush1.bf16.msra.mxu0 0
        %4912 = vmatprep.subr.bf16.mxu0 0
        %4913 = vmatpush1.bf16.msra.mxu0 0
        %4914 = vmatprep.subr.bf16.mxu0 0
        %4915 = vmatpush1.bf16.msra.mxu0 0
        %4916 = vmatprep.subr.bf16.mxu0 0
        %4917 = vmatpush1.bf16.msra.mxu0 0
        %4918 = vmatprep.subr.bf16.mxu0 0
        %4919 = vmatpush1.bf16.msra.mxu0 0
        %4920 = vmatprep.subr.bf16.mxu0 0
        %4921 = vmatpush1.bf16.msra.mxu0 0
        %4922 = vmatprep.subr.bf16.mxu0 0
        %4923 = vmatpush1.bf16.msra.mxu0 0
        %4924 = vmatprep.subr.bf16.mxu0 0
        %4925 = vmatpush1.bf16.msra.mxu0 0
        %4926 = vmatprep.subr.bf16.mxu0 0
        %4927 = vmatpush1.bf16.msra.mxu0 0
        %4928 = vmatprep.subr.bf16.mxu0 0
        %4929 = vmatpush1.bf16.msra.mxu0 0
        %4930 = vmatprep.mubr.bf16.mxu0 0
        %4931 = vmatmul.mubr.bf16.gmra.mrb[0].mxu0 %v4893
        %v4932 = vpop.f32.mrb[0].mxu0
        %v4933 = vadd.f32 %v4854, %v4932
        %v4934 = vpop.f32.mrb[0].mxu0
        %v4935 = vpop.f32.mrb[0].mxu0
        %v4936 = vadd.f32 %v4857, %v4935
        %v4937 = vpop.f32.mrb[0].mxu0
        %4938 = vmatprep.mubr.bf16.mxu0 0
        %4939 = vmatmul.mubr.bf16.gmra.mrb[0].mxu0 %v4896
        %v4940 = vpop.f32.mrb[0].mxu0
        %v4941 = vadd.f32 %v4862, %v4940
        %v4942 = vpop.f32.mrb[0].mxu0
        %v4943 = vpop.f32.mrb[0].mxu0
        %v4944 = vadd.f32 %v4865, %v4943
        %v4945 = vpop.f32.mrb[0].mxu0
        %4946 = vdwg.mxu0
        %v4947 = vpack.c.bf16 %v4766, %v4765
        %v4948 = vpack.c.bf16 %v4768, %v4767
        %v4949 = vld [vmem:[%s11 + $0x40] sm:$0xf]
        %v4950 = vld [vmem:[%s11 + $0x44] sm:$0xf]
        %v4951 = vld [vmem:[%s11 + $0x48] sm:$0xf]
        %v4952 = vld [vmem:[%s11 + $0x4c] sm:$0xf]
        %v4953 = vld [vmem:[%s11 + $0x50] sm:$0xf]
        %v4954 = vld [vmem:[%s11 + $0x54] sm:$0xf]
        %v4955 = vld [vmem:[%s11 + $0x58] sm:$0xf]
        %v4956 = vld [vmem:[%s11 + $0x5c] sm:$0xf]
        %v4965 = vunpack.c.l.b16 %v4949
        %v4966 = vunpack.c.l.b16 %v4950
        %v4967 = vunpack.c.l.b16 %v4951
        %v4968 = vunpack.c.l.b16 %v4952
        %v4969 = vunpack.c.l.b16 %v4953
        %v4970 = vunpack.c.l.b16 %v4954
        %v4971 = vunpack.c.l.b16 %v4955
        %v4972 = vunpack.c.l.b16 %v4956
        %v4973 = vpack.c.b16 %v4966, %v4965
        %v4974 = vpack.c.b16 %v4968, %v4967
        %v4975 = vpack.c.b16 %v4970, %v4969
        %v4976 = vpack.c.b16 %v4972, %v4971
        %v4982 = vsel %vm813, %v4947, 0
        %v4985 = vsel %vm813, %v4948, 0
        %4987 = vmatprep.subr.bf16.mxu0 0
        %4988 = vmatpush1.bf16.msra.mxu0 %v4973
        %4989 = vmatprep.subr.bf16.mxu0 0
        %4990 = vmatpush1.bf16.msra.mxu0 %v4974
        %4991 = vmatprep.subr.bf16.mxu0 0
        %4992 = vmatpush1.bf16.msra.mxu0 %v4975
        %4993 = vmatprep.subr.bf16.mxu0 0
        %4994 = vmatpush1.bf16.msra.mxu0 %v4976
        %4995 = vmatprep.subr.bf16.mxu0 0
        %4996 = vmatpush1.bf16.msra.mxu0 0
        %4997 = vmatprep.subr.bf16.mxu0 0
        %4998 = vmatpush1.bf16.msra.mxu0 0
        %4999 = vmatprep.subr.bf16.mxu0 0
        %5000 = vmatpush1.bf16.msra.mxu0 0
        %5001 = vmatprep.subr.bf16.mxu0 0
        %5002 = vmatpush1.bf16.msra.mxu0 0
        %5003 = vmatprep.subr.bf16.mxu0 0
        %5004 = vmatpush1.bf16.msra.mxu0 0
        %5005 = vmatprep.subr.bf16.mxu0 0
        %5006 = vmatpush1.bf16.msra.mxu0 0
        %5007 = vmatprep.subr.bf16.mxu0 0
        %5008 = vmatpush1.bf16.msra.mxu0 0
        %5009 = vmatprep.subr.bf16.mxu0 0
        %5010 = vmatpush1.bf16.msra.mxu0 0
        %5011 = vmatprep.subr.bf16.mxu0 0
        %5012 = vmatpush1.bf16.msra.mxu0 0
        %5013 = vmatprep.subr.bf16.mxu0 0
        %5014 = vmatpush1.bf16.msra.mxu0 0
        %5015 = vmatprep.subr.bf16.mxu0 0
        %5016 = vmatpush1.bf16.msra.mxu0 0
        %5017 = vmatprep.subr.bf16.mxu0 0
        %5018 = vmatpush1.bf16.msra.mxu0 0
        %5019 = vmatprep.mubr.bf16.mxu0 0
        %5020 = vmatmul.mubr.bf16.gmra.mrb[0].mxu0 %v4982
        %v5021 = vpop.f32.mrb[0].mxu0
        %v5022 = vadd.f32 0.0, %v5021
        %v5023 = vpop.f32.mrb[0].mxu0
        %v5024 = vpop.f32.mrb[0].mxu0
        %v5025 = vadd.f32 0.0, %v5024
        %v5026 = vpop.f32.mrb[0].mxu0
        %5027 = vmatprep.mubr.bf16.mxu0 0
        %5028 = vmatmul.mubr.bf16.gmra.mrb[0].mxu0 %v4985
        %v5029 = vpop.f32.mrb[0].mxu0
        %v5030 = vadd.f32 0.0, %v5029
        %v5031 = vpop.f32.mrb[0].mxu0
        %v5032 = vpop.f32.mrb[0].mxu0
        %v5033 = vadd.f32 0.0, %v5032
        %v5034 = vpop.f32.mrb[0].mxu0
        %5035 = vdwg.mxu0
        %v5036 = vadd.f32 %v4933, %v5022
        %v5037 = vadd.f32 %v4936, %v5025
        %v5038 = vadd.f32 %v4941, %v5030
        %v5039 = vadd.f32 %v4944, %v5033
        %v5040 = vld [vmem:[%s12] sm:$0x1]
        %v5042 = vlaneseq
        %v5043 = vshrl.u32 %v5042, 7
        %v5044 = vsub.s32 0, %v5043
        %v5045 = vrot.slane %v5040, %v5044
        %v5047 = vadd.f32 %v5036, %v5045
        %v5048 = vadd.f32 %v5037, %v5045
        %v5049 = vadd.f32 %v5038, %v5045
        %v5050 = vadd.f32 %v5039, %v5045
        %v5051 = vmax.f32 %v5047, 0.0
        %v5052 = vmax.f32 %v5048, 0.0
        %v5053 = vmax.f32 %v5049, 0.0
        %v5054 = vmax.f32 %v5050, 0.0
        %5055 = vst.msk [vmem:[#allocation2 + $0x1] sm:$0xff] %vm813, %v5051
        %5056 = vst.msk [vmem:[#allocation2 + $0x9] sm:$0xff] %vm813, %v5052
        %5057 = vst.msk [vmem:[#allocation2 + $0x11] sm:$0xff] %vm813, %v5053
        %5058 = vst.msk [vmem:[#allocation2 + $0x19] sm:$0xff] %vm813, %v5054
        %v5059 = vld [vmem:[#allocation2] sm:$0xff]
        %v5060 = vld [vmem:[#allocation2 + $0x8] sm:$0xff]
        %v5061 = vld [vmem:[#allocation2 + $0x10] sm:$0xff]
        %v5062 = vld [vmem:[#allocation2 + $0x18] sm:$0xff]
        %v5063 = vsel %vm4439, 0.0, %v5059
        %v5064 = vsel %vm4440, 0.0, %v5060
        %v5065 = vsel %vm4441, 0.0, %v5061
        %v5066 = vsel %vm4442, 0.0, %v5062
        %v5067 = vld [vmem:[#allocation2 + $0x2] sm:$0xff]
        %v5068 = vld [vmem:[#allocation2 + $0xa] sm:$0xff]
        %v5069 = vld [vmem:[#allocation2 + $0x12] sm:$0xff]
        %v5070 = vld [vmem:[#allocation2 + $0x1a] sm:$0xff]
        %v5071 = vsel %vm4451, 0.0, %v5067
        %v5072 = vsel %vm4452, 0.0, %v5068
        %v5073 = vsel %vm4453, 0.0, %v5069
        %v5074 = vsel %vm4454, 0.0, %v5070
        %v5075 = vpack.c.bf16 %v5064, %v5063
        %v5076 = vpack.c.bf16 %v5066, %v5065
        %v5077 = vld [vmem:[%s13] sm:$0xf]
        %v5078 = vld [vmem:[%s13 + $0x4] sm:$0xf]
        %v5079 = vld [vmem:[%s13 + $0x8] sm:$0xf]
        %v5080 = vld [vmem:[%s13 + $0xc] sm:$0xf]
        %v5081 = vld [vmem:[%s13 + $0x10] sm:$0xf]
        %v5082 = vld [vmem:[%s13 + $0x14] sm:$0xf]
        %v5083 = vld [vmem:[%s13 + $0x18] sm:$0xf]
        %v5084 = vld [vmem:[%s13 + $0x1c] sm:$0xf]
        %v5085 = vpack.c.bf16 %v5052, %v5051
        %v5086 = vpack.c.bf16 %v5054, %v5053
        %v5087 = vld [vmem:[%s13 + $0x20] sm:$0xf]
        %v5088 = vld [vmem:[%s13 + $0x24] sm:$0xf]
        %v5089 = vld [vmem:[%s13 + $0x28] sm:$0xf]
        %v5090 = vld [vmem:[%s13 + $0x2c] sm:$0xf]
        %v5091 = vld [vmem:[%s13 + $0x30] sm:$0xf]
        %v5092 = vld [vmem:[%s13 + $0x34] sm:$0xf]
        %v5093 = vld [vmem:[%s13 + $0x38] sm:$0xf]
        %v5094 = vld [vmem:[%s13 + $0x3c] sm:$0xf]
        %v5103 = vunpack.c.l.b16 %v5087
        %v5104 = vunpack.c.l.b16 %v5088
        %v5105 = vunpack.c.l.b16 %v5089
        %v5106 = vunpack.c.l.b16 %v5090
        %v5107 = vunpack.c.l.b16 %v5091
        %v5108 = vunpack.c.l.b16 %v5092
        %v5109 = vunpack.c.l.b16 %v5093
        %v5110 = vunpack.c.l.b16 %v5094
        %v5111 = vpack.c.b16 %v5104, %v5103
        %v5112 = vpack.c.b16 %v5106, %v5105
        %v5113 = vpack.c.b16 %v5108, %v5107
        %v5114 = vpack.c.b16 %v5110, %v5109
        %v5120 = vsel %vm813, %v5085, 0
        %v5123 = vsel %vm813, %v5086, 0
        %5125 = vmatprep.subr.bf16.mxu0 0
        %5126 = vmatpush1.bf16.msra.mxu0 %v5111
        %5127 = vmatprep.subr.bf16.mxu0 0
        %5128 = vmatpush1.bf16.msra.mxu0 %v5112
        %5129 = vmatprep.subr.bf16.mxu0 0
        %5130 = vmatpush1.bf16.msra.mxu0 %v5113
        %5131 = vmatprep.subr.bf16.mxu0 0
        %5132 = vmatpush1.bf16.msra.mxu0 %v5114
        %5133 = vmatprep.subr.bf16.mxu0 0
        %5134 = vmatpush1.bf16.msra.mxu0 0
        %5135 = vmatprep.subr.bf16.mxu0 0
        %5136 = vmatpush1.bf16.msra.mxu0 0
        %5137 = vmatprep.subr.bf16.mxu0 0
        %5138 = vmatpush1.bf16.msra.mxu0 0
        %5139 = vmatprep.subr.bf16.mxu0 0
        %5140 = vmatpush1.bf16.msra.mxu0 0
        %5141 = vmatprep.subr.bf16.mxu0 0
        %5142 = vmatpush1.bf16.msra.mxu0 0
        %5143 = vmatprep.subr.bf16.mxu0 0
        %5144 = vmatpush1.bf16.msra.mxu0 0
        %5145 = vmatprep.subr.bf16.mxu0 0
        %5146 = vmatpush1.bf16.msra.mxu0 0
        %5147 = vmatprep.subr.bf16.mxu0 0
        %5148 = vmatpush1.bf16.msra.mxu0 0
        %5149 = vmatprep.subr.bf16.mxu0 0
        %5150 = vmatpush1.bf16.msra.mxu0 0
        %5151 = vmatprep.subr.bf16.mxu0 0
        %5152 = vmatpush1.bf16.msra.mxu0 0
        %5153 = vmatprep.subr.bf16.mxu0 0
        %5154 = vmatpush1.bf16.msra.mxu0 0
        %5155 = vmatprep.subr.bf16.mxu0 0
        %5156 = vmatpush1.bf16.msra.mxu0 0
        %5157 = vmatprep.mubr.bf16.mxu0 0
        %5158 = vmatmul.mubr.bf16.gmra.mrb[0].mxu0 %v5120
        %v5159 = vpop.f32.mrb[0].mxu0
        %v5160 = vadd.f32 0.0, %v5159
        %v5161 = vpop.f32.mrb[0].mxu0
        %v5162 = vpop.f32.mrb[0].mxu0
        %v5163 = vadd.f32 0.0, %v5162
        %v5164 = vpop.f32.mrb[0].mxu0
        %5165 = vmatprep.mubr.bf16.mxu0 0
        %5166 = vmatmul.mubr.bf16.gmra.mrb[0].mxu0 %v5123
        %v5167 = vpop.f32.mrb[0].mxu0
        %v5168 = vadd.f32 0.0, %v5167
        %v5169 = vpop.f32.mrb[0].mxu0
        %v5170 = vpop.f32.mrb[0].mxu0
        %v5171 = vadd.f32 0.0, %v5170
        %v5172 = vpop.f32.mrb[0].mxu0
        %5173 = vdwg.mxu0
        %v5182 = vunpack.c.l.b16 %v5077
        %v5183 = vunpack.c.l.b16 %v5078
        %v5184 = vunpack.c.l.b16 %v5079
        %v5185 = vunpack.c.l.b16 %v5080
        %v5186 = vunpack.c.l.b16 %v5081
        %v5187 = vunpack.c.l.b16 %v5082
        %v5188 = vunpack.c.l.b16 %v5083
        %v5189 = vunpack.c.l.b16 %v5084
        %v5190 = vpack.c.b16 %v5183, %v5182
        %v5191 = vpack.c.b16 %v5185, %v5184
        %v5192 = vpack.c.b16 %v5187, %v5186
        %v5193 = vpack.c.b16 %v5189, %v5188
        %v5199 = vsel %vm813, %v5075, 0
        %v5202 = vsel %vm813, %v5076, 0
        %5204 = vmatprep.subr.bf16.mxu0 0
        %5205 = vmatpush1.bf16.msra.mxu0 %v5190
        %5206 = vmatprep.subr.bf16.mxu0 0
        %5207 = vmatpush1.bf16.msra.mxu0 %v5191
        %5208 = vmatprep.subr.bf16.mxu0 0
        %5209 = vmatpush1.bf16.msra.mxu0 %v5192
        %5210 = vmatprep.subr.bf16.mxu0 0
        %5211 = vmatpush1.bf16.msra.mxu0 %v5193
        %5212 = vmatprep.subr.bf16.mxu0 0
        %5213 = vmatpush1.bf16.msra.mxu0 0
        %5214 = vmatprep.subr.bf16.mxu0 0
        %5215 = vmatpush1.bf16.msra.mxu0 0
        %5216 = vmatprep.subr.bf16.mxu0 0
        %5217 = vmatpush1.bf16.msra.mxu0 0
        %5218 = vmatprep.subr.bf16.mxu0 0
        %5219 = vmatpush1.bf16.msra.mxu0 0
        %5220 = vmatprep.subr.bf16.mxu0 0
        %5221 = vmatpush1.bf16.msra.mxu0 0
        %5222 = vmatprep.subr.bf16.mxu0 0
        %5223 = vmatpush1.bf16.msra.mxu0 0
        %5224 = vmatprep.subr.bf16.mxu0 0
        %5225 = vmatpush1.bf16.msra.mxu0 0
        %5226 = vmatprep.subr.bf16.mxu0 0
        %5227 = vmatpush1.bf16.msra.mxu0 0
        %5228 = vmatprep.subr.bf16.mxu0 0
        %5229 = vmatpush1.bf16.msra.mxu0 0
        %5230 = vmatprep.subr.bf16.mxu0 0
        %5231 = vmatpush1.bf16.msra.mxu0 0
        %5232 = vmatprep.subr.bf16.mxu0 0
        %5233 = vmatpush1.bf16.msra.mxu0 0
        %5234 = vmatprep.subr.bf16.mxu0 0
        %5235 = vmatpush1.bf16.msra.mxu0 0
        %5236 = vmatprep.mubr.bf16.mxu0 0
        %5237 = vmatmul.mubr.bf16.gmra.mrb[0].mxu0 %v5199
        %v5238 = vpop.f32.mrb[0].mxu0
        %v5239 = vadd.f32 %v5160, %v5238
        %v5240 = vpop.f32.mrb[0].mxu0
        %v5241 = vpop.f32.mrb[0].mxu0
        %v5242 = vadd.f32 %v5163, %v5241
        %v5243 = vpop.f32.mrb[0].mxu0
        %5244 = vmatprep.mubr.bf16.mxu0 0
        %5245 = vmatmul.mubr.bf16.gmra.mrb[0].mxu0 %v5202
        %v5246 = vpop.f32.mrb[0].mxu0
        %v5247 = vadd.f32 %v5168, %v5246
        %v5248 = vpop.f32.mrb[0].mxu0
        %v5249 = vpop.f32.mrb[0].mxu0
        %v5250 = vadd.f32 %v5171, %v5249
        %v5251 = vpop.f32.mrb[0].mxu0
        %5252 = vdwg.mxu0
        %v5253 = vpack.c.bf16 %v5072, %v5071
        %v5254 = vpack.c.bf16 %v5074, %v5073
        %v5255 = vld [vmem:[%s13 + $0x40] sm:$0xf]
        %v5256 = vld [vmem:[%s13 + $0x44] sm:$0xf]
        %v5257 = vld [vmem:[%s13 + $0x48] sm:$0xf]
        %v5258 = vld [vmem:[%s13 + $0x4c] sm:$0xf]
        %v5259 = vld [vmem:[%s13 + $0x50] sm:$0xf]
        %v5260 = vld [vmem:[%s13 + $0x54] sm:$0xf]
        %v5261 = vld [vmem:[%s13 + $0x58] sm:$0xf]
        %v5262 = vld [vmem:[%s13 + $0x5c] sm:$0xf]
        %v5271 = vunpack.c.l.b16 %v5255
        %v5272 = vunpack.c.l.b16 %v5256
        %v5273 = vunpack.c.l.b16 %v5257
        %v5274 = vunpack.c.l.b16 %v5258
        %v5275 = vunpack.c.l.b16 %v5259
        %v5276 = vunpack.c.l.b16 %v5260
        %v5277 = vunpack.c.l.b16 %v5261
        %v5278 = vunpack.c.l.b16 %v5262
        %v5279 = vpack.c.b16 %v5272, %v5271
        %v5280 = vpack.c.b16 %v5274, %v5273
        %v5281 = vpack.c.b16 %v5276, %v5275
        %v5282 = vpack.c.b16 %v5278, %v5277
        %v5288 = vsel %vm813, %v5253, 0
        %v5291 = vsel %vm813, %v5254, 0
        %5293 = vmatprep.subr.bf16.mxu0 0
        %5294 = vmatpush1.bf16.msra.mxu0 %v5279
        %5295 = vmatprep.subr.bf16.mxu0 0
        %5296 = vmatpush1.bf16.msra.mxu0 %v5280
        %5297 = vmatprep.subr.bf16.mxu0 0
        %5298 = vmatpush1.bf16.msra.mxu0 %v5281
        %5299 = vmatprep.subr.bf16.mxu0 0
        %5300 = vmatpush1.bf16.msra.mxu0 %v5282
        %5301 = vmatprep.subr.bf16.mxu0 0
        %5302 = vmatpush1.bf16.msra.mxu0 0
        %5303 = vmatprep.subr.bf16.mxu0 0
        %5304 = vmatpush1.bf16.msra.mxu0 0
        %5305 = vmatprep.subr.bf16.mxu0 0
        %5306 = vmatpush1.bf16.msra.mxu0 0
        %5307 = vmatprep.subr.bf16.mxu0 0
        %5308 = vmatpush1.bf16.msra.mxu0 0
        %5309 = vmatprep.subr.bf16.mxu0 0
        %5310 = vmatpush1.bf16.msra.mxu0 0
        %5311 = vmatprep.subr.bf16.mxu0 0
        %5312 = vmatpush1.bf16.msra.mxu0 0
        %5313 = vmatprep.subr.bf16.mxu0 0
        %5314 = vmatpush1.bf16.msra.mxu0 0
        %5315 = vmatprep.subr.bf16.mxu0 0
        %5316 = vmatpush1.bf16.msra.mxu0 0
        %5317 = vmatprep.subr.bf16.mxu0 0
        %5318 = vmatpush1.bf16.msra.mxu0 0
        %5319 = vmatprep.subr.bf16.mxu0 0
        %5320 = vmatpush1.bf16.msra.mxu0 0
        %5321 = vmatprep.subr.bf16.mxu0 0
        %5322 = vmatpush1.bf16.msra.mxu0 0
        %5323 = vmatprep.subr.bf16.mxu0 0
        %5324 = vmatpush1.bf16.msra.mxu0 0
        %5325 = vmatprep.mubr.bf16.mxu0 0
        %5326 = vmatmul.mubr.bf16.gmra.mrb[0].mxu0 %v5288
        %v5327 = vpop.f32.mrb[0].mxu0
        %v5328 = vadd.f32 0.0, %v5327
        %v5329 = vpop.f32.mrb[0].mxu0
        %v5330 = vpop.f32.mrb[0].mxu0
        %v5331 = vadd.f32 0.0, %v5330
        %v5332 = vpop.f32.mrb[0].mxu0
        %5333 = vmatprep.mubr.bf16.mxu0 0
        %5334 = vmatmul.mubr.bf16.gmra.mrb[0].mxu0 %v5291
        %v5335 = vpop.f32.mrb[0].mxu0
        %v5336 = vadd.f32 0.0, %v5335
        %v5337 = vpop.f32.mrb[0].mxu0
        %v5338 = vpop.f32.mrb[0].mxu0
        %v5339 = vadd.f32 0.0, %v5338
        %v5340 = vpop.f32.mrb[0].mxu0
        %5341 = vdwg.mxu0
        %v5342 = vadd.f32 %v5239, %v5328
        %v5343 = vadd.f32 %v5242, %v5331
        %v5344 = vadd.f32 %v5247, %v5336
        %v5345 = vadd.f32 %v5250, %v5339
        %v5346 = vld [vmem:[%s14] sm:$0x1]
        %v5348 = vlaneseq
        %v5349 = vshrl.u32 %v5348, 7
        %v5350 = vsub.s32 0, %v5349
        %v5351 = vrot.slane %v5346, %v5350
        %v5353 = vadd.f32 %v5342, %v5351
        %v5354 = vadd.f32 %v5343, %v5351
        %v5355 = vadd.f32 %v5344, %v5351
        %v5356 = vadd.f32 %v5345, %v5351
        %v5357 = vmax.f32 %v5353, 0.0
        %v5358 = vmax.f32 %v5354, 0.0
        %v5359 = vmax.f32 %v5355, 0.0
        %v5360 = vmax.f32 %v5356, 0.0
        %5361 = vst.msk [vmem:[#allocation2] sm:$0xff] %vm813, %v5357
        %5362 = vst.msk [vmem:[#allocation2 + $0x8] sm:$0xff] %vm813, %v5358
        %5363 = vst.msk [vmem:[#allocation2 + $0x10] sm:$0xff] %vm813, %v5359
        %5364 = vst.msk [vmem:[#allocation2 + $0x18] sm:$0xff] %vm813, %v5360
        %v5365 = vld [vmem:[#allocation2] ss:$4 sm:$0xff]
        %v5366 = vpack.c.bf16 %v5365, %v5365
        %v5367 = vld [vmem:[%s15] sm:$0xf]
        %v5368 = vld [vmem:[%s15 + $0x4] sm:$0xf]
        %v5369 = vld [vmem:[%s15 + $0x8] sm:$0xf]
        %v5370 = vld [vmem:[%s15 + $0xc] sm:$0xf]
        %v5371 = vld [vmem:[%s15 + $0x10] sm:$0xf]
        %v5372 = vld [vmem:[%s15 + $0x14] sm:$0xf]
        %v5373 = vld [vmem:[%s15 + $0x18] sm:$0xf]
        %v5374 = vld [vmem:[%s15 + $0x1c] sm:$0xf]
        %v5375 = vld [vmem:[%s1391] ss:$4 sm:$0xff]
        %v5376 = vpack.c.bf16 %v5375, %v5375
        %v5377 = vld [vmem:[%s15 + $0x20] sm:$0xf]
        %v5378 = vld [vmem:[%s15 + $0x24] sm:$0xf]
        %v5379 = vld [vmem:[%s15 + $0x28] sm:$0xf]
        %v5380 = vld [vmem:[%s15 + $0x2c] sm:$0xf]
        %v5381 = vld [vmem:[%s15 + $0x30] sm:$0xf]
        %v5382 = vld [vmem:[%s15 + $0x34] sm:$0xf]
        %v5383 = vld [vmem:[%s15 + $0x38] sm:$0xf]
        %v5384 = vld [vmem:[%s15 + $0x3c] sm:$0xf]
        %v5393 = vunpack.c.l.b16 %v5377
        %v5394 = vunpack.c.l.b16 %v5378
        %v5395 = vunpack.c.l.b16 %v5379
        %v5396 = vunpack.c.l.b16 %v5380
        %v5397 = vunpack.c.l.b16 %v5381
        %v5398 = vunpack.c.l.b16 %v5382
        %v5399 = vunpack.c.l.b16 %v5383
        %v5400 = vunpack.c.l.b16 %v5384
        %v5401 = vpack.c.b16 %v5394, %v5393
        %v5402 = vpack.c.b16 %v5396, %v5395
        %v5403 = vpack.c.b16 %v5398, %v5397
        %v5404 = vpack.c.b16 %v5400, %v5399
        %v5410 = vsel %vm813, %v5376, 0
        %5412 = vmatprep.subr.bf16.mxu0 0
        %5413 = vmatpush1.bf16.msra.mxu0 %v5401
        %5414 = vmatprep.subr.bf16.mxu0 0
        %5415 = vmatpush1.bf16.msra.mxu0 %v5402
        %5416 = vmatprep.subr.bf16.mxu0 0
        %5417 = vmatpush1.bf16.msra.mxu0 %v5403
        %5418 = vmatprep.subr.bf16.mxu0 0
        %5419 = vmatpush1.bf16.msra.mxu0 %v5404
        %5420 = vmatprep.subr.bf16.mxu0 0
        %5421 = vmatpush1.bf16.msra.mxu0 0
        %5422 = vmatprep.subr.bf16.mxu0 0
        %5423 = vmatpush1.bf16.msra.mxu0 0
        %5424 = vmatprep.subr.bf16.mxu0 0
        %5425 = vmatpush1.bf16.msra.mxu0 0
        %5426 = vmatprep.subr.bf16.mxu0 0
        %5427 = vmatpush1.bf16.msra.mxu0 0
        %5428 = vmatprep.subr.bf16.mxu0 0
        %5429 = vmatpush1.bf16.msra.mxu0 0
        %5430 = vmatprep.subr.bf16.mxu0 0
        %5431 = vmatpush1.bf16.msra.mxu0 0
        %5432 = vmatprep.subr.bf16.mxu0 0
        %5433 = vmatpush1.bf16.msra.mxu0 0
        %5434 = vmatprep.subr.bf16.mxu0 0
        %5435 = vmatpush1.bf16.msra.mxu0 0
        %5436 = vmatprep.subr.bf16.mxu0 0
        %5437 = vmatpush1.bf16.msra.mxu0 0
        %5438 = vmatprep.subr.bf16.mxu0 0
        %5439 = vmatpush1.bf16.msra.mxu0 0
        %5440 = vmatprep.subr.bf16.mxu0 0
        %5441 = vmatpush1.bf16.msra.mxu0 0
        %5442 = vmatprep.subr.bf16.mxu0 0
        %5443 = vmatpush1.bf16.msra.mxu0 0
        %5444 = vmatprep.mubr.bf16.mxu0 0
        %5445 = vmatmul.mubr.bf16.gmra.mrb[0].mxu0 %v5410
        %v5446 = vpop.f32.mrb[0].mxu0
        %v5447 = vadd.f32 0.0, %v5446
        %v5448 = vpop.f32.mrb[0].mxu0
        %v5449 = vpop.f32.mrb[0].mxu0
        %v5450 = vpop.f32.mrb[0].mxu0
        %5451 = vdwg.mxu0
        %v5460 = vunpack.c.l.b16 %v5367
        %v5461 = vunpack.c.l.b16 %v5368
        %v5462 = vunpack.c.l.b16 %v5369
        %v5463 = vunpack.c.l.b16 %v5370
        %v5464 = vunpack.c.l.b16 %v5371
        %v5465 = vunpack.c.l.b16 %v5372
        %v5466 = vunpack.c.l.b16 %v5373
        %v5467 = vunpack.c.l.b16 %v5374
        %v5468 = vpack.c.b16 %v5461, %v5460
        %v5469 = vpack.c.b16 %v5463, %v5462
        %v5470 = vpack.c.b16 %v5465, %v5464
        %v5471 = vpack.c.b16 %v5467, %v5466
        %v5477 = vsel %vm813, %v5366, 0
        %5479 = vmatprep.subr.bf16.mxu0 0
        %5480 = vmatpush1.bf16.msra.mxu0 %v5468
        %5481 = vmatprep.subr.bf16.mxu0 0
        %5482 = vmatpush1.bf16.msra.mxu0 %v5469
        %5483 = vmatprep.subr.bf16.mxu0 0
        %5484 = vmatpush1.bf16.msra.mxu0 %v5470
        %5485 = vmatprep.subr.bf16.mxu0 0
        %5486 = vmatpush1.bf16.msra.mxu0 %v5471
        %5487 = vmatprep.subr.bf16.mxu0 0
        %5488 = vmatpush1.bf16.msra.mxu0 0
        %5489 = vmatprep.subr.bf16.mxu0 0
        %5490 = vmatpush1.bf16.msra.mxu0 0
        %5491 = vmatprep.subr.bf16.mxu0 0
        %5492 = vmatpush1.bf16.msra.mxu0 0
        %5493 = vmatprep.subr.bf16.mxu0 0
        %5494 = vmatpush1.bf16.msra.mxu0 0
        %5495 = vmatprep.subr.bf16.mxu0 0
        %5496 = vmatpush1.bf16.msra.mxu0 0
        %5497 = vmatprep.subr.bf16.mxu0 0
        %5498 = vmatpush1.bf16.msra.mxu0 0
        %5499 = vmatprep.subr.bf16.mxu0 0
        %5500 = vmatpush1.bf16.msra.mxu0 0
        %5501 = vmatprep.subr.bf16.mxu0 0
        %5502 = vmatpush1.bf16.msra.mxu0 0
        %5503 = vmatprep.subr.bf16.mxu0 0
        %5504 = vmatpush1.bf16.msra.mxu0 0
        %5505 = vmatprep.subr.bf16.mxu0 0
        %5506 = vmatpush1.bf16.msra.mxu0 0
        %5507 = vmatprep.subr.bf16.mxu0 0
        %5508 = vmatpush1.bf16.msra.mxu0 0
        %5509 = vmatprep.subr.bf16.mxu0 0
        %5510 = vmatpush1.bf16.msra.mxu0 0
        %5511 = vmatprep.mubr.bf16.mxu0 0
        %5512 = vmatmul.mubr.bf16.gmra.mrb[0].mxu0 %v5477
        %v5513 = vpop.f32.mrb[0].mxu0
        %v5514 = vadd.f32 %v5447, %v5513
        %v5515 = vpop.f32.mrb[0].mxu0
        %v5516 = vpop.f32.mrb[0].mxu0
        %v5517 = vpop.f32.mrb[0].mxu0
        %5518 = vdwg.mxu0
        %s5519 = scalar_lea.vmem [#allocation2], 2
        %v5520 = vld [vmem:[%s5519] ss:$4 sm:$0xff]
        %v5521 = vpack.c.bf16 %v5520, %v5520
        %v5522 = vld [vmem:[%s15 + $0x40] sm:$0xf]
        %v5523 = vld [vmem:[%s15 + $0x44] sm:$0xf]
        %v5524 = vld [vmem:[%s15 + $0x48] sm:$0xf]
        %v5525 = vld [vmem:[%s15 + $0x4c] sm:$0xf]
        %v5526 = vld [vmem:[%s15 + $0x50] sm:$0xf]
        %v5527 = vld [vmem:[%s15 + $0x54] sm:$0xf]
        %v5528 = vld [vmem:[%s15 + $0x58] sm:$0xf]
        %v5529 = vld [vmem:[%s15 + $0x5c] sm:$0xf]
        %v5538 = vunpack.c.l.b16 %v5522
        %v5539 = vunpack.c.l.b16 %v5523
        %v5540 = vunpack.c.l.b16 %v5524
        %v5541 = vunpack.c.l.b16 %v5525
        %v5542 = vunpack.c.l.b16 %v5526
        %v5543 = vunpack.c.l.b16 %v5527
        %v5544 = vunpack.c.l.b16 %v5528
        %v5545 = vunpack.c.l.b16 %v5529
        %v5546 = vpack.c.b16 %v5539, %v5538
        %v5547 = vpack.c.b16 %v5541, %v5540
        %v5548 = vpack.c.b16 %v5543, %v5542
        %v5549 = vpack.c.b16 %v5545, %v5544
        %v5555 = vsel %vm813, %v5521, 0
        %5557 = vmatprep.subr.bf16.mxu0 0
        %5558 = vmatpush1.bf16.msra.mxu0 %v5546
        %5559 = vmatprep.subr.bf16.mxu0 0
        %5560 = vmatpush1.bf16.msra.mxu0 %v5547
        %5561 = vmatprep.subr.bf16.mxu0 0
        %5562 = vmatpush1.bf16.msra.mxu0 %v5548
        %5563 = vmatprep.subr.bf16.mxu0 0
        %5564 = vmatpush1.bf16.msra.mxu0 %v5549
        %5565 = vmatprep.subr.bf16.mxu0 0
        %5566 = vmatpush1.bf16.msra.mxu0 0
        %5567 = vmatprep.subr.bf16.mxu0 0
        %5568 = vmatpush1.bf16.msra.mxu0 0
        %5569 = vmatprep.subr.bf16.mxu0 0
        %5570 = vmatpush1.bf16.msra.mxu0 0
        %5571 = vmatprep.subr.bf16.mxu0 0
        %5572 = vmatpush1.bf16.msra.mxu0 0
        %5573 = vmatprep.subr.bf16.mxu0 0
        %5574 = vmatpush1.bf16.msra.mxu0 0
        %5575 = vmatprep.subr.bf16.mxu0 0
        %5576 = vmatpush1.bf16.msra.mxu0 0
        %5577 = vmatprep.subr.bf16.mxu0 0
        %5578 = vmatpush1.bf16.msra.mxu0 0
        %5579 = vmatprep.subr.bf16.mxu0 0
        %5580 = vmatpush1.bf16.msra.mxu0 0
        %5581 = vmatprep.subr.bf16.mxu0 0
        %5582 = vmatpush1.bf16.msra.mxu0 0
        %5583 = vmatprep.subr.bf16.mxu0 0
        %5584 = vmatpush1.bf16.msra.mxu0 0
        %5585 = vmatprep.subr.bf16.mxu0 0
        %5586 = vmatpush1.bf16.msra.mxu0 0
        %5587 = vmatprep.subr.bf16.mxu0 0
        %5588 = vmatpush1.bf16.msra.mxu0 0
        %5589 = vmatprep.mubr.bf16.mxu0 0
        %5590 = vmatmul.mubr.bf16.gmra.mrb[0].mxu0 %v5555
        %v5591 = vpop.f32.mrb[0].mxu0
        %v5592 = vadd.f32 0.0, %v5591
        %v5593 = vpop.f32.mrb[0].mxu0
        %v5594 = vpop.f32.mrb[0].mxu0
        %v5595 = vpop.f32.mrb[0].mxu0
        %5596 = vdwg.mxu0
        %v5597 = vadd.f32 %v5514, %v5592
        %s5598 = scalar_lea.vmem [#allocation2], 3
        %v5599 = vld [vmem:[%s5598] ss:$4 sm:$0xff]
        %v5600 = vpack.c.bf16 %v5599, %v5599
        %v5601 = vld [vmem:[%s15 + $0x60] sm:$0xf]
        %v5602 = vld [vmem:[%s15 + $0x64] sm:$0xf]
        %v5603 = vld [vmem:[%s15 + $0x68] sm:$0xf]
        %v5604 = vld [vmem:[%s15 + $0x6c] sm:$0xf]
        %v5605 = vld [vmem:[%s15 + $0x70] sm:$0xf]
        %v5606 = vld [vmem:[%s15 + $0x74] sm:$0xf]
        %v5607 = vld [vmem:[%s15 + $0x78] sm:$0xf]
        %v5608 = vld [vmem:[%s15 + $0x7c] sm:$0xf]
        %v5617 = vunpack.c.l.b16 %v5601
        %v5618 = vunpack.c.l.b16 %v5602
        %v5619 = vunpack.c.l.b16 %v5603
        %v5620 = vunpack.c.l.b16 %v5604
        %v5621 = vunpack.c.l.b16 %v5605
        %v5622 = vunpack.c.l.b16 %v5606
        %v5623 = vunpack.c.l.b16 %v5607
        %v5624 = vunpack.c.l.b16 %v5608
        %v5625 = vpack.c.b16 %v5618, %v5617
        %v5626 = vpack.c.b16 %v5620, %v5619
        %v5627 = vpack.c.b16 %v5622, %v5621
        %v5628 = vpack.c.b16 %v5624, %v5623
        %v5634 = vsel %vm813, %v5600, 0
        %5636 = vmatprep.subr.bf16.mxu0 0
        %5637 = vmatpush1.bf16.msra.mxu0 %v5625
        %5638 = vmatprep.subr.bf16.mxu0 0
        %5639 = vmatpush1.bf16.msra.mxu0 %v5626
        %5640 = vmatprep.subr.bf16.mxu0 0
        %5641 = vmatpush1.bf16.msra.mxu0 %v5627
        %5642 = vmatprep.subr.bf16.mxu0 0
        %5643 = vmatpush1.bf16.msra.mxu0 %v5628
        %5644 = vmatprep.subr.bf16.mxu0 0
        %5645 = vmatpush1.bf16.msra.mxu0 0
        %5646 = vmatprep.subr.bf16.mxu0 0
        %5647 = vmatpush1.bf16.msra.mxu0 0
        %5648 = vmatprep.subr.bf16.mxu0 0
        %5649 = vmatpush1.bf16.msra.mxu0 0
        %5650 = vmatprep.subr.bf16.mxu0 0
        %5651 = vmatpush1.bf16.msra.mxu0 0
        %5652 = vmatprep.subr.bf16.mxu0 0
        %5653 = vmatpush1.bf16.msra.mxu0 0
        %5654 = vmatprep.subr.bf16.mxu0 0
        %5655 = vmatpush1.bf16.msra.mxu0 0
        %5656 = vmatprep.subr.bf16.mxu0 0
        %5657 = vmatpush1.bf16.msra.mxu0 0
        %5658 = vmatprep.subr.bf16.mxu0 0
        %5659 = vmatpush1.bf16.msra.mxu0 0
        %5660 = vmatprep.subr.bf16.mxu0 0
        %5661 = vmatpush1.bf16.msra.mxu0 0
        %5662 = vmatprep.subr.bf16.mxu0 0
        %5663 = vmatpush1.bf16.msra.mxu0 0
        %5664 = vmatprep.subr.bf16.mxu0 0
        %5665 = vmatpush1.bf16.msra.mxu0 0
        %5666 = vmatprep.subr.bf16.mxu0 0
        %5667 = vmatpush1.bf16.msra.mxu0 0
        %5668 = vmatprep.mubr.bf16.mxu0 0
        %5669 = vmatmul.mubr.bf16.gmra.mrb[0].mxu0 %v5634
        %v5670 = vpop.f32.mrb[0].mxu0
        %v5671 = vadd.f32 0.0, %v5670
        %v5672 = vpop.f32.mrb[0].mxu0
        %v5673 = vpop.f32.mrb[0].mxu0
        %v5674 = vpop.f32.mrb[0].mxu0
        %5675 = vdwg.mxu0
        %v5676 = vadd.f32 %v5597, %v5671
        %v5677 = vld [vmem:[%s16] sm:$0x1]
        %v5679 = vlaneseq
        %v5680 = vshrl.u32 %v5679, 7
        %v5681 = vsub.s32 0, %v5680
        %v5682 = vrot.slane %v5677, %v5681
        %v5684 = vadd.f32 %v5676, %v5682
        %5685 = vst.msk [vmem:[%s542] sm:$0xff] %vm2930, %v5684
        %s5686 = sand.u32 %s401, 1
        %s5687 = scalar_lea.sflag [#allocation4], %s5686
        %s5688 = sand.u32 %s401, 1
        %s5689 = smul.addr %s5688, 8
        %s5690 = scalar_lea.vmem [#allocation3], %s5689
        // Predicated region
        $region89: #{feature_extractor_4.1} parent=87 // pred_check
          %p5691 = pneg %p411
        $region90: #{feature_extractor_4.1} parent=87 // pred_check_branch
          %5693 = sbr.rel (%p5691) target = $region92
        $region91: #{feature_extractor_4.1} parent=87 // pred_region
          %s5695 = ssub.s32 128, 128
          %5696 = vsyncadd %s5687, %s5695
          %s5697 = smul.addr %s31, 128
          %s5698 = scalar_lea.hbm %s17, %s5697
          %s5700 = sshll.u32 %s5690, 4
          %s5701 = int_to_ptr.vmem [resolvable:$true] %s5700
          %5703 = dma.vmem_to_hbm [thread:$0]  %s5701, 128, %s5698, %s5687
        $region92: #{feature_extractor_4.1} parent=87 // pred_fallthru
          _
      $region88: #{feature_extractor_4.1} parent=5 // pred_fallthru
        _
      %p5704 = scmp.le.s32.totalorder 2, %s26
      // Predicated region
      $region93: #{feature_extractor_4.1} parent=5 // pred_check
        %p5705 = pneg %p5704
      $region94: #{feature_extractor_4.1} parent=5 // pred_check_branch
        %5707 = sbr.rel (%p5705) target = $region96
      $region95: #{feature_extractor_4.1} parent=5 // pred_region
        %s5708 = ssub.s32 %s26, 2
        // Predicated region
        $region97: #{feature_extractor_4.1} parent=95 // pred_check
          %p5709 = pneg %p417
        $region98: #{feature_extractor_4.1} parent=95 // pred_check_branch
          %5711 = sbr.rel (%p5709) target = $region100
        $region99: #{feature_extractor_4.1} parent=95 // pred_region
          %s5712 = sand.u32 %s402, 1
          %s5713 = scalar_lea.sflag [#allocation4], %s5712
          %s5714 = sand.u32 %s402, 1
          %s5715 = smul.addr %s5714, 8
          %s5716 = scalar_lea.vmem [#allocation3], %s5715
          %5717 = dma.done %s5713, 128
        $region100: #{feature_extractor_4.1} parent=95 // pred_fallthru
          _
      $region96: #{feature_extractor_4.1} parent=5 // pred_fallthru
        _
    $region6: #{feature_extractor_4.1} parent=1 // loop_footer
      %s30 = sadd.s32 1, %s26
    $region7: #{feature_extractor_4.1} parent=1 // loop_footer_branch
      %25 = sbr.rel target = $region3
    $region8: #{feature_extractor_4.1} parent=1 // loop_exit
      _
    %5718 = vsyncpa [#allocation4], 1
    %s5719 = scalar_lea.sflag [#allocation4], 1
    %5720 = vsyncpa %s5719, 1

</llo_original>
